<compile_context>
chip_gen: v5e
topology: v5e:2x2
jax: 0.10.0
libtpu: 0.0.40
codegen_flags: <defaults>
</compile_context>

<pallas_src>
import math
import functools

import jax
import jax.numpy as jnp
from jax.experimental import pallas as pl
from jax.experimental.pallas import tpu as pltpu


# ------------------------------- helpers ------------------------------------

def _prod(xs):
    p = 1
    for x in xs:
        p *= x
    return p


def _pick_row_tile(m, candidates=(512, 256, 128, 64, 32, 16, 8)):
    """Largest row tile dividing m that still yields >=2 grid steps (v7x: 2 TCs);
    fall back to any divisor, else the full extent."""
    for c in candidates:
        if m % c == 0 and m // c >= 2:
            return c
    for c in candidates:
        if m % c == 0:
            return c
    return m


def _pick_batch_tile(b, candidates=(8, 4, 2, 1)):
    for c in candidates:
        if b % c == 0 and b // c >= 2:
            return c
    return b


def _layer_norm_f32(x, gamma, beta, eps):
    mu = jnp.mean(x, axis=-1, keepdims=True)
    xc = x - mu
    var = jnp.mean(xc * xc, axis=-1, keepdims=True)
    return xc * jax.lax.rsqrt(var + eps) * gamma + beta


_NEG = -1e9


# ----------------------------- Pallas kernels --------------------------------

def _self_attn_layer_kernel(x_ref, kpad_ref, g_ref, b_ref, wqkv_ref, bqkv_ref,
                            wo_ref, bo_ref, o_ref, *, num_heads, causal, eps):
    """Whole self-attention sublayer for a block of Bt batch elements:
       x + Wo( MHA( LN(x) @ Wqkv ) )   (scale pre-folded into Wq)."""
    Bt, T, D = x_ref.shape
    dh = D // num_heads

    x = x_ref[...].astype(jnp.float32)                              # [Bt, T, D]
    xn = _layer_norm_f32(x.reshape(Bt * T, D), g_ref[...], b_ref[...], eps)
    qkv = jnp.dot(xn.astype(jnp.bfloat16), wqkv_ref[...],
                  preferred_element_type=jnp.float32) + bqkv_ref[...]
    qkv = qkv.reshape(Bt, T, 3 * D)

    # additive mask bias, built ONCE per grid step (0 keep / -1e9 drop)
    bias = (kpad_ref[...].astype(jnp.float32) - 1.0) * (-_NEG)      # [Bt, 1, T]
    bias = bias * (-1.0)                                            # -> 0 / -1e9
    if causal:
        row = jax.lax.broadcasted_iota(jnp.int32, (T, T), 0)
        col = jax.lax.broadcasted_iota(jnp.int32, (T, T), 1)
        bias = bias + (col > row).astype(jnp.float32)[None] * _NEG  # [Bt, T, T]

    out = jnp.zeros((Bt * T, D), jnp.float32)
    for h in range(num_heads):                                      # static unroll
        lo = h * dh
        qh = qkv[:, :, lo:lo + dh].astype(jnp.bfloat16)
        kh = qkv[:, :, D + lo:D + lo + dh].astype(jnp.bfloat16)
        vh = qkv[:, :, 2 * D + lo:2 * D + lo + dh].astype(jnp.bfloat16)
        s = jnp.einsum('btd,bsd->bts', qh, kh,
                       preferred_element_type=jnp.float32) + bias
        s = s - jnp.max(s, axis=-1, keepdims=True)
        p = jnp.exp(s)
        p = p * pl.reciprocal(jnp.sum(p, axis=-1, keepdims=True), approx=True)
        ctx = jnp.einsum('bts,bsd->btd', p.astype(jnp.bfloat16), vh,
                         preferred_element_type=jnp.float32)
        # fold head-merge into the output projection: accumulate ctx_h @ Wo[rows of head h]
        out = out + jnp.dot(ctx.reshape(Bt * T, dh).astype(jnp.bfloat16),
                            wo_ref[lo:lo + dh, :],
                            preferred_element_type=jnp.float32)

    o_ref[...] = (x + (out + bo_ref[...]).reshape(Bt, T, D)).astype(o_ref.dtype)


def _cross_attn_layer_kernel(x_ref, enc_ref, qpad_ref, kpad_ref, g_ref, b_ref,
                             wq_ref, bq_ref, wkv_ref, bkv_ref, wo_ref, bo_ref,
                             o_ref, *, num_heads, eps):
    """Whole cross-attention sublayer: x + Wo( MHA( LN(x)@Wq , enc@Wkv ) )."""
    Bt, T, D = x_ref.shape
    S = enc_ref.shape[1]
    dh = D // num_heads

    x = x_ref[...].astype(jnp.float32)                              # [Bt, T, D]
    xn = _layer_norm_f32(x.reshape(Bt * T, D), g_ref[...], b_ref[...], eps)
    q = (jnp.dot(xn.astype(jnp.bfloat16), wq_ref[...],
                 preferred_element_type=jnp.float32)
         + bq_ref[...]).reshape(Bt, T, D)
    enc = enc_ref[...].astype(jnp.bfloat16)                         # [Bt, S, D]
    kv = (jnp.dot(enc.reshape(Bt * S, D), wkv_ref[...],
                  preferred_element_type=jnp.float32)
          + bkv_ref[...]).reshape(Bt, S, 2 * D)

    # cross mask = dec(query) pad * enc(key) pad, as an additive bias, once per step
    bias = (qpad_ref[...].astype(jnp.float32) * kpad_ref[...].astype(jnp.float32)
            - 1.0) * (-_NEG) * (-1.0)                               # [Bt, T, S]

    out = jnp.zeros((Bt * T, D), jnp.float32)
    for h in range(num_heads):
        lo = h * dh
        qh = q[:, :, lo:lo + dh].astype(jnp.bfloat16)
        kh = kv[:, :, lo:lo + dh].astype(jnp.bfloat16)
        vh = kv[:, :, D + lo:D + lo + dh].astype(jnp.bfloat16)
        s = jnp.einsum('btd,bsd->bts', qh, kh,
                       preferred_element_type=jnp.float32) + bias
        s = s - jnp.max(s, axis=-1, keepdims=True)
        p = jnp.exp(s)
        p = p * pl.reciprocal(jnp.sum(p, axis=-1, keepdims=True), approx=True)
        ctx = jnp.einsum('bts,bsd->btd', p.astype(jnp.bfloat16), vh,
                         preferred_element_type=jnp.float32)
        out = out + jnp.dot(ctx.reshape(Bt * T, dh).astype(jnp.bfloat16),
                            wo_ref[lo:lo + dh, :],
                            preferred_element_type=jnp.float32)

    o_ref[...] = (x + (out + bo_ref[...]).reshape(Bt, T, D)).astype(o_ref.dtype)


def _ln_ffn_kernel(x_ref, g_ref, b_ref, w1_ref, b1_ref, w2_ref, b2_ref, o_ref, *, eps):
    x = x_ref[...].astype(jnp.float32)
    xn = _layer_norm_f32(x, g_ref[...], b_ref[...], eps)
    h = jnp.dot(xn.astype(jnp.bfloat16), w1_ref[...],
                preferred_element_type=jnp.float32) + b1_ref[...]
    h = jnp.maximum(h, 0.0)                                         # ReLU
    y = jnp.dot(h.astype(jnp.bfloat16), w2_ref[...],
                preferred_element_type=jnp.float32) + b2_ref[...]
    # TODO(synk): ResConnection source not provided; assuming pre-norm residual
    # x + dropout(sublayer(LayerNorm(x))) with dropout disabled (eval mode).
    o_ref[...] = (x + y).astype(o_ref.dtype)


def _linear_kernel(x_ref, w_ref, bias_ref, o_ref):
    acc = jnp.dot(x_ref[...].astype(jnp.bfloat16), w_ref[...],
                  preferred_element_type=jnp.float32)
    o_ref[...] = (acc + bias_ref[...]).astype(o_ref.dtype)


# ------------------------------ kernel wrappers -------------------------------

def self_attn_layer(x, kpad, p, num_heads, causal, eps=1e-5):
    """x: [B,T,D] bf16 residual stream; kpad: [B,1,T] float key-pad (1 keep / 0 pad)."""
    B, T, D = x.shape
    bt = _pick_batch_tile(B)
    assert bt == B or B % bt == 0
    return pl.pallas_call(
        functools.partial(_self_attn_layer_kernel, num_heads=num_heads,
                          causal=causal, eps=eps),
        out_shape=jax.ShapeDtypeStruct((B, T, D), x.dtype),
        grid=(B // bt,),
        in_specs=[pl.BlockSpec((bt, T, D), lambda b: (b, 0, 0)),
                  pl.BlockSpec((bt, 1, T), lambda b: (b, 0, 0)),
                  pl.BlockSpec((1, D), lambda b: (0, 0)),
                  pl.BlockSpec((1, D), lambda b: (0, 0)),
                  pl.BlockSpec((D, 3 * D), lambda b: (0, 0)),
                  pl.BlockSpec((1, 3 * D), lambda b: (0, 0)),
                  pl.BlockSpec((D, D), lambda b: (0, 0)),
                  pl.BlockSpec((1, D), lambda b: (0, 0))],
        out_specs=pl.BlockSpec((bt, T, D), lambda b: (b, 0, 0)),
        compiler_params=pltpu.CompilerParams(dimension_semantics=("parallel",)),
    )(x, kpad, p["ln_g"].reshape(1, D), p["ln_b"].reshape(1, D),
      p["wqkv"], p["bqkv"].reshape(1, 3 * D), p["wo"], p["bo"].reshape(1, D))


def cross_attn_layer(x, enc_out, qpad, kpad, p, num_heads, eps=1e-5):
    """x: [B,T,D]; enc_out: [B,S,D]; qpad: [B,T,1]; kpad: [B,1,S]."""
    B, T, D = x.shape
    S = enc_out.shape[1]
    bt = _pick_batch_tile(B)
    return pl.pallas_call(
        functools.partial(_cross_attn_layer_kernel, num_heads=num_heads, eps=eps),
        out_shape=jax.ShapeDtypeStruct((B, T, D), x.dtype),
        grid=(B // bt,),
        in_specs=[pl.BlockSpec((bt, T, D), lambda b: (b, 0, 0)),
                  pl.BlockSpec((bt, S, D), lambda b: (b, 0, 0)),
                  pl.BlockSpec((bt, T, 1), lambda b: (b, 0, 0)),
                  pl.BlockSpec((bt, 1, S), lambda b: (b, 0, 0)),
                  pl.BlockSpec((1, D), lambda b: (0, 0)),
                  pl.BlockSpec((1, D), lambda b: (0, 0)),
                  pl.BlockSpec((D, D), lambda b: (0, 0)),
                  pl.BlockSpec((1, D), lambda b: (0, 0)),
                  pl.BlockSpec((D, 2 * D), lambda b: (0, 0)),
                  pl.BlockSpec((1, 2 * D), lambda b: (0, 0)),
                  pl.BlockSpec((D, D), lambda b: (0, 0)),
                  pl.BlockSpec((1, D), lambda b: (0, 0))],
        out_specs=pl.BlockSpec((bt, T, D), lambda b: (b, 0, 0)),
        compiler_params=pltpu.CompilerParams(dimension_semantics=("parallel",)),
    )(x, enc_out, qpad, kpad, p["ln_g"].reshape(1, D), p["ln_b"].reshape(1, D),
      p["wq"], p["bq"].reshape(1, D), p["wkv"], p["bkv"].reshape(1, 2 * D),
      p["wo"], p["bo"].reshape(1, D))


def ffn_layer(x, p, eps=1e-5):
    """y = x + W2(ReLU(W1(LayerNorm(x)))) — one fused kernel, tiled over rows only."""
    *lead, D = x.shape
    M = _prod(lead)
    H = p["w1"].shape[1]
    x2 = x.reshape(M, D)
    tm = _pick_row_tile(M)
    assert tm == M or tm % 8 == 0
    out = pl.pallas_call(
        functools.partial(_ln_ffn_kernel, eps=eps),
        out_shape=jax.ShapeDtypeStruct((M, D), x.dtype),
        grid=(M // tm,),
        in_specs=[pl.BlockSpec((tm, D), lambda i: (i, 0)),
                  pl.BlockSpec((1, D), lambda i: (0, 0)),
                  pl.BlockSpec((1, D), lambda i: (0, 0)),
                  pl.BlockSpec((D, H), lambda i: (0, 0)),
                  pl.BlockSpec((1, H), lambda i: (0, 0)),
                  pl.BlockSpec((H, D), lambda i: (0, 0)),
                  pl.BlockSpec((1, D), lambda i: (0, 0))],
        out_specs=pl.BlockSpec((tm, D), lambda i: (i, 0)),
        compiler_params=pltpu.CompilerParams(dimension_semantics=("parallel",)),
    )(x2, p["ln_g"].reshape(1, D), p["ln_b"].reshape(1, D),
      p["w1"], p["b1"].reshape(1, H), p["w2"], p["b2"].reshape(1, D))
    return out.reshape(*lead, D)


def linear(x, w, b, out_dtype=jnp.float32):
    """y = x @ w + b (final vocab projection)."""
    *lead, D = x.shape
    M = _prod(lead)
    N = w.shape[1]
    x2 = x.reshape(M, D)
    tm = _pick_row_tile(M)
    tn = N if N <= 1024 else _pick_row_tile(N, (1024, 512, 256))
    assert tm == M or tm % 8 == 0
    assert tn == N or tn % 128 == 0
    out = pl.pallas_call(
        _linear_kernel,
        out_shape=jax.ShapeDtypeStruct((M, N), out_dtype),
        grid=(M // tm, N // tn),
        in_specs=[pl.BlockSpec((tm, D), lambda i, j: (i, 0)),
                  pl.BlockSpec((D, tn), lambda i, j: (0, j)),
                  pl.BlockSpec((1, tn), lambda i, j: (0, j))],
        out_specs=pl.BlockSpec((tm, tn), lambda i, j: (i, j)),
        compiler_params=pltpu.CompilerParams(
            dimension_semantics=("parallel", "parallel")),
    )(x2, w, b.reshape(1, N))
    return out.reshape(*lead, N)


# ------------------------------ model glue ------------------------------------

def sinusoidal_pe(max_len, d_model):
    pos = jnp.arange(max_len, dtype=jnp.float32)[:, None]
    i = jnp.arange(0, d_model, 2, dtype=jnp.float32)
    div = jnp.exp(-math.log(10000.0) * i / d_model)
    pe = jnp.zeros((max_len, d_model), jnp.float32)
    pe = pe.at[:, 0::2].set(jnp.sin(pos * div))
    pe = pe.at[:, 1::2].set(jnp.cos(pos * div))
    return pe


def encoder(params, enc_inputs, num_heads):
    # TODO(synk): bertlib.BERT source not provided; standard pre-norm Transformer
    # encoder (token emb + sinusoidal PE + self-attn/FFN, key-padding mask) stands in.
    B, S = enc_inputs.shape
    x = (params["emb"][enc_inputs] + params["pe"][:S][None]).astype(jnp.bfloat16)
    kpad = (enc_inputs != 0).astype(jnp.float32).reshape(B, 1, S)
    for lp in params["layers"]:
        x = self_attn_layer(x, kpad, lp["attn"], num_heads, causal=False)
        x = ffn_layer(x, lp["ffn"])
    return x


def decoder(params, dec_inputs, enc_outputs, enc_inputs, num_heads):
    B, T = dec_inputs.shape
    S = enc_inputs.shape[1]
    x = (params["emb"][dec_inputs] + params["pe"][:T][None]).astype(jnp.bfloat16)
    dec_pad = (dec_inputs != 0).astype(jnp.float32)
    enc_pad = (enc_inputs != 0).astype(jnp.float32)
    self_kpad = dec_pad.reshape(B, 1, T)     # dec-self mask = key pad * causal
    cross_kpad = enc_pad.reshape(B, 1, S)    # cross mask   = dec(query) pad * enc(key) pad
    cross_qpad = dec_pad.reshape(B, T, 1)
    for lp in params["layers"]:
        x = self_attn_layer(x, self_kpad, lp["self_attn"], num_heads, causal=True)
        x = cross_attn_layer(x, enc_outputs, cross_qpad, cross_kpad,
                             lp["cross_attn"], num_heads)
        x = ffn_layer(x, lp["ffn"])
    return x


def transformer_forward(params, enc_inputs, dec_inputs, num_heads):
    enc_out = encoder(params["encoder"], enc_inputs, num_heads)
    dec_out = decoder(params["decoder"], dec_inputs, enc_out, enc_inputs, num_heads)
    logits = linear(dec_out, params["out_w"], params["out_b"])
    return logits, dec_out


# ----------------------------- parameter init ---------------------------------

class KeyGen:
    def __init__(self, key):
        self.key = key
        self.i = 0

    def __call__(self):
        self.i += 1
        return jax.random.fold_in(self.key, self.i)


def _normal_f32(kg, shape, scale=0.02):
    return jax.random.normal(kg(), shape, jnp.float32) * scale


def init_self_attn(kg, d, num_heads):
    dh = d // num_heads
    scale = 1.0 / math.sqrt(dh)
    wqkv = _normal_f32(kg, (d, 3 * d))
    # fold the 1/sqrt(head_dim) attention scale into the Q projection (exact refactor)
    wqkv = wqkv.at[:, :d].multiply(scale)
    bqkv = jnp.zeros((3 * d,), jnp.float32)       # zero, so the fold is a no-op here
    return {"ln_g": jnp.ones((d,), jnp.float32), "ln_b": jnp.zeros((d,), jnp.float32),
            "wqkv": wqkv.astype(jnp.bfloat16), "bqkv": bqkv,
            "wo": _normal_f32(kg, (d, d)).astype(jnp.bfloat16),
            "bo": jnp.zeros((d,), jnp.float32)}


def init_cross_attn(kg, d, num_heads):
    dh = d // num_heads
    scale = 1.0 / math.sqrt(dh)
    wq = _normal_f32(kg, (d, d)) * scale          # fold scale into Q projection
    return {"ln_g": jnp.ones((d,), jnp.float32), "ln_b": jnp.zeros((d,), jnp.float32),
            "wq": wq.astype(jnp.bfloat16), "bq": jnp.zeros((d,), jnp.float32),
            "wkv": _normal_f32(kg, (d, 2 * d)).astype(jnp.bfloat16),
            "bkv": jnp.zeros((2 * d,), jnp.float32),
            "wo": _normal_f32(kg, (d, d)).astype(jnp.bfloat16),
            "bo": jnp.zeros((d,), jnp.float32)}


def init_ffn(kg, d, dff):
    return {"ln_g": jnp.ones((d,), jnp.float32), "ln_b": jnp.zeros((d,), jnp.float32),
            "w1": _normal_f32(kg, (d, dff)).astype(jnp.bfloat16),
            "b1": jnp.zeros((dff,), jnp.float32),
            "w2": _normal_f32(kg, (dff, d)).astype(jnp.bfloat16),
            "b2": jnp.zeros((d,), jnp.float32)}


def init_params(key, src_vocab, tgt_vocab, d_model, num_layers, num_heads, dff, max_len):
    kg = KeyGen(key)
    pe = sinusoidal_pe(max_len, d_model)
    enc_layers = [{"attn": init_self_attn(kg, d_model, num_heads),
                   "ffn": init_ffn(kg, d_model, dff)} for _ in range(num_layers)]
    dec_layers = [{"self_attn": init_self_attn(kg, d_model, num_heads),
                   "cross_attn": init_cross_attn(kg, d_model, num_heads),
                   "ffn": init_ffn(kg, d_model, dff)} for _ in range(num_layers)]
    return {
        "encoder": {"emb": _normal_f32(kg, (src_vocab, d_model)),
                    "pe": pe, "layers": enc_layers},
        "decoder": {"emb": _normal_f32(kg, (tgt_vocab, d_model)),
                    "pe": pe, "layers": dec_layers},
        "out_w": _normal_f32(kg, (d_model, tgt_vocab)).astype(jnp.bfloat16),
        "out_b": jnp.zeros((tgt_vocab,), jnp.float32),
    }


# ---------------------------------- main ---------------------------------------

if __name__ == "__main__":
    # small, lane-dense TPU-friendly config (d_model / dff / vocab multiples of 128)
    SRC_VOCAB, TGT_VOCAB = 256, 256
    D_MODEL, NUM_LAYERS, NUM_HEADS, DFF = 256, 2, 2, 512
    B, SRC_LEN, TGT_LEN, MAX_LEN = 2, 8, 8, 64

    key = jax.random.PRNGKey(0)
    k_par, k_enc, k_dec = jax.random.split(key, 3)

    params = init_params(k_par, SRC_VOCAB, TGT_VOCAB, D_MODEL, NUM_LAYERS,
                         NUM_HEADS, DFF, MAX_LEN)

    # integer token ids with trailing PAD (0) positions to exercise the masks
    enc_inputs = jax.random.randint(k_enc, (B, SRC_LEN), 1, SRC_VOCAB).astype(jnp.int32)
    dec_inputs = jax.random.randint(k_dec, (B, TGT_LEN), 1, TGT_VOCAB).astype(jnp.int32)
    enc_pad_pattern = jnp.array([[1, 1, 1, 1, 1, 1, 0, 0],
                                 [1, 1, 1, 1, 0, 0, 0, 0]], dtype=jnp.int32)
    dec_pad_pattern = jnp.array([[1, 1, 1, 1, 1, 0, 0, 0],
                                 [1, 1, 1, 0, 0, 0, 0, 0]], dtype=jnp.int32)
    enc_inputs = enc_inputs * enc_pad_pattern
    dec_inputs = dec_inputs * dec_pad_pattern

    fwd = jax.jit(lambda p, e, d: transformer_forward(p, e, d, NUM_HEADS))
    logits, dec_outputs = fwd(params, enc_inputs, dec_inputs)
    jax.block_until_ready((logits, dec_outputs))

    assert logits.shape == (B, TGT_LEN, TGT_VOCAB)
    assert dec_outputs.shape == (B, TGT_LEN, D_MODEL)
    assert bool(jnp.all(jnp.isfinite(logits)))
    print("KERNEL_OK")
</pallas_src>

<mosaic_0001>
module attributes {stable_mosaic.version = 11 : i64} {
  func.func @_self_attn_layer_kernel(%arg0: i32, %arg1: memref<1x8x256xbf16, #tpu.memory_space<vmem>>, %arg2: memref<1x1x8xf32, #tpu.memory_space<vmem>>, %arg3: memref<1x256xf32, #tpu.memory_space<vmem>>, %arg4: memref<1x256xf32, #tpu.memory_space<vmem>>, %arg5: memref<256x768xbf16, #tpu.memory_space<vmem>>, %arg6: memref<1x768xf32, #tpu.memory_space<vmem>>, %arg7: memref<256x256xbf16, #tpu.memory_space<vmem>>, %arg8: memref<1x256xf32, #tpu.memory_space<vmem>>, %arg9: memref<1x8x256xbf16, #tpu.memory_space<vmem>>) attributes {dimension_semantics = [#tpu.dimension_semantics<parallel>], iteration_bounds = array<i64: 2>, scalar_prefetch = 0 : i64, scratch_operands = 0 : i64, tpu.core_type = #tpu.core_type<tc>, window_params = [{transform_indices = @transform_0, window_bounds = array<i64: 1, 8, 256>}, {transform_indices = @transform_1, window_bounds = array<i64: 1, 1, 8>}, {pipeline_mode = #tpu.pipeline_mode<synchronous>, transform_indices = @transform_2, window_bounds = array<i64: 1, 256>}, {pipeline_mode = #tpu.pipeline_mode<synchronous>, transform_indices = @transform_3, window_bounds = array<i64: 1, 256>}, {pipeline_mode = #tpu.pipeline_mode<synchronous>, transform_indices = @transform_4, window_bounds = array<i64: 256, 768>}, {pipeline_mode = #tpu.pipeline_mode<synchronous>, transform_indices = @transform_5, window_bounds = array<i64: 1, 768>}, {pipeline_mode = #tpu.pipeline_mode<synchronous>, transform_indices = @transform_6, window_bounds = array<i64: 256, 256>}, {pipeline_mode = #tpu.pipeline_mode<synchronous>, transform_indices = @transform_7, window_bounds = array<i64: 1, 256>}, {transform_indices = @transform_8, window_bounds = array<i64: 1, 8, 256>}]} {
    %c0 = arith.constant 0 : index
    %c0_0 = arith.constant 0 : index
    %c0_1 = arith.constant 0 : index
    %0 = vector.load %arg1[%c0, %c0_0, %c0_1] : memref<1x8x256xbf16, #tpu.memory_space<vmem>>, vector<1x8x256xbf16>
    %1 = arith.extf %0 : vector<1x8x256xbf16> to vector<1x8x256xf32>
    %2 = vector.shape_cast %1 : vector<1x8x256xf32> to vector<8x256xf32>
    %c0_2 = arith.constant 0 : index
    %c0_3 = arith.constant 0 : index
    %3 = vector.load %arg3[%c0_2, %c0_3] : memref<1x256xf32, #tpu.memory_space<vmem>>, vector<1x256xf32>
    %c0_4 = arith.constant 0 : index
    %c0_5 = arith.constant 0 : index
    %4 = vector.load %arg4[%c0_4, %c0_5] : memref<1x256xf32, #tpu.memory_space<vmem>>, vector<1x256xf32>
    %cst = arith.constant dense<0.000000e+00> : vector<8xf32>
    %5 = vector.multi_reduction <add>, %2, %cst [1] : vector<8x256xf32> to vector<8xf32>
    %6 = vector.shape_cast %5 : vector<8xf32> to vector<8x1xf32>
    %cst_6 = arith.constant 2.560000e+02 : f32
    %7 = vector.broadcast %cst_6 : f32 to vector<8x1xf32>
    %8 = arith.divf %6, %7 : vector<8x1xf32>
    %9 = vector.broadcast %8 : vector<8x1xf32> to vector<8x256xf32>
    %10 = arith.subf %2, %9 : vector<8x256xf32>
    %11 = arith.mulf %10, %10 : vector<8x256xf32>
    %cst_7 = arith.constant dense<0.000000e+00> : vector<8xf32>
    %12 = vector.multi_reduction <add>, %11, %cst_7 [1] : vector<8x256xf32> to vector<8xf32>
    %13 = vector.shape_cast %12 : vector<8xf32> to vector<8x1xf32>
    %cst_8 = arith.constant 2.560000e+02 : f32
    %14 = vector.broadcast %cst_8 : f32 to vector<8x1xf32>
    %15 = arith.divf %13, %14 : vector<8x1xf32>
    %cst_9 = arith.constant 9.99999974E-6 : f32
    %16 = vector.broadcast %cst_9 : f32 to vector<8x1xf32>
    %17 = arith.addf %15, %16 : vector<8x1xf32>
    %18 = math.rsqrt %17 : vector<8x1xf32>
    %19 = vector.broadcast %18 : vector<8x1xf32> to vector<8x256xf32>
    %20 = arith.mulf %10, %19 : vector<8x256xf32>
    %21 = vector.broadcast %3 : vector<1x256xf32> to vector<8x256xf32>
    %22 = arith.mulf %20, %21 : vector<8x256xf32>
    %23 = vector.broadcast %4 : vector<1x256xf32> to vector<8x256xf32>
    %24 = arith.addf %22, %23 : vector<8x256xf32>
    %25 = arith.truncf %24 : vector<8x256xf32> to vector<8x256xbf16>
    %c0_10 = arith.constant 0 : index
    %c0_11 = arith.constant 0 : index
    %26 = vector.load %arg5[%c0_10, %c0_11] : memref<256x768xbf16, #tpu.memory_space<vmem>>, vector<256x768xbf16>
    %cst_12 = arith.constant dense<0.000000e+00> : vector<8x768xf32>
    %27 = tpu.matmul %25, %26, %cst_12 {dimension_numbers = #tpu.dot_dimension_numbers<[1], [0], [0], [1], [0, 0, 1, 1], [], []>} : vector<8x256xbf16>, vector<256x768xbf16>, vector<8x768xf32> -> vector<8x768xf32>
    %c0_13 = arith.constant 0 : index
    %c0_14 = arith.constant 0 : index
    %28 = vector.load %arg6[%c0_13, %c0_14] : memref<1x768xf32, #tpu.memory_space<vmem>>, vector<1x768xf32>
    %29 = vector.broadcast %28 : vector<1x768xf32> to vector<8x768xf32>
    %30 = arith.addf %27, %29 : vector<8x768xf32>
    %31 = vector.shape_cast %30 : vector<8x768xf32> to vector<1x8x768xf32>
    %c0_15 = arith.constant 0 : index
    %c0_16 = arith.constant 0 : index
    %c0_17 = arith.constant 0 : index
    %32 = vector.load %arg2[%c0_15, %c0_16, %c0_17] : memref<1x1x8xf32, #tpu.memory_space<vmem>>, vector<1x1x8xf32>
    %cst_18 = arith.constant 1.000000e+00 : f32
    %33 = vector.broadcast %cst_18 : f32 to vector<1x1x8xf32>
    %34 = arith.subf %32, %33 : vector<1x1x8xf32>
    %cst_19 = arith.constant 1.000000e+09 : f32
    %35 = vector.broadcast %cst_19 : f32 to vector<1x1x8xf32>
    %36 = arith.mulf %34, %35 : vector<1x1x8xf32>
    %cst_20 = arith.constant -1.000000e+00 : f32
    %37 = vector.broadcast %cst_20 : f32 to vector<1x1x8xf32>
    %38 = arith.mulf %36, %37 : vector<1x1x8xf32>
    %39 = tpu.iota {dimensions = array<i32: 0>} : vector<8x8xi32>
    %40 = tpu.iota {dimensions = array<i32: 1>} : vector<8x8xi32>
    %41 = arith.cmpi sgt, %40, %39 : vector<8x8xi32>
    %42 = arith.extui %41 : vector<8x8xi1> to vector<8x8xi32>
    %43 = arith.sitofp %42 : vector<8x8xi32> to vector<8x8xf32>
    %44 = vector.shape_cast %43 : vector<8x8xf32> to vector<1x8x8xf32>
    %cst_21 = arith.constant -1.000000e+09 : f32
    %45 = vector.broadcast %cst_21 : f32 to vector<1x8x8xf32>
    %46 = arith.mulf %44, %45 : vector<1x8x8xf32>
    %47 = vector.broadcast %38 : vector<1x1x8xf32> to vector<1x8x8xf32>
    %48 = arith.addf %47, %46 : vector<1x8x8xf32>
    %cst_22 = arith.constant 0.000000e+00 : f32
    %49 = vector.broadcast %cst_22 : f32 to vector<8x256xf32>
    %50 = vector.extract_strided_slice %31 {offsets = [0, 0, 0], sizes = [1, 8, 128], strides = [1, 1, 1]} : vector<1x8x768xf32> to vector<1x8x128xf32>
    %51 = arith.truncf %50 : vector<1x8x128xf32> to vector<1x8x128xbf16>
    %52 = vector.extract_strided_slice %31 {offsets = [0, 0, 256], sizes = [1, 8, 128], strides = [1, 1, 1]} : vector<1x8x768xf32> to vector<1x8x128xf32>
    %53 = arith.truncf %52 : vector<1x8x128xf32> to vector<1x8x128xbf16>
    %54 = vector.extract_strided_slice %31 {offsets = [0, 0, 512], sizes = [1, 8, 128], strides = [1, 1, 1]} : vector<1x8x768xf32> to vector<1x8x128xf32>
    %55 = arith.truncf %54 : vector<1x8x128xf32> to vector<1x8x128xbf16>
    "tpu.trace_start"() <{level = 10 : i32, message = "btd,bsd->bts"}> : () -> ()
    %cst_23 = arith.constant dense<0.000000e+00> : vector<1x8x8xf32>
    %56 = tpu.matmul %51, %53, %cst_23 {dimension_numbers = #tpu.dot_dimension_numbers<[2], [2], [1], [1], [0, 0, 0, 1, 1, 1], [0], [0]>} : vector<1x8x128xbf16>, vector<1x8x128xbf16>, vector<1x8x8xf32> -> vector<1x8x8xf32>
    "tpu.trace_stop"() : () -> ()
    %57 = arith.addf %56, %48 : vector<1x8x8xf32>
    %cst_24 = arith.constant dense<0xFF800000> : vector<1x8xf32>
    %58 = vector.multi_reduction <maximumf>, %57, %cst_24 [2] : vector<1x8x8xf32> to vector<1x8xf32>
    %59 = vector.shape_cast %58 : vector<1x8xf32> to vector<1x8x1xf32>
    %60 = vector.broadcast %59 : vector<1x8x1xf32> to vector<1x8x8xf32>
    %61 = arith.subf %57, %60 : vector<1x8x8xf32>
    %62 = math.exp %61 : vector<1x8x8xf32>
    %cst_25 = arith.constant dense<0.000000e+00> : vector<1x8xf32>
    %63 = vector.multi_reduction <add>, %62, %cst_25 [2] : vector<1x8x8xf32> to vector<1x8xf32>
    %64 = vector.shape_cast %63 : vector<1x8xf32> to vector<1x8x1xf32>
    %65 = tpu.reciprocal %64 {approx = true} : vector<1x8x1xf32> -> vector<1x8x1xf32>
    %66 = vector.broadcast %65 : vector<1x8x1xf32> to vector<1x8x8xf32>
    %67 = arith.mulf %62, %66 : vector<1x8x8xf32>
    %68 = arith.truncf %67 : vector<1x8x8xf32> to vector<1x8x8xbf16>
    "tpu.trace_start"() <{level = 10 : i32, message = "bts,bsd->btd"}> : () -> ()
    %cst_26 = arith.constant dense<0.000000e+00> : vector<1x8x128xf32>
    %69 = tpu.matmul %68, %55, %cst_26 {dimension_numbers = #tpu.dot_dimension_numbers<[2], [1], [1], [2], [0, 0, 0, 1, 1, 2], [0], [0]>} : vector<1x8x8xbf16>, vector<1x8x128xbf16>, vector<1x8x128xf32> -> vector<1x8x128xf32>
    "tpu.trace_stop"() : () -> ()
    %70 = vector.shape_cast %69 : vector<1x8x128xf32> to vector<8x128xf32>
    %71 = arith.truncf %70 : vector<8x128xf32> to vector<8x128xbf16>
    %c0_27 = arith.constant 0 : index
    %c0_28 = arith.constant 0 : index
    %72 = vector.load %arg7[%c0_27, %c0_28] : memref<256x256xbf16, #tpu.memory_space<vmem>>, vector<128x256xbf16>
    %cst_29 = arith.constant dense<0.000000e+00> : vector<8x256xf32>
    %73 = tpu.matmul %71, %72, %cst_29 {dimension_numbers = #tpu.dot_dimension_numbers<[1], [0], [0], [1], [0, 0, 1, 1], [], []>} : vector<8x128xbf16>, vector<128x256xbf16>, vector<8x256xf32> -> vector<8x256xf32>
    %74 = arith.addf %49, %73 : vector<8x256xf32>
    %75 = vector.extract_strided_slice %31 {offsets = [0, 0, 128], sizes = [1, 8, 128], strides = [1, 1, 1]} : vector<1x8x768xf32> to vector<1x8x128xf32>
    %76 = arith.truncf %75 : vector<1x8x128xf32> to vector<1x8x128xbf16>
    %77 = vector.extract_strided_slice %31 {offsets = [0, 0, 384], sizes = [1, 8, 128], strides = [1, 1, 1]} : vector<1x8x768xf32> to vector<1x8x128xf32>
    %78 = arith.truncf %77 : vector<1x8x128xf32> to vector<1x8x128xbf16>
    %79 = vector.extract_strided_slice %31 {offsets = [0, 0, 640], sizes = [1, 8, 128], strides = [1, 1, 1]} : vector<1x8x768xf32> to vector<1x8x128xf32>
    %80 = arith.truncf %79 : vector<1x8x128xf32> to vector<1x8x128xbf16>
    "tpu.trace_start"() <{level = 10 : i32, message = "btd,bsd->bts"}> : () -> ()
    %cst_30 = arith.constant dense<0.000000e+00> : vector<1x8x8xf32>
    %81 = tpu.matmul %76, %78, %cst_30 {dimension_numbers = #tpu.dot_dimension_numbers<[2], [2], [1], [1], [0, 0, 0, 1, 1, 1], [0], [0]>} : vector<1x8x128xbf16>, vector<1x8x128xbf16>, vector<1x8x8xf32> -> vector<1x8x8xf32>
    "tpu.trace_stop"() : () -> ()
    %82 = arith.addf %81, %48 : vector<1x8x8xf32>
    %cst_31 = arith.constant dense<0xFF800000> : vector<1x8xf32>
    %83 = vector.multi_reduction <maximumf>, %82, %cst_31 [2] : vector<1x8x8xf32> to vector<1x8xf32>
    %84 = vector.shape_cast %83 : vector<1x8xf32> to vector<1x8x1xf32>
    %85 = vector.broadcast %84 : vector<1x8x1xf32> to vector<1x8x8xf32>
    %86 = arith.subf %82, %85 : vector<1x8x8xf32>
    %87 = math.exp %86 : vector<1x8x8xf32>
    %cst_32 = arith.constant dense<0.000000e+00> : vector<1x8xf32>
    %88 = vector.multi_reduction <add>, %87, %cst_32 [2] : vector<1x8x8xf32> to vector<1x8xf32>
    %89 = vector.shape_cast %88 : vector<1x8xf32> to vector<1x8x1xf32>
    %90 = tpu.reciprocal %89 {approx = true} : vector<1x8x1xf32> -> vector<1x8x1xf32>
    %91 = vector.broadcast %90 : vector<1x8x1xf32> to vector<1x8x8xf32>
    %92 = arith.mulf %87, %91 : vector<1x8x8xf32>
    %93 = arith.truncf %92 : vector<1x8x8xf32> to vector<1x8x8xbf16>
    "tpu.trace_start"() <{level = 10 : i32, message = "bts,bsd->btd"}> : () -> ()
    %cst_33 = arith.constant dense<0.000000e+00> : vector<1x8x128xf32>
    %94 = tpu.matmul %93, %80, %cst_33 {dimension_numbers = #tpu.dot_dimension_numbers<[2], [1], [1], [2], [0, 0, 0, 1, 1, 2], [0], [0]>} : vector<1x8x8xbf16>, vector<1x8x128xbf16>, vector<1x8x128xf32> -> vector<1x8x128xf32>
    "tpu.trace_stop"() : () -> ()
    %95 = vector.shape_cast %94 : vector<1x8x128xf32> to vector<8x128xf32>
    %96 = arith.truncf %95 : vector<8x128xf32> to vector<8x128xbf16>
    %c128 = arith.constant 128 : index
    %c0_34 = arith.constant 0 : index
    %97 = vector.load %arg7[%c128, %c0_34] : memref<256x256xbf16, #tpu.memory_space<vmem>>, vector<128x256xbf16>
    %cst_35 = arith.constant dense<0.000000e+00> : vector<8x256xf32>
    %98 = tpu.matmul %96, %97, %cst_35 {dimension_numbers = #tpu.dot_dimension_numbers<[1], [0], [0], [1], [0, 0, 1, 1], [], []>} : vector<8x128xbf16>, vector<128x256xbf16>, vector<8x256xf32> -> vector<8x256xf32>
    %99 = arith.addf %74, %98 : vector<8x256xf32>
    %c0_36 = arith.constant 0 : index
    %c0_37 = arith.constant 0 : index
    %100 = vector.load %arg8[%c0_36, %c0_37] : memref<1x256xf32, #tpu.memory_space<vmem>>, vector<1x256xf32>
    %101 = vector.broadcast %100 : vector<1x256xf32> to vector<8x256xf32>
    %102 = arith.addf %99, %101 : vector<8x256xf32>
    %103 = vector.shape_cast %102 : vector<8x256xf32> to vector<1x8x256xf32>
    %104 = arith.addf %1, %103 : vector<1x8x256xf32>
    %105 = arith.truncf %104 : vector<1x8x256xf32> to vector<1x8x256xbf16>
    %c0_38 = arith.constant 0 : index
    %c0_39 = arith.constant 0 : index
    %c0_40 = arith.constant 0 : index
    %106 = vector.load %arg9[%c0_38, %c0_39, %c0_40] : memref<1x8x256xbf16, #tpu.memory_space<vmem>>, vector<1x8x256xbf16>
    tpu.vector_store %arg9[%c0_38, %c0_39, %c0_40], %105 {strides = array<i32>} : memref<1x8x256xbf16, #tpu.memory_space<vmem>>, vector<1x8x256xbf16>,
    return
  }
  func.func @transform_0(%arg0: i32) -> (i32, i32, i32) {
    %c0_i32 = arith.constant 0 : i32
    %c0_i32_0 = arith.constant 0 : i32
    %c0_i32_1 = arith.constant 0 : i32
    return %arg0, %c0_i32, %c0_i32_0 : i32, i32, i32
  }
  func.func @transform_1(%arg0: i32) -> (i32, i32, i32) {
    %c0_i32 = arith.constant 0 : i32
    %c0_i32_0 = arith.constant 0 : i32
    %c0_i32_1 = arith.constant 0 : i32
    return %arg0, %c0_i32, %c0_i32_0 : i32, i32, i32
  }
  func.func @transform_2(%arg0: i32) -> (i32, i32) {
    %c0_i32 = arith.constant 0 : i32
    %c0_i32_0 = arith.constant 0 : i32
    %c0_i32_1 = arith.constant 0 : i32
    return %c0_i32, %c0_i32_0 : i32, i32
  }
  func.func @transform_3(%arg0: i32) -> (i32, i32) {
    %c0_i32 = arith.constant 0 : i32
    %c0_i32_0 = arith.constant 0 : i32
    %c0_i32_1 = arith.constant 0 : i32
    return %c0_i32, %c0_i32_0 : i32, i32
  }
  func.func @transform_4(%arg0: i32) -> (i32, i32) {
    %c0_i32 = arith.constant 0 : i32
    %c0_i32_0 = arith.constant 0 : i32
    %c0_i32_1 = arith.constant 0 : i32
    return %c0_i32, %c0_i32_0 : i32, i32
  }
  func.func @transform_5(%arg0: i32) -> (i32, i32) {
    %c0_i32 = arith.constant 0 : i32
    %c0_i32_0 = arith.constant 0 : i32
    %c0_i32_1 = arith.constant 0 : i32
    return %c0_i32, %c0_i32_0 : i32, i32
  }
  func.func @transform_6(%arg0: i32) -> (i32, i32) {
    %c0_i32 = arith.constant 0 : i32
    %c0_i32_0 = arith.constant 0 : i32
    %c0_i32_1 = arith.constant 0 : i32
    return %c0_i32, %c0_i32_0 : i32, i32
  }
  func.func @transform_7(%arg0: i32) -> (i32, i32) {
    %c0_i32 = arith.constant 0 : i32
    %c0_i32_0 = arith.constant 0 : i32
    %c0_i32_1 = arith.constant 0 : i32
    return %c0_i32, %c0_i32_0 : i32, i32
  }
  func.func @transform_8(%arg0: i32) -> (i32, i32, i32) {
    %c0_i32 = arith.constant 0 : i32
    %c0_i32_0 = arith.constant 0 : i32
    %c0_i32_1 = arith.constant 0 : i32
    return %arg0, %c0_i32, %c0_i32_0 : i32, i32, i32
  }
}

module attributes {stable_mosaic.version = 11 : i64} {
  func.func @_ln_ffn_kernel(%arg0: i32, %arg1: memref<8x256xbf16, #tpu.memory_space<vmem>>, %arg2: memref<1x256xf32, #tpu.memory_space<vmem>>, %arg3: memref<1x256xf32, #tpu.memory_space<vmem>>, %arg4: memref<256x512xbf16, #tpu.memory_space<vmem>>, %arg5: memref<1x512xf32, #tpu.memory_space<vmem>>, %arg6: memref<512x256xbf16, #tpu.memory_space<vmem>>, %arg7: memref<1x256xf32, #tpu.memory_space<vmem>>, %arg8: memref<8x256xbf16, #tpu.memory_space<vmem>>) attributes {dimension_semantics = [#tpu.dimension_semantics<parallel>], iteration_bounds = array<i64: 2>, scalar_prefetch = 0 : i64, scratch_operands = 0 : i64, tpu.core_type = #tpu.core_type<tc>, window_params = [{transform_indices = @transform_0, window_bounds = array<i64: 8, 256>}, {pipeline_mode = #tpu.pipeline_mode<synchronous>, transform_indices = @transform_1, window_bounds = array<i64: 1, 256>}, {pipeline_mode = #tpu.pipeline_mode<synchronous>, transform_indices = @transform_2, window_bounds = array<i64: 1, 256>}, {pipeline_mode = #tpu.pipeline_mode<synchronous>, transform_indices = @transform_3, window_bounds = array<i64: 256, 512>}, {pipeline_mode = #tpu.pipeline_mode<synchronous>, transform_indices = @transform_4, window_bounds = array<i64: 1, 512>}, {pipeline_mode = #tpu.pipeline_mode<synchronous>, transform_indices = @transform_5, window_bounds = array<i64: 512, 256>}, {pipeline_mode = #tpu.pipeline_mode<synchronous>, transform_indices = @transform_6, window_bounds = array<i64: 1, 256>}, {transform_indices = @transform_7, window_bounds = array<i64: 8, 256>}]} {
    %c0 = arith.constant 0 : index
    %c0_0 = arith.constant 0 : index
    %0 = vector.load %arg1[%c0, %c0_0] : memref<8x256xbf16, #tpu.memory_space<vmem>>, vector<8x256xbf16>
    %1 = arith.extf %0 : vector<8x256xbf16> to vector<8x256xf32>
    %c0_1 = arith.constant 0 : index
    %c0_2 = arith.constant 0 : index
    %2 = vector.load %arg2[%c0_1, %c0_2] : memref<1x256xf32, #tpu.memory_space<vmem>>, vector<1x256xf32>
    %c0_3 = arith.constant 0 : index
    %c0_4 = arith.constant 0 : index
    %3 = vector.load %arg3[%c0_3, %c0_4] : memref<1x256xf32, #tpu.memory_space<vmem>>, vector<1x256xf32>
    %cst = arith.constant dense<0.000000e+00> : vector<8xf32>
    %4 = vector.multi_reduction <add>, %1, %cst [1] : vector<8x256xf32> to vector<8xf32>
    %5 = vector.shape_cast %4 : vector<8xf32> to vector<8x1xf32>
    %cst_5 = arith.constant 2.560000e+02 : f32
    %6 = vector.broadcast %cst_5 : f32 to vector<8x1xf32>
    %7 = arith.divf %5, %6 : vector<8x1xf32>
    %8 = vector.broadcast %7 : vector<8x1xf32> to vector<8x256xf32>
    %9 = arith.subf %1, %8 : vector<8x256xf32>
    %10 = arith.mulf %9, %9 : vector<8x256xf32>
    %cst_6 = arith.constant dense<0.000000e+00> : vector<8xf32>
    %11 = vector.multi_reduction <add>, %10, %cst_6 [1] : vector<8x256xf32> to vector<8xf32>
    %12 = vector.shape_cast %11 : vector<8xf32> to vector<8x1xf32>
    %cst_7 = arith.constant 2.560000e+02 : f32
    %13 = vector.broadcast %cst_7 : f32 to vector<8x1xf32>
    %14 = arith.divf %12, %13 : vector<8x1xf32>
    %cst_8 = arith.constant 9.99999974E-6 : f32
    %15 = vector.broadcast %cst_8 : f32 to vector<8x1xf32>
    %16 = arith.addf %14, %15 : vector<8x1xf32>
    %17 = math.rsqrt %16 : vector<8x1xf32>
    %18 = vector.broadcast %17 : vector<8x1xf32> to vector<8x256xf32>
    %19 = arith.mulf %9, %18 : vector<8x256xf32>
    %20 = vector.broadcast %2 : vector<1x256xf32> to vector<8x256xf32>
    %21 = arith.mulf %19, %20 : vector<8x256xf32>
    %22 = vector.broadcast %3 : vector<1x256xf32> to vector<8x256xf32>
    %23 = arith.addf %21, %22 : vector<8x256xf32>
    %24 = arith.truncf %23 : vector<8x256xf32> to vector<8x256xbf16>
    %c0_9 = arith.constant 0 : index
    %c0_10 = arith.constant 0 : index
    %25 = vector.load %arg4[%c0_9, %c0_10] : memref<256x512xbf16, #tpu.memory_space<vmem>>, vector<256x512xbf16>
    %cst_11 = arith.constant dense<0.000000e+00> : vector<8x512xf32>
    %26 = tpu.matmul %24, %25, %cst_11 {dimension_numbers = #tpu.dot_dimension_numbers<[1], [0], [0], [1], [0, 0, 1, 1], [], []>} : vector<8x256xbf16>, vector<256x512xbf16>, vector<8x512xf32> -> vector<8x512xf32>
    %c0_12 = arith.constant 0 : index
    %c0_13 = arith.constant 0 : index
    %27 = vector.load %arg5[%c0_12, %c0_13] : memref<1x512xf32, #tpu.memory_space<vmem>>, vector<1x512xf32>
    %28 = vector.broadcast %27 : vector<1x512xf32> to vector<8x512xf32>
    %29 = arith.addf %26, %28 : vector<8x512xf32>
    %cst_14 = arith.constant 0.000000e+00 : f32
    %30 = vector.broadcast %cst_14 : f32 to vector<8x512xf32>
    %31 = arith.maximumf %29, %30 : vector<8x512xf32>
    %32 = arith.truncf %31 : vector<8x512xf32> to vector<8x512xbf16>
    %c0_15 = arith.constant 0 : index
    %c0_16 = arith.constant 0 : index
    %33 = vector.load %arg6[%c0_15, %c0_16] : memref<512x256xbf16, #tpu.memory_space<vmem>>, vector<512x256xbf16>
    %cst_17 = arith.constant dense<0.000000e+00> : vector<8x256xf32>
    %34 = tpu.matmul %32, %33, %cst_17 {dimension_numbers = #tpu.dot_dimension_numbers<[1], [0], [0], [1], [0, 0, 1, 1], [], []>} : vector<8x512xbf16>, vector<512x256xbf16>, vector<8x256xf32> -> vector<8x256xf32>
    %c0_18 = arith.constant 0 : index
    %c0_19 = arith.constant 0 : index
    %35 = vector.load %arg7[%c0_18, %c0_19] : memref<1x256xf32, #tpu.memory_space<vmem>>, vector<1x256xf32>
    %36 = vector.broadcast %35 : vector<1x256xf32> to vector<8x256xf32>
    %37 = arith.addf %34, %36 : vector<8x256xf32>
    %38 = arith.addf %1, %37 : vector<8x256xf32>
    %39 = arith.truncf %38 : vector<8x256xf32> to vector<8x256xbf16>
    %c0_20 = arith.constant 0 : index
    %c0_21 = arith.constant 0 : index
    %40 = vector.load %arg8[%c0_20, %c0_21] : memref<8x256xbf16, #tpu.memory_space<vmem>>, vector<8x256xbf16>
    tpu.vector_store %arg8[%c0_20, %c0_21], %39 {strides = array<i32>} : memref<8x256xbf16, #tpu.memory_space<vmem>>, vector<8x256xbf16>,
    return
  }
  func.func @transform_0(%arg0: i32) -> (i32, i32) {
    %c0_i32 = arith.constant 0 : i32
    %c0_i32_0 = arith.constant 0 : i32
    return %arg0, %c0_i32 : i32, i32
  }
  func.func @transform_1(%arg0: i32) -> (i32, i32) {
    %c0_i32 = arith.constant 0 : i32
    %c0_i32_0 = arith.constant 0 : i32
    %c0_i32_1 = arith.constant 0 : i32
    return %c0_i32, %c0_i32_0 : i32, i32
  }
  func.func @transform_2(%arg0: i32) -> (i32, i32) {
    %c0_i32 = arith.constant 0 : i32
    %c0_i32_0 = arith.constant 0 : i32
    %c0_i32_1 = arith.constant 0 : i32
    return %c0_i32, %c0_i32_0 : i32, i32
  }
  func.func @transform_3(%arg0: i32) -> (i32, i32) {
    %c0_i32 = arith.constant 0 : i32
    %c0_i32_0 = arith.constant 0 : i32
    %c0_i32_1 = arith.constant 0 : i32
    return %c0_i32, %c0_i32_0 : i32, i32
  }
  func.func @transform_4(%arg0: i32) -> (i32, i32) {
    %c0_i32 = arith.constant 0 : i32
    %c0_i32_0 = arith.constant 0 : i32
    %c0_i32_1 = arith.constant 0 : i32
    return %c0_i32, %c0_i32_0 : i32, i32
  }
  func.func @transform_5(%arg0: i32) -> (i32, i32) {
    %c0_i32 = arith.constant 0 : i32
    %c0_i32_0 = arith.constant 0 : i32
    %c0_i32_1 = arith.constant 0 : i32
    return %c0_i32, %c0_i32_0 : i32, i32
  }
  func.func @transform_6(%arg0: i32) -> (i32, i32) {
    %c0_i32 = arith.constant 0 : i32
    %c0_i32_0 = arith.constant 0 : i32
    %c0_i32_1 = arith.constant 0 : i32
    return %c0_i32, %c0_i32_0 : i32, i32
  }
  func.func @transform_7(%arg0: i32) -> (i32, i32) {
    %c0_i32 = arith.constant 0 : i32
    %c0_i32_0 = arith.constant 0 : i32
    return %arg0, %c0_i32 : i32, i32
  }
}

module attributes {stable_mosaic.version = 11 : i64} {
  func.func @_self_attn_layer_kernel(%arg0: i32, %arg1: memref<1x8x256xbf16, #tpu.memory_space<vmem>>, %arg2: memref<1x1x8xf32, #tpu.memory_space<vmem>>, %arg3: memref<1x256xf32, #tpu.memory_space<vmem>>, %arg4: memref<1x256xf32, #tpu.memory_space<vmem>>, %arg5: memref<256x768xbf16, #tpu.memory_space<vmem>>, %arg6: memref<1x768xf32, #tpu.memory_space<vmem>>, %arg7: memref<256x256xbf16, #tpu.memory_space<vmem>>, %arg8: memref<1x256xf32, #tpu.memory_space<vmem>>, %arg9: memref<1x8x256xbf16, #tpu.memory_space<vmem>>) attributes {dimension_semantics = [#tpu.dimension_semantics<parallel>], iteration_bounds = array<i64: 2>, scalar_prefetch = 0 : i64, scratch_operands = 0 : i64, tpu.core_type = #tpu.core_type<tc>, window_params = [{transform_indices = @transform_0, window_bounds = array<i64: 1, 8, 256>}, {transform_indices = @transform_1, window_bounds = array<i64: 1, 1, 8>}, {pipeline_mode = #tpu.pipeline_mode<synchronous>, transform_indices = @transform_2, window_bounds = array<i64: 1, 256>}, {pipeline_mode = #tpu.pipeline_mode<synchronous>, transform_indices = @transform_3, window_bounds = array<i64: 1, 256>}, {pipeline_mode = #tpu.pipeline_mode<synchronous>, transform_indices = @transform_4, window_bounds = array<i64: 256, 768>}, {pipeline_mode = #tpu.pipeline_mode<synchronous>, transform_indices = @transform_5, window_bounds = array<i64: 1, 768>}, {pipeline_mode = #tpu.pipeline_mode<synchronous>, transform_indices = @transform_6, window_bounds = array<i64: 256, 256>}, {pipeline_mode = #tpu.pipeline_mode<synchronous>, transform_indices = @transform_7, window_bounds = array<i64: 1, 256>}, {transform_indices = @transform_8, window_bounds = array<i64: 1, 8, 256>}]} {
    %c0 = arith.constant 0 : index
    %c0_0 = arith.constant 0 : index
    %c0_1 = arith.constant 0 : index
    %0 = vector.load %arg1[%c0, %c0_0, %c0_1] : memref<1x8x256xbf16, #tpu.memory_space<vmem>>, vector<1x8x256xbf16>
    %1 = arith.extf %0 : vector<1x8x256xbf16> to vector<1x8x256xf32>
    %2 = vector.shape_cast %1 : vector<1x8x256xf32> to vector<8x256xf32>
    %c0_2 = arith.constant 0 : index
    %c0_3 = arith.constant 0 : index
    %3 = vector.load %arg3[%c0_2, %c0_3] : memref<1x256xf32, #tpu.memory_space<vmem>>, vector<1x256xf32>
    %c0_4 = arith.constant 0 : index
    %c0_5 = arith.constant 0 : index
    %4 = vector.load %arg4[%c0_4, %c0_5] : memref<1x256xf32, #tpu.memory_space<vmem>>, vector<1x256xf32>
    %cst = arith.constant dense<0.000000e+00> : vector<8xf32>
    %5 = vector.multi_reduction <add>, %2, %cst [1] : vector<8x256xf32> to vector<8xf32>
    %6 = vector.shape_cast %5 : vector<8xf32> to vector<8x1xf32>
    %cst_6 = arith.constant 2.560000e+02 : f32
    %7 = vector.broadcast %cst_6 : f32 to vector<8x1xf32>
    %8 = arith.divf %6, %7 : vector<8x1xf32>
    %9 = vector.broadcast %8 : vector<8x1xf32> to vector<8x256xf32>
    %10 = arith.subf %2, %9 : vector<8x256xf32>
    %11 = arith.mulf %10, %10 : vector<8x256xf32>
    %cst_7 = arith.constant dense<0.000000e+00> : vector<8xf32>
    %12 = vector.multi_reduction <add>, %11, %cst_7 [1] : vector<8x256xf32> to vector<8xf32>
    %13 = vector.shape_cast %12 : vector<8xf32> to vector<8x1xf32>
    %cst_8 = arith.constant 2.560000e+02 : f32
    %14 = vector.broadcast %cst_8 : f32 to vector<8x1xf32>
    %15 = arith.divf %13, %14 : vector<8x1xf32>
    %cst_9 = arith.constant 9.99999974E-6 : f32
    %16 = vector.broadcast %cst_9 : f32 to vector<8x1xf32>
    %17 = arith.addf %15, %16 : vector<8x1xf32>
    %18 = math.rsqrt %17 : vector<8x1xf32>
    %19 = vector.broadcast %18 : vector<8x1xf32> to vector<8x256xf32>
    %20 = arith.mulf %10, %19 : vector<8x256xf32>
    %21 = vector.broadcast %3 : vector<1x256xf32> to vector<8x256xf32>
    %22 = arith.mulf %20, %21 : vector<8x256xf32>
    %23 = vector.broadcast %4 : vector<1x256xf32> to vector<8x256xf32>
    %24 = arith.addf %22, %23 : vector<8x256xf32>
    %25 = arith.truncf %24 : vector<8x256xf32> to vector<8x256xbf16>
    %c0_10 = arith.constant 0 : index
    %c0_11 = arith.constant 0 : index
    %26 = vector.load %arg5[%c0_10, %c0_11] : memref<256x768xbf16, #tpu.memory_space<vmem>>, vector<256x768xbf16>
    %cst_12 = arith.constant dense<0.000000e+00> : vector<8x768xf32>
    %27 = tpu.matmul %25, %26, %cst_12 {dimension_numbers = #tpu.dot_dimension_numbers<[1], [0], [0], [1], [0, 0, 1, 1], [], []>} : vector<8x256xbf16>, vector<256x768xbf16>, vector<8x768xf32> -> vector<8x768xf32>
    %c0_13 = arith.constant 0 : index
    %c0_14 = arith.constant 0 : index
    %28 = vector.load %arg6[%c0_13, %c0_14] : memref<1x768xf32, #tpu.memory_space<vmem>>, vector<1x768xf32>
    %29 = vector.broadcast %28 : vector<1x768xf32> to vector<8x768xf32>
    %30 = arith.addf %27, %29 : vector<8x768xf32>
    %31 = vector.shape_cast %30 : vector<8x768xf32> to vector<1x8x768xf32>
    %c0_15 = arith.constant 0 : index
    %c0_16 = arith.constant 0 : index
    %c0_17 = arith.constant 0 : index
    %32 = vector.load %arg2[%c0_15, %c0_16, %c0_17] : memref<1x1x8xf32, #tpu.memory_space<vmem>>, vector<1x1x8xf32>
    %cst_18 = arith.constant 1.000000e+00 : f32
    %33 = vector.broadcast %cst_18 : f32 to vector<1x1x8xf32>
    %34 = arith.subf %32, %33 : vector<1x1x8xf32>
    %cst_19 = arith.constant 1.000000e+09 : f32
    %35 = vector.broadcast %cst_19 : f32 to vector<1x1x8xf32>
    %36 = arith.mulf %34, %35 : vector<1x1x8xf32>
    %cst_20 = arith.constant -1.000000e+00 : f32
    %37 = vector.broadcast %cst_20 : f32 to vector<1x1x8xf32>
    %38 = arith.mulf %36, %37 : vector<1x1x8xf32>
    %cst_21 = arith.constant 0.000000e+00 : f32
    %39 = vector.broadcast %cst_21 : f32 to vector<8x256xf32>
    %40 = vector.extract_strided_slice %31 {offsets = [0, 0, 0], sizes = [1, 8, 128], strides = [1, 1, 1]} : vector<1x8x768xf32> to vector<1x8x128xf32>
    %41 = arith.truncf %40 : vector<1x8x128xf32> to vector<1x8x128xbf16>
    %42 = vector.extract_strided_slice %31 {offsets = [0, 0, 256], sizes = [1, 8, 128], strides = [1, 1, 1]} : vector<1x8x768xf32> to vector<1x8x128xf32>
    %43 = arith.truncf %42 : vector<1x8x128xf32> to vector<1x8x128xbf16>
    %44 = vector.extract_strided_slice %31 {offsets = [0, 0, 512], sizes = [1, 8, 128], strides = [1, 1, 1]} : vector<1x8x768xf32> to vector<1x8x128xf32>
    %45 = arith.truncf %44 : vector<1x8x128xf32> to vector<1x8x128xbf16>
    "tpu.trace_start"() <{level = 10 : i32, message = "btd,bsd->bts"}> : () -> ()
    %cst_22 = arith.constant dense<0.000000e+00> : vector<1x8x8xf32>
    %46 = tpu.matmul %41, %43, %cst_22 {dimension_numbers = #tpu.dot_dimension_numbers<[2], [2], [1], [1], [0, 0, 0, 1, 1, 1], [0], [0]>} : vector<1x8x128xbf16>, vector<1x8x128xbf16>, vector<1x8x8xf32> -> vector<1x8x8xf32>
    "tpu.trace_stop"() : () -> ()
    %47 = vector.broadcast %38 : vector<1x1x8xf32> to vector<1x8x8xf32>
    %48 = arith.addf %46, %47 : vector<1x8x8xf32>
    %cst_23 = arith.constant dense<0xFF800000> : vector<1x8xf32>
    %49 = vector.multi_reduction <maximumf>, %48, %cst_23 [2] : vector<1x8x8xf32> to vector<1x8xf32>
    %50 = vector.shape_cast %49 : vector<1x8xf32> to vector<1x8x1xf32>
    %51 = vector.broadcast %50 : vector<1x8x1xf32> to vector<1x8x8xf32>
    %52 = arith.subf %48, %51 : vector<1x8x8xf32>
    %53 = math.exp %52 : vector<1x8x8xf32>
    %cst_24 = arith.constant dense<0.000000e+00> : vector<1x8xf32>
    %54 = vector.multi_reduction <add>, %53, %cst_24 [2] : vector<1x8x8xf32> to vector<1x8xf32>
    %55 = vector.shape_cast %54 : vector<1x8xf32> to vector<1x8x1xf32>
    %56 = tpu.reciprocal %55 {approx = true} : vector<1x8x1xf32> -> vector<1x8x1xf32>
    %57 = vector.broadcast %56 : vector<1x8x1xf32> to vector<1x8x8xf32>
    %58 = arith.mulf %53, %57 : vector<1x8x8xf32>
    %59 = arith.truncf %58 : vector<1x8x8xf32> to vector<1x8x8xbf16>
    "tpu.trace_start"() <{level = 10 : i32, message = "bts,bsd->btd"}> : () -> ()
    %cst_25 = arith.constant dense<0.000000e+00> : vector<1x8x128xf32>
    %60 = tpu.matmul %59, %45, %cst_25 {dimension_numbers = #tpu.dot_dimension_numbers<[2], [1], [1], [2], [0, 0, 0, 1, 1, 2], [0], [0]>} : vector<1x8x8xbf16>, vector<1x8x128xbf16>, vector<1x8x128xf32> -> vector<1x8x128xf32>
    "tpu.trace_stop"() : () -> ()
    %61 = vector.shape_cast %60 : vector<1x8x128xf32> to vector<8x128xf32>
    %62 = arith.truncf %61 : vector<8x128xf32> to vector<8x128xbf16>
    %c0_26 = arith.constant 0 : index
    %c0_27 = arith.constant 0 : index
    %63 = vector.load %arg7[%c0_26, %c0_27] : memref<256x256xbf16, #tpu.memory_space<vmem>>, vector<128x256xbf16>
    %cst_28 = arith.constant dense<0.000000e+00> : vector<8x256xf32>
    %64 = tpu.matmul %62, %63, %cst_28 {dimension_numbers = #tpu.dot_dimension_numbers<[1], [0], [0], [1], [0, 0, 1, 1], [], []>} : vector<8x128xbf16>, vector<128x256xbf16>, vector<8x256xf32> -> vector<8x256xf32>
    %65 = arith.addf %39, %64 : vector<8x256xf32>
    %66 = vector.extract_strided_slice %31 {offsets = [0, 0, 128], sizes = [1, 8, 128], strides = [1, 1, 1]} : vector<1x8x768xf32> to vector<1x8x128xf32>
    %67 = arith.truncf %66 : vector<1x8x128xf32> to vector<1x8x128xbf16>
    %68 = vector.extract_strided_slice %31 {offsets = [0, 0, 384], sizes = [1, 8, 128], strides = [1, 1, 1]} : vector<1x8x768xf32> to vector<1x8x128xf32>
    %69 = arith.truncf %68 : vector<1x8x128xf32> to vector<1x8x128xbf16>
    %70 = vector.extract_strided_slice %31 {offsets = [0, 0, 640], sizes = [1, 8, 128], strides = [1, 1, 1]} : vector<1x8x768xf32> to vector<1x8x128xf32>
    %71 = arith.truncf %70 : vector<1x8x128xf32> to vector<1x8x128xbf16>
    "tpu.trace_start"() <{level = 10 : i32, message = "btd,bsd->bts"}> : () -> ()
    %cst_29 = arith.constant dense<0.000000e+00> : vector<1x8x8xf32>
    %72 = tpu.matmul %67, %69, %cst_29 {dimension_numbers = #tpu.dot_dimension_numbers<[2], [2], [1], [1], [0, 0, 0, 1, 1, 1], [0], [0]>} : vector<1x8x128xbf16>, vector<1x8x128xbf16>, vector<1x8x8xf32> -> vector<1x8x8xf32>
    "tpu.trace_stop"() : () -> ()
    %73 = vector.broadcast %38 : vector<1x1x8xf32> to vector<1x8x8xf32>
    %74 = arith.addf %72, %73 : vector<1x8x8xf32>
    %cst_30 = arith.constant dense<0xFF800000> : vector<1x8xf32>
    %75 = vector.multi_reduction <maximumf>, %74, %cst_30 [2] : vector<1x8x8xf32> to vector<1x8xf32>
    %76 = vector.shape_cast %75 : vector<1x8xf32> to vector<1x8x1xf32>
    %77 = vector.broadcast %76 : vector<1x8x1xf32> to vector<1x8x8xf32>
    %78 = arith.subf %74, %77 : vector<1x8x8xf32>
    %79 = math.exp %78 : vector<1x8x8xf32>
    %cst_31 = arith.constant dense<0.000000e+00> : vector<1x8xf32>
    %80 = vector.multi_reduction <add>, %79, %cst_31 [2] : vector<1x8x8xf32> to vector<1x8xf32>
    %81 = vector.shape_cast %80 : vector<1x8xf32> to vector<1x8x1xf32>
    %82 = tpu.reciprocal %81 {approx = true} : vector<1x8x1xf32> -> vector<1x8x1xf32>
    %83 = vector.broadcast %82 : vector<1x8x1xf32> to vector<1x8x8xf32>
    %84 = arith.mulf %79, %83 : vector<1x8x8xf32>
    %85 = arith.truncf %84 : vector<1x8x8xf32> to vector<1x8x8xbf16>
    "tpu.trace_start"() <{level = 10 : i32, message = "bts,bsd->btd"}> : () -> ()
    %cst_32 = arith.constant dense<0.000000e+00> : vector<1x8x128xf32>
    %86 = tpu.matmul %85, %71, %cst_32 {dimension_numbers = #tpu.dot_dimension_numbers<[2], [1], [1], [2], [0, 0, 0, 1, 1, 2], [0], [0]>} : vector<1x8x8xbf16>, vector<1x8x128xbf16>, vector<1x8x128xf32> -> vector<1x8x128xf32>
    "tpu.trace_stop"() : () -> ()
    %87 = vector.shape_cast %86 : vector<1x8x128xf32> to vector<8x128xf32>
    %88 = arith.truncf %87 : vector<8x128xf32> to vector<8x128xbf16>
    %c128 = arith.constant 128 : index
    %c0_33 = arith.constant 0 : index
    %89 = vector.load %arg7[%c128, %c0_33] : memref<256x256xbf16, #tpu.memory_space<vmem>>, vector<128x256xbf16>
    %cst_34 = arith.constant dense<0.000000e+00> : vector<8x256xf32>
    %90 = tpu.matmul %88, %89, %cst_34 {dimension_numbers = #tpu.dot_dimension_numbers<[1], [0], [0], [1], [0, 0, 1, 1], [], []>} : vector<8x128xbf16>, vector<128x256xbf16>, vector<8x256xf32> -> vector<8x256xf32>
    %91 = arith.addf %65, %90 : vector<8x256xf32>
    %c0_35 = arith.constant 0 : index
    %c0_36 = arith.constant 0 : index
    %92 = vector.load %arg8[%c0_35, %c0_36] : memref<1x256xf32, #tpu.memory_space<vmem>>, vector<1x256xf32>
    %93 = vector.broadcast %92 : vector<1x256xf32> to vector<8x256xf32>
    %94 = arith.addf %91, %93 : vector<8x256xf32>
    %95 = vector.shape_cast %94 : vector<8x256xf32> to vector<1x8x256xf32>
    %96 = arith.addf %1, %95 : vector<1x8x256xf32>
    %97 = arith.truncf %96 : vector<1x8x256xf32> to vector<1x8x256xbf16>
    %c0_37 = arith.constant 0 : index
    %c0_38 = arith.constant 0 : index
    %c0_39 = arith.constant 0 : index
    %98 = vector.load %arg9[%c0_37, %c0_38, %c0_39] : memref<1x8x256xbf16, #tpu.memory_space<vmem>>, vector<1x8x256xbf16>
    tpu.vector_store %arg9[%c0_37, %c0_38, %c0_39], %97 {strides = array<i32>} : memref<1x8x256xbf16, #tpu.memory_space<vmem>>, vector<1x8x256xbf16>,
    return
  }
  func.func @transform_0(%arg0: i32) -> (i32, i32, i32) {
    %c0_i32 = arith.constant 0 : i32
    %c0_i32_0 = arith.constant 0 : i32
    %c0_i32_1 = arith.constant 0 : i32
    return %arg0, %c0_i32, %c0_i32_0 : i32, i32, i32
  }
  func.func @transform_1(%arg0: i32) -> (i32, i32, i32) {
    %c0_i32 = arith.constant 0 : i32
    %c0_i32_0 = arith.constant 0 : i32
    %c0_i32_1 = arith.constant 0 : i32
    return %arg0, %c0_i32, %c0_i32_0 : i32, i32, i32
  }
  func.func @transform_2(%arg0: i32) -> (i32, i32) {
    %c0_i32 = arith.constant 0 : i32
    %c0_i32_0 = arith.constant 0 : i32
    %c0_i32_1 = arith.constant 0 : i32
    return %c0_i32, %c0_i32_0 : i32, i32
  }
  func.func @transform_3(%arg0: i32) -> (i32, i32) {
    %c0_i32 = arith.constant 0 : i32
    %c0_i32_0 = arith.constant 0 : i32
    %c0_i32_1 = arith.constant 0 : i32
    return %c0_i32, %c0_i32_0 : i32, i32
  }
  func.func @transform_4(%arg0: i32) -> (i32, i32) {
    %c0_i32 = arith.constant 0 : i32
    %c0_i32_0 = arith.constant 0 : i32
    %c0_i32_1 = arith.constant 0 : i32
    return %c0_i32, %c0_i32_0 : i32, i32
  }
  func.func @transform_5(%arg0: i32) -> (i32, i32) {
    %c0_i32 = arith.constant 0 : i32
    %c0_i32_0 = arith.constant 0 : i32
    %c0_i32_1 = arith.constant 0 : i32
    return %c0_i32, %c0_i32_0 : i32, i32
  }
  func.func @transform_6(%arg0: i32) -> (i32, i32) {
    %c0_i32 = arith.constant 0 : i32
    %c0_i32_0 = arith.constant 0 : i32
    %c0_i32_1 = arith.constant 0 : i32
    return %c0_i32, %c0_i32_0 : i32, i32
  }
  func.func @transform_7(%arg0: i32) -> (i32, i32) {
    %c0_i32 = arith.constant 0 : i32
    %c0_i32_0 = arith.constant 0 : i32
    %c0_i32_1 = arith.constant 0 : i32
    return %c0_i32, %c0_i32_0 : i32, i32
  }
  func.func @transform_8(%arg0: i32) -> (i32, i32, i32) {
    %c0_i32 = arith.constant 0 : i32
    %c0_i32_0 = arith.constant 0 : i32
    %c0_i32_1 = arith.constant 0 : i32
    return %arg0, %c0_i32, %c0_i32_0 : i32, i32, i32
  }
}

module attributes {stable_mosaic.version = 11 : i64} {
  func.func @_self_attn_layer_kernel(%arg0: i32, %arg1: memref<1x8x256xbf16, #tpu.memory_space<vmem>>, %arg2: memref<1x1x8xf32, #tpu.memory_space<vmem>>, %arg3: memref<1x256xf32, #tpu.memory_space<vmem>>, %arg4: memref<1x256xf32, #tpu.memory_space<vmem>>, %arg5: memref<256x768xbf16, #tpu.memory_space<vmem>>, %arg6: memref<1x768xf32, #tpu.memory_space<vmem>>, %arg7: memref<256x256xbf16, #tpu.memory_space<vmem>>, %arg8: memref<1x256xf32, #tpu.memory_space<vmem>>, %arg9: memref<1x8x256xbf16, #tpu.memory_space<vmem>>) attributes {dimension_semantics = [#tpu.dimension_semantics<parallel>], iteration_bounds = array<i64: 2>, scalar_prefetch = 0 : i64, scratch_operands = 0 : i64, tpu.core_type = #tpu.core_type<tc>, window_params = [{transform_indices = @transform_0, window_bounds = array<i64: 1, 8, 256>}, {transform_indices = @transform_1, window_bounds = array<i64: 1, 1, 8>}, {pipeline_mode = #tpu.pipeline_mode<synchronous>, transform_indices = @transform_2, window_bounds = array<i64: 1, 256>}, {pipeline_mode = #tpu.pipeline_mode<synchronous>, transform_indices = @transform_3, window_bounds = array<i64: 1, 256>}, {pipeline_mode = #tpu.pipeline_mode<synchronous>, transform_indices = @transform_4, window_bounds = array<i64: 256, 768>}, {pipeline_mode = #tpu.pipeline_mode<synchronous>, transform_indices = @transform_5, window_bounds = array<i64: 1, 768>}, {pipeline_mode = #tpu.pipeline_mode<synchronous>, transform_indices = @transform_6, window_bounds = array<i64: 256, 256>}, {pipeline_mode = #tpu.pipeline_mode<synchronous>, transform_indices = @transform_7, window_bounds = array<i64: 1, 256>}, {transform_indices = @transform_8, window_bounds = array<i64: 1, 8, 256>}]} {
    %c0 = arith.constant 0 : index
    %c0_0 = arith.constant 0 : index
    %c0_1 = arith.constant 0 : index
    %0 = vector.load %arg1[%c0, %c0_0, %c0_1] : memref<1x8x256xbf16, #tpu.memory_space<vmem>>, vector<1x8x256xbf16>
    %1 = arith.extf %0 : vector<1x8x256xbf16> to vector<1x8x256xf32>
    %2 = vector.shape_cast %1 : vector<1x8x256xf32> to vector<8x256xf32>
    %c0_2 = arith.constant 0 : index
    %c0_3 = arith.constant 0 : index
    %3 = vector.load %arg3[%c0_2, %c0_3] : memref<1x256xf32, #tpu.memory_space<vmem>>, vector<1x256xf32>
    %c0_4 = arith.constant 0 : index
    %c0_5 = arith.constant 0 : index
    %4 = vector.load %arg4[%c0_4, %c0_5] : memref<1x256xf32, #tpu.memory_space<vmem>>, vector<1x256xf32>
    %cst = arith.constant dense<0.000000e+00> : vector<8xf32>
    %5 = vector.multi_reduction <add>, %2, %cst [1] : vector<8x256xf32> to vector<8xf32>
    %6 = vector.shape_cast %5 : vector<8xf32> to vector<8x1xf32>
    %cst_6 = arith.constant 2.560000e+02 : f32
    %7 = vector.broadcast %cst_6 : f32 to vector<8x1xf32>
    %8 = arith.divf %6, %7 : vector<8x1xf32>
    %9 = vector.broadcast %8 : vector<8x1xf32> to vector<8x256xf32>
    %10 = arith.subf %2, %9 : vector<8x256xf32>
    %11 = arith.mulf %10, %10 : vector<8x256xf32>
    %cst_7 = arith.constant dense<0.000000e+00> : vector<8xf32>
    %12 = vector.multi_reduction <add>, %11, %cst_7 [1] : vector<8x256xf32> to vector<8xf32>
    %13 = vector.shape_cast %12 : vector<8xf32> to vector<8x1xf32>
    %cst_8 = arith.constant 2.560000e+02 : f32
    %14 = vector.broadcast %cst_8 : f32 to vector<8x1xf32>
    %15 = arith.divf %13, %14 : vector<8x1xf32>
    %cst_9 = arith.constant 9.99999974E-6 : f32
    %16 = vector.broadcast %cst_9 : f32 to vector<8x1xf32>
    %17 = arith.addf %15, %16 : vector<8x1xf32>
    %18 = math.rsqrt %17 : vector<8x1xf32>
    %19 = vector.broadcast %18 : vector<8x1xf32> to vector<8x256xf32>
    %20 = arith.mulf %10, %19 : vector<8x256xf32>
    %21 = vector.broadcast %3 : vector<1x256xf32> to vector<8x256xf32>
    %22 = arith.mulf %20, %21 : vector<8x256xf32>
    %23 = vector.broadcast %4 : vector<1x256xf32> to vector<8x256xf32>
    %24 = arith.addf %22, %23 : vector<8x256xf32>
    %25 = arith.truncf %24 : vector<8x256xf32> to vector<8x256xbf16>
    %c0_10 = arith.constant 0 : index
    %c0_11 = arith.constant 0 : index
    %26 = vector.load %arg5[%c0_10, %c0_11] : memref<256x768xbf16, #tpu.memory_space<vmem>>, vector<256x768xbf16>
    %cst_12 = arith.constant dense<0.000000e+00> : vector<8x768xf32>
    %27 = tpu.matmul %25, %26, %cst_12 {dimension_numbers = #tpu.dot_dimension_numbers<[1], [0], [0], [1], [0, 0, 1, 1], [], []>} : vector<8x256xbf16>, vector<256x768xbf16>, vector<8x768xf32> -> vector<8x768xf32>
    %c0_13 = arith.constant 0 : index
    %c0_14 = arith.constant 0 : index
    %28 = vector.load %arg6[%c0_13, %c0_14] : memref<1x768xf32, #tpu.memory_space<vmem>>, vector<1x768xf32>
    %29 = vector.broadcast %28 : vector<1x768xf32> to vector<8x768xf32>
    %30 = arith.addf %27, %29 : vector<8x768xf32>
    %31 = vector.shape_cast %30 : vector<8x768xf32> to vector<1x8x768xf32>
    %c0_15 = arith.constant 0 : index
    %c0_16 = arith.constant 0 : index
    %c0_17 = arith.constant 0 : index
    %32 = vector.load %arg2[%c0_15, %c0_16, %c0_17] : memref<1x1x8xf32, #tpu.memory_space<vmem>>, vector<1x1x8xf32>
    %cst_18 = arith.constant 1.000000e+00 : f32
    %33 = vector.broadcast %cst_18 : f32 to vector<1x1x8xf32>
    %34 = arith.subf %32, %33 : vector<1x1x8xf32>
    %cst_19 = arith.constant 1.000000e+09 : f32
    %35 = vector.broadcast %cst_19 : f32 to vector<1x1x8xf32>
    %36 = arith.mulf %34, %35 : vector<1x1x8xf32>
    %cst_20 = arith.constant -1.000000e+00 : f32
    %37 = vector.broadcast %cst_20 : f32 to vector<1x1x8xf32>
    %38 = arith.mulf %36, %37 : vector<1x1x8xf32>
    %cst_21 = arith.constant 0.000000e+00 : f32
    %39 = vector.broadcast %cst_21 : f32 to vector<8x256xf32>
    %40 = vector.extract_strided_slice %31 {offsets = [0, 0, 0], sizes = [1, 8, 128], strides = [1, 1, 1]} : vector<1x8x768xf32> to vector<1x8x128xf32>
    %41 = arith.truncf %40 : vector<1x8x128xf32> to vector<1x8x128xbf16>
    %42 = vector.extract_strided_slice %31 {offsets = [0, 0, 256], sizes = [1, 8, 128], strides = [1, 1, 1]} : vector<1x8x768xf32> to vector<1x8x128xf32>
    %43 = arith.truncf %42 : vector<1x8x128xf32> to vector<1x8x128xbf16>
    %44 = vector.extract_strided_slice %31 {offsets = [0, 0, 512], sizes = [1, 8, 128], strides = [1, 1, 1]} : vector<1x8x768xf32> to vector<1x8x128xf32>
    %45 = arith.truncf %44 : vector<1x8x128xf32> to vector<1x8x128xbf16>
    "tpu.trace_start"() <{level = 10 : i32, message = "btd,bsd->bts"}> : () -> ()
    %cst_22 = arith.constant dense<0.000000e+00> : vector<1x8x8xf32>
    %46 = tpu.matmul %41, %43, %cst_22 {dimension_numbers = #tpu.dot_dimension_numbers<[2], [2], [1], [1], [0, 0, 0, 1, 1, 1], [0], [0]>} : vector<1x8x128xbf16>, vector<1x8x128xbf16>, vector<1x8x8xf32> -> vector<1x8x8xf32>
    "tpu.trace_stop"() : () -> ()
    %47 = vector.broadcast %38 : vector<1x1x8xf32> to vector<1x8x8xf32>
    %48 = arith.addf %46, %47 : vector<1x8x8xf32>
    %cst_23 = arith.constant dense<0xFF800000> : vector<1x8xf32>
    %49 = vector.multi_reduction <maximumf>, %48, %cst_23 [2] : vector<1x8x8xf32> to vector<1x8xf32>
    %50 = vector.shape_cast %49 : vector<1x8xf32> to vector<1x8x1xf32>
    %51 = vector.broadcast %50 : vector<1x8x1xf32> to vector<1x8x8xf32>
    %52 = arith.subf %48, %51 : vector<1x8x8xf32>
    %53 = math.exp %52 : vector<1x8x8xf32>
    %cst_24 = arith.constant dense<0.000000e+00> : vector<1x8xf32>
    %54 = vector.multi_reduction <add>, %53, %cst_24 [2] : vector<1x8x8xf32> to vector<1x8xf32>
    %55 = vector.shape_cast %54 : vector<1x8xf32> to vector<1x8x1xf32>
    %56 = tpu.reciprocal %55 {approx = true} : vector<1x8x1xf32> -> vector<1x8x1xf32>
    %57 = vector.broadcast %56 : vector<1x8x1xf32> to vector<1x8x8xf32>
    %58 = arith.mulf %53, %57 : vector<1x8x8xf32>
    %59 = arith.truncf %58 : vector<1x8x8xf32> to vector<1x8x8xbf16>
    "tpu.trace_start"() <{level = 10 : i32, message = "bts,bsd->btd"}> : () -> ()
    %cst_25 = arith.constant dense<0.000000e+00> : vector<1x8x128xf32>
    %60 = tpu.matmul %59, %45, %cst_25 {dimension_numbers = #tpu.dot_dimension_numbers<[2], [1], [1], [2], [0, 0, 0, 1, 1, 2], [0], [0]>} : vector<1x8x8xbf16>, vector<1x8x128xbf16>, vector<1x8x128xf32> -> vector<1x8x128xf32>
    "tpu.trace_stop"() : () -> ()
    %61 = vector.shape_cast %60 : vector<1x8x128xf32> to vector<8x128xf32>
    %62 = arith.truncf %61 : vector<8x128xf32> to vector<8x128xbf16>
    %c0_26 = arith.constant 0 : index
    %c0_27 = arith.constant 0 : index
    %63 = vector.load %arg7[%c0_26, %c0_27] : memref<256x256xbf16, #tpu.memory_space<vmem>>, vector<128x256xbf16>
    %cst_28 = arith.constant dense<0.000000e+00> : vector<8x256xf32>
    %64 = tpu.matmul %62, %63, %cst_28 {dimension_numbers = #tpu.dot_dimension_numbers<[1], [0], [0], [1], [0, 0, 1, 1], [], []>} : vector<8x128xbf16>, vector<128x256xbf16>, vector<8x256xf32> -> vector<8x256xf32>
    %65 = arith.addf %39, %64 : vector<8x256xf32>
    %66 = vector.extract_strided_slice %31 {offsets = [0, 0, 128], sizes = [1, 8, 128], strides = [1, 1, 1]} : vector<1x8x768xf32> to vector<1x8x128xf32>
    %67 = arith.truncf %66 : vector<1x8x128xf32> to vector<1x8x128xbf16>
    %68 = vector.extract_strided_slice %31 {offsets = [0, 0, 384], sizes = [1, 8, 128], strides = [1, 1, 1]} : vector<1x8x768xf32> to vector<1x8x128xf32>
    %69 = arith.truncf %68 : vector<1x8x128xf32> to vector<1x8x128xbf16>
    %70 = vector.extract_strided_slice %31 {offsets = [0, 0, 640], sizes = [1, 8, 128], strides = [1, 1, 1]} : vector<1x8x768xf32> to vector<1x8x128xf32>
    %71 = arith.truncf %70 : vector<1x8x128xf32> to vector<1x8x128xbf16>
    "tpu.trace_start"() <{level = 10 : i32, message = "btd,bsd->bts"}> : () -> ()
    %cst_29 = arith.constant dense<0.000000e+00> : vector<1x8x8xf32>
    %72 = tpu.matmul %67, %69, %cst_29 {dimension_numbers = #tpu.dot_dimension_numbers<[2], [2], [1], [1], [0, 0, 0, 1, 1, 1], [0], [0]>} : vector<1x8x128xbf16>, vector<1x8x128xbf16>, vector<1x8x8xf32> -> vector<1x8x8xf32>
    "tpu.trace_stop"() : () -> ()
    %73 = vector.broadcast %38 : vector<1x1x8xf32> to vector<1x8x8xf32>
    %74 = arith.addf %72, %73 : vector<1x8x8xf32>
    %cst_30 = arith.constant dense<0xFF800000> : vector<1x8xf32>
    %75 = vector.multi_reduction <maximumf>, %74, %cst_30 [2] : vector<1x8x8xf32> to vector<1x8xf32>
    %76 = vector.shape_cast %75 : vector<1x8xf32> to vector<1x8x1xf32>
    %77 = vector.broadcast %76 : vector<1x8x1xf32> to vector<1x8x8xf32>
    %78 = arith.subf %74, %77 : vector<1x8x8xf32>
    %79 = math.exp %78 : vector<1x8x8xf32>
    %cst_31 = arith.constant dense<0.000000e+00> : vector<1x8xf32>
    %80 = vector.multi_reduction <add>, %79, %cst_31 [2] : vector<1x8x8xf32> to vector<1x8xf32>
    %81 = vector.shape_cast %80 : vector<1x8xf32> to vector<1x8x1xf32>
    %82 = tpu.reciprocal %81 {approx = true} : vector<1x8x1xf32> -> vector<1x8x1xf32>
    %83 = vector.broadcast %82 : vector<1x8x1xf32> to vector<1x8x8xf32>
    %84 = arith.mulf %79, %83 : vector<1x8x8xf32>
    %85 = arith.truncf %84 : vector<1x8x8xf32> to vector<1x8x8xbf16>
    "tpu.trace_start"() <{level = 10 : i32, message = "bts,bsd->btd"}> : () -> ()
    %cst_32 = arith.constant dense<0.000000e+00> : vector<1x8x128xf32>
    %86 = tpu.matmul %85, %71, %cst_32 {dimension_numbers = #tpu.dot_dimension_numbers<[2], [1], [1], [2], [0, 0, 0, 1, 1, 2], [0], [0]>} : vector<1x8x8xbf16>, vector<1x8x128xbf16>, vector<1x8x128xf32> -> vector<1x8x128xf32>
    "tpu.trace_stop"() : () -> ()
    %87 = vector.shape_cast %86 : vector<1x8x128xf32> to vector<8x128xf32>
    %88 = arith.truncf %87 : vector<8x128xf32> to vector<8x128xbf16>
    %c128 = arith.constant 128 : index
    %c0_33 = arith.constant 0 : index
    %89 = vector.load %arg7[%c128, %c0_33] : memref<256x256xbf16, #tpu.memory_space<vmem>>, vector<128x256xbf16>
    %cst_34 = arith.constant dense<0.000000e+00> : vector<8x256xf32>
    %90 = tpu.matmul %88, %89, %cst_34 {dimension_numbers = #tpu.dot_dimension_numbers<[1], [0], [0], [1], [0, 0, 1, 1], [], []>} : vector<8x128xbf16>, vector<128x256xbf16>, vector<8x256xf32> -> vector<8x256xf32>
    %91 = arith.addf %65, %90 : vector<8x256xf32>
    %c0_35 = arith.constant 0 : index
    %c0_36 = arith.constant 0 : index
    %92 = vector.load %arg8[%c0_35, %c0_36] : memref<1x256xf32, #tpu.memory_space<vmem>>, vector<1x256xf32>
    %93 = vector.broadcast %92 : vector<1x256xf32> to vector<8x256xf32>
    %94 = arith.addf %91, %93 : vector<8x256xf32>
    %95 = vector.shape_cast %94 : vector<8x256xf32> to vector<1x8x256xf32>
    %96 = arith.addf %1, %95 : vector<1x8x256xf32>
    %97 = arith.truncf %96 : vector<1x8x256xf32> to vector<1x8x256xbf16>
    %c0_37 = arith.constant 0 : index
    %c0_38 = arith.constant 0 : index
    %c0_39 = arith.constant 0 : index
    %98 = vector.load %arg9[%c0_37, %c0_38, %c0_39] : memref<1x8x256xbf16, #tpu.memory_space<vmem>>, vector<1x8x256xbf16>
    tpu.vector_store %arg9[%c0_37, %c0_38, %c0_39], %97 {strides = array<i32>} : memref<1x8x256xbf16, #tpu.memory_space<vmem>>, vector<1x8x256xbf16>,
    return
  }
  func.func @transform_0(%arg0: i32) -> (i32, i32, i32) {
    %c0_i32 = arith.constant 0 : i32
    %c0_i32_0 = arith.constant 0 : i32
    %c0_i32_1 = arith.constant 0 : i32
    return %arg0, %c0_i32, %c0_i32_0 : i32, i32, i32
  }
  func.func @transform_1(%arg0: i32) -> (i32, i32, i32) {
    %c0_i32 = arith.constant 0 : i32
    %c0_i32_0 = arith.constant 0 : i32
    %c0_i32_1 = arith.constant 0 : i32
    return %arg0, %c0_i32, %c0_i32_0 : i32, i32, i32
  }
  func.func @transform_2(%arg0: i32) -> (i32, i32) {
    %c0_i32 = arith.constant 0 : i32
    %c0_i32_0 = arith.constant 0 : i32
    %c0_i32_1 = arith.constant 0 : i32
    return %c0_i32, %c0_i32_0 : i32, i32
  }
  func.func @transform_3(%arg0: i32) -> (i32, i32) {
    %c0_i32 = arith.constant 0 : i32
    %c0_i32_0 = arith.constant 0 : i32
    %c0_i32_1 = arith.constant 0 : i32
    return %c0_i32, %c0_i32_0 : i32, i32
  }
  func.func @transform_4(%arg0: i32) -> (i32, i32) {
    %c0_i32 = arith.constant 0 : i32
    %c0_i32_0 = arith.constant 0 : i32
    %c0_i32_1 = arith.constant 0 : i32
    return %c0_i32, %c0_i32_0 : i32, i32
  }
  func.func @transform_5(%arg0: i32) -> (i32, i32) {
    %c0_i32 = arith.constant 0 : i32
    %c0_i32_0 = arith.constant 0 : i32
    %c0_i32_1 = arith.constant 0 : i32
    return %c0_i32, %c0_i32_0 : i32, i32
  }
  func.func @transform_6(%arg0: i32) -> (i32, i32) {
    %c0_i32 = arith.constant 0 : i32
    %c0_i32_0 = arith.constant 0 : i32
    %c0_i32_1 = arith.constant 0 : i32
    return %c0_i32, %c0_i32_0 : i32, i32
  }
  func.func @transform_7(%arg0: i32) -> (i32, i32) {
    %c0_i32 = arith.constant 0 : i32
    %c0_i32_0 = arith.constant 0 : i32
    %c0_i32_1 = arith.constant 0 : i32
    return %c0_i32, %c0_i32_0 : i32, i32
  }
  func.func @transform_8(%arg0: i32) -> (i32, i32, i32) {
    %c0_i32 = arith.constant 0 : i32
    %c0_i32_0 = arith.constant 0 : i32
    %c0_i32_1 = arith.constant 0 : i32
    return %arg0, %c0_i32, %c0_i32_0 : i32, i32, i32
  }
}

module attributes {stable_mosaic.version = 11 : i64} {
  func.func @_linear_kernel(%arg0: i32, %arg1: i32, %arg2: memref<8x256xbf16, #tpu.memory_space<vmem>>, %arg3: memref<256x256xbf16, #tpu.memory_space<vmem>>, %arg4: memref<1x256xf32, #tpu.memory_space<vmem>>, %arg5: memref<8x256xf32, #tpu.memory_space<vmem>>) attributes {dimension_semantics = [#tpu.dimension_semantics<parallel>, #tpu.dimension_semantics<parallel>], iteration_bounds = array<i64: 2, 1>, scalar_prefetch = 0 : i64, scratch_operands = 0 : i64, tpu.core_type = #tpu.core_type<tc>, window_params = [{transform_indices = @transform_0, window_bounds = array<i64: 8, 256>}, {transform_indices = @transform_1, window_bounds = array<i64: 256, 256>}, {transform_indices = @transform_2, window_bounds = array<i64: 1, 256>}, {transform_indices = @transform_3, window_bounds = array<i64: 8, 256>}]} {
    %c0 = arith.constant 0 : index
    %c0_0 = arith.constant 0 : index
    %0 = vector.load %arg2[%c0, %c0_0] : memref<8x256xbf16, #tpu.memory_space<vmem>>, vector<8x256xbf16>
    %c0_1 = arith.constant 0 : index
    %c0_2 = arith.constant 0 : index
    %1 = vector.load %arg3[%c0_1, %c0_2] : memref<256x256xbf16, #tpu.memory_space<vmem>>, vector<256x256xbf16>
    %cst = arith.constant dense<0.000000e+00> : vector<8x256xf32>
    %2 = tpu.matmul %0, %1, %cst {dimension_numbers = #tpu.dot_dimension_numbers<[1], [0], [0], [1], [0, 0, 1, 1], [], []>} : vector<8x256xbf16>, vector<256x256xbf16>, vector<8x256xf32> -> vector<8x256xf32>
    %c0_3 = arith.constant 0 : index
    %c0_4 = arith.constant 0 : index
    %3 = vector.load %arg4[%c0_3, %c0_4] : memref<1x256xf32, #tpu.memory_space<vmem>>, vector<1x256xf32>
    %4 = vector.broadcast %3 : vector<1x256xf32> to vector<8x256xf32>
    %5 = arith.addf %2, %4 : vector<8x256xf32>
    %c0_5 = arith.constant 0 : index
    %c0_6 = arith.constant 0 : index
    %6 = vector.load %arg5[%c0_5, %c0_6] : memref<8x256xf32, #tpu.memory_space<vmem>>, vector<8x256xf32>
    tpu.vector_store %arg5[%c0_5, %c0_6], %5 {strides = array<i32>} : memref<8x256xf32, #tpu.memory_space<vmem>>, vector<8x256xf32>,
    return
  }
  func.func @transform_0(%arg0: i32, %arg1: i32) -> (i32, i32) {
    %c0_i32 = arith.constant 0 : i32
    %c0_i32_0 = arith.constant 0 : i32
    return %arg0, %c0_i32 : i32, i32
  }
  func.func @transform_1(%arg0: i32, %arg1: i32) -> (i32, i32) {
    %c0_i32 = arith.constant 0 : i32
    %c0_i32_0 = arith.constant 0 : i32
    return %c0_i32, %arg1 : i32, i32
  }
  func.func @transform_2(%arg0: i32, %arg1: i32) -> (i32, i32) {
    %c0_i32 = arith.constant 0 : i32
    %c0_i32_0 = arith.constant 0 : i32
    return %c0_i32, %arg1 : i32, i32
  }
  func.func @transform_3(%arg0: i32, %arg1: i32) -> (i32, i32) {
    %c0_i32 = arith.constant 0 : i32
    return %arg0, %arg1 : i32, i32
  }
}

module attributes {stable_mosaic.version = 11 : i64} {
  func.func @_self_attn_layer_kernel(%arg0: i32, %arg1: memref<1x8x256xbf16, #tpu.memory_space<vmem>>, %arg2: memref<1x1x8xf32, #tpu.memory_space<vmem>>, %arg3: memref<1x256xf32, #tpu.memory_space<vmem>>, %arg4: memref<1x256xf32, #tpu.memory_space<vmem>>, %arg5: memref<256x768xbf16, #tpu.memory_space<vmem>>, %arg6: memref<1x768xf32, #tpu.memory_space<vmem>>, %arg7: memref<256x256xbf16, #tpu.memory_space<vmem>>, %arg8: memref<1x256xf32, #tpu.memory_space<vmem>>, %arg9: memref<1x8x256xbf16, #tpu.memory_space<vmem>>) attributes {dimension_semantics = [#tpu.dimension_semantics<parallel>], iteration_bounds = array<i64: 2>, scalar_prefetch = 0 : i64, scratch_operands = 0 : i64, tpu.core_type = #tpu.core_type<tc>, window_params = [{transform_indices = @transform_0, window_bounds = array<i64: 1, 8, 256>}, {transform_indices = @transform_1, window_bounds = array<i64: 1, 1, 8>}, {pipeline_mode = #tpu.pipeline_mode<synchronous>, transform_indices = @transform_2, window_bounds = array<i64: 1, 256>}, {pipeline_mode = #tpu.pipeline_mode<synchronous>, transform_indices = @transform_3, window_bounds = array<i64: 1, 256>}, {pipeline_mode = #tpu.pipeline_mode<synchronous>, transform_indices = @transform_4, window_bounds = array<i64: 256, 768>}, {pipeline_mode = #tpu.pipeline_mode<synchronous>, transform_indices = @transform_5, window_bounds = array<i64: 1, 768>}, {pipeline_mode = #tpu.pipeline_mode<synchronous>, transform_indices = @transform_6, window_bounds = array<i64: 256, 256>}, {pipeline_mode = #tpu.pipeline_mode<synchronous>, transform_indices = @transform_7, window_bounds = array<i64: 1, 256>}, {transform_indices = @transform_8, window_bounds = array<i64: 1, 8, 256>}]} {
    %c0 = arith.constant 0 : index
    %c0_0 = arith.constant 0 : index
    %c0_1 = arith.constant 0 : index
    %0 = vector.load %arg1[%c0, %c0_0, %c0_1] : memref<1x8x256xbf16, #tpu.memory_space<vmem>>, vector<1x8x256xbf16>
    %1 = arith.extf %0 : vector<1x8x256xbf16> to vector<1x8x256xf32>
    %2 = vector.shape_cast %1 : vector<1x8x256xf32> to vector<8x256xf32>
    %c0_2 = arith.constant 0 : index
    %c0_3 = arith.constant 0 : index
    %3 = vector.load %arg3[%c0_2, %c0_3] : memref<1x256xf32, #tpu.memory_space<vmem>>, vector<1x256xf32>
    %c0_4 = arith.constant 0 : index
    %c0_5 = arith.constant 0 : index
    %4 = vector.load %arg4[%c0_4, %c0_5] : memref<1x256xf32, #tpu.memory_space<vmem>>, vector<1x256xf32>
    %cst = arith.constant dense<0.000000e+00> : vector<8xf32>
    %5 = vector.multi_reduction <add>, %2, %cst [1] : vector<8x256xf32> to vector<8xf32>
    %6 = vector.shape_cast %5 : vector<8xf32> to vector<8x1xf32>
    %cst_6 = arith.constant 2.560000e+02 : f32
    %7 = vector.broadcast %cst_6 : f32 to vector<8x1xf32>
    %8 = arith.divf %6, %7 : vector<8x1xf32>
    %9 = vector.broadcast %8 : vector<8x1xf32> to vector<8x256xf32>
    %10 = arith.subf %2, %9 : vector<8x256xf32>
    %11 = arith.mulf %10, %10 : vector<8x256xf32>
    %cst_7 = arith.constant dense<0.000000e+00> : vector<8xf32>
    %12 = vector.multi_reduction <add>, %11, %cst_7 [1] : vector<8x256xf32> to vector<8xf32>
    %13 = vector.shape_cast %12 : vector<8xf32> to vector<8x1xf32>
    %cst_8 = arith.constant 2.560000e+02 : f32
    %14 = vector.broadcast %cst_8 : f32 to vector<8x1xf32>
    %15 = arith.divf %13, %14 : vector<8x1xf32>
    %cst_9 = arith.constant 9.99999974E-6 : f32
    %16 = vector.broadcast %cst_9 : f32 to vector<8x1xf32>
    %17 = arith.addf %15, %16 : vector<8x1xf32>
    %18 = math.rsqrt %17 : vector<8x1xf32>
    %19 = vector.broadcast %18 : vector<8x1xf32> to vector<8x256xf32>
    %20 = arith.mulf %10, %19 : vector<8x256xf32>
    %21 = vector.broadcast %3 : vector<1x256xf32> to vector<8x256xf32>
    %22 = arith.mulf %20, %21 : vector<8x256xf32>
    %23 = vector.broadcast %4 : vector<1x256xf32> to vector<8x256xf32>
    %24 = arith.addf %22, %23 : vector<8x256xf32>
    %25 = arith.truncf %24 : vector<8x256xf32> to vector<8x256xbf16>
    %c0_10 = arith.constant 0 : index
    %c0_11 = arith.constant 0 : index
    %26 = vector.load %arg5[%c0_10, %c0_11] : memref<256x768xbf16, #tpu.memory_space<vmem>>, vector<256x768xbf16>
    %cst_12 = arith.constant dense<0.000000e+00> : vector<8x768xf32>
    %27 = tpu.matmul %25, %26, %cst_12 {dimension_numbers = #tpu.dot_dimension_numbers<[1], [0], [0], [1], [0, 0, 1, 1], [], []>} : vector<8x256xbf16>, vector<256x768xbf16>, vector<8x768xf32> -> vector<8x768xf32>
    %c0_13 = arith.constant 0 : index
    %c0_14 = arith.constant 0 : index
    %28 = vector.load %arg6[%c0_13, %c0_14] : memref<1x768xf32, #tpu.memory_space<vmem>>, vector<1x768xf32>
    %29 = vector.broadcast %28 : vector<1x768xf32> to vector<8x768xf32>
    %30 = arith.addf %27, %29 : vector<8x768xf32>
    %31 = vector.shape_cast %30 : vector<8x768xf32> to vector<1x8x768xf32>
    %c0_15 = arith.constant 0 : index
    %c0_16 = arith.constant 0 : index
    %c0_17 = arith.constant 0 : index
    %32 = vector.load %arg2[%c0_15, %c0_16, %c0_17] : memref<1x1x8xf32, #tpu.memory_space<vmem>>, vector<1x1x8xf32>
    %cst_18 = arith.constant 1.000000e+00 : f32
    %33 = vector.broadcast %cst_18 : f32 to vector<1x1x8xf32>
    %34 = arith.subf %32, %33 : vector<1x1x8xf32>
    %cst_19 = arith.constant 1.000000e+09 : f32
    %35 = vector.broadcast %cst_19 : f32 to vector<1x1x8xf32>
    %36 = arith.mulf %34, %35 : vector<1x1x8xf32>
    %cst_20 = arith.constant -1.000000e+00 : f32
    %37 = vector.broadcast %cst_20 : f32 to vector<1x1x8xf32>
    %38 = arith.mulf %36, %37 : vector<1x1x8xf32>
    %39 = tpu.iota {dimensions = array<i32: 0>} : vector<8x8xi32>
    %40 = tpu.iota {dimensions = array<i32: 1>} : vector<8x8xi32>
    %41 = arith.cmpi sgt, %40, %39 : vector<8x8xi32>
    %42 = arith.extui %41 : vector<8x8xi1> to vector<8x8xi32>
    %43 = arith.sitofp %42 : vector<8x8xi32> to vector<8x8xf32>
    %44 = vector.shape_cast %43 : vector<8x8xf32> to vector<1x8x8xf32>
    %cst_21 = arith.constant -1.000000e+09 : f32
    %45 = vector.broadcast %cst_21 : f32 to vector<1x8x8xf32>
    %46 = arith.mulf %44, %45 : vector<1x8x8xf32>
    %47 = vector.broadcast %38 : vector<1x1x8xf32> to vector<1x8x8xf32>
    %48 = arith.addf %47, %46 : vector<1x8x8xf32>
    %cst_22 = arith.constant 0.000000e+00 : f32
    %49 = vector.broadcast %cst_22 : f32 to vector<8x256xf32>
    %50 = vector.extract_strided_slice %31 {offsets = [0, 0, 0], sizes = [1, 8, 128], strides = [1, 1, 1]} : vector<1x8x768xf32> to vector<1x8x128xf32>
    %51 = arith.truncf %50 : vector<1x8x128xf32> to vector<1x8x128xbf16>
    %52 = vector.extract_strided_slice %31 {offsets = [0, 0, 256], sizes = [1, 8, 128], strides = [1, 1, 1]} : vector<1x8x768xf32> to vector<1x8x128xf32>
    %53 = arith.truncf %52 : vector<1x8x128xf32> to vector<1x8x128xbf16>
    %54 = vector.extract_strided_slice %31 {offsets = [0, 0, 512], sizes = [1, 8, 128], strides = [1, 1, 1]} : vector<1x8x768xf32> to vector<1x8x128xf32>
    %55 = arith.truncf %54 : vector<1x8x128xf32> to vector<1x8x128xbf16>
    "tpu.trace_start"() <{level = 10 : i32, message = "btd,bsd->bts"}> : () -> ()
    %cst_23 = arith.constant dense<0.000000e+00> : vector<1x8x8xf32>
    %56 = tpu.matmul %51, %53, %cst_23 {dimension_numbers = #tpu.dot_dimension_numbers<[2], [2], [1], [1], [0, 0, 0, 1, 1, 1], [0], [0]>} : vector<1x8x128xbf16>, vector<1x8x128xbf16>, vector<1x8x8xf32> -> vector<1x8x8xf32>
    "tpu.trace_stop"() : () -> ()
    %57 = arith.addf %56, %48 : vector<1x8x8xf32>
    %cst_24 = arith.constant dense<0xFF800000> : vector<1x8xf32>
    %58 = vector.multi_reduction <maximumf>, %57, %cst_24 [2] : vector<1x8x8xf32> to vector<1x8xf32>
    %59 = vector.shape_cast %58 : vector<1x8xf32> to vector<1x8x1xf32>
    %60 = vector.broadcast %59 : vector<1x8x1xf32> to vector<1x8x8xf32>
    %61 = arith.subf %57, %60 : vector<1x8x8xf32>
    %62 = math.exp %61 : vector<1x8x8xf32>
    %cst_25 = arith.constant dense<0.000000e+00> : vector<1x8xf32>
    %63 = vector.multi_reduction <add>, %62, %cst_25 [2] : vector<1x8x8xf32> to vector<1x8xf32>
    %64 = vector.shape_cast %63 : vector<1x8xf32> to vector<1x8x1xf32>
    %65 = tpu.reciprocal %64 {approx = true} : vector<1x8x1xf32> -> vector<1x8x1xf32>
    %66 = vector.broadcast %65 : vector<1x8x1xf32> to vector<1x8x8xf32>
    %67 = arith.mulf %62, %66 : vector<1x8x8xf32>
    %68 = arith.truncf %67 : vector<1x8x8xf32> to vector<1x8x8xbf16>
    "tpu.trace_start"() <{level = 10 : i32, message = "bts,bsd->btd"}> : () -> ()
    %cst_26 = arith.constant dense<0.000000e+00> : vector<1x8x128xf32>
    %69 = tpu.matmul %68, %55, %cst_26 {dimension_numbers = #tpu.dot_dimension_numbers<[2], [1], [1], [2], [0, 0, 0, 1, 1, 2], [0], [0]>} : vector<1x8x8xbf16>, vector<1x8x128xbf16>, vector<1x8x128xf32> -> vector<1x8x128xf32>
    "tpu.trace_stop"() : () -> ()
    %70 = vector.shape_cast %69 : vector<1x8x128xf32> to vector<8x128xf32>
    %71 = arith.truncf %70 : vector<8x128xf32> to vector<8x128xbf16>
    %c0_27 = arith.constant 0 : index
    %c0_28 = arith.constant 0 : index
    %72 = vector.load %arg7[%c0_27, %c0_28] : memref<256x256xbf16, #tpu.memory_space<vmem>>, vector<128x256xbf16>
    %cst_29 = arith.constant dense<0.000000e+00> : vector<8x256xf32>
    %73 = tpu.matmul %71, %72, %cst_29 {dimension_numbers = #tpu.dot_dimension_numbers<[1], [0], [0], [1], [0, 0, 1, 1], [], []>} : vector<8x128xbf16>, vector<128x256xbf16>, vector<8x256xf32> -> vector<8x256xf32>
    %74 = arith.addf %49, %73 : vector<8x256xf32>
    %75 = vector.extract_strided_slice %31 {offsets = [0, 0, 128], sizes = [1, 8, 128], strides = [1, 1, 1]} : vector<1x8x768xf32> to vector<1x8x128xf32>
    %76 = arith.truncf %75 : vector<1x8x128xf32> to vector<1x8x128xbf16>
    %77 = vector.extract_strided_slice %31 {offsets = [0, 0, 384], sizes = [1, 8, 128], strides = [1, 1, 1]} : vector<1x8x768xf32> to vector<1x8x128xf32>
    %78 = arith.truncf %77 : vector<1x8x128xf32> to vector<1x8x128xbf16>
    %79 = vector.extract_strided_slice %31 {offsets = [0, 0, 640], sizes = [1, 8, 128], strides = [1, 1, 1]} : vector<1x8x768xf32> to vector<1x8x128xf32>
    %80 = arith.truncf %79 : vector<1x8x128xf32> to vector<1x8x128xbf16>
    "tpu.trace_start"() <{level = 10 : i32, message = "btd,bsd->bts"}> : () -> ()
    %cst_30 = arith.constant dense<0.000000e+00> : vector<1x8x8xf32>
    %81 = tpu.matmul %76, %78, %cst_30 {dimension_numbers = #tpu.dot_dimension_numbers<[2], [2], [1], [1], [0, 0, 0, 1, 1, 1], [0], [0]>} : vector<1x8x128xbf16>, vector<1x8x128xbf16>, vector<1x8x8xf32> -> vector<1x8x8xf32>
    "tpu.trace_stop"() : () -> ()
    %82 = arith.addf %81, %48 : vector<1x8x8xf32>
    %cst_31 = arith.constant dense<0xFF800000> : vector<1x8xf32>
    %83 = vector.multi_reduction <maximumf>, %82, %cst_31 [2] : vector<1x8x8xf32> to vector<1x8xf32>
    %84 = vector.shape_cast %83 : vector<1x8xf32> to vector<1x8x1xf32>
    %85 = vector.broadcast %84 : vector<1x8x1xf32> to vector<1x8x8xf32>
    %86 = arith.subf %82, %85 : vector<1x8x8xf32>
    %87 = math.exp %86 : vector<1x8x8xf32>
    %cst_32 = arith.constant dense<0.000000e+00> : vector<1x8xf32>
    %88 = vector.multi_reduction <add>, %87, %cst_32 [2] : vector<1x8x8xf32> to vector<1x8xf32>
    %89 = vector.shape_cast %88 : vector<1x8xf32> to vector<1x8x1xf32>
    %90 = tpu.reciprocal %89 {approx = true} : vector<1x8x1xf32> -> vector<1x8x1xf32>
    %91 = vector.broadcast %90 : vector<1x8x1xf32> to vector<1x8x8xf32>
    %92 = arith.mulf %87, %91 : vector<1x8x8xf32>
    %93 = arith.truncf %92 : vector<1x8x8xf32> to vector<1x8x8xbf16>
    "tpu.trace_start"() <{level = 10 : i32, message = "bts,bsd->btd"}> : () -> ()
    %cst_33 = arith.constant dense<0.000000e+00> : vector<1x8x128xf32>
    %94 = tpu.matmul %93, %80, %cst_33 {dimension_numbers = #tpu.dot_dimension_numbers<[2], [1], [1], [2], [0, 0, 0, 1, 1, 2], [0], [0]>} : vector<1x8x8xbf16>, vector<1x8x128xbf16>, vector<1x8x128xf32> -> vector<1x8x128xf32>
    "tpu.trace_stop"() : () -> ()
    %95 = vector.shape_cast %94 : vector<1x8x128xf32> to vector<8x128xf32>
    %96 = arith.truncf %95 : vector<8x128xf32> to vector<8x128xbf16>
    %c128 = arith.constant 128 : index
    %c0_34 = arith.constant 0 : index
    %97 = vector.load %arg7[%c128, %c0_34] : memref<256x256xbf16, #tpu.memory_space<vmem>>, vector<128x256xbf16>
    %cst_35 = arith.constant dense<0.000000e+00> : vector<8x256xf32>
    %98 = tpu.matmul %96, %97, %cst_35 {dimension_numbers = #tpu.dot_dimension_numbers<[1], [0], [0], [1], [0, 0, 1, 1], [], []>} : vector<8x128xbf16>, vector<128x256xbf16>, vector<8x256xf32> -> vector<8x256xf32>
    %99 = arith.addf %74, %98 : vector<8x256xf32>
    %c0_36 = arith.constant 0 : index
    %c0_37 = arith.constant 0 : index
    %100 = vector.load %arg8[%c0_36, %c0_37] : memref<1x256xf32, #tpu.memory_space<vmem>>, vector<1x256xf32>
    %101 = vector.broadcast %100 : vector<1x256xf32> to vector<8x256xf32>
    %102 = arith.addf %99, %101 : vector<8x256xf32>
    %103 = vector.shape_cast %102 : vector<8x256xf32> to vector<1x8x256xf32>
    %104 = arith.addf %1, %103 : vector<1x8x256xf32>
    %105 = arith.truncf %104 : vector<1x8x256xf32> to vector<1x8x256xbf16>
    %c0_38 = arith.constant 0 : index
    %c0_39 = arith.constant 0 : index
    %c0_40 = arith.constant 0 : index
    %106 = vector.load %arg9[%c0_38, %c0_39, %c0_40] : memref<1x8x256xbf16, #tpu.memory_space<vmem>>, vector<1x8x256xbf16>
    tpu.vector_store %arg9[%c0_38, %c0_39, %c0_40], %105 {strides = array<i32>} : memref<1x8x256xbf16, #tpu.memory_space<vmem>>, vector<1x8x256xbf16>,
    return
  }
  func.func @transform_0(%arg0: i32) -> (i32, i32, i32) {
    %c0_i32 = arith.constant 0 : i32
    %c0_i32_0 = arith.constant 0 : i32
    %c0_i32_1 = arith.constant 0 : i32
    return %arg0, %c0_i32, %c0_i32_0 : i32, i32, i32
  }
  func.func @transform_1(%arg0: i32) -> (i32, i32, i32) {
    %c0_i32 = arith.constant 0 : i32
    %c0_i32_0 = arith.constant 0 : i32
    %c0_i32_1 = arith.constant 0 : i32
    return %arg0, %c0_i32, %c0_i32_0 : i32, i32, i32
  }
  func.func @transform_2(%arg0: i32) -> (i32, i32) {
    %c0_i32 = arith.constant 0 : i32
    %c0_i32_0 = arith.constant 0 : i32
    %c0_i32_1 = arith.constant 0 : i32
    return %c0_i32, %c0_i32_0 : i32, i32
  }
  func.func @transform_3(%arg0: i32) -> (i32, i32) {
    %c0_i32 = arith.constant 0 : i32
    %c0_i32_0 = arith.constant 0 : i32
    %c0_i32_1 = arith.constant 0 : i32
    return %c0_i32, %c0_i32_0 : i32, i32
  }
  func.func @transform_4(%arg0: i32) -> (i32, i32) {
    %c0_i32 = arith.constant 0 : i32
    %c0_i32_0 = arith.constant 0 : i32
    %c0_i32_1 = arith.constant 0 : i32
    return %c0_i32, %c0_i32_0 : i32, i32
  }
  func.func @transform_5(%arg0: i32) -> (i32, i32) {
    %c0_i32 = arith.constant 0 : i32
    %c0_i32_0 = arith.constant 0 : i32
    %c0_i32_1 = arith.constant 0 : i32
    return %c0_i32, %c0_i32_0 : i32, i32
  }
  func.func @transform_6(%arg0: i32) -> (i32, i32) {
    %c0_i32 = arith.constant 0 : i32
    %c0_i32_0 = arith.constant 0 : i32
    %c0_i32_1 = arith.constant 0 : i32
    return %c0_i32, %c0_i32_0 : i32, i32
  }
  func.func @transform_7(%arg0: i32) -> (i32, i32) {
    %c0_i32 = arith.constant 0 : i32
    %c0_i32_0 = arith.constant 0 : i32
    %c0_i32_1 = arith.constant 0 : i32
    return %c0_i32, %c0_i32_0 : i32, i32
  }
  func.func @transform_8(%arg0: i32) -> (i32, i32, i32) {
    %c0_i32 = arith.constant 0 : i32
    %c0_i32_0 = arith.constant 0 : i32
    %c0_i32_1 = arith.constant 0 : i32
    return %arg0, %c0_i32, %c0_i32_0 : i32, i32, i32
  }
}

module attributes {stable_mosaic.version = 11 : i64} {
  func.func @_cross_attn_layer_kernel(%arg0: i32, %arg1: memref<1x8x256xbf16, #tpu.memory_space<vmem>>, %arg2: memref<1x8x256xbf16, #tpu.memory_space<vmem>>, %arg3: memref<1x8x1xf32, #tpu.memory_space<vmem>>, %arg4: memref<1x1x8xf32, #tpu.memory_space<vmem>>, %arg5: memref<1x256xf32, #tpu.memory_space<vmem>>, %arg6: memref<1x256xf32, #tpu.memory_space<vmem>>, %arg7: memref<256x256xbf16, #tpu.memory_space<vmem>>, %arg8: memref<1x256xf32, #tpu.memory_space<vmem>>, %arg9: memref<256x512xbf16, #tpu.memory_space<vmem>>, %arg10: memref<1x512xf32, #tpu.memory_space<vmem>>, %arg11: memref<256x256xbf16, #tpu.memory_space<vmem>>, %arg12: memref<1x256xf32, #tpu.memory_space<vmem>>, %arg13: memref<1x8x256xbf16, #tpu.memory_space<vmem>>) attributes {dimension_semantics = [#tpu.dimension_semantics<parallel>], iteration_bounds = array<i64: 2>, scalar_prefetch = 0 : i64, scratch_operands = 0 : i64, tpu.core_type = #tpu.core_type<tc>, window_params = [{transform_indices = @transform_0, window_bounds = array<i64: 1, 8, 256>}, {transform_indices = @transform_1, window_bounds = array<i64: 1, 8, 256>}, {transform_indices = @transform_2, window_bounds = array<i64: 1, 8, 1>}, {transform_indices = @transform_3, window_bounds = array<i64: 1, 1, 8>}, {pipeline_mode = #tpu.pipeline_mode<synchronous>, transform_indices = @transform_4, window_bounds = array<i64: 1, 256>}, {pipeline_mode = #tpu.pipeline_mode<synchronous>, transform_indices = @transform_5, window_bounds = array<i64: 1, 256>}, {pipeline_mode = #tpu.pipeline_mode<synchronous>, transform_indices = @transform_6, window_bounds = array<i64: 256, 256>}, {pipeline_mode = #tpu.pipeline_mode<synchronous>, transform_indices = @transform_7, window_bounds = array<i64: 1, 256>}, {pipeline_mode = #tpu.pipeline_mode<synchronous>, transform_indices = @transform_8, window_bounds = array<i64: 256, 512>}, {pipeline_mode = #tpu.pipeline_mode<synchronous>, transform_indices = @transform_9, window_bounds = array<i64: 1, 512>}, {pipeline_mode = #tpu.pipeline_mode<synchronous>, transform_indices = @transform_10, window_bounds = array<i64: 256, 256>}, {pipeline_mode = #tpu.pipeline_mode<synchronous>, transform_indices = @transform_11, window_bounds = array<i64: 1, 256>}, {transform_indices = @transform_12, window_bounds = array<i64: 1, 8, 256>}]} {
    %c0 = arith.constant 0 : index
    %c0_0 = arith.constant 0 : index
    %c0_1 = arith.constant 0 : index
    %0 = vector.load %arg1[%c0, %c0_0, %c0_1] : memref<1x8x256xbf16, #tpu.memory_space<vmem>>, vector<1x8x256xbf16>
    %1 = arith.extf %0 : vector<1x8x256xbf16> to vector<1x8x256xf32>
    %2 = vector.shape_cast %1 : vector<1x8x256xf32> to vector<8x256xf32>
    %c0_2 = arith.constant 0 : index
    %c0_3 = arith.constant 0 : index
    %3 = vector.load %arg5[%c0_2, %c0_3] : memref<1x256xf32, #tpu.memory_space<vmem>>, vector<1x256xf32>
    %c0_4 = arith.constant 0 : index
    %c0_5 = arith.constant 0 : index
    %4 = vector.load %arg6[%c0_4, %c0_5] : memref<1x256xf32, #tpu.memory_space<vmem>>, vector<1x256xf32>
    %cst = arith.constant dense<0.000000e+00> : vector<8xf32>
    %5 = vector.multi_reduction <add>, %2, %cst [1] : vector<8x256xf32> to vector<8xf32>
    %6 = vector.shape_cast %5 : vector<8xf32> to vector<8x1xf32>
    %cst_6 = arith.constant 2.560000e+02 : f32
    %7 = vector.broadcast %cst_6 : f32 to vector<8x1xf32>
    %8 = arith.divf %6, %7 : vector<8x1xf32>
    %9 = vector.broadcast %8 : vector<8x1xf32> to vector<8x256xf32>
    %10 = arith.subf %2, %9 : vector<8x256xf32>
    %11 = arith.mulf %10, %10 : vector<8x256xf32>
    %cst_7 = arith.constant dense<0.000000e+00> : vector<8xf32>
    %12 = vector.multi_reduction <add>, %11, %cst_7 [1] : vector<8x256xf32> to vector<8xf32>
    %13 = vector.shape_cast %12 : vector<8xf32> to vector<8x1xf32>
    %cst_8 = arith.constant 2.560000e+02 : f32
    %14 = vector.broadcast %cst_8 : f32 to vector<8x1xf32>
    %15 = arith.divf %13, %14 : vector<8x1xf32>
    %cst_9 = arith.constant 9.99999974E-6 : f32
    %16 = vector.broadcast %cst_9 : f32 to vector<8x1xf32>
    %17 = arith.addf %15, %16 : vector<8x1xf32>
    %18 = math.rsqrt %17 : vector<8x1xf32>
    %19 = vector.broadcast %18 : vector<8x1xf32> to vector<8x256xf32>
    %20 = arith.mulf %10, %19 : vector<8x256xf32>
    %21 = vector.broadcast %3 : vector<1x256xf32> to vector<8x256xf32>
    %22 = arith.mulf %20, %21 : vector<8x256xf32>
    %23 = vector.broadcast %4 : vector<1x256xf32> to vector<8x256xf32>
    %24 = arith.addf %22, %23 : vector<8x256xf32>
    %25 = arith.truncf %24 : vector<8x256xf32> to vector<8x256xbf16>
    %c0_10 = arith.constant 0 : index
    %c0_11 = arith.constant 0 : index
    %26 = vector.load %arg7[%c0_10, %c0_11] : memref<256x256xbf16, #tpu.memory_space<vmem>>, vector<256x256xbf16>
    %cst_12 = arith.constant dense<0.000000e+00> : vector<8x256xf32>
    %27 = tpu.matmul %25, %26, %cst_12 {dimension_numbers = #tpu.dot_dimension_numbers<[1], [0], [0], [1], [0, 0, 1, 1], [], []>} : vector<8x256xbf16>, vector<256x256xbf16>, vector<8x256xf32> -> vector<8x256xf32>
    %c0_13 = arith.constant 0 : index
    %c0_14 = arith.constant 0 : index
    %28 = vector.load %arg8[%c0_13, %c0_14] : memref<1x256xf32, #tpu.memory_space<vmem>>, vector<1x256xf32>
    %29 = vector.broadcast %28 : vector<1x256xf32> to vector<8x256xf32>
    %30 = arith.addf %27, %29 : vector<8x256xf32>
    %31 = vector.shape_cast %30 : vector<8x256xf32> to vector<1x8x256xf32>
    %c0_15 = arith.constant 0 : index
    %c0_16 = arith.constant 0 : index
    %c0_17 = arith.constant 0 : index
    %32 = vector.load %arg2[%c0_15, %c0_16, %c0_17] : memref<1x8x256xbf16, #tpu.memory_space<vmem>>, vector<1x8x256xbf16>
    %33 = vector.shape_cast %32 : vector<1x8x256xbf16> to vector<8x256xbf16>
    %c0_18 = arith.constant 0 : index
    %c0_19 = arith.constant 0 : index
    %34 = vector.load %arg9[%c0_18, %c0_19] : memref<256x512xbf16, #tpu.memory_space<vmem>>, vector<256x512xbf16>
    %cst_20 = arith.constant dense<0.000000e+00> : vector<8x512xf32>
    %35 = tpu.matmul %33, %34, %cst_20 {dimension_numbers = #tpu.dot_dimension_numbers<[1], [0], [0], [1], [0, 0, 1, 1], [], []>} : vector<8x256xbf16>, vector<256x512xbf16>, vector<8x512xf32> -> vector<8x512xf32>
    %c0_21 = arith.constant 0 : index
    %c0_22 = arith.constant 0 : index
    %36 = vector.load %arg10[%c0_21, %c0_22] : memref<1x512xf32, #tpu.memory_space<vmem>>, vector<1x512xf32>
    %37 = vector.broadcast %36 : vector<1x512xf32> to vector<8x512xf32>
    %38 = arith.addf %35, %37 : vector<8x512xf32>
    %39 = vector.shape_cast %38 : vector<8x512xf32> to vector<1x8x512xf32>
    %c0_23 = arith.constant 0 : index
    %c0_24 = arith.constant 0 : index
    %c0_25 = arith.constant 0 : index
    %40 = vector.load %arg3[%c0_23, %c0_24, %c0_25] : memref<1x8x1xf32, #tpu.memory_space<vmem>>, vector<1x8x1xf32>
    %c0_26 = arith.constant 0 : index
    %c0_27 = arith.constant 0 : index
    %c0_28 = arith.constant 0 : index
    %41 = vector.load %arg4[%c0_26, %c0_27, %c0_28] : memref<1x1x8xf32, #tpu.memory_space<vmem>>, vector<1x1x8xf32>
    %42 = vector.broadcast %40 : vector<1x8x1xf32> to vector<1x8x8xf32>
    %43 = vector.broadcast %41 : vector<1x1x8xf32> to vector<1x8x8xf32>
    %44 = arith.mulf %42, %43 : vector<1x8x8xf32>
    %cst_29 = arith.constant 1.000000e+00 : f32
    %45 = vector.broadcast %cst_29 : f32 to vector<1x8x8xf32>
    %46 = arith.subf %44, %45 : vector<1x8x8xf32>
    %cst_30 = arith.constant 1.000000e+09 : f32
    %47 = vector.broadcast %cst_30 : f32 to vector<1x8x8xf32>
    %48 = arith.mulf %46, %47 : vector<1x8x8xf32>
    %cst_31 = arith.constant -1.000000e+00 : f32
    %49 = vector.broadcast %cst_31 : f32 to vector<1x8x8xf32>
    %50 = arith.mulf %48, %49 : vector<1x8x8xf32>
    %cst_32 = arith.constant 0.000000e+00 : f32
    %51 = vector.broadcast %cst_32 : f32 to vector<8x256xf32>
    %52 = vector.extract_strided_slice %31 {offsets = [0, 0, 0], sizes = [1, 8, 128], strides = [1, 1, 1]} : vector<1x8x256xf32> to vector<1x8x128xf32>
    %53 = arith.truncf %52 : vector<1x8x128xf32> to vector<1x8x128xbf16>
    %54 = vector.extract_strided_slice %39 {offsets = [0, 0, 0], sizes = [1, 8, 128], strides = [1, 1, 1]} : vector<1x8x512xf32> to vector<1x8x128xf32>
    %55 = arith.truncf %54 : vector<1x8x128xf32> to vector<1x8x128xbf16>
    %56 = vector.extract_strided_slice %39 {offsets = [0, 0, 256], sizes = [1, 8, 128], strides = [1, 1, 1]} : vector<1x8x512xf32> to vector<1x8x128xf32>
    %57 = arith.truncf %56 : vector<1x8x128xf32> to vector<1x8x128xbf16>
    "tpu.trace_start"() <{level = 10 : i32, message = "btd,bsd->bts"}> : () -> ()
    %cst_33 = arith.constant dense<0.000000e+00> : vector<1x8x8xf32>
    %58 = tpu.matmul %53, %55, %cst_33 {dimension_numbers = #tpu.dot_dimension_numbers<[2], [2], [1], [1], [0, 0, 0, 1, 1, 1], [0], [0]>} : vector<1x8x128xbf16>, vector<1x8x128xbf16>, vector<1x8x8xf32> -> vector<1x8x8xf32>
    "tpu.trace_stop"() : () -> ()
    %59 = arith.addf %58, %50 : vector<1x8x8xf32>
    %cst_34 = arith.constant dense<0xFF800000> : vector<1x8xf32>
    %60 = vector.multi_reduction <maximumf>, %59, %cst_34 [2] : vector<1x8x8xf32> to vector<1x8xf32>
    %61 = vector.shape_cast %60 : vector<1x8xf32> to vector<1x8x1xf32>
    %62 = vector.broadcast %61 : vector<1x8x1xf32> to vector<1x8x8xf32>
    %63 = arith.subf %59, %62 : vector<1x8x8xf32>
    %64 = math.exp %63 : vector<1x8x8xf32>
    %cst_35 = arith.constant dense<0.000000e+00> : vector<1x8xf32>
    %65 = vector.multi_reduction <add>, %64, %cst_35 [2] : vector<1x8x8xf32> to vector<1x8xf32>
    %66 = vector.shape_cast %65 : vector<1x8xf32> to vector<1x8x1xf32>
    %67 = tpu.reciprocal %66 {approx = true} : vector<1x8x1xf32> -> vector<1x8x1xf32>
    %68 = vector.broadcast %67 : vector<1x8x1xf32> to vector<1x8x8xf32>
    %69 = arith.mulf %64, %68 : vector<1x8x8xf32>
    %70 = arith.truncf %69 : vector<1x8x8xf32> to vector<1x8x8xbf16>
    "tpu.trace_start"() <{level = 10 : i32, message = "bts,bsd->btd"}> : () -> ()
    %cst_36 = arith.constant dense<0.000000e+00> : vector<1x8x128xf32>
    %71 = tpu.matmul %70, %57, %cst_36 {dimension_numbers = #tpu.dot_dimension_numbers<[2], [1], [1], [2], [0, 0, 0, 1, 1, 2], [0], [0]>} : vector<1x8x8xbf16>, vector<1x8x128xbf16>, vector<1x8x128xf32> -> vector<1x8x128xf32>
    "tpu.trace_stop"() : () -> ()
    %72 = vector.shape_cast %71 : vector<1x8x128xf32> to vector<8x128xf32>
    %73 = arith.truncf %72 : vector<8x128xf32> to vector<8x128xbf16>
    %c0_37 = arith.constant 0 : index
    %c0_38 = arith.constant 0 : index
    %74 = vector.load %arg11[%c0_37, %c0_38] : memref<256x256xbf16, #tpu.memory_space<vmem>>, vector<128x256xbf16>
    %cst_39 = arith.constant dense<0.000000e+00> : vector<8x256xf32>
    %75 = tpu.matmul %73, %74, %cst_39 {dimension_numbers = #tpu.dot_dimension_numbers<[1], [0], [0], [1], [0, 0, 1, 1], [], []>} : vector<8x128xbf16>, vector<128x256xbf16>, vector<8x256xf32> -> vector<8x256xf32>
    %76 = arith.addf %51, %75 : vector<8x256xf32>
    %77 = vector.extract_strided_slice %31 {offsets = [0, 0, 128], sizes = [1, 8, 128], strides = [1, 1, 1]} : vector<1x8x256xf32> to vector<1x8x128xf32>
    %78 = arith.truncf %77 : vector<1x8x128xf32> to vector<1x8x128xbf16>
    %79 = vector.extract_strided_slice %39 {offsets = [0, 0, 128], sizes = [1, 8, 128], strides = [1, 1, 1]} : vector<1x8x512xf32> to vector<1x8x128xf32>
    %80 = arith.truncf %79 : vector<1x8x128xf32> to vector<1x8x128xbf16>
    %81 = vector.extract_strided_slice %39 {offsets = [0, 0, 384], sizes = [1, 8, 128], strides = [1, 1, 1]} : vector<1x8x512xf32> to vector<1x8x128xf32>
    %82 = arith.truncf %81 : vector<1x8x128xf32> to vector<1x8x128xbf16>
    "tpu.trace_start"() <{level = 10 : i32, message = "btd,bsd->bts"}> : () -> ()
    %cst_40 = arith.constant dense<0.000000e+00> : vector<1x8x8xf32>
    %83 = tpu.matmul %78, %80, %cst_40 {dimension_numbers = #tpu.dot_dimension_numbers<[2], [2], [1], [1], [0, 0, 0, 1, 1, 1], [0], [0]>} : vector<1x8x128xbf16>, vector<1x8x128xbf16>, vector<1x8x8xf32> -> vector<1x8x8xf32>
    "tpu.trace_stop"() : () -> ()
    %84 = arith.addf %83, %50 : vector<1x8x8xf32>
    %cst_41 = arith.constant dense<0xFF800000> : vector<1x8xf32>
    %85 = vector.multi_reduction <maximumf>, %84, %cst_41 [2] : vector<1x8x8xf32> to vector<1x8xf32>
    %86 = vector.shape_cast %85 : vector<1x8xf32> to vector<1x8x1xf32>
    %87 = vector.broadcast %86 : vector<1x8x1xf32> to vector<1x8x8xf32>
    %88 = arith.subf %84, %87 : vector<1x8x8xf32>
    %89 = math.exp %88 : vector<1x8x8xf32>
    %cst_42 = arith.constant dense<0.000000e+00> : vector<1x8xf32>
    %90 = vector.multi_reduction <add>, %89, %cst_42 [2] : vector<1x8x8xf32> to vector<1x8xf32>
    %91 = vector.shape_cast %90 : vector<1x8xf32> to vector<1x8x1xf32>
    %92 = tpu.reciprocal %91 {approx = true} : vector<1x8x1xf32> -> vector<1x8x1xf32>
    %93 = vector.broadcast %92 : vector<1x8x1xf32> to vector<1x8x8xf32>
    %94 = arith.mulf %89, %93 : vector<1x8x8xf32>
    %95 = arith.truncf %94 : vector<1x8x8xf32> to vector<1x8x8xbf16>
    "tpu.trace_start"() <{level = 10 : i32, message = "bts,bsd->btd"}> : () -> ()
    %cst_43 = arith.constant dense<0.000000e+00> : vector<1x8x128xf32>
    %96 = tpu.matmul %95, %82, %cst_43 {dimension_numbers = #tpu.dot_dimension_numbers<[2], [1], [1], [2], [0, 0, 0, 1, 1, 2], [0], [0]>} : vector<1x8x8xbf16>, vector<1x8x128xbf16>, vector<1x8x128xf32> -> vector<1x8x128xf32>
    "tpu.trace_stop"() : () -> ()
    %97 = vector.shape_cast %96 : vector<1x8x128xf32> to vector<8x128xf32>
    %98 = arith.truncf %97 : vector<8x128xf32> to vector<8x128xbf16>
    %c128 = arith.constant 128 : index
    %c0_44 = arith.constant 0 : index
    %99 = vector.load %arg11[%c128, %c0_44] : memref<256x256xbf16, #tpu.memory_space<vmem>>, vector<128x256xbf16>
    %cst_45 = arith.constant dense<0.000000e+00> : vector<8x256xf32>
    %100 = tpu.matmul %98, %99, %cst_45 {dimension_numbers = #tpu.dot_dimension_numbers<[1], [0], [0], [1], [0, 0, 1, 1], [], []>} : vector<8x128xbf16>, vector<128x256xbf16>, vector<8x256xf32> -> vector<8x256xf32>
    %101 = arith.addf %76, %100 : vector<8x256xf32>
    %c0_46 = arith.constant 0 : index
    %c0_47 = arith.constant 0 : index
    %102 = vector.load %arg12[%c0_46, %c0_47] : memref<1x256xf32, #tpu.memory_space<vmem>>, vector<1x256xf32>
    %103 = vector.broadcast %102 : vector<1x256xf32> to vector<8x256xf32>
    %104 = arith.addf %101, %103 : vector<8x256xf32>
    %105 = vector.shape_cast %104 : vector<8x256xf32> to vector<1x8x256xf32>
    %106 = arith.addf %1, %105 : vector<1x8x256xf32>
    %107 = arith.truncf %106 : vector<1x8x256xf32> to vector<1x8x256xbf16>
    %c0_48 = arith.constant 0 : index
    %c0_49 = arith.constant 0 : index
    %c0_50 = arith.constant 0 : index
    %108 = vector.load %arg13[%c0_48, %c0_49, %c0_50] : memref<1x8x256xbf16, #tpu.memory_space<vmem>>, vector<1x8x256xbf16>
    tpu.vector_store %arg13[%c0_48, %c0_49, %c0_50], %107 {strides = array<i32>} : memref<1x8x256xbf16, #tpu.memory_space<vmem>>, vector<1x8x256xbf16>,
    return
  }
  func.func @transform_0(%arg0: i32) -> (i32, i32, i32) {
    %c0_i32 = arith.constant 0 : i32
    %c0_i32_0 = arith.constant 0 : i32
    %c0_i32_1 = arith.constant 0 : i32
    return %arg0, %c0_i32, %c0_i32_0 : i32, i32, i32
  }
  func.func @transform_1(%arg0: i32) -> (i32, i32, i32) {
    %c0_i32 = arith.constant 0 : i32
    %c0_i32_0 = arith.constant 0 : i32
    %c0_i32_1 = arith.constant 0 : i32
    return %arg0, %c0_i32, %c0_i32_0 : i32, i32, i32
  }
  func.func @transform_2(%arg0: i32) -> (i32, i32, i32) {
    %c0_i32 = arith.constant 0 : i32
    %c0_i32_0 = arith.constant 0 : i32
    %c0_i32_1 = arith.constant 0 : i32
    return %arg0, %c0_i32, %c0_i32_0 : i32, i32, i32
  }
  func.func @transform_3(%arg0: i32) -> (i32, i32, i32) {
    %c0_i32 = arith.constant 0 : i32
    %c0_i32_0 = arith.constant 0 : i32
    %c0_i32_1 = arith.constant 0 : i32
    return %arg0, %c0_i32, %c0_i32_0 : i32, i32, i32
  }
  func.func @transform_4(%arg0: i32) -> (i32, i32) {
    %c0_i32 = arith.constant 0 : i32
    %c0_i32_0 = arith.constant 0 : i32
    %c0_i32_1 = arith.constant 0 : i32
    return %c0_i32, %c0_i32_0 : i32, i32
  }
  func.func @transform_5(%arg0: i32) -> (i32, i32) {
    %c0_i32 = arith.constant 0 : i32
    %c0_i32_0 = arith.constant 0 : i32
    %c0_i32_1 = arith.constant 0 : i32
    return %c0_i32, %c0_i32_0 : i32, i32
  }
  func.func @transform_6(%arg0: i32) -> (i32, i32) {
    %c0_i32 = arith.constant 0 : i32
    %c0_i32_0 = arith.constant 0 : i32
    %c0_i32_1 = arith.constant 0 : i32
    return %c0_i32, %c0_i32_0 : i32, i32
  }
  func.func @transform_7(%arg0: i32) -> (i32, i32) {
    %c0_i32 = arith.constant 0 : i32
    %c0_i32_0 = arith.constant 0 : i32
    %c0_i32_1 = arith.constant 0 : i32
    return %c0_i32, %c0_i32_0 : i32, i32
  }
  func.func @transform_8(%arg0: i32) -> (i32, i32) {
    %c0_i32 = arith.constant 0 : i32
    %c0_i32_0 = arith.constant 0 : i32
    %c0_i32_1 = arith.constant 0 : i32
    return %c0_i32, %c0_i32_0 : i32, i32
  }
  func.func @transform_9(%arg0: i32) -> (i32, i32) {
    %c0_i32 = arith.constant 0 : i32
    %c0_i32_0 = arith.constant 0 : i32
    %c0_i32_1 = arith.constant 0 : i32
    return %c0_i32, %c0_i32_0 : i32, i32
  }
  func.func @transform_10(%arg0: i32) -> (i32, i32) {
    %c0_i32 = arith.constant 0 : i32
    %c0_i32_0 = arith.constant 0 : i32
    %c0_i32_1 = arith.constant 0 : i32
    return %c0_i32, %c0_i32_0 : i32, i32
  }
  func.func @transform_11(%arg0: i32) -> (i32, i32) {
    %c0_i32 = arith.constant 0 : i32
    %c0_i32_0 = arith.constant 0 : i32
    %c0_i32_1 = arith.constant 0 : i32
    return %c0_i32, %c0_i32_0 : i32, i32
  }
  func.func @transform_12(%arg0: i32) -> (i32, i32, i32) {
    %c0_i32 = arith.constant 0 : i32
    %c0_i32_0 = arith.constant 0 : i32
    %c0_i32_1 = arith.constant 0 : i32
    return %arg0, %c0_i32, %c0_i32_0 : i32, i32, i32
  }
}

</mosaic_0001>

<llo_original>
// kernel: _lambda_.12
$region0: #{_lambda_.12}
  #allocation0 [shape = 'u32[]', space=smem, size = 0x4, offset = 0x4, fixed_abs, tag = 'smem constant byte address 0x4 - core index']
  #allocation1 [shape = 'u32[72,128]{1,0:T(1,128)}', space=vmem, size = 0x9000, scoped, tag = 'internal scratch']
  %s0 = inlined_call_operand.vmem [shape: bf16[16,256], index: 0, kind: input, shape index: {}]
  %s1 = inlined_call_operand.vmem [shape: f32[1,256], index: 1, kind: input, shape index: {}]
  %s2 = inlined_call_operand.vmem [shape: f32[1,256], index: 2, kind: input, shape index: {}]
  %s3 = inlined_call_operand.hbm [shape: bf16[256,512], index: 3, kind: input, shape index: {}]
  %s4 = inlined_call_operand.vmem [shape: f32[1,512], index: 4, kind: input, shape index: {}]
  %s5 = inlined_call_operand.hbm [shape: bf16[512,256], index: 5, kind: input, shape index: {}]
  %s6 = inlined_call_operand.vmem [shape: f32[1,256], index: 6, kind: input, shape index: {}]
  %s7 = inlined_call_operand.vmem [shape: bf16[16,256], index: 7, kind: output, shape index: {}]
  %s8 = sld [smem:[#allocation0]]
  $region69: #{_lambda_.12} parent=0
    _
  %s10 = ssub.s32 1, %s8
  %s11 = scalar_select 0, %s10, %s8
  $region1: #{_lambda_.12} parent=0
    #allocation2 [shape = 'u8[262144]{0}', space=vmem, size = 0x40000, scoped, tag = 'input window, operand 3, single buffered']
    #allocation3 [shape = 's32[2]{0}', space=sflag, size = 0x8, scoped, tag = 'scoped memory for _lambda_.12']
    #allocation4 [shape = 'u8[262144]{0}', space=vmem, size = 0x40000, scoped, tag = 'input window, operand 5, single buffered']
    #allocation5 [shape = 's32[1]{0}', space=sflag, size = 0x4, scoped, tag = 'scoped memory for _lambda_.12']
    %12 = vsyncpa [#allocation3], 0
    %13 = vsyncpa [#allocation5], 0
    loop: start=0, step=1, limit=4
    $region2: #{_lambda_.12} parent=1 // loop_pre_header
      _
    $region3: #{_lambda_.12} parent=1 // loop_header
      %s15 = sphi 0, %s19
      %p16 = scmp.ge.s32.totalorder %s15, 4
      %s25 = sphi 0, %s27
      %s28 = sphi 0, %s25
      %s29 = sphi 0, %s28
      %s45 = sphi 0, %s29
      %s49 = sphi 0, %s49
      %s51 = sphi 0, %s49
      %s52 = sphi 0, %s51
      %s66 = sphi 0, %s52
      %s70 = sphi 0, %s70
      %s72 = sphi 0, %s70
      %s73 = sphi 0, %s72
      %s87 = sphi 0, %s73
      %s91 = sphi 0, %s91
      %s93 = sphi 0, %s91
      %s94 = sphi 0, %s93
      %s108 = sphi 0, %s94
      %s112 = sphi 0, %s112
      %s114 = sphi 0, %s112
      %s115 = sphi 0, %s114
      %s129 = sphi 0, %s115
      %s133 = sphi 0, %s133
      %s135 = sphi 0, %s133
      %s136 = sphi 0, %s135
      %s150 = sphi 0, %s136
      %s154 = sphi 0, %s154
      %s156 = sphi 0, %s154
      %s157 = sphi 0, %s156
      %s171 = sphi 0, %s157
      %s177 = sphi 0, %s179
      %s180 = sphi 0, %s177
      %s181 = sphi 0, %s180
      %s197 = sphi 0, %s181
    $region4: #{_lambda_.12} parent=1 // loop_header_branch
      %18 = sbr.rel (%p16) target = $region8
    $region5: #{_lambda_.12} parent=1 // loop_body
      %s20 = ssub.s32 %s15, 1
      %s21 = ssub.s32 %s15, 2
      %s22 = sadd.s32 %s15, 1
      %s23 = ssub.s32 %s15, %s22
      %p24 = scmp.eq.s32.totalorder %s23, 0
      %s26 = sadd.s32 %s25, 1
      %s27 = scalar_select %p24, %s25, %s26
      %p30 = pneg %p24
      %p31 = scmp.eq.s32.totalorder %s15, 1
      %p32 = por %p30, %p31
      %p33 = scmp.ne.s32.totalorder %s25, %s28
      %p34 = scmp.eq.s32.totalorder %s15, 0
      %p35 = por %p33, %p34
      %p36 = scmp.ne.s32.totalorder %s25, %s28
      %p37 = scmp.eq.s32.totalorder %s20, 1
      %p38 = por %p36, %p37
      %p39 = scmp.ne.s32.totalorder %s28, %s29
      %p40 = scmp.eq.s32.totalorder %s20, 0
      %p41 = por %p39, %p40
      %p42 = scmp.ne.s32.totalorder %s28, %s29
      %p43 = scmp.eq.s32.totalorder %s21, 1
      %p44 = por %p42, %p43
      %p46 = scmp.ne.s32.totalorder %s29, %s45
      %p47 = scmp.eq.s32.totalorder %s21, 0
      %p48 = por %p46, %p47
      %s50 = sadd.s32 %s49, 1
      %p53 = scmp.eq.s32.totalorder %s15, 1
      %p54 = scmp.ne.s32.totalorder %s49, %s51
      %p55 = scmp.eq.s32.totalorder %s15, 0
      %p56 = por %p54, %p55
      %p57 = scmp.ne.s32.totalorder %s49, %s51
      %p58 = scmp.eq.s32.totalorder %s20, 1
      %p59 = por %p57, %p58
      %p60 = scmp.ne.s32.totalorder %s51, %s52
      %p61 = scmp.eq.s32.totalorder %s20, 0
      %p62 = por %p60, %p61
      %p63 = scmp.ne.s32.totalorder %s51, %s52
      %p64 = scmp.eq.s32.totalorder %s21, 1
      %p65 = por %p63, %p64
      %p67 = scmp.ne.s32.totalorder %s52, %s66
      %p68 = scmp.eq.s32.totalorder %s21, 0
      %p69 = por %p67, %p68
      %s71 = sadd.s32 %s70, 1
      %p74 = scmp.eq.s32.totalorder %s15, 1
      %p75 = scmp.ne.s32.totalorder %s70, %s72
      %p76 = scmp.eq.s32.totalorder %s15, 0
      %p77 = por %p75, %p76
      %p78 = scmp.ne.s32.totalorder %s70, %s72
      %p79 = scmp.eq.s32.totalorder %s20, 1
      %p80 = por %p78, %p79
      %p81 = scmp.ne.s32.totalorder %s72, %s73
      %p82 = scmp.eq.s32.totalorder %s20, 0
      %p83 = por %p81, %p82
      %p84 = scmp.ne.s32.totalorder %s72, %s73
      %p85 = scmp.eq.s32.totalorder %s21, 1
      %p86 = por %p84, %p85
      %p88 = scmp.ne.s32.totalorder %s73, %s87
      %p89 = scmp.eq.s32.totalorder %s21, 0
      %p90 = por %p88, %p89
      %s92 = sadd.s32 %s91, 1
      %p95 = scmp.eq.s32.totalorder %s15, 1
      %p96 = scmp.ne.s32.totalorder %s91, %s93
      %p97 = scmp.eq.s32.totalorder %s15, 0
      %p98 = por %p96, %p97
      %p99 = scmp.ne.s32.totalorder %s91, %s93
      %p100 = scmp.eq.s32.totalorder %s20, 1
      %p101 = por %p99, %p100
      %p102 = scmp.ne.s32.totalorder %s93, %s94
      %p103 = scmp.eq.s32.totalorder %s20, 0
      %p104 = por %p102, %p103
      %p105 = scmp.ne.s32.totalorder %s93, %s94
      %p106 = scmp.eq.s32.totalorder %s21, 1
      %p107 = por %p105, %p106
      %p109 = scmp.ne.s32.totalorder %s94, %s108
      %p110 = scmp.eq.s32.totalorder %s21, 0
      %p111 = por %p109, %p110
      %s113 = sadd.s32 %s112, 1
      %p116 = scmp.eq.s32.totalorder %s15, 1
      %p117 = scmp.ne.s32.totalorder %s112, %s114
      %p118 = scmp.eq.s32.totalorder %s15, 0
      %p119 = por %p117, %p118
      %p120 = scmp.ne.s32.totalorder %s112, %s114
      %p121 = scmp.eq.s32.totalorder %s20, 1
      %p122 = por %p120, %p121
      %p123 = scmp.ne.s32.totalorder %s114, %s115
      %p124 = scmp.eq.s32.totalorder %s20, 0
      %p125 = por %p123, %p124
      %p126 = scmp.ne.s32.totalorder %s114, %s115
      %p127 = scmp.eq.s32.totalorder %s21, 1
      %p128 = por %p126, %p127
      %p130 = scmp.ne.s32.totalorder %s115, %s129
      %p131 = scmp.eq.s32.totalorder %s21, 0
      %p132 = por %p130, %p131
      %s134 = sadd.s32 %s133, 1
      %p137 = scmp.eq.s32.totalorder %s15, 1
      %p138 = scmp.ne.s32.totalorder %s133, %s135
      %p139 = scmp.eq.s32.totalorder %s15, 0
      %p140 = por %p138, %p139
      %p141 = scmp.ne.s32.totalorder %s133, %s135
      %p142 = scmp.eq.s32.totalorder %s20, 1
      %p143 = por %p141, %p142
      %p144 = scmp.ne.s32.totalorder %s135, %s136
      %p145 = scmp.eq.s32.totalorder %s20, 0
      %p146 = por %p144, %p145
      %p147 = scmp.ne.s32.totalorder %s135, %s136
      %p148 = scmp.eq.s32.totalorder %s21, 1
      %p149 = por %p147, %p148
      %p151 = scmp.ne.s32.totalorder %s136, %s150
      %p152 = scmp.eq.s32.totalorder %s21, 0
      %p153 = por %p151, %p152
      %s155 = sadd.s32 %s154, 1
      %p158 = scmp.eq.s32.totalorder %s15, 1
      %p159 = scmp.ne.s32.totalorder %s154, %s156
      %p160 = scmp.eq.s32.totalorder %s15, 0
      %p161 = por %p159, %p160
      %p162 = scmp.ne.s32.totalorder %s154, %s156
      %p163 = scmp.eq.s32.totalorder %s20, 1
      %p164 = por %p162, %p163
      %p165 = scmp.ne.s32.totalorder %s156, %s157
      %p166 = scmp.eq.s32.totalorder %s20, 0
      %p167 = por %p165, %p166
      %p168 = scmp.ne.s32.totalorder %s156, %s157
      %p169 = scmp.eq.s32.totalorder %s21, 1
      %p170 = por %p168, %p169
      %p172 = scmp.ne.s32.totalorder %s157, %s171
      %p173 = scmp.eq.s32.totalorder %s21, 0
      %p174 = por %p172, %p173
      %s175 = ssub.s32 %s15, %s22
      %p176 = scmp.eq.s32.totalorder %s175, 0
      %s178 = sadd.s32 %s177, 1
      %s179 = scalar_select %p176, %s177, %s178
      %p182 = pneg %p176
      %p183 = scmp.eq.s32.totalorder %s15, 1
      %p184 = por %p182, %p183
      %p185 = scmp.ne.s32.totalorder %s177, %s180
      %p186 = scmp.eq.s32.totalorder %s15, 0
      %p187 = por %p185, %p186
      %p188 = scmp.ne.s32.totalorder %s177, %s180
      %p189 = scmp.eq.s32.totalorder %s20, 1
      %p190 = por %p188, %p189
      %p191 = scmp.ne.s32.totalorder %s180, %s181
      %p192 = scmp.eq.s32.totalorder %s20, 0
      %p193 = por %p191, %p192
      %p194 = scmp.ne.s32.totalorder %s180, %s181
      %p195 = scmp.eq.s32.totalorder %s21, 1
      %p196 = por %p194, %p195
      %p198 = scmp.ne.s32.totalorder %s181, %s197
      %p199 = scmp.eq.s32.totalorder %s21, 0
      %p200 = por %p198, %p199
      %p201 = scmp.le.s32.totalorder 1, %s15
      %p202 = scmp.lt.s32.totalorder %s15, 3
      %p203 = pnand %p201, %p202
      %p204 = pneg %p203
      // Predicated region
      $region9: #{_lambda_.12} parent=5 // pred_check
        _
      $region10: #{_lambda_.12} parent=5 // pred_check_branch
        %206 = sbr.rel (%p203) target = $region12
      $region11: #{_lambda_.12} parent=5 // pred_region
        %s207 = ssub.s32 %s15, 1
        // Predicated region
        $region13: #{_lambda_.12} parent=11 // pred_check
          %p208 = pneg %p62
        $region14: #{_lambda_.12} parent=11 // pred_check_branch
          %210 = sbr.rel (%p208) target = $region16
        $region15: #{_lambda_.12} parent=11 // pred_region
          _
        $region16: #{_lambda_.12} parent=11 // pred_fallthru
          _
        // Predicated region
        $region17: #{_lambda_.12} parent=11 // pred_check
          %p211 = pneg %p83
        $region18: #{_lambda_.12} parent=11 // pred_check_branch
          %213 = sbr.rel (%p211) target = $region20
        $region19: #{_lambda_.12} parent=11 // pred_region
          _
        $region20: #{_lambda_.12} parent=11 // pred_fallthru
          _
        // Predicated region
        $region21: #{_lambda_.12} parent=11 // pred_check
          %p214 = pneg %p104
        $region22: #{_lambda_.12} parent=11 // pred_check_branch
          %216 = sbr.rel (%p214) target = $region24
        $region23: #{_lambda_.12} parent=11 // pred_region
          %218 = vsyncadd [#allocation3], 0
          %s219 = sshll.u32 %s3, 4
          %s220 = int_to_ptr.hbm [resolvable:$true] %s219
          %s221 = sshll.u32 [#allocation2], 4
          %s222 = int_to_ptr.vmem [resolvable:$true] %s221
          %227 = dma.hbm_to_vmem [thread:$0]  %s220, 8192, %s222, [#allocation3], 256, 256, 16
        $region24: #{_lambda_.12} parent=11 // pred_fallthru
          _
        // Predicated region
        $region25: #{_lambda_.12} parent=11 // pred_check
          %p228 = pneg %p125
        $region26: #{_lambda_.12} parent=11 // pred_check_branch
          %230 = sbr.rel (%p228) target = $region28
        $region27: #{_lambda_.12} parent=11 // pred_region
          _
        $region28: #{_lambda_.12} parent=11 // pred_fallthru
          _
        // Predicated region
        $region29: #{_lambda_.12} parent=11 // pred_check
          %p231 = pneg %p146
        $region30: #{_lambda_.12} parent=11 // pred_check_branch
          %233 = sbr.rel (%p231) target = $region32
        $region31: #{_lambda_.12} parent=11 // pred_region
          %235 = vsyncadd [#allocation5], 0
          %s236 = sshll.u32 %s5, 4
          %s237 = int_to_ptr.hbm [resolvable:$true] %s236
          %s238 = sshll.u32 [#allocation4], 4
          %s239 = int_to_ptr.vmem [resolvable:$true] %s238
          %244 = dma.hbm_to_vmem [thread:$0]  %s237, 8192, %s239, [#allocation5], 128, 128, 8
        $region32: #{_lambda_.12} parent=11 // pred_fallthru
          _
        // Predicated region
        $region33: #{_lambda_.12} parent=11 // pred_check
          %p245 = pneg %p167
        $region34: #{_lambda_.12} parent=11 // pred_check_branch
          %247 = sbr.rel (%p245) target = $region36
        $region35: #{_lambda_.12} parent=11 // pred_region
          _
        $region36: #{_lambda_.12} parent=11 // pred_fallthru
          _
      $region12: #{_lambda_.12} parent=5 // pred_fallthru
        _
      %p248 = scmp.lt.s32.totalorder %s15, 2
      // Predicated region
      $region37: #{_lambda_.12} parent=5 // pred_check
        %p249 = pneg %p248
      $region38: #{_lambda_.12} parent=5 // pred_check_branch
        %251 = sbr.rel (%p249) target = $region40
      $region39: #{_lambda_.12} parent=5 // pred_region
        // Predicated region
        $region41: #{_lambda_.12} parent=39 // pred_check
          %p252 = pneg %p35
        $region42: #{_lambda_.12} parent=39 // pred_check_branch
          %254 = sbr.rel (%p252) target = $region44
        $region43: #{_lambda_.12} parent=39 // pred_region
          %p255 = scmp.lt.s32.totalorder %s15, 1
          %s256 = scalar_select %p255, %s15, 1
          %s257 = smul.addr %s256, 2
          %s258 = smul.addr %s257, 4
          %s259 = scalar_lea.vmem %s0, %s258
        $region44: #{_lambda_.12} parent=39 // pred_fallthru
          _
      $region40: #{_lambda_.12} parent=5 // pred_fallthru
        _
      %p260 = scmp.le.s32.totalorder 1, %s15
      %p261 = scmp.lt.s32.totalorder %s15, 3
      %p262 = pnand %p260, %p261
      %p263 = pneg %p262
      // Predicated region
      $region45: #{_lambda_.12} parent=5 // pred_check
        _
      $region46: #{_lambda_.12} parent=5 // pred_check_branch
        %265 = sbr.rel (%p262) target = $region48
      $region47: #{_lambda_.12} parent=5 // pred_region
        %s266 = ssub.s32 %s15, 1
        // Predicated region
        $region49: #{_lambda_.12} parent=47 // pred_check
          %p267 = pneg %p104
        $region50: #{_lambda_.12} parent=47 // pred_check_branch
          %269 = sbr.rel (%p267) target = $region52
        $region51: #{_lambda_.12} parent=47 // pred_region
          %271 = dma.done [#allocation3], 8192
        $region52: #{_lambda_.12} parent=47 // pred_fallthru
          _
        // Predicated region
        $region53: #{_lambda_.12} parent=47 // pred_check
          %p272 = pneg %p146
        $region54: #{_lambda_.12} parent=47 // pred_check_branch
          %274 = sbr.rel (%p272) target = $region56
        $region55: #{_lambda_.12} parent=47 // pred_region
          %276 = dma.done [#allocation5], 8192
        $region56: #{_lambda_.12} parent=47 // pred_fallthru
          _
        %p277 = scmp.lt.s32.totalorder %s20, 1
        %s278 = scalar_select %p277, %s20, 1
        %s279 = smul.addr %s278, 2
        %s280 = smul.addr %s279, 4
        %s281 = scalar_lea.vmem %s0, %s280
        %p282 = pneg %p41
        %p283 = pneg %p38
        %p284 = pneg %p62
        %p285 = pneg %p59
        %p286 = pneg %p83
        %p287 = pneg %p80
        %p288 = pneg %p104
        %p289 = pneg %p101
        %p290 = pneg %p125
        %p291 = pneg %p122
        %p292 = pneg %p146
        %p293 = pneg %p143
        %p294 = pneg %p167
        %p295 = pneg %p164
        %p296 = pneg %p193
        %p297 = pneg %p190
        %p298 = scmp.lt.s32.totalorder %s20, 1
        %s299 = scalar_select %p298, %s20, 1
        %s300 = smul.addr %s299, 2
        %s301 = smul.addr %s300, 4
        %s302 = scalar_lea.vmem %s7, %s301
        %p303 = scmp.lt.s32.totalorder %s20, 1
        %s304 = scalar_select %p303, %s20, 1
        %s305 = smul.addr %s304, 2
        %s306 = smul.addr %s305, 4
        %s307 = scalar_lea.vmem %s0, %s306
        %p308 = scmp.lt.s32.totalorder %s20, 1
        %s309 = scalar_select %p308, %s20, 1
        %s310 = smul.addr %s309, 2
        %s311 = smul.addr %s310, 4
        %s312 = scalar_lea.vmem %s7, %s311
        %v313 = vld [vmem:[%s307] sm:$0xff]
        %v314 = vunpack.c.l.bf16 %v313
        %v315 = vunpack.c.h.bf16 %v313
        %v316 = vld [vmem:[%s1] sm:$0x3]
        %v317 = vld [vmem:[%s2] sm:$0x3]
        %v318 = vadd.f32 %v314, %v315
        %319 = vadd.xlane.f32.xlu0 %v318
        %v320 = vpop.xlane.xlu0 %319
        %v321 = vrcp.pop 256.0
        %v322 = vmul.f32 256.0, %v321
        %v323 = vsub.f32 1.0, %v322
        %v324 = vmul.f32 %v321, %v323
        %v325 = vadd.f32 %v321, %v324
        %vm326 = vweird.f32 %v321
        %v327 = vsel %vm326, %v321, %v325
        %v328 = vmul.f32 %v320, %v327
        %v329 = vsub.f32 %v314, %v328
        %v330 = vsub.f32 %v315, %v328
        %v331 = vmul.f32 %v329, %v329
        %v332 = vmul.f32 %v330, %v330
        %v333 = vadd.f32 %v331, %v332
        %334 = vadd.xlane.f32.xlu0 %v333
        %v335 = vpop.xlane.xlu0 %334
        %v336 = vmul.f32 %v335, %v327
        %v337 = vadd.f32 %v336, 1e-05
        %v338 = vrsqrt.pop %v337
        %v339 = vmul.f32 %v338, %v337
        %v340 = vmul.f32 %v339, %v338
        %v341 = vmul.f32 0.5, %v340
        %v342 = vsub.f32 1.5, %v341
        %v343 = vmul.f32 %v338, %v342
        %vm344 = vweird.f32 %v337
        %vm345 = vweird.f32 %v338
        %vm346 = vmor %vm344, %vm345
        %v347 = vsel %vm346, %v338, %v343
        %v348 = vmul.f32 %v329, %v347
        %v349 = vmul.f32 %v330, %v347
        %v351 = vperm.slane %v316, 0
        %v352 = vperm.slane %v316, 1
        %v355 = vmul.f32 %v348, %v351
        %v356 = vmul.f32 %v349, %v352
        %v358 = vperm.slane %v317, 0
        %v359 = vperm.slane %v317, 1
        %v362 = vadd.f32 %v355, %v358
        %v363 = vadd.f32 %v356, %v359
        %v364 = vpack.c.bf16 %v362, %v362
        %v365 = vpack.c.bf16 %v363, %v363
        %v366 = vld [vmem:[#allocation2] sm:$0xff]
        %v367 = vld [vmem:[#allocation2 + $0x8] sm:$0xff]
        %v368 = vld [vmem:[#allocation2 + $0x10] sm:$0xff]
        %v369 = vld [vmem:[#allocation2 + $0x18] sm:$0xff]
        %v370 = vld [vmem:[#allocation2 + $0x20] sm:$0xff]
        %v371 = vld [vmem:[#allocation2 + $0x28] sm:$0xff]
        %v372 = vld [vmem:[#allocation2 + $0x30] sm:$0xff]
        %v373 = vld [vmem:[#allocation2 + $0x38] sm:$0xff]
        %v374 = vld [vmem:[#allocation2 + $0x40] sm:$0xff]
        %v375 = vld [vmem:[#allocation2 + $0x48] sm:$0xff]
        %v376 = vld [vmem:[#allocation2 + $0x50] sm:$0xff]
        %v377 = vld [vmem:[#allocation2 + $0x58] sm:$0xff]
        %v378 = vld [vmem:[#allocation2 + $0x60] sm:$0xff]
        %v379 = vld [vmem:[#allocation2 + $0x68] sm:$0xff]
        %v380 = vld [vmem:[#allocation2 + $0x70] sm:$0xff]
        %v381 = vld [vmem:[#allocation2 + $0x78] sm:$0xff]
        %v382 = vld [vmem:[#allocation2 + $0x80] sm:$0xff]
        %v383 = vld [vmem:[#allocation2 + $0x88] sm:$0xff]
        %v384 = vld [vmem:[#allocation2 + $0x90] sm:$0xff]
        %v385 = vld [vmem:[#allocation2 + $0x98] sm:$0xff]
        %v386 = vld [vmem:[#allocation2 + $0xa0] sm:$0xff]
        %v387 = vld [vmem:[#allocation2 + $0xa8] sm:$0xff]
        %v388 = vld [vmem:[#allocation2 + $0xb0] sm:$0xff]
        %v389 = vld [vmem:[#allocation2 + $0xb8] sm:$0xff]
        %v390 = vld [vmem:[#allocation2 + $0xc0] sm:$0xff]
        %v391 = vld [vmem:[#allocation2 + $0xc8] sm:$0xff]
        %v392 = vld [vmem:[#allocation2 + $0xd0] sm:$0xff]
        %v393 = vld [vmem:[#allocation2 + $0xd8] sm:$0xff]
        %v394 = vld [vmem:[#allocation2 + $0xe0] sm:$0xff]
        %v395 = vld [vmem:[#allocation2 + $0xe8] sm:$0xff]
        %v396 = vld [vmem:[#allocation2 + $0xf0] sm:$0xff]
        %v397 = vld [vmem:[#allocation2 + $0xf8] sm:$0xff]
        %v398 = vld [vmem:[#allocation2 + $0x100] sm:$0xff]
        %v399 = vld [vmem:[#allocation2 + $0x108] sm:$0xff]
        %v400 = vld [vmem:[#allocation2 + $0x110] sm:$0xff]
        %v401 = vld [vmem:[#allocation2 + $0x118] sm:$0xff]
        %v402 = vld [vmem:[#allocation2 + $0x120] sm:$0xff]
        %v403 = vld [vmem:[#allocation2 + $0x128] sm:$0xff]
        %v404 = vld [vmem:[#allocation2 + $0x130] sm:$0xff]
        %v405 = vld [vmem:[#allocation2 + $0x138] sm:$0xff]
        %v406 = vld [vmem:[#allocation2 + $0x140] sm:$0xff]
        %v407 = vld [vmem:[#allocation2 + $0x148] sm:$0xff]
        %v408 = vld [vmem:[#allocation2 + $0x150] sm:$0xff]
        %v409 = vld [vmem:[#allocation2 + $0x158] sm:$0xff]
        %v410 = vld [vmem:[#allocation2 + $0x160] sm:$0xff]
        %v411 = vld [vmem:[#allocation2 + $0x168] sm:$0xff]
        %v412 = vld [vmem:[#allocation2 + $0x170] sm:$0xff]
        %v413 = vld [vmem:[#allocation2 + $0x178] sm:$0xff]
        %v414 = vld [vmem:[#allocation2 + $0x180] sm:$0xff]
        %v415 = vld [vmem:[#allocation2 + $0x188] sm:$0xff]
        %v416 = vld [vmem:[#allocation2 + $0x190] sm:$0xff]
        %v417 = vld [vmem:[#allocation2 + $0x198] sm:$0xff]
        %v418 = vld [vmem:[#allocation2 + $0x1a0] sm:$0xff]
        %v419 = vld [vmem:[#allocation2 + $0x1a8] sm:$0xff]
        %v420 = vld [vmem:[#allocation2 + $0x1b0] sm:$0xff]
        %v421 = vld [vmem:[#allocation2 + $0x1b8] sm:$0xff]
        %v422 = vld [vmem:[#allocation2 + $0x1c0] sm:$0xff]
        %v423 = vld [vmem:[#allocation2 + $0x1c8] sm:$0xff]
        %v424 = vld [vmem:[#allocation2 + $0x1d0] sm:$0xff]
        %v425 = vld [vmem:[#allocation2 + $0x1d8] sm:$0xff]
        %v426 = vld [vmem:[#allocation2 + $0x1e0] sm:$0xff]
        %v427 = vld [vmem:[#allocation2 + $0x1e8] sm:$0xff]
        %v428 = vld [vmem:[#allocation2 + $0x1f0] sm:$0xff]
        %v429 = vld [vmem:[#allocation2 + $0x1f8] sm:$0xff]
        %v430 = vld [vmem:[%s4] sm:$0xf]
        %v432 = vperm.slane %v430, 0
        %v433 = vperm.slane %v430, 1
        %v434 = vperm.slane %v430, 2
        %v435 = vperm.slane %v430, 3
        %v504 = vunpack.c.l.b16 %v366
        %v505 = vunpack.c.h.b16 %v366
        %v506 = vunpack.c.l.b16 %v367
        %v507 = vunpack.c.h.b16 %v367
        %v508 = vunpack.c.l.b16 %v368
        %v509 = vunpack.c.h.b16 %v368
        %v510 = vunpack.c.l.b16 %v369
        %v511 = vunpack.c.h.b16 %v369
        %v512 = vunpack.c.l.b16 %v370
        %v513 = vunpack.c.h.b16 %v370
        %v514 = vunpack.c.l.b16 %v371
        %v515 = vunpack.c.h.b16 %v371
        %v516 = vunpack.c.l.b16 %v372
        %v517 = vunpack.c.h.b16 %v372
        %v518 = vunpack.c.l.b16 %v373
        %v519 = vunpack.c.h.b16 %v373
        %v520 = vunpack.c.l.b16 %v374
        %v521 = vunpack.c.h.b16 %v374
        %v522 = vunpack.c.l.b16 %v375
        %v523 = vunpack.c.h.b16 %v375
        %v524 = vunpack.c.l.b16 %v376
        %v525 = vunpack.c.h.b16 %v376
        %v526 = vunpack.c.l.b16 %v377
        %v527 = vunpack.c.h.b16 %v377
        %v528 = vunpack.c.l.b16 %v378
        %v529 = vunpack.c.h.b16 %v378
        %v530 = vunpack.c.l.b16 %v379
        %v531 = vunpack.c.h.b16 %v379
        %v532 = vunpack.c.l.b16 %v380
        %v533 = vunpack.c.h.b16 %v380
        %v534 = vunpack.c.l.b16 %v381
        %v535 = vunpack.c.h.b16 %v381
        %v536 = vunpack.c.l.b16 %v382
        %v537 = vunpack.c.h.b16 %v382
        %v538 = vunpack.c.l.b16 %v383
        %v539 = vunpack.c.h.b16 %v383
        %v540 = vunpack.c.l.b16 %v384
        %v541 = vunpack.c.h.b16 %v384
        %v542 = vunpack.c.l.b16 %v385
        %v543 = vunpack.c.h.b16 %v385
        %v544 = vunpack.c.l.b16 %v386
        %v545 = vunpack.c.h.b16 %v386
        %v546 = vunpack.c.l.b16 %v387
        %v547 = vunpack.c.h.b16 %v387
        %v548 = vunpack.c.l.b16 %v388
        %v549 = vunpack.c.h.b16 %v388
        %v550 = vunpack.c.l.b16 %v389
        %v551 = vunpack.c.h.b16 %v389
        %v552 = vunpack.c.l.b16 %v390
        %v553 = vunpack.c.h.b16 %v390
        %v554 = vunpack.c.l.b16 %v391
        %v555 = vunpack.c.h.b16 %v391
        %v556 = vunpack.c.l.b16 %v392
        %v557 = vunpack.c.h.b16 %v392
        %v558 = vunpack.c.l.b16 %v393
        %v559 = vunpack.c.h.b16 %v393
        %v560 = vunpack.c.l.b16 %v394
        %v561 = vunpack.c.h.b16 %v394
        %v562 = vunpack.c.l.b16 %v395
        %v563 = vunpack.c.h.b16 %v395
        %v564 = vunpack.c.l.b16 %v396
        %v565 = vunpack.c.h.b16 %v396
        %v566 = vunpack.c.l.b16 %v397
        %v567 = vunpack.c.h.b16 %v397
        %v568 = vunpack.c.l.b16 %v398
        %v569 = vunpack.c.h.b16 %v398
        %v570 = vunpack.c.l.b16 %v399
        %v571 = vunpack.c.h.b16 %v399
        %v572 = vunpack.c.l.b16 %v400
        %v573 = vunpack.c.h.b16 %v400
        %v574 = vunpack.c.l.b16 %v401
        %v575 = vunpack.c.h.b16 %v401
        %v576 = vunpack.c.l.b16 %v402
        %v577 = vunpack.c.h.b16 %v402
        %v578 = vunpack.c.l.b16 %v403
        %v579 = vunpack.c.h.b16 %v403
        %v580 = vunpack.c.l.b16 %v404
        %v581 = vunpack.c.h.b16 %v404
        %v582 = vunpack.c.l.b16 %v405
        %v583 = vunpack.c.h.b16 %v405
        %v584 = vunpack.c.l.b16 %v406
        %v585 = vunpack.c.h.b16 %v406
        %v586 = vunpack.c.l.b16 %v407
        %v587 = vunpack.c.h.b16 %v407
        %v588 = vunpack.c.l.b16 %v408
        %v589 = vunpack.c.h.b16 %v408
        %v590 = vunpack.c.l.b16 %v409
        %v591 = vunpack.c.h.b16 %v409
        %v592 = vunpack.c.l.b16 %v410
        %v593 = vunpack.c.h.b16 %v410
        %v594 = vunpack.c.l.b16 %v411
        %v595 = vunpack.c.h.b16 %v411
        %v596 = vunpack.c.l.b16 %v412
        %v597 = vunpack.c.h.b16 %v412
        %v598 = vunpack.c.l.b16 %v413
        %v599 = vunpack.c.h.b16 %v413
        %v600 = vunpack.c.l.b16 %v414
        %v601 = vunpack.c.h.b16 %v414
        %v602 = vunpack.c.l.b16 %v415
        %v603 = vunpack.c.h.b16 %v415
        %v604 = vunpack.c.l.b16 %v416
        %v605 = vunpack.c.h.b16 %v416
        %v606 = vunpack.c.l.b16 %v417
        %v607 = vunpack.c.h.b16 %v417
        %v608 = vunpack.c.l.b16 %v418
        %v609 = vunpack.c.h.b16 %v418
        %v610 = vunpack.c.l.b16 %v419
        %v611 = vunpack.c.h.b16 %v419
        %v612 = vunpack.c.l.b16 %v420
        %v613 = vunpack.c.h.b16 %v420
        %v614 = vunpack.c.l.b16 %v421
        %v615 = vunpack.c.h.b16 %v421
        %v616 = vunpack.c.l.b16 %v422
        %v617 = vunpack.c.h.b16 %v422
        %v618 = vunpack.c.l.b16 %v423
        %v619 = vunpack.c.h.b16 %v423
        %v620 = vunpack.c.l.b16 %v424
        %v621 = vunpack.c.h.b16 %v424
        %v622 = vunpack.c.l.b16 %v425
        %v623 = vunpack.c.h.b16 %v425
        %v624 = vunpack.c.l.b16 %v426
        %v625 = vunpack.c.h.b16 %v426
        %v626 = vunpack.c.l.b16 %v427
        %v627 = vunpack.c.h.b16 %v427
        %v628 = vunpack.c.l.b16 %v428
        %v629 = vunpack.c.h.b16 %v428
        %v630 = vunpack.c.l.b16 %v429
        %v631 = vunpack.c.h.b16 %v429
        %v632 = vpack.c.b16 %v508, %v504
        %v633 = vpack.c.b16 %v509, %v505
        %v634 = vpack.c.b16 %v510, %v506
        %v635 = vpack.c.b16 %v511, %v507
        %v636 = vpack.c.b16 %v516, %v512
        %v637 = vpack.c.b16 %v517, %v513
        %v638 = vpack.c.b16 %v518, %v514
        %v639 = vpack.c.b16 %v519, %v515
        %v640 = vpack.c.b16 %v524, %v520
        %v641 = vpack.c.b16 %v525, %v521
        %v642 = vpack.c.b16 %v526, %v522
        %v643 = vpack.c.b16 %v527, %v523
        %v644 = vpack.c.b16 %v532, %v528
        %v645 = vpack.c.b16 %v533, %v529
        %v646 = vpack.c.b16 %v534, %v530
        %v647 = vpack.c.b16 %v535, %v531
        %v648 = vpack.c.b16 %v540, %v536
        %v649 = vpack.c.b16 %v541, %v537
        %v650 = vpack.c.b16 %v542, %v538
        %v651 = vpack.c.b16 %v543, %v539
        %v652 = vpack.c.b16 %v548, %v544
        %v653 = vpack.c.b16 %v549, %v545
        %v654 = vpack.c.b16 %v550, %v546
        %v655 = vpack.c.b16 %v551, %v547
        %v656 = vpack.c.b16 %v556, %v552
        %v657 = vpack.c.b16 %v557, %v553
        %v658 = vpack.c.b16 %v558, %v554
        %v659 = vpack.c.b16 %v559, %v555
        %v660 = vpack.c.b16 %v564, %v560
        %v661 = vpack.c.b16 %v565, %v561
        %v662 = vpack.c.b16 %v566, %v562
        %v663 = vpack.c.b16 %v567, %v563
        %v664 = vpack.c.b16 %v572, %v568
        %v665 = vpack.c.b16 %v573, %v569
        %v666 = vpack.c.b16 %v574, %v570
        %v667 = vpack.c.b16 %v575, %v571
        %v668 = vpack.c.b16 %v580, %v576
        %v669 = vpack.c.b16 %v581, %v577
        %v670 = vpack.c.b16 %v582, %v578
        %v671 = vpack.c.b16 %v583, %v579
        %v672 = vpack.c.b16 %v588, %v584
        %v673 = vpack.c.b16 %v589, %v585
        %v674 = vpack.c.b16 %v590, %v586
        %v675 = vpack.c.b16 %v591, %v587
        %v676 = vpack.c.b16 %v596, %v592
        %v677 = vpack.c.b16 %v597, %v593
        %v678 = vpack.c.b16 %v598, %v594
        %v679 = vpack.c.b16 %v599, %v595
        %v680 = vpack.c.b16 %v604, %v600
        %v681 = vpack.c.b16 %v605, %v601
        %v682 = vpack.c.b16 %v606, %v602
        %v683 = vpack.c.b16 %v607, %v603
        %v684 = vpack.c.b16 %v612, %v608
        %v685 = vpack.c.b16 %v613, %v609
        %v686 = vpack.c.b16 %v614, %v610
        %v687 = vpack.c.b16 %v615, %v611
        %v688 = vpack.c.b16 %v620, %v616
        %v689 = vpack.c.b16 %v621, %v617
        %v690 = vpack.c.b16 %v622, %v618
        %v691 = vpack.c.b16 %v623, %v619
        %v692 = vpack.c.b16 %v628, %v624
        %v693 = vpack.c.b16 %v629, %v625
        %v694 = vpack.c.b16 %v630, %v626
        %v695 = vpack.c.b16 %v631, %v627
        %760 = vmatpush.bf16.msra.mxu0 %v660
        %761 = vmatpush.bf16.msra.mxu0 %v656
        %762 = vmatpush.bf16.msra.mxu0 %v652
        %763 = vmatpush.bf16.msra.mxu0 %v648
        %764 = vmatpush.bf16.msra.mxu0 %v644
        %765 = vmatpush.bf16.msra.mxu0 %v640
        %766 = vmatpush.bf16.msra.mxu0 %v636
        %767 = vmatpush.bf16.msra.mxu0 %v632
        %768 = vmatmul.bf16.gmra.mxu0 %v364
        %v769 = vpop.f32.mrf.mxu0
        %v770 = vadd.f32 %v432, %v769
        %v771 = vpop.f32.mrf.mxu0
        %772 = vdwg.mxu0
        %773 = vmatpush.bf16.msra.mxu0 %v692
        %774 = vmatpush.bf16.msra.mxu0 %v688
        %775 = vmatpush.bf16.msra.mxu0 %v684
        %776 = vmatpush.bf16.msra.mxu0 %v680
        %777 = vmatpush.bf16.msra.mxu0 %v676
        %778 = vmatpush.bf16.msra.mxu0 %v672
        %779 = vmatpush.bf16.msra.mxu0 %v668
        %780 = vmatpush.bf16.msra.mxu0 %v664
        %781 = vmatmul.bf16.gmra.mxu0 %v365
        %v782 = vpop.f32.mrf.mxu0
        %v783 = vadd.f32 %v770, %v782
        %v784 = vpop.f32.mrf.mxu0
        %785 = vdwg.mxu0
        %786 = vmatpush.bf16.msra.mxu0 %v661
        %787 = vmatpush.bf16.msra.mxu0 %v657
        %788 = vmatpush.bf16.msra.mxu0 %v653
        %789 = vmatpush.bf16.msra.mxu0 %v649
        %790 = vmatpush.bf16.msra.mxu0 %v645
        %791 = vmatpush.bf16.msra.mxu0 %v641
        %792 = vmatpush.bf16.msra.mxu0 %v637
        %793 = vmatpush.bf16.msra.mxu0 %v633
        %794 = vmatmul.bf16.gmra.mxu0 %v364
        %v795 = vpop.f32.mrf.mxu0
        %v796 = vadd.f32 %v433, %v795
        %v797 = vpop.f32.mrf.mxu0
        %798 = vdwg.mxu0
        %799 = vmatpush.bf16.msra.mxu0 %v693
        %800 = vmatpush.bf16.msra.mxu0 %v689
        %801 = vmatpush.bf16.msra.mxu0 %v685
        %802 = vmatpush.bf16.msra.mxu0 %v681
        %803 = vmatpush.bf16.msra.mxu0 %v677
        %804 = vmatpush.bf16.msra.mxu0 %v673
        %805 = vmatpush.bf16.msra.mxu0 %v669
        %806 = vmatpush.bf16.msra.mxu0 %v665
        %807 = vmatmul.bf16.gmra.mxu0 %v365
        %v808 = vpop.f32.mrf.mxu0
        %v809 = vadd.f32 %v796, %v808
        %v810 = vpop.f32.mrf.mxu0
        %811 = vdwg.mxu0
        %812 = vmatpush.bf16.msra.mxu0 %v662
        %813 = vmatpush.bf16.msra.mxu0 %v658
        %814 = vmatpush.bf16.msra.mxu0 %v654
        %815 = vmatpush.bf16.msra.mxu0 %v650
        %816 = vmatpush.bf16.msra.mxu0 %v646
        %817 = vmatpush.bf16.msra.mxu0 %v642
        %818 = vmatpush.bf16.msra.mxu0 %v638
        %819 = vmatpush.bf16.msra.mxu0 %v634
        %820 = vmatmul.bf16.gmra.mxu0 %v364
        %v821 = vpop.f32.mrf.mxu0
        %v822 = vadd.f32 %v434, %v821
        %v823 = vpop.f32.mrf.mxu0
        %824 = vdwg.mxu0
        %825 = vmatpush.bf16.msra.mxu0 %v694
        %826 = vmatpush.bf16.msra.mxu0 %v690
        %827 = vmatpush.bf16.msra.mxu0 %v686
        %828 = vmatpush.bf16.msra.mxu0 %v682
        %829 = vmatpush.bf16.msra.mxu0 %v678
        %830 = vmatpush.bf16.msra.mxu0 %v674
        %831 = vmatpush.bf16.msra.mxu0 %v670
        %832 = vmatpush.bf16.msra.mxu0 %v666
        %833 = vmatmul.bf16.gmra.mxu0 %v365
        %v834 = vpop.f32.mrf.mxu0
        %v835 = vadd.f32 %v822, %v834
        %v836 = vpop.f32.mrf.mxu0
        %837 = vdwg.mxu0
        %838 = vmatpush.bf16.msra.mxu0 %v663
        %839 = vmatpush.bf16.msra.mxu0 %v659
        %840 = vmatpush.bf16.msra.mxu0 %v655
        %841 = vmatpush.bf16.msra.mxu0 %v651
        %842 = vmatpush.bf16.msra.mxu0 %v647
        %843 = vmatpush.bf16.msra.mxu0 %v643
        %844 = vmatpush.bf16.msra.mxu0 %v639
        %845 = vmatpush.bf16.msra.mxu0 %v635
        %846 = vmatmul.bf16.gmra.mxu0 %v364
        %v847 = vpop.f32.mrf.mxu0
        %v848 = vadd.f32 %v435, %v847
        %v849 = vpop.f32.mrf.mxu0
        %850 = vdwg.mxu0
        %851 = vmatpush.bf16.msra.mxu0 %v695
        %852 = vmatpush.bf16.msra.mxu0 %v691
        %853 = vmatpush.bf16.msra.mxu0 %v687
        %854 = vmatpush.bf16.msra.mxu0 %v683
        %855 = vmatpush.bf16.msra.mxu0 %v679
        %856 = vmatpush.bf16.msra.mxu0 %v675
        %857 = vmatpush.bf16.msra.mxu0 %v671
        %858 = vmatpush.bf16.msra.mxu0 %v667
        %859 = vmatmul.bf16.gmra.mxu0 %v365
        %v860 = vpop.f32.mrf.mxu0
        %v861 = vadd.f32 %v848, %v860
        %v862 = vpop.f32.mrf.mxu0
        %863 = vdwg.mxu0
        %v864 = vmax.f32 %v783, 0.0
        %v865 = vmax.f32 %v809, 0.0
        %v866 = vmax.f32 %v835, 0.0
        %v867 = vmax.f32 %v861, 0.0
        %v868 = vpack.c.bf16 %v864, %v864
        %v869 = vpack.c.bf16 %v865, %v865
        %v870 = vpack.c.bf16 %v866, %v866
        %v871 = vpack.c.bf16 %v867, %v867
        %v872 = vld [vmem:[#allocation4] sm:$0xff]
        %v873 = vld [vmem:[#allocation4 + $0x8] sm:$0xff]
        %v874 = vld [vmem:[#allocation4 + $0x10] sm:$0xff]
        %v875 = vld [vmem:[#allocation4 + $0x18] sm:$0xff]
        %v876 = vld [vmem:[#allocation4 + $0x20] sm:$0xff]
        %v877 = vld [vmem:[#allocation4 + $0x28] sm:$0xff]
        %v878 = vld [vmem:[#allocation4 + $0x30] sm:$0xff]
        %v879 = vld [vmem:[#allocation4 + $0x38] sm:$0xff]
        %v880 = vld [vmem:[#allocation4 + $0x40] sm:$0xff]
        %v881 = vld [vmem:[#allocation4 + $0x48] sm:$0xff]
        %v882 = vld [vmem:[#allocation4 + $0x50] sm:$0xff]
        %v883 = vld [vmem:[#allocation4 + $0x58] sm:$0xff]
        %v884 = vld [vmem:[#allocation4 + $0x60] sm:$0xff]
        %v885 = vld [vmem:[#allocation4 + $0x68] sm:$0xff]
        %v886 = vld [vmem:[#allocation4 + $0x70] sm:$0xff]
        %v887 = vld [vmem:[#allocation4 + $0x78] sm:$0xff]
        %v888 = vld [vmem:[#allocation4 + $0x80] sm:$0xff]
        %v889 = vld [vmem:[#allocation4 + $0x88] sm:$0xff]
        %v890 = vld [vmem:[#allocation4 + $0x90] sm:$0xff]
        %v891 = vld [vmem:[#allocation4 + $0x98] sm:$0xff]
        %v892 = vld [vmem:[#allocation4 + $0xa0] sm:$0xff]
        %v893 = vld [vmem:[#allocation4 + $0xa8] sm:$0xff]
        %v894 = vld [vmem:[#allocation4 + $0xb0] sm:$0xff]
        %v895 = vld [vmem:[#allocation4 + $0xb8] sm:$0xff]
        %v896 = vld [vmem:[#allocation4 + $0xc0] sm:$0xff]
        %v897 = vld [vmem:[#allocation4 + $0xc8] sm:$0xff]
        %v898 = vld [vmem:[#allocation4 + $0xd0] sm:$0xff]
        %v899 = vld [vmem:[#allocation4 + $0xd8] sm:$0xff]
        %v900 = vld [vmem:[#allocation4 + $0xe0] sm:$0xff]
        %v901 = vld [vmem:[#allocation4 + $0xe8] sm:$0xff]
        %v902 = vld [vmem:[#allocation4 + $0xf0] sm:$0xff]
        %v903 = vld [vmem:[#allocation4 + $0xf8] sm:$0xff]
        %v904 = vld [vmem:[#allocation4 + $0x100] sm:$0xff]
        %v905 = vld [vmem:[#allocation4 + $0x108] sm:$0xff]
        %v906 = vld [vmem:[#allocation4 + $0x110] sm:$0xff]
        %v907 = vld [vmem:[#allocation4 + $0x118] sm:$0xff]
        %v908 = vld [vmem:[#allocation4 + $0x120] sm:$0xff]
        %v909 = vld [vmem:[#allocation4 + $0x128] sm:$0xff]
        %v910 = vld [vmem:[#allocation4 + $0x130] sm:$0xff]
        %v911 = vld [vmem:[#allocation4 + $0x138] sm:$0xff]
        %v912 = vld [vmem:[#allocation4 + $0x140] sm:$0xff]
        %v913 = vld [vmem:[#allocation4 + $0x148] sm:$0xff]
        %v914 = vld [vmem:[#allocation4 + $0x150] sm:$0xff]
        %v915 = vld [vmem:[#allocation4 + $0x158] sm:$0xff]
        %v916 = vld [vmem:[#allocation4 + $0x160] sm:$0xff]
        %v917 = vld [vmem:[#allocation4 + $0x168] sm:$0xff]
        %v918 = vld [vmem:[#allocation4 + $0x170] sm:$0xff]
        %v919 = vld [vmem:[#allocation4 + $0x178] sm:$0xff]
        %v920 = vld [vmem:[#allocation4 + $0x180] sm:$0xff]
        %v921 = vld [vmem:[#allocation4 + $0x188] sm:$0xff]
        %v922 = vld [vmem:[#allocation4 + $0x190] sm:$0xff]
        %v923 = vld [vmem:[#allocation4 + $0x198] sm:$0xff]
        %v924 = vld [vmem:[#allocation4 + $0x1a0] sm:$0xff]
        %v925 = vld [vmem:[#allocation4 + $0x1a8] sm:$0xff]
        %v926 = vld [vmem:[#allocation4 + $0x1b0] sm:$0xff]
        %v927 = vld [vmem:[#allocation4 + $0x1b8] sm:$0xff]
        %v928 = vld [vmem:[#allocation4 + $0x1c0] sm:$0xff]
        %v929 = vld [vmem:[#allocation4 + $0x1c8] sm:$0xff]
        %v930 = vld [vmem:[#allocation4 + $0x1d0] sm:$0xff]
        %v931 = vld [vmem:[#allocation4 + $0x1d8] sm:$0xff]
        %v932 = vld [vmem:[#allocation4 + $0x1e0] sm:$0xff]
        %v933 = vld [vmem:[#allocation4 + $0x1e8] sm:$0xff]
        %v934 = vld [vmem:[#allocation4 + $0x1f0] sm:$0xff]
        %v935 = vld [vmem:[#allocation4 + $0x1f8] sm:$0xff]
        %v936 = vld [vmem:[%s6] sm:$0x3]
        %v938 = vperm.slane %v936, 0
        %v939 = vperm.slane %v936, 1
        %v1006 = vunpack.c.l.b16 %v872
        %v1007 = vunpack.c.h.b16 %v872
        %v1008 = vunpack.c.l.b16 %v873
        %v1009 = vunpack.c.h.b16 %v873
        %v1010 = vunpack.c.l.b16 %v874
        %v1011 = vunpack.c.h.b16 %v874
        %v1012 = vunpack.c.l.b16 %v875
        %v1013 = vunpack.c.h.b16 %v875
        %v1014 = vunpack.c.l.b16 %v876
        %v1015 = vunpack.c.h.b16 %v876
        %v1016 = vunpack.c.l.b16 %v877
        %v1017 = vunpack.c.h.b16 %v877
        %v1018 = vunpack.c.l.b16 %v878
        %v1019 = vunpack.c.h.b16 %v878
        %v1020 = vunpack.c.l.b16 %v879
        %v1021 = vunpack.c.h.b16 %v879
        %v1022 = vunpack.c.l.b16 %v880
        %v1023 = vunpack.c.h.b16 %v880
        %v1024 = vunpack.c.l.b16 %v881
        %v1025 = vunpack.c.h.b16 %v881
        %v1026 = vunpack.c.l.b16 %v882
        %v1027 = vunpack.c.h.b16 %v882
        %v1028 = vunpack.c.l.b16 %v883
        %v1029 = vunpack.c.h.b16 %v883
        %v1030 = vunpack.c.l.b16 %v884
        %v1031 = vunpack.c.h.b16 %v884
        %v1032 = vunpack.c.l.b16 %v885
        %v1033 = vunpack.c.h.b16 %v885
        %v1034 = vunpack.c.l.b16 %v886
        %v1035 = vunpack.c.h.b16 %v886
        %v1036 = vunpack.c.l.b16 %v887
        %v1037 = vunpack.c.h.b16 %v887
        %v1038 = vunpack.c.l.b16 %v888
        %v1039 = vunpack.c.h.b16 %v888
        %v1040 = vunpack.c.l.b16 %v889
        %v1041 = vunpack.c.h.b16 %v889
        %v1042 = vunpack.c.l.b16 %v890
        %v1043 = vunpack.c.h.b16 %v890
        %v1044 = vunpack.c.l.b16 %v891
        %v1045 = vunpack.c.h.b16 %v891
        %v1046 = vunpack.c.l.b16 %v892
        %v1047 = vunpack.c.h.b16 %v892
        %v1048 = vunpack.c.l.b16 %v893
        %v1049 = vunpack.c.h.b16 %v893
        %v1050 = vunpack.c.l.b16 %v894
        %v1051 = vunpack.c.h.b16 %v894
        %v1052 = vunpack.c.l.b16 %v895
        %v1053 = vunpack.c.h.b16 %v895
        %v1054 = vunpack.c.l.b16 %v896
        %v1055 = vunpack.c.h.b16 %v896
        %v1056 = vunpack.c.l.b16 %v897
        %v1057 = vunpack.c.h.b16 %v897
        %v1058 = vunpack.c.l.b16 %v898
        %v1059 = vunpack.c.h.b16 %v898
        %v1060 = vunpack.c.l.b16 %v899
        %v1061 = vunpack.c.h.b16 %v899
        %v1062 = vunpack.c.l.b16 %v900
        %v1063 = vunpack.c.h.b16 %v900
        %v1064 = vunpack.c.l.b16 %v901
        %v1065 = vunpack.c.h.b16 %v901
        %v1066 = vunpack.c.l.b16 %v902
        %v1067 = vunpack.c.h.b16 %v902
        %v1068 = vunpack.c.l.b16 %v903
        %v1069 = vunpack.c.h.b16 %v903
        %v1070 = vunpack.c.l.b16 %v904
        %v1071 = vunpack.c.h.b16 %v904
        %v1072 = vunpack.c.l.b16 %v905
        %v1073 = vunpack.c.h.b16 %v905
        %v1074 = vunpack.c.l.b16 %v906
        %v1075 = vunpack.c.h.b16 %v906
        %v1076 = vunpack.c.l.b16 %v907
        %v1077 = vunpack.c.h.b16 %v907
        %v1078 = vunpack.c.l.b16 %v908
        %v1079 = vunpack.c.h.b16 %v908
        %v1080 = vunpack.c.l.b16 %v909
        %v1081 = vunpack.c.h.b16 %v909
        %v1082 = vunpack.c.l.b16 %v910
        %v1083 = vunpack.c.h.b16 %v910
        %v1084 = vunpack.c.l.b16 %v911
        %v1085 = vunpack.c.h.b16 %v911
        %v1086 = vunpack.c.l.b16 %v912
        %v1087 = vunpack.c.h.b16 %v912
        %v1088 = vunpack.c.l.b16 %v913
        %v1089 = vunpack.c.h.b16 %v913
        %v1090 = vunpack.c.l.b16 %v914
        %v1091 = vunpack.c.h.b16 %v914
        %v1092 = vunpack.c.l.b16 %v915
        %v1093 = vunpack.c.h.b16 %v915
        %v1094 = vunpack.c.l.b16 %v916
        %v1095 = vunpack.c.h.b16 %v916
        %v1096 = vunpack.c.l.b16 %v917
        %v1097 = vunpack.c.h.b16 %v917
        %v1098 = vunpack.c.l.b16 %v918
        %v1099 = vunpack.c.h.b16 %v918
        %v1100 = vunpack.c.l.b16 %v919
        %v1101 = vunpack.c.h.b16 %v919
        %v1102 = vunpack.c.l.b16 %v920
        %v1103 = vunpack.c.h.b16 %v920
        %v1104 = vunpack.c.l.b16 %v921
        %v1105 = vunpack.c.h.b16 %v921
        %v1106 = vunpack.c.l.b16 %v922
        %v1107 = vunpack.c.h.b16 %v922
        %v1108 = vunpack.c.l.b16 %v923
        %v1109 = vunpack.c.h.b16 %v923
        %v1110 = vunpack.c.l.b16 %v924
        %v1111 = vunpack.c.h.b16 %v924
        %v1112 = vunpack.c.l.b16 %v925
        %v1113 = vunpack.c.h.b16 %v925
        %v1114 = vunpack.c.l.b16 %v926
        %v1115 = vunpack.c.h.b16 %v926
        %v1116 = vunpack.c.l.b16 %v927
        %v1117 = vunpack.c.h.b16 %v927
        %v1118 = vunpack.c.l.b16 %v928
        %v1119 = vunpack.c.h.b16 %v928
        %v1120 = vunpack.c.l.b16 %v929
        %v1121 = vunpack.c.h.b16 %v929
        %v1122 = vunpack.c.l.b16 %v930
        %v1123 = vunpack.c.h.b16 %v930
        %v1124 = vunpack.c.l.b16 %v931
        %v1125 = vunpack.c.h.b16 %v931
        %v1126 = vunpack.c.l.b16 %v932
        %v1127 = vunpack.c.h.b16 %v932
        %v1128 = vunpack.c.l.b16 %v933
        %v1129 = vunpack.c.h.b16 %v933
        %v1130 = vunpack.c.l.b16 %v934
        %v1131 = vunpack.c.h.b16 %v934
        %v1132 = vunpack.c.l.b16 %v935
        %v1133 = vunpack.c.h.b16 %v935
        %v1134 = vpack.c.b16 %v1008, %v1006
        %v1135 = vpack.c.b16 %v1009, %v1007
        %v1136 = vpack.c.b16 %v1012, %v1010
        %v1137 = vpack.c.b16 %v1013, %v1011
        %v1138 = vpack.c.b16 %v1016, %v1014
        %v1139 = vpack.c.b16 %v1017, %v1015
        %v1140 = vpack.c.b16 %v1020, %v1018
        %v1141 = vpack.c.b16 %v1021, %v1019
        %v1142 = vpack.c.b16 %v1024, %v1022
        %v1143 = vpack.c.b16 %v1025, %v1023
        %v1144 = vpack.c.b16 %v1028, %v1026
        %v1145 = vpack.c.b16 %v1029, %v1027
        %v1146 = vpack.c.b16 %v1032, %v1030
        %v1147 = vpack.c.b16 %v1033, %v1031
        %v1148 = vpack.c.b16 %v1036, %v1034
        %v1149 = vpack.c.b16 %v1037, %v1035
        %v1150 = vpack.c.b16 %v1040, %v1038
        %v1151 = vpack.c.b16 %v1041, %v1039
        %v1152 = vpack.c.b16 %v1044, %v1042
        %v1153 = vpack.c.b16 %v1045, %v1043
        %v1154 = vpack.c.b16 %v1048, %v1046
        %v1155 = vpack.c.b16 %v1049, %v1047
        %v1156 = vpack.c.b16 %v1052, %v1050
        %v1157 = vpack.c.b16 %v1053, %v1051
        %v1158 = vpack.c.b16 %v1056, %v1054
        %v1159 = vpack.c.b16 %v1057, %v1055
        %v1160 = vpack.c.b16 %v1060, %v1058
        %v1161 = vpack.c.b16 %v1061, %v1059
        %v1162 = vpack.c.b16 %v1064, %v1062
        %v1163 = vpack.c.b16 %v1065, %v1063
        %v1164 = vpack.c.b16 %v1068, %v1066
        %v1165 = vpack.c.b16 %v1069, %v1067
        %v1166 = vpack.c.b16 %v1072, %v1070
        %v1167 = vpack.c.b16 %v1073, %v1071
        %v1168 = vpack.c.b16 %v1076, %v1074
        %v1169 = vpack.c.b16 %v1077, %v1075
        %v1170 = vpack.c.b16 %v1080, %v1078
        %v1171 = vpack.c.b16 %v1081, %v1079
        %v1172 = vpack.c.b16 %v1084, %v1082
        %v1173 = vpack.c.b16 %v1085, %v1083
        %v1174 = vpack.c.b16 %v1088, %v1086
        %v1175 = vpack.c.b16 %v1089, %v1087
        %v1176 = vpack.c.b16 %v1092, %v1090
        %v1177 = vpack.c.b16 %v1093, %v1091
        %v1178 = vpack.c.b16 %v1096, %v1094
        %v1179 = vpack.c.b16 %v1097, %v1095
        %v1180 = vpack.c.b16 %v1100, %v1098
        %v1181 = vpack.c.b16 %v1101, %v1099
        %v1182 = vpack.c.b16 %v1104, %v1102
        %v1183 = vpack.c.b16 %v1105, %v1103
        %v1184 = vpack.c.b16 %v1108, %v1106
        %v1185 = vpack.c.b16 %v1109, %v1107
        %v1186 = vpack.c.b16 %v1112, %v1110
        %v1187 = vpack.c.b16 %v1113, %v1111
        %v1188 = vpack.c.b16 %v1116, %v1114
        %v1189 = vpack.c.b16 %v1117, %v1115
        %v1190 = vpack.c.b16 %v1120, %v1118
        %v1191 = vpack.c.b16 %v1121, %v1119
        %v1192 = vpack.c.b16 %v1124, %v1122
        %v1193 = vpack.c.b16 %v1125, %v1123
        %v1194 = vpack.c.b16 %v1128, %v1126
        %v1195 = vpack.c.b16 %v1129, %v1127
        %v1196 = vpack.c.b16 %v1132, %v1130
        %v1197 = vpack.c.b16 %v1133, %v1131
        %1262 = vmatpush.bf16.msra.mxu0 %v1148
        %1263 = vmatpush.bf16.msra.mxu0 %v1146
        %1264 = vmatpush.bf16.msra.mxu0 %v1144
        %1265 = vmatpush.bf16.msra.mxu0 %v1142
        %1266 = vmatpush.bf16.msra.mxu0 %v1140
        %1267 = vmatpush.bf16.msra.mxu0 %v1138
        %1268 = vmatpush.bf16.msra.mxu0 %v1136
        %1269 = vmatpush.bf16.msra.mxu0 %v1134
        %1270 = vmatmul.bf16.gmra.mxu0 %v868
        %v1271 = vpop.f32.mrf.mxu0
        %v1272 = vadd.f32 %v938, %v1271
        %v1273 = vpop.f32.mrf.mxu0
        %1274 = vdwg.mxu0
        %1275 = vmatpush.bf16.msra.mxu0 %v1164
        %1276 = vmatpush.bf16.msra.mxu0 %v1162
        %1277 = vmatpush.bf16.msra.mxu0 %v1160
        %1278 = vmatpush.bf16.msra.mxu0 %v1158
        %1279 = vmatpush.bf16.msra.mxu0 %v1156
        %1280 = vmatpush.bf16.msra.mxu0 %v1154
        %1281 = vmatpush.bf16.msra.mxu0 %v1152
        %1282 = vmatpush.bf16.msra.mxu0 %v1150
        %1283 = vmatmul.bf16.gmra.mxu0 %v869
        %v1284 = vpop.f32.mrf.mxu0
        %v1285 = vadd.f32 %v1272, %v1284
        %v1286 = vpop.f32.mrf.mxu0
        %1287 = vdwg.mxu0
        %1288 = vmatpush.bf16.msra.mxu0 %v1180
        %1289 = vmatpush.bf16.msra.mxu0 %v1178
        %1290 = vmatpush.bf16.msra.mxu0 %v1176
        %1291 = vmatpush.bf16.msra.mxu0 %v1174
        %1292 = vmatpush.bf16.msra.mxu0 %v1172
        %1293 = vmatpush.bf16.msra.mxu0 %v1170
        %1294 = vmatpush.bf16.msra.mxu0 %v1168
        %1295 = vmatpush.bf16.msra.mxu0 %v1166
        %1296 = vmatmul.bf16.gmra.mxu0 %v870
        %v1297 = vpop.f32.mrf.mxu0
        %v1298 = vadd.f32 %v1285, %v1297
        %v1299 = vpop.f32.mrf.mxu0
        %1300 = vdwg.mxu0
        %1301 = vmatpush.bf16.msra.mxu0 %v1196
        %1302 = vmatpush.bf16.msra.mxu0 %v1194
        %1303 = vmatpush.bf16.msra.mxu0 %v1192
        %1304 = vmatpush.bf16.msra.mxu0 %v1190
        %1305 = vmatpush.bf16.msra.mxu0 %v1188
        %1306 = vmatpush.bf16.msra.mxu0 %v1186
        %1307 = vmatpush.bf16.msra.mxu0 %v1184
        %1308 = vmatpush.bf16.msra.mxu0 %v1182
        %1309 = vmatmul.bf16.gmra.mxu0 %v871
        %v1310 = vpop.f32.mrf.mxu0
        %v1311 = vadd.f32 %v1298, %v1310
        %v1312 = vpop.f32.mrf.mxu0
        %1313 = vdwg.mxu0
        %1314 = vmatpush.bf16.msra.mxu0 %v1149
        %1315 = vmatpush.bf16.msra.mxu0 %v1147
        %1316 = vmatpush.bf16.msra.mxu0 %v1145
        %1317 = vmatpush.bf16.msra.mxu0 %v1143
        %1318 = vmatpush.bf16.msra.mxu0 %v1141
        %1319 = vmatpush.bf16.msra.mxu0 %v1139
        %1320 = vmatpush.bf16.msra.mxu0 %v1137
        %1321 = vmatpush.bf16.msra.mxu0 %v1135
        %1322 = vmatmul.bf16.gmra.mxu0 %v868
        %v1323 = vpop.f32.mrf.mxu0
        %v1324 = vadd.f32 %v939, %v1323
        %v1325 = vpop.f32.mrf.mxu0
        %1326 = vdwg.mxu0
        %1327 = vmatpush.bf16.msra.mxu0 %v1165
        %1328 = vmatpush.bf16.msra.mxu0 %v1163
        %1329 = vmatpush.bf16.msra.mxu0 %v1161
        %1330 = vmatpush.bf16.msra.mxu0 %v1159
        %1331 = vmatpush.bf16.msra.mxu0 %v1157
        %1332 = vmatpush.bf16.msra.mxu0 %v1155
        %1333 = vmatpush.bf16.msra.mxu0 %v1153
        %1334 = vmatpush.bf16.msra.mxu0 %v1151
        %1335 = vmatmul.bf16.gmra.mxu0 %v869
        %v1336 = vpop.f32.mrf.mxu0
        %v1337 = vadd.f32 %v1324, %v1336
        %v1338 = vpop.f32.mrf.mxu0
        %1339 = vdwg.mxu0
        %1340 = vmatpush.bf16.msra.mxu0 %v1181
        %1341 = vmatpush.bf16.msra.mxu0 %v1179
        %1342 = vmatpush.bf16.msra.mxu0 %v1177
        %1343 = vmatpush.bf16.msra.mxu0 %v1175
        %1344 = vmatpush.bf16.msra.mxu0 %v1173
        %1345 = vmatpush.bf16.msra.mxu0 %v1171
        %1346 = vmatpush.bf16.msra.mxu0 %v1169
        %1347 = vmatpush.bf16.msra.mxu0 %v1167
        %1348 = vmatmul.bf16.gmra.mxu0 %v870
        %v1349 = vpop.f32.mrf.mxu0
        %v1350 = vadd.f32 %v1337, %v1349
        %v1351 = vpop.f32.mrf.mxu0
        %1352 = vdwg.mxu0
        %1353 = vmatpush.bf16.msra.mxu0 %v1197
        %1354 = vmatpush.bf16.msra.mxu0 %v1195
        %1355 = vmatpush.bf16.msra.mxu0 %v1193
        %1356 = vmatpush.bf16.msra.mxu0 %v1191
        %1357 = vmatpush.bf16.msra.mxu0 %v1189
        %1358 = vmatpush.bf16.msra.mxu0 %v1187
        %1359 = vmatpush.bf16.msra.mxu0 %v1185
        %1360 = vmatpush.bf16.msra.mxu0 %v1183
        %1361 = vmatmul.bf16.gmra.mxu0 %v871
        %v1362 = vpop.f32.mrf.mxu0
        %v1363 = vadd.f32 %v1350, %v1362
        %v1364 = vpop.f32.mrf.mxu0
        %1365 = vdwg.mxu0
        %v1366 = vadd.f32 %v314, %v1311
        %v1367 = vadd.f32 %v315, %v1363
        %v1368 = vpack.c.bf16 %v1367, %v1366
        %1369 = vst [vmem:[%s312] sm:$0xff] %v1368
        %p1370 = scmp.lt.s32.totalorder %s20, 1
        %s1371 = scalar_select %p1370, %s20, 1
        %s1372 = smul.addr %s1371, 2
        %s1373 = smul.addr %s1372, 4
        %s1374 = scalar_lea.vmem %s7, %s1373
        // Predicated region
        $region57: #{_lambda_.12} parent=47 // pred_check
          %p1375 = pneg %p190
        $region58: #{_lambda_.12} parent=47 // pred_check_branch
          %1377 = sbr.rel (%p1375) target = $region60
        $region59: #{_lambda_.12} parent=47 // pred_region
          _
        $region60: #{_lambda_.12} parent=47 // pred_fallthru
          _
      $region48: #{_lambda_.12} parent=5 // pred_fallthru
        _
      %p1378 = scmp.le.s32.totalorder 2, %s15
      // Predicated region
      $region61: #{_lambda_.12} parent=5 // pred_check
        %p1379 = pneg %p1378
      $region62: #{_lambda_.12} parent=5 // pred_check_branch
        %1381 = sbr.rel (%p1379) target = $region64
      $region63: #{_lambda_.12} parent=5 // pred_region
        %s1382 = ssub.s32 %s15, 2
        // Predicated region
        $region65: #{_lambda_.12} parent=63 // pred_check
          %p1383 = pneg %p196
        $region66: #{_lambda_.12} parent=63 // pred_check_branch
          %1385 = sbr.rel (%p1383) target = $region68
        $region67: #{_lambda_.12} parent=63 // pred_region
          %p1386 = scmp.lt.s32.totalorder %s21, 1
          %s1387 = scalar_select %p1386, %s21, 1
          %s1388 = smul.addr %s1387, 2
          %s1389 = smul.addr %s1388, 4
          %s1390 = scalar_lea.vmem %s7, %s1389
        $region68: #{_lambda_.12} parent=63 // pred_fallthru
          _
      $region64: #{_lambda_.12} parent=5 // pred_fallthru
        _
    $region6: #{_lambda_.12} parent=1 // loop_footer
      %s19 = sadd.s32 1, %s15
    $region7: #{_lambda_.12} parent=1 // loop_footer_branch
      %14 = sbr.rel target = $region3
    $region8: #{_lambda_.12} parent=1 // loop_exit
      _
    %1391 = vsyncpa [#allocation3], 1
    %s1392 = scalar_lea.sflag [#allocation3], 1
    %1393 = vsyncpa %s1392, 1
    %1394 = vsyncpa [#allocation5], 1

// kernel: _lambda_.15
$region0: #{_lambda_.15}
  #allocation0 [shape = 'u32[]', space=smem, size = 0x4, offset = 0x4, fixed_abs, tag = 'smem constant byte address 0x4 - core index']
  #allocation1 [shape = 'u32[72,128]{1,0:T(1,128)}', space=vmem, size = 0x9000, scoped, tag = 'internal scratch']
  %s0 = inlined_call_operand.vmem [shape: bf16[2,8,256], index: 0, kind: input, shape index: {}]
  %s1 = inlined_call_operand.vmem [shape: f32[2,1,8], index: 1, kind: input, shape index: {}]
  %s2 = inlined_call_operand.vmem [shape: f32[1,256], index: 2, kind: input, shape index: {}]
  %s3 = inlined_call_operand.vmem [shape: f32[1,256], index: 3, kind: input, shape index: {}]
  %s4 = inlined_call_operand.hbm [shape: bf16[256,768], index: 4, kind: input, shape index: {}]
  %s5 = inlined_call_operand.vmem [shape: f32[1,768], index: 5, kind: input, shape index: {}]
  %s6 = inlined_call_operand.vmem [shape: bf16[256,256], index: 6, kind: input, shape index: {}]
  %s7 = inlined_call_operand.vmem [shape: f32[1,256], index: 7, kind: input, shape index: {}]
  %s8 = inlined_call_operand.vmem [shape: bf16[2,8,256], index: 8, kind: output, shape index: {}]
  %s9 = sld [smem:[#allocation0]]
  $region69: #{_lambda_.15} parent=0
    _
  %s11 = ssub.s32 1, %s9
  %s12 = scalar_select 0, %s11, %s9
  $region1: #{_lambda_.15} parent=0
    #allocation2 [shape = 'u8[393216]{0}', space=vmem, size = 0x60000, scoped, tag = 'input window, operand 4, single buffered']
    #allocation3 [shape = 's32[2]{0}', space=sflag, size = 0x8, scoped, tag = 'scoped memory for _lambda_.15']
    %13 = vsyncpa [#allocation3], 0
    loop: start=0, step=1, limit=4
    $region2: #{_lambda_.15} parent=1 // loop_pre_header
      _
    $region3: #{_lambda_.15} parent=1 // loop_header
      %s15 = sphi 0, %s19
      %p16 = scmp.ge.s32.totalorder %s15, 4
      %s25 = sphi 0, %s27
      %s28 = sphi 0, %s25
      %s29 = sphi 0, %s28
      %s45 = sphi 0, %s29
      %s51 = sphi 0, %s53
      %s54 = sphi 0, %s51
      %s55 = sphi 0, %s54
      %s71 = sphi 0, %s55
      %s75 = sphi 0, %s75
      %s77 = sphi 0, %s75
      %s78 = sphi 0, %s77
      %s92 = sphi 0, %s78
      %s96 = sphi 0, %s96
      %s98 = sphi 0, %s96
      %s99 = sphi 0, %s98
      %s113 = sphi 0, %s99
      %s117 = sphi 0, %s117
      %s119 = sphi 0, %s117
      %s120 = sphi 0, %s119
      %s134 = sphi 0, %s120
      %s138 = sphi 0, %s138
      %s140 = sphi 0, %s138
      %s141 = sphi 0, %s140
      %s155 = sphi 0, %s141
      %s159 = sphi 0, %s159
      %s161 = sphi 0, %s159
      %s162 = sphi 0, %s161
      %s176 = sphi 0, %s162
      %s180 = sphi 0, %s180
      %s182 = sphi 0, %s180
      %s183 = sphi 0, %s182
      %s197 = sphi 0, %s183
      %s203 = sphi 0, %s205
      %s206 = sphi 0, %s203
      %s207 = sphi 0, %s206
      %s223 = sphi 0, %s207
    $region4: #{_lambda_.15} parent=1 // loop_header_branch
      %18 = sbr.rel (%p16) target = $region8
    $region5: #{_lambda_.15} parent=1 // loop_body
      %s20 = ssub.s32 %s15, 1
      %s21 = ssub.s32 %s15, 2
      %s22 = sadd.s32 %s15, 1
      %s23 = ssub.s32 %s15, %s22
      %p24 = scmp.eq.s32.totalorder %s23, 0
      %s26 = sadd.s32 %s25, 1
      %s27 = scalar_select %p24, %s25, %s26
      %p30 = pneg %p24
      %p31 = scmp.eq.s32.totalorder %s15, 1
      %p32 = por %p30, %p31
      %p33 = scmp.ne.s32.totalorder %s25, %s28
      %p34 = scmp.eq.s32.totalorder %s15, 0
      %p35 = por %p33, %p34
      %p36 = scmp.ne.s32.totalorder %s25, %s28
      %p37 = scmp.eq.s32.totalorder %s20, 1
      %p38 = por %p36, %p37
      %p39 = scmp.ne.s32.totalorder %s28, %s29
      %p40 = scmp.eq.s32.totalorder %s20, 0
      %p41 = por %p39, %p40
      %p42 = scmp.ne.s32.totalorder %s28, %s29
      %p43 = scmp.eq.s32.totalorder %s21, 1
      %p44 = por %p42, %p43
      %p46 = scmp.ne.s32.totalorder %s29, %s45
      %p47 = scmp.eq.s32.totalorder %s21, 0
      %p48 = por %p46, %p47
      %s49 = ssub.s32 %s15, %s22
      %p50 = scmp.eq.s32.totalorder %s49, 0
      %s52 = sadd.s32 %s51, 1
      %s53 = scalar_select %p50, %s51, %s52
      %p56 = pneg %p50
      %p57 = scmp.eq.s32.totalorder %s15, 1
      %p58 = por %p56, %p57
      %p59 = scmp.ne.s32.totalorder %s51, %s54
      %p60 = scmp.eq.s32.totalorder %s15, 0
      %p61 = por %p59, %p60
      %p62 = scmp.ne.s32.totalorder %s51, %s54
      %p63 = scmp.eq.s32.totalorder %s20, 1
      %p64 = por %p62, %p63
      %p65 = scmp.ne.s32.totalorder %s54, %s55
      %p66 = scmp.eq.s32.totalorder %s20, 0
      %p67 = por %p65, %p66
      %p68 = scmp.ne.s32.totalorder %s54, %s55
      %p69 = scmp.eq.s32.totalorder %s21, 1
      %p70 = por %p68, %p69
      %p72 = scmp.ne.s32.totalorder %s55, %s71
      %p73 = scmp.eq.s32.totalorder %s21, 0
      %p74 = por %p72, %p73
      %s76 = sadd.s32 %s75, 1
      %p79 = scmp.eq.s32.totalorder %s15, 1
      %p80 = scmp.ne.s32.totalorder %s75, %s77
      %p81 = scmp.eq.s32.totalorder %s15, 0
      %p82 = por %p80, %p81
      %p83 = scmp.ne.s32.totalorder %s75, %s77
      %p84 = scmp.eq.s32.totalorder %s20, 1
      %p85 = por %p83, %p84
      %p86 = scmp.ne.s32.totalorder %s77, %s78
      %p87 = scmp.eq.s32.totalorder %s20, 0
      %p88 = por %p86, %p87
      %p89 = scmp.ne.s32.totalorder %s77, %s78
      %p90 = scmp.eq.s32.totalorder %s21, 1
      %p91 = por %p89, %p90
      %p93 = scmp.ne.s32.totalorder %s78, %s92
      %p94 = scmp.eq.s32.totalorder %s21, 0
      %p95 = por %p93, %p94
      %s97 = sadd.s32 %s96, 1
      %p100 = scmp.eq.s32.totalorder %s15, 1
      %p101 = scmp.ne.s32.totalorder %s96, %s98
      %p102 = scmp.eq.s32.totalorder %s15, 0
      %p103 = por %p101, %p102
      %p104 = scmp.ne.s32.totalorder %s96, %s98
      %p105 = scmp.eq.s32.totalorder %s20, 1
      %p106 = por %p104, %p105
      %p107 = scmp.ne.s32.totalorder %s98, %s99
      %p108 = scmp.eq.s32.totalorder %s20, 0
      %p109 = por %p107, %p108
      %p110 = scmp.ne.s32.totalorder %s98, %s99
      %p111 = scmp.eq.s32.totalorder %s21, 1
      %p112 = por %p110, %p111
      %p114 = scmp.ne.s32.totalorder %s99, %s113
      %p115 = scmp.eq.s32.totalorder %s21, 0
      %p116 = por %p114, %p115
      %s118 = sadd.s32 %s117, 1
      %p121 = scmp.eq.s32.totalorder %s15, 1
      %p122 = scmp.ne.s32.totalorder %s117, %s119
      %p123 = scmp.eq.s32.totalorder %s15, 0
      %p124 = por %p122, %p123
      %p125 = scmp.ne.s32.totalorder %s117, %s119
      %p126 = scmp.eq.s32.totalorder %s20, 1
      %p127 = por %p125, %p126
      %p128 = scmp.ne.s32.totalorder %s119, %s120
      %p129 = scmp.eq.s32.totalorder %s20, 0
      %p130 = por %p128, %p129
      %p131 = scmp.ne.s32.totalorder %s119, %s120
      %p132 = scmp.eq.s32.totalorder %s21, 1
      %p133 = por %p131, %p132
      %p135 = scmp.ne.s32.totalorder %s120, %s134
      %p136 = scmp.eq.s32.totalorder %s21, 0
      %p137 = por %p135, %p136
      %s139 = sadd.s32 %s138, 1
      %p142 = scmp.eq.s32.totalorder %s15, 1
      %p143 = scmp.ne.s32.totalorder %s138, %s140
      %p144 = scmp.eq.s32.totalorder %s15, 0
      %p145 = por %p143, %p144
      %p146 = scmp.ne.s32.totalorder %s138, %s140
      %p147 = scmp.eq.s32.totalorder %s20, 1
      %p148 = por %p146, %p147
      %p149 = scmp.ne.s32.totalorder %s140, %s141
      %p150 = scmp.eq.s32.totalorder %s20, 0
      %p151 = por %p149, %p150
      %p152 = scmp.ne.s32.totalorder %s140, %s141
      %p153 = scmp.eq.s32.totalorder %s21, 1
      %p154 = por %p152, %p153
      %p156 = scmp.ne.s32.totalorder %s141, %s155
      %p157 = scmp.eq.s32.totalorder %s21, 0
      %p158 = por %p156, %p157
      %s160 = sadd.s32 %s159, 1
      %p163 = scmp.eq.s32.totalorder %s15, 1
      %p164 = scmp.ne.s32.totalorder %s159, %s161
      %p165 = scmp.eq.s32.totalorder %s15, 0
      %p166 = por %p164, %p165
      %p167 = scmp.ne.s32.totalorder %s159, %s161
      %p168 = scmp.eq.s32.totalorder %s20, 1
      %p169 = por %p167, %p168
      %p170 = scmp.ne.s32.totalorder %s161, %s162
      %p171 = scmp.eq.s32.totalorder %s20, 0
      %p172 = por %p170, %p171
      %p173 = scmp.ne.s32.totalorder %s161, %s162
      %p174 = scmp.eq.s32.totalorder %s21, 1
      %p175 = por %p173, %p174
      %p177 = scmp.ne.s32.totalorder %s162, %s176
      %p178 = scmp.eq.s32.totalorder %s21, 0
      %p179 = por %p177, %p178
      %s181 = sadd.s32 %s180, 1
      %p184 = scmp.eq.s32.totalorder %s15, 1
      %p185 = scmp.ne.s32.totalorder %s180, %s182
      %p186 = scmp.eq.s32.totalorder %s15, 0
      %p187 = por %p185, %p186
      %p188 = scmp.ne.s32.totalorder %s180, %s182
      %p189 = scmp.eq.s32.totalorder %s20, 1
      %p190 = por %p188, %p189
      %p191 = scmp.ne.s32.totalorder %s182, %s183
      %p192 = scmp.eq.s32.totalorder %s20, 0
      %p193 = por %p191, %p192
      %p194 = scmp.ne.s32.totalorder %s182, %s183
      %p195 = scmp.eq.s32.totalorder %s21, 1
      %p196 = por %p194, %p195
      %p198 = scmp.ne.s32.totalorder %s183, %s197
      %p199 = scmp.eq.s32.totalorder %s21, 0
      %p200 = por %p198, %p199
      %s201 = ssub.s32 %s15, %s22
      %p202 = scmp.eq.s32.totalorder %s201, 0
      %s204 = sadd.s32 %s203, 1
      %s205 = scalar_select %p202, %s203, %s204
      %p208 = pneg %p202
      %p209 = scmp.eq.s32.totalorder %s15, 1
      %p210 = por %p208, %p209
      %p211 = scmp.ne.s32.totalorder %s203, %s206
      %p212 = scmp.eq.s32.totalorder %s15, 0
      %p213 = por %p211, %p212
      %p214 = scmp.ne.s32.totalorder %s203, %s206
      %p215 = scmp.eq.s32.totalorder %s20, 1
      %p216 = por %p214, %p215
      %p217 = scmp.ne.s32.totalorder %s206, %s207
      %p218 = scmp.eq.s32.totalorder %s20, 0
      %p219 = por %p217, %p218
      %p220 = scmp.ne.s32.totalorder %s206, %s207
      %p221 = scmp.eq.s32.totalorder %s21, 1
      %p222 = por %p220, %p221
      %p224 = scmp.ne.s32.totalorder %s207, %s223
      %p225 = scmp.eq.s32.totalorder %s21, 0
      %p226 = por %p224, %p225
      %p227 = scmp.le.s32.totalorder 1, %s15
      %p228 = scmp.lt.s32.totalorder %s15, 3
      %p229 = pnand %p227, %p228
      %p230 = pneg %p229
      // Predicated region
      $region9: #{_lambda_.15} parent=5 // pred_check
        _
      $region10: #{_lambda_.15} parent=5 // pred_check_branch
        %232 = sbr.rel (%p229) target = $region12
      $region11: #{_lambda_.15} parent=5 // pred_region
        %s233 = ssub.s32 %s15, 1
        // Predicated region
        $region13: #{_lambda_.15} parent=11 // pred_check
          %p234 = pneg %p88
        $region14: #{_lambda_.15} parent=11 // pred_check_branch
          %236 = sbr.rel (%p234) target = $region16
        $region15: #{_lambda_.15} parent=11 // pred_region
          _
        $region16: #{_lambda_.15} parent=11 // pred_fallthru
          _
        // Predicated region
        $region17: #{_lambda_.15} parent=11 // pred_check
          %p237 = pneg %p109
        $region18: #{_lambda_.15} parent=11 // pred_check_branch
          %239 = sbr.rel (%p237) target = $region20
        $region19: #{_lambda_.15} parent=11 // pred_region
          _
        $region20: #{_lambda_.15} parent=11 // pred_fallthru
          _
        // Predicated region
        $region21: #{_lambda_.15} parent=11 // pred_check
          %p240 = pneg %p130
        $region22: #{_lambda_.15} parent=11 // pred_check_branch
          %242 = sbr.rel (%p240) target = $region24
        $region23: #{_lambda_.15} parent=11 // pred_region
          %244 = vsyncadd [#allocation3], 0
          %s245 = sshll.u32 %s4, 4
          %s246 = int_to_ptr.hbm [resolvable:$true] %s245
          %s247 = sshll.u32 [#allocation2], 4
          %s248 = int_to_ptr.vmem [resolvable:$true] %s247
          %253 = dma.hbm_to_vmem [thread:$0]  %s246, 12288, %s248, [#allocation3], 384, 384, 24
        $region24: #{_lambda_.15} parent=11 // pred_fallthru
          _
        // Predicated region
        $region25: #{_lambda_.15} parent=11 // pred_check
          %p254 = pneg %p151
        $region26: #{_lambda_.15} parent=11 // pred_check_branch
          %256 = sbr.rel (%p254) target = $region28
        $region27: #{_lambda_.15} parent=11 // pred_region
          _
        $region28: #{_lambda_.15} parent=11 // pred_fallthru
          _
        // Predicated region
        $region29: #{_lambda_.15} parent=11 // pred_check
          %p257 = pneg %p172
        $region30: #{_lambda_.15} parent=11 // pred_check_branch
          %259 = sbr.rel (%p257) target = $region32
        $region31: #{_lambda_.15} parent=11 // pred_region
          _
        $region32: #{_lambda_.15} parent=11 // pred_fallthru
          _
        // Predicated region
        $region33: #{_lambda_.15} parent=11 // pred_check
          %p260 = pneg %p193
        $region34: #{_lambda_.15} parent=11 // pred_check_branch
          %262 = sbr.rel (%p260) target = $region36
        $region35: #{_lambda_.15} parent=11 // pred_region
          _
        $region36: #{_lambda_.15} parent=11 // pred_fallthru
          _
      $region12: #{_lambda_.15} parent=5 // pred_fallthru
        _
      %p263 = scmp.lt.s32.totalorder %s15, 2
      // Predicated region
      $region37: #{_lambda_.15} parent=5 // pred_check
        %p264 = pneg %p263
      $region38: #{_lambda_.15} parent=5 // pred_check_branch
        %266 = sbr.rel (%p264) target = $region40
      $region39: #{_lambda_.15} parent=5 // pred_region
        // Predicated region
        $region41: #{_lambda_.15} parent=39 // pred_check
          %p267 = pneg %p35
        $region42: #{_lambda_.15} parent=39 // pred_check_branch
          %269 = sbr.rel (%p267) target = $region44
        $region43: #{_lambda_.15} parent=39 // pred_region
          %p270 = scmp.lt.s32.totalorder %s15, 1
          %s271 = scalar_select %p270, %s15, 1
          %s272 = smul.addr %s271, 2
          %s273 = smul.addr %s272, 4
          %s274 = scalar_lea.vmem %s0, %s273
        $region44: #{_lambda_.15} parent=39 // pred_fallthru
          _
        // Predicated region
        $region45: #{_lambda_.15} parent=39 // pred_check
          %p275 = pneg %p61
        $region46: #{_lambda_.15} parent=39 // pred_check_branch
          %277 = sbr.rel (%p275) target = $region48
        $region47: #{_lambda_.15} parent=39 // pred_region
          %p278 = scmp.lt.s32.totalorder %s15, 1
          %s279 = scalar_select %p278, %s15, 1
          %s280 = scalar_lea.vmem %s1, %s279
        $region48: #{_lambda_.15} parent=39 // pred_fallthru
          _
      $region40: #{_lambda_.15} parent=5 // pred_fallthru
        _
      %p281 = scmp.le.s32.totalorder 1, %s15
      %p282 = scmp.lt.s32.totalorder %s15, 3
      %p283 = pnand %p281, %p282
      %p284 = pneg %p283
      // Predicated region
      $region49: #{_lambda_.15} parent=5 // pred_check
        _
      $region50: #{_lambda_.15} parent=5 // pred_check_branch
        %286 = sbr.rel (%p283) target = $region52
      $region51: #{_lambda_.15} parent=5 // pred_region
        %s287 = ssub.s32 %s15, 1
        // Predicated region
        $region53: #{_lambda_.15} parent=51 // pred_check
          %p288 = pneg %p130
        $region54: #{_lambda_.15} parent=51 // pred_check_branch
          %290 = sbr.rel (%p288) target = $region56
        $region55: #{_lambda_.15} parent=51 // pred_region
          %292 = dma.done [#allocation3], 12288
        $region56: #{_lambda_.15} parent=51 // pred_fallthru
          _
        %p293 = scmp.lt.s32.totalorder %s20, 1
        %s294 = scalar_select %p293, %s20, 1
        %s295 = smul.addr %s294, 2
        %s296 = smul.addr %s295, 4
        %s297 = scalar_lea.vmem %s0, %s296
        %p298 = pneg %p41
        %p299 = pneg %p38
        %p300 = scmp.lt.s32.totalorder %s20, 1
        %s301 = scalar_select %p300, %s20, 1
        %s302 = scalar_lea.vmem %s1, %s301
        %p303 = pneg %p67
        %p304 = pneg %p64
        %p305 = pneg %p88
        %p306 = pneg %p85
        %p307 = pneg %p109
        %p308 = pneg %p106
        %p309 = pneg %p130
        %p310 = pneg %p127
        %p311 = pneg %p151
        %p312 = pneg %p148
        %p313 = pneg %p172
        %p314 = pneg %p169
        %p315 = pneg %p193
        %p316 = pneg %p190
        %p317 = pneg %p219
        %p318 = pneg %p216
        %p319 = scmp.lt.s32.totalorder %s20, 1
        %s320 = scalar_select %p319, %s20, 1
        %s321 = smul.addr %s320, 2
        %s322 = smul.addr %s321, 4
        %s323 = scalar_lea.vmem %s8, %s322
        %p324 = scmp.lt.s32.totalorder %s20, 1
        %s325 = scalar_select %p324, %s20, 1
        %s326 = smul.addr %s325, 2
        %s327 = smul.addr %s326, 4
        %s328 = scalar_lea.vmem %s0, %s327
        %p329 = scmp.lt.s32.totalorder %s20, 1
        %s330 = scalar_select %p329, %s20, 1
        %s331 = scalar_lea.vmem %s1, %s330
        %p332 = scmp.lt.s32.totalorder %s20, 1
        %s333 = scalar_select %p332, %s20, 1
        %s334 = smul.addr %s333, 2
        %s335 = smul.addr %s334, 4
        %s336 = scalar_lea.vmem %s8, %s335
        %v338 = vld [vmem:[%s328] sm:$0xff]
        %v339 = vunpack.c.l.bf16 %v338
        %v340 = vunpack.c.h.bf16 %v338
        %v341 = vld [vmem:[%s2] sm:$0x3]
        %v342 = vld [vmem:[%s3] sm:$0x3]
        %v343 = vadd.f32 %v339, %v340
        %344 = vadd.xlane.f32.xlu0 %v343
        %v345 = vpop.xlane.xlu0 %344
        %v346 = vrcp.pop 256.0
        %v347 = vmul.f32 256.0, %v346
        %v348 = vsub.f32 1.0, %v347
        %v349 = vmul.f32 %v346, %v348
        %v350 = vadd.f32 %v346, %v349
        %vm351 = vweird.f32 %v346
        %v352 = vsel %vm351, %v346, %v350
        %v353 = vmul.f32 %v345, %v352
        %v354 = vsub.f32 %v339, %v353
        %v355 = vsub.f32 %v340, %v353
        %v356 = vmul.f32 %v354, %v354
        %v357 = vmul.f32 %v355, %v355
        %v358 = vadd.f32 %v356, %v357
        %359 = vadd.xlane.f32.xlu0 %v358
        %v360 = vpop.xlane.xlu0 %359
        %v361 = vmul.f32 %v360, %v352
        %v362 = vadd.f32 %v361, 1e-05
        %v363 = vrsqrt.pop %v362
        %v364 = vmul.f32 %v363, %v362
        %v365 = vmul.f32 %v364, %v363
        %v366 = vmul.f32 0.5, %v365
        %v367 = vsub.f32 1.5, %v366
        %v368 = vmul.f32 %v363, %v367
        %vm369 = vweird.f32 %v362
        %vm370 = vweird.f32 %v363
        %vm371 = vmor %vm369, %vm370
        %v372 = vsel %vm371, %v363, %v368
        %v373 = vmul.f32 %v354, %v372
        %v374 = vmul.f32 %v355, %v372
        %v376 = vperm.slane %v341, 0
        %v377 = vperm.slane %v341, 1
        %v380 = vmul.f32 %v373, %v376
        %v381 = vmul.f32 %v374, %v377
        %v383 = vperm.slane %v342, 0
        %v384 = vperm.slane %v342, 1
        %v387 = vadd.f32 %v380, %v383
        %v388 = vadd.f32 %v381, %v384
        %v389 = vpack.c.bf16 %v387, %v387
        %v390 = vpack.c.bf16 %v388, %v388
        %v391 = vld [vmem:[#allocation2] sm:$0xff]
        %v392 = vld [vmem:[#allocation2 + $0x8] sm:$0xff]
        %v393 = vld [vmem:[#allocation2 + $0x10] sm:$0xff]
        %v394 = vld [vmem:[#allocation2 + $0x18] sm:$0xff]
        %v395 = vld [vmem:[#allocation2 + $0x20] sm:$0xff]
        %v396 = vld [vmem:[#allocation2 + $0x28] sm:$0xff]
        %v397 = vld [vmem:[#allocation2 + $0x30] sm:$0xff]
        %v398 = vld [vmem:[#allocation2 + $0x38] sm:$0xff]
        %v399 = vld [vmem:[#allocation2 + $0x40] sm:$0xff]
        %v400 = vld [vmem:[#allocation2 + $0x48] sm:$0xff]
        %v401 = vld [vmem:[#allocation2 + $0x50] sm:$0xff]
        %v402 = vld [vmem:[#allocation2 + $0x58] sm:$0xff]
        %v403 = vld [vmem:[#allocation2 + $0x60] sm:$0xff]
        %v404 = vld [vmem:[#allocation2 + $0x68] sm:$0xff]
        %v405 = vld [vmem:[#allocation2 + $0x70] sm:$0xff]
        %v406 = vld [vmem:[#allocation2 + $0x78] sm:$0xff]
        %v407 = vld [vmem:[#allocation2 + $0x80] sm:$0xff]
        %v408 = vld [vmem:[#allocation2 + $0x88] sm:$0xff]
        %v409 = vld [vmem:[#allocation2 + $0x90] sm:$0xff]
        %v410 = vld [vmem:[#allocation2 + $0x98] sm:$0xff]
        %v411 = vld [vmem:[#allocation2 + $0xa0] sm:$0xff]
        %v412 = vld [vmem:[#allocation2 + $0xa8] sm:$0xff]
        %v413 = vld [vmem:[#allocation2 + $0xb0] sm:$0xff]
        %v414 = vld [vmem:[#allocation2 + $0xb8] sm:$0xff]
        %v415 = vld [vmem:[#allocation2 + $0xc0] sm:$0xff]
        %v416 = vld [vmem:[#allocation2 + $0xc8] sm:$0xff]
        %v417 = vld [vmem:[#allocation2 + $0xd0] sm:$0xff]
        %v418 = vld [vmem:[#allocation2 + $0xd8] sm:$0xff]
        %v419 = vld [vmem:[#allocation2 + $0xe0] sm:$0xff]
        %v420 = vld [vmem:[#allocation2 + $0xe8] sm:$0xff]
        %v421 = vld [vmem:[#allocation2 + $0xf0] sm:$0xff]
        %v422 = vld [vmem:[#allocation2 + $0xf8] sm:$0xff]
        %v423 = vld [vmem:[#allocation2 + $0x100] sm:$0xff]
        %v424 = vld [vmem:[#allocation2 + $0x108] sm:$0xff]
        %v425 = vld [vmem:[#allocation2 + $0x110] sm:$0xff]
        %v426 = vld [vmem:[#allocation2 + $0x118] sm:$0xff]
        %v427 = vld [vmem:[#allocation2 + $0x120] sm:$0xff]
        %v428 = vld [vmem:[#allocation2 + $0x128] sm:$0xff]
        %v429 = vld [vmem:[#allocation2 + $0x130] sm:$0xff]
        %v430 = vld [vmem:[#allocation2 + $0x138] sm:$0xff]
        %v431 = vld [vmem:[#allocation2 + $0x140] sm:$0xff]
        %v432 = vld [vmem:[#allocation2 + $0x148] sm:$0xff]
        %v433 = vld [vmem:[#allocation2 + $0x150] sm:$0xff]
        %v434 = vld [vmem:[#allocation2 + $0x158] sm:$0xff]
        %v435 = vld [vmem:[#allocation2 + $0x160] sm:$0xff]
        %v436 = vld [vmem:[#allocation2 + $0x168] sm:$0xff]
        %v437 = vld [vmem:[#allocation2 + $0x170] sm:$0xff]
        %v438 = vld [vmem:[#allocation2 + $0x178] sm:$0xff]
        %v439 = vld [vmem:[#allocation2 + $0x180] sm:$0xff]
        %v440 = vld [vmem:[#allocation2 + $0x188] sm:$0xff]
        %v441 = vld [vmem:[#allocation2 + $0x190] sm:$0xff]
        %v442 = vld [vmem:[#allocation2 + $0x198] sm:$0xff]
        %v443 = vld [vmem:[#allocation2 + $0x1a0] sm:$0xff]
        %v444 = vld [vmem:[#allocation2 + $0x1a8] sm:$0xff]
        %v445 = vld [vmem:[#allocation2 + $0x1b0] sm:$0xff]
        %v446 = vld [vmem:[#allocation2 + $0x1b8] sm:$0xff]
        %v447 = vld [vmem:[#allocation2 + $0x1c0] sm:$0xff]
        %v448 = vld [vmem:[#allocation2 + $0x1c8] sm:$0xff]
        %v449 = vld [vmem:[#allocation2 + $0x1d0] sm:$0xff]
        %v450 = vld [vmem:[#allocation2 + $0x1d8] sm:$0xff]
        %v451 = vld [vmem:[#allocation2 + $0x1e0] sm:$0xff]
        %v452 = vld [vmem:[#allocation2 + $0x1e8] sm:$0xff]
        %v453 = vld [vmem:[#allocation2 + $0x1f0] sm:$0xff]
        %v454 = vld [vmem:[#allocation2 + $0x1f8] sm:$0xff]
        %v455 = vld [vmem:[#allocation2 + $0x200] sm:$0xff]
        %v456 = vld [vmem:[#allocation2 + $0x208] sm:$0xff]
        %v457 = vld [vmem:[#allocation2 + $0x210] sm:$0xff]
        %v458 = vld [vmem:[#allocation2 + $0x218] sm:$0xff]
        %v459 = vld [vmem:[#allocation2 + $0x220] sm:$0xff]
        %v460 = vld [vmem:[#allocation2 + $0x228] sm:$0xff]
        %v461 = vld [vmem:[#allocation2 + $0x230] sm:$0xff]
        %v462 = vld [vmem:[#allocation2 + $0x238] sm:$0xff]
        %v463 = vld [vmem:[#allocation2 + $0x240] sm:$0xff]
        %v464 = vld [vmem:[#allocation2 + $0x248] sm:$0xff]
        %v465 = vld [vmem:[#allocation2 + $0x250] sm:$0xff]
        %v466 = vld [vmem:[#allocation2 + $0x258] sm:$0xff]
        %v467 = vld [vmem:[#allocation2 + $0x260] sm:$0xff]
        %v468 = vld [vmem:[#allocation2 + $0x268] sm:$0xff]
        %v469 = vld [vmem:[#allocation2 + $0x270] sm:$0xff]
        %v470 = vld [vmem:[#allocation2 + $0x278] sm:$0xff]
        %v471 = vld [vmem:[#allocation2 + $0x280] sm:$0xff]
        %v472 = vld [vmem:[#allocation2 + $0x288] sm:$0xff]
        %v473 = vld [vmem:[#allocation2 + $0x290] sm:$0xff]
        %v474 = vld [vmem:[#allocation2 + $0x298] sm:$0xff]
        %v475 = vld [vmem:[#allocation2 + $0x2a0] sm:$0xff]
        %v476 = vld [vmem:[#allocation2 + $0x2a8] sm:$0xff]
        %v477 = vld [vmem:[#allocation2 + $0x2b0] sm:$0xff]
        %v478 = vld [vmem:[#allocation2 + $0x2b8] sm:$0xff]
        %v479 = vld [vmem:[#allocation2 + $0x2c0] sm:$0xff]
        %v480 = vld [vmem:[#allocation2 + $0x2c8] sm:$0xff]
        %v481 = vld [vmem:[#allocation2 + $0x2d0] sm:$0xff]
        %v482 = vld [vmem:[#allocation2 + $0x2d8] sm:$0xff]
        %v483 = vld [vmem:[#allocation2 + $0x2e0] sm:$0xff]
        %v484 = vld [vmem:[#allocation2 + $0x2e8] sm:$0xff]
        %v485 = vld [vmem:[#allocation2 + $0x2f0] sm:$0xff]
        %v486 = vld [vmem:[#allocation2 + $0x2f8] sm:$0xff]
        %v487 = vld [vmem:[%s5] sm:$0x3f]
        %v489 = vperm.slane %v487, 0
        %v490 = vperm.slane %v487, 1
        %v491 = vperm.slane %v487, 2
        %v492 = vperm.slane %v487, 3
        %v493 = vperm.slane %v487, 4
        %v494 = vperm.slane %v487, 5
        %v597 = vunpack.c.l.b16 %v391
        %v598 = vunpack.c.h.b16 %v391
        %v599 = vunpack.c.l.b16 %v392
        %v600 = vunpack.c.h.b16 %v392
        %v601 = vunpack.c.l.b16 %v393
        %v602 = vunpack.c.h.b16 %v393
        %v603 = vunpack.c.l.b16 %v394
        %v604 = vunpack.c.h.b16 %v394
        %v605 = vunpack.c.l.b16 %v395
        %v606 = vunpack.c.h.b16 %v395
        %v607 = vunpack.c.l.b16 %v396
        %v608 = vunpack.c.h.b16 %v396
        %v609 = vunpack.c.l.b16 %v397
        %v610 = vunpack.c.h.b16 %v397
        %v611 = vunpack.c.l.b16 %v398
        %v612 = vunpack.c.h.b16 %v398
        %v613 = vunpack.c.l.b16 %v399
        %v614 = vunpack.c.h.b16 %v399
        %v615 = vunpack.c.l.b16 %v400
        %v616 = vunpack.c.h.b16 %v400
        %v617 = vunpack.c.l.b16 %v401
        %v618 = vunpack.c.h.b16 %v401
        %v619 = vunpack.c.l.b16 %v402
        %v620 = vunpack.c.h.b16 %v402
        %v621 = vunpack.c.l.b16 %v403
        %v622 = vunpack.c.h.b16 %v403
        %v623 = vunpack.c.l.b16 %v404
        %v624 = vunpack.c.h.b16 %v404
        %v625 = vunpack.c.l.b16 %v405
        %v626 = vunpack.c.h.b16 %v405
        %v627 = vunpack.c.l.b16 %v406
        %v628 = vunpack.c.h.b16 %v406
        %v629 = vunpack.c.l.b16 %v407
        %v630 = vunpack.c.h.b16 %v407
        %v631 = vunpack.c.l.b16 %v408
        %v632 = vunpack.c.h.b16 %v408
        %v633 = vunpack.c.l.b16 %v409
        %v634 = vunpack.c.h.b16 %v409
        %v635 = vunpack.c.l.b16 %v410
        %v636 = vunpack.c.h.b16 %v410
        %v637 = vunpack.c.l.b16 %v411
        %v638 = vunpack.c.h.b16 %v411
        %v639 = vunpack.c.l.b16 %v412
        %v640 = vunpack.c.h.b16 %v412
        %v641 = vunpack.c.l.b16 %v413
        %v642 = vunpack.c.h.b16 %v413
        %v643 = vunpack.c.l.b16 %v414
        %v644 = vunpack.c.h.b16 %v414
        %v645 = vunpack.c.l.b16 %v415
        %v646 = vunpack.c.h.b16 %v415
        %v647 = vunpack.c.l.b16 %v416
        %v648 = vunpack.c.h.b16 %v416
        %v649 = vunpack.c.l.b16 %v417
        %v650 = vunpack.c.h.b16 %v417
        %v651 = vunpack.c.l.b16 %v418
        %v652 = vunpack.c.h.b16 %v418
        %v653 = vunpack.c.l.b16 %v419
        %v654 = vunpack.c.h.b16 %v419
        %v655 = vunpack.c.l.b16 %v420
        %v656 = vunpack.c.h.b16 %v420
        %v657 = vunpack.c.l.b16 %v421
        %v658 = vunpack.c.h.b16 %v421
        %v659 = vunpack.c.l.b16 %v422
        %v660 = vunpack.c.h.b16 %v422
        %v661 = vunpack.c.l.b16 %v423
        %v662 = vunpack.c.h.b16 %v423
        %v663 = vunpack.c.l.b16 %v424
        %v664 = vunpack.c.h.b16 %v424
        %v665 = vunpack.c.l.b16 %v425
        %v666 = vunpack.c.h.b16 %v425
        %v667 = vunpack.c.l.b16 %v426
        %v668 = vunpack.c.h.b16 %v426
        %v669 = vunpack.c.l.b16 %v427
        %v670 = vunpack.c.h.b16 %v427
        %v671 = vunpack.c.l.b16 %v428
        %v672 = vunpack.c.h.b16 %v428
        %v673 = vunpack.c.l.b16 %v429
        %v674 = vunpack.c.h.b16 %v429
        %v675 = vunpack.c.l.b16 %v430
        %v676 = vunpack.c.h.b16 %v430
        %v677 = vunpack.c.l.b16 %v431
        %v678 = vunpack.c.h.b16 %v431
        %v679 = vunpack.c.l.b16 %v432
        %v680 = vunpack.c.h.b16 %v432
        %v681 = vunpack.c.l.b16 %v433
        %v682 = vunpack.c.h.b16 %v433
        %v683 = vunpack.c.l.b16 %v434
        %v684 = vunpack.c.h.b16 %v434
        %v685 = vunpack.c.l.b16 %v435
        %v686 = vunpack.c.h.b16 %v435
        %v687 = vunpack.c.l.b16 %v436
        %v688 = vunpack.c.h.b16 %v436
        %v689 = vunpack.c.l.b16 %v437
        %v690 = vunpack.c.h.b16 %v437
        %v691 = vunpack.c.l.b16 %v438
        %v692 = vunpack.c.h.b16 %v438
        %v693 = vunpack.c.l.b16 %v439
        %v694 = vunpack.c.h.b16 %v439
        %v695 = vunpack.c.l.b16 %v440
        %v696 = vunpack.c.h.b16 %v440
        %v697 = vunpack.c.l.b16 %v441
        %v698 = vunpack.c.h.b16 %v441
        %v699 = vunpack.c.l.b16 %v442
        %v700 = vunpack.c.h.b16 %v442
        %v701 = vunpack.c.l.b16 %v443
        %v702 = vunpack.c.h.b16 %v443
        %v703 = vunpack.c.l.b16 %v444
        %v704 = vunpack.c.h.b16 %v444
        %v705 = vunpack.c.l.b16 %v445
        %v706 = vunpack.c.h.b16 %v445
        %v707 = vunpack.c.l.b16 %v446
        %v708 = vunpack.c.h.b16 %v446
        %v709 = vunpack.c.l.b16 %v447
        %v710 = vunpack.c.h.b16 %v447
        %v711 = vunpack.c.l.b16 %v448
        %v712 = vunpack.c.h.b16 %v448
        %v713 = vunpack.c.l.b16 %v449
        %v714 = vunpack.c.h.b16 %v449
        %v715 = vunpack.c.l.b16 %v450
        %v716 = vunpack.c.h.b16 %v450
        %v717 = vunpack.c.l.b16 %v451
        %v718 = vunpack.c.h.b16 %v451
        %v719 = vunpack.c.l.b16 %v452
        %v720 = vunpack.c.h.b16 %v452
        %v721 = vunpack.c.l.b16 %v453
        %v722 = vunpack.c.h.b16 %v453
        %v723 = vunpack.c.l.b16 %v454
        %v724 = vunpack.c.h.b16 %v454
        %v725 = vunpack.c.l.b16 %v455
        %v726 = vunpack.c.h.b16 %v455
        %v727 = vunpack.c.l.b16 %v456
        %v728 = vunpack.c.h.b16 %v456
        %v729 = vunpack.c.l.b16 %v457
        %v730 = vunpack.c.h.b16 %v457
        %v731 = vunpack.c.l.b16 %v458
        %v732 = vunpack.c.h.b16 %v458
        %v733 = vunpack.c.l.b16 %v459
        %v734 = vunpack.c.h.b16 %v459
        %v735 = vunpack.c.l.b16 %v460
        %v736 = vunpack.c.h.b16 %v460
        %v737 = vunpack.c.l.b16 %v461
        %v738 = vunpack.c.h.b16 %v461
        %v739 = vunpack.c.l.b16 %v462
        %v740 = vunpack.c.h.b16 %v462
        %v741 = vunpack.c.l.b16 %v463
        %v742 = vunpack.c.h.b16 %v463
        %v743 = vunpack.c.l.b16 %v464
        %v744 = vunpack.c.h.b16 %v464
        %v745 = vunpack.c.l.b16 %v465
        %v746 = vunpack.c.h.b16 %v465
        %v747 = vunpack.c.l.b16 %v466
        %v748 = vunpack.c.h.b16 %v466
        %v749 = vunpack.c.l.b16 %v467
        %v750 = vunpack.c.h.b16 %v467
        %v751 = vunpack.c.l.b16 %v468
        %v752 = vunpack.c.h.b16 %v468
        %v753 = vunpack.c.l.b16 %v469
        %v754 = vunpack.c.h.b16 %v469
        %v755 = vunpack.c.l.b16 %v470
        %v756 = vunpack.c.h.b16 %v470
        %v757 = vunpack.c.l.b16 %v471
        %v758 = vunpack.c.h.b16 %v471
        %v759 = vunpack.c.l.b16 %v472
        %v760 = vunpack.c.h.b16 %v472
        %v761 = vunpack.c.l.b16 %v473
        %v762 = vunpack.c.h.b16 %v473
        %v763 = vunpack.c.l.b16 %v474
        %v764 = vunpack.c.h.b16 %v474
        %v765 = vunpack.c.l.b16 %v475
        %v766 = vunpack.c.h.b16 %v475
        %v767 = vunpack.c.l.b16 %v476
        %v768 = vunpack.c.h.b16 %v476
        %v769 = vunpack.c.l.b16 %v477
        %v770 = vunpack.c.h.b16 %v477
        %v771 = vunpack.c.l.b16 %v478
        %v772 = vunpack.c.h.b16 %v478
        %v773 = vunpack.c.l.b16 %v479
        %v774 = vunpack.c.h.b16 %v479
        %v775 = vunpack.c.l.b16 %v480
        %v776 = vunpack.c.h.b16 %v480
        %v777 = vunpack.c.l.b16 %v481
        %v778 = vunpack.c.h.b16 %v481
        %v779 = vunpack.c.l.b16 %v482
        %v780 = vunpack.c.h.b16 %v482
        %v781 = vunpack.c.l.b16 %v483
        %v782 = vunpack.c.h.b16 %v483
        %v783 = vunpack.c.l.b16 %v484
        %v784 = vunpack.c.h.b16 %v484
        %v785 = vunpack.c.l.b16 %v485
        %v786 = vunpack.c.h.b16 %v485
        %v787 = vunpack.c.l.b16 %v486
        %v788 = vunpack.c.h.b16 %v486
        %v789 = vpack.c.b16 %v603, %v597
        %v790 = vpack.c.b16 %v604, %v598
        %v791 = vpack.c.b16 %v605, %v599
        %v792 = vpack.c.b16 %v606, %v600
        %v793 = vpack.c.b16 %v607, %v601
        %v794 = vpack.c.b16 %v608, %v602
        %v795 = vpack.c.b16 %v615, %v609
        %v796 = vpack.c.b16 %v616, %v610
        %v797 = vpack.c.b16 %v617, %v611
        %v798 = vpack.c.b16 %v618, %v612
        %v799 = vpack.c.b16 %v619, %v613
        %v800 = vpack.c.b16 %v620, %v614
        %v801 = vpack.c.b16 %v627, %v621
        %v802 = vpack.c.b16 %v628, %v622
        %v803 = vpack.c.b16 %v629, %v623
        %v804 = vpack.c.b16 %v630, %v624
        %v805 = vpack.c.b16 %v631, %v625
        %v806 = vpack.c.b16 %v632, %v626
        %v807 = vpack.c.b16 %v639, %v633
        %v808 = vpack.c.b16 %v640, %v634
        %v809 = vpack.c.b16 %v641, %v635
        %v810 = vpack.c.b16 %v642, %v636
        %v811 = vpack.c.b16 %v643, %v637
        %v812 = vpack.c.b16 %v644, %v638
        %v813 = vpack.c.b16 %v651, %v645
        %v814 = vpack.c.b16 %v652, %v646
        %v815 = vpack.c.b16 %v653, %v647
        %v816 = vpack.c.b16 %v654, %v648
        %v817 = vpack.c.b16 %v655, %v649
        %v818 = vpack.c.b16 %v656, %v650
        %v819 = vpack.c.b16 %v663, %v657
        %v820 = vpack.c.b16 %v664, %v658
        %v821 = vpack.c.b16 %v665, %v659
        %v822 = vpack.c.b16 %v666, %v660
        %v823 = vpack.c.b16 %v667, %v661
        %v824 = vpack.c.b16 %v668, %v662
        %v825 = vpack.c.b16 %v675, %v669
        %v826 = vpack.c.b16 %v676, %v670
        %v827 = vpack.c.b16 %v677, %v671
        %v828 = vpack.c.b16 %v678, %v672
        %v829 = vpack.c.b16 %v679, %v673
        %v830 = vpack.c.b16 %v680, %v674
        %v831 = vpack.c.b16 %v687, %v681
        %v832 = vpack.c.b16 %v688, %v682
        %v833 = vpack.c.b16 %v689, %v683
        %v834 = vpack.c.b16 %v690, %v684
        %v835 = vpack.c.b16 %v691, %v685
        %v836 = vpack.c.b16 %v692, %v686
        %v837 = vpack.c.b16 %v699, %v693
        %v838 = vpack.c.b16 %v700, %v694
        %v839 = vpack.c.b16 %v701, %v695
        %v840 = vpack.c.b16 %v702, %v696
        %v841 = vpack.c.b16 %v703, %v697
        %v842 = vpack.c.b16 %v704, %v698
        %v843 = vpack.c.b16 %v711, %v705
        %v844 = vpack.c.b16 %v712, %v706
        %v845 = vpack.c.b16 %v713, %v707
        %v846 = vpack.c.b16 %v714, %v708
        %v847 = vpack.c.b16 %v715, %v709
        %v848 = vpack.c.b16 %v716, %v710
        %v849 = vpack.c.b16 %v723, %v717
        %v850 = vpack.c.b16 %v724, %v718
        %v851 = vpack.c.b16 %v725, %v719
        %v852 = vpack.c.b16 %v726, %v720
        %v853 = vpack.c.b16 %v727, %v721
        %v854 = vpack.c.b16 %v728, %v722
        %v855 = vpack.c.b16 %v735, %v729
        %v856 = vpack.c.b16 %v736, %v730
        %v857 = vpack.c.b16 %v737, %v731
        %v858 = vpack.c.b16 %v738, %v732
        %v859 = vpack.c.b16 %v739, %v733
        %v860 = vpack.c.b16 %v740, %v734
        %v861 = vpack.c.b16 %v747, %v741
        %v862 = vpack.c.b16 %v748, %v742
        %v863 = vpack.c.b16 %v749, %v743
        %v864 = vpack.c.b16 %v750, %v744
        %v865 = vpack.c.b16 %v751, %v745
        %v866 = vpack.c.b16 %v752, %v746
        %v867 = vpack.c.b16 %v759, %v753
        %v868 = vpack.c.b16 %v760, %v754
        %v869 = vpack.c.b16 %v761, %v755
        %v870 = vpack.c.b16 %v762, %v756
        %v871 = vpack.c.b16 %v763, %v757
        %v872 = vpack.c.b16 %v764, %v758
        %v873 = vpack.c.b16 %v771, %v765
        %v874 = vpack.c.b16 %v772, %v766
        %v875 = vpack.c.b16 %v773, %v767
        %v876 = vpack.c.b16 %v774, %v768
        %v877 = vpack.c.b16 %v775, %v769
        %v878 = vpack.c.b16 %v776, %v770
        %v879 = vpack.c.b16 %v783, %v777
        %v880 = vpack.c.b16 %v784, %v778
        %v881 = vpack.c.b16 %v785, %v779
        %v882 = vpack.c.b16 %v786, %v780
        %v883 = vpack.c.b16 %v787, %v781
        %v884 = vpack.c.b16 %v788, %v782
        %981 = vmatpush.bf16.msra.mxu0 %v831
        %982 = vmatpush.bf16.msra.mxu0 %v825
        %983 = vmatpush.bf16.msra.mxu0 %v819
        %984 = vmatpush.bf16.msra.mxu0 %v813
        %985 = vmatpush.bf16.msra.mxu0 %v807
        %986 = vmatpush.bf16.msra.mxu0 %v801
        %987 = vmatpush.bf16.msra.mxu0 %v795
        %988 = vmatpush.bf16.msra.mxu0 %v789
        %989 = vmatmul.bf16.gmra.mxu0 %v389
        %v990 = vpop.f32.mrf.mxu0
        %v991 = vadd.f32 %v489, %v990
        %v992 = vpop.f32.mrf.mxu0
        %993 = vdwg.mxu0
        %994 = vmatpush.bf16.msra.mxu0 %v879
        %995 = vmatpush.bf16.msra.mxu0 %v873
        %996 = vmatpush.bf16.msra.mxu0 %v867
        %997 = vmatpush.bf16.msra.mxu0 %v861
        %998 = vmatpush.bf16.msra.mxu0 %v855
        %999 = vmatpush.bf16.msra.mxu0 %v849
        %1000 = vmatpush.bf16.msra.mxu0 %v843
        %1001 = vmatpush.bf16.msra.mxu0 %v837
        %1002 = vmatmul.bf16.gmra.mxu0 %v390
        %v1003 = vpop.f32.mrf.mxu0
        %v1004 = vadd.f32 %v991, %v1003
        %v1005 = vpop.f32.mrf.mxu0
        %1006 = vdwg.mxu0
        %1007 = vmatpush.bf16.msra.mxu0 %v832
        %1008 = vmatpush.bf16.msra.mxu0 %v826
        %1009 = vmatpush.bf16.msra.mxu0 %v820
        %1010 = vmatpush.bf16.msra.mxu0 %v814
        %1011 = vmatpush.bf16.msra.mxu0 %v808
        %1012 = vmatpush.bf16.msra.mxu0 %v802
        %1013 = vmatpush.bf16.msra.mxu0 %v796
        %1014 = vmatpush.bf16.msra.mxu0 %v790
        %1015 = vmatmul.bf16.gmra.mxu0 %v389
        %v1016 = vpop.f32.mrf.mxu0
        %v1017 = vadd.f32 %v490, %v1016
        %v1018 = vpop.f32.mrf.mxu0
        %1019 = vdwg.mxu0
        %1020 = vmatpush.bf16.msra.mxu0 %v880
        %1021 = vmatpush.bf16.msra.mxu0 %v874
        %1022 = vmatpush.bf16.msra.mxu0 %v868
        %1023 = vmatpush.bf16.msra.mxu0 %v862
        %1024 = vmatpush.bf16.msra.mxu0 %v856
        %1025 = vmatpush.bf16.msra.mxu0 %v850
        %1026 = vmatpush.bf16.msra.mxu0 %v844
        %1027 = vmatpush.bf16.msra.mxu0 %v838
        %1028 = vmatmul.bf16.gmra.mxu0 %v390
        %v1029 = vpop.f32.mrf.mxu0
        %v1030 = vadd.f32 %v1017, %v1029
        %v1031 = vpop.f32.mrf.mxu0
        %1032 = vdwg.mxu0
        %1033 = vmatpush.bf16.msra.mxu0 %v833
        %1034 = vmatpush.bf16.msra.mxu0 %v827
        %1035 = vmatpush.bf16.msra.mxu0 %v821
        %1036 = vmatpush.bf16.msra.mxu0 %v815
        %1037 = vmatpush.bf16.msra.mxu0 %v809
        %1038 = vmatpush.bf16.msra.mxu0 %v803
        %1039 = vmatpush.bf16.msra.mxu0 %v797
        %1040 = vmatpush.bf16.msra.mxu0 %v791
        %1041 = vmatmul.bf16.gmra.mxu0 %v389
        %v1042 = vpop.f32.mrf.mxu0
        %v1043 = vadd.f32 %v491, %v1042
        %v1044 = vpop.f32.mrf.mxu0
        %1045 = vdwg.mxu0
        %1046 = vmatpush.bf16.msra.mxu0 %v881
        %1047 = vmatpush.bf16.msra.mxu0 %v875
        %1048 = vmatpush.bf16.msra.mxu0 %v869
        %1049 = vmatpush.bf16.msra.mxu0 %v863
        %1050 = vmatpush.bf16.msra.mxu0 %v857
        %1051 = vmatpush.bf16.msra.mxu0 %v851
        %1052 = vmatpush.bf16.msra.mxu0 %v845
        %1053 = vmatpush.bf16.msra.mxu0 %v839
        %1054 = vmatmul.bf16.gmra.mxu0 %v390
        %v1055 = vpop.f32.mrf.mxu0
        %v1056 = vadd.f32 %v1043, %v1055
        %v1057 = vpop.f32.mrf.mxu0
        %1058 = vdwg.mxu0
        %1059 = vmatpush.bf16.msra.mxu0 %v834
        %1060 = vmatpush.bf16.msra.mxu0 %v828
        %1061 = vmatpush.bf16.msra.mxu0 %v822
        %1062 = vmatpush.bf16.msra.mxu0 %v816
        %1063 = vmatpush.bf16.msra.mxu0 %v810
        %1064 = vmatpush.bf16.msra.mxu0 %v804
        %1065 = vmatpush.bf16.msra.mxu0 %v798
        %1066 = vmatpush.bf16.msra.mxu0 %v792
        %1067 = vmatmul.bf16.gmra.mxu0 %v389
        %v1068 = vpop.f32.mrf.mxu0
        %v1069 = vadd.f32 %v492, %v1068
        %v1070 = vpop.f32.mrf.mxu0
        %1071 = vdwg.mxu0
        %1072 = vmatpush.bf16.msra.mxu0 %v882
        %1073 = vmatpush.bf16.msra.mxu0 %v876
        %1074 = vmatpush.bf16.msra.mxu0 %v870
        %1075 = vmatpush.bf16.msra.mxu0 %v864
        %1076 = vmatpush.bf16.msra.mxu0 %v858
        %1077 = vmatpush.bf16.msra.mxu0 %v852
        %1078 = vmatpush.bf16.msra.mxu0 %v846
        %1079 = vmatpush.bf16.msra.mxu0 %v840
        %1080 = vmatmul.bf16.gmra.mxu0 %v390
        %v1081 = vpop.f32.mrf.mxu0
        %v1082 = vadd.f32 %v1069, %v1081
        %v1083 = vpop.f32.mrf.mxu0
        %1084 = vdwg.mxu0
        %1085 = vmatpush.bf16.msra.mxu0 %v835
        %1086 = vmatpush.bf16.msra.mxu0 %v829
        %1087 = vmatpush.bf16.msra.mxu0 %v823
        %1088 = vmatpush.bf16.msra.mxu0 %v817
        %1089 = vmatpush.bf16.msra.mxu0 %v811
        %1090 = vmatpush.bf16.msra.mxu0 %v805
        %1091 = vmatpush.bf16.msra.mxu0 %v799
        %1092 = vmatpush.bf16.msra.mxu0 %v793
        %1093 = vmatmul.bf16.gmra.mxu0 %v389
        %v1094 = vpop.f32.mrf.mxu0
        %v1095 = vadd.f32 %v493, %v1094
        %v1096 = vpop.f32.mrf.mxu0
        %1097 = vdwg.mxu0
        %1098 = vmatpush.bf16.msra.mxu0 %v883
        %1099 = vmatpush.bf16.msra.mxu0 %v877
        %1100 = vmatpush.bf16.msra.mxu0 %v871
        %1101 = vmatpush.bf16.msra.mxu0 %v865
        %1102 = vmatpush.bf16.msra.mxu0 %v859
        %1103 = vmatpush.bf16.msra.mxu0 %v853
        %1104 = vmatpush.bf16.msra.mxu0 %v847
        %1105 = vmatpush.bf16.msra.mxu0 %v841
        %1106 = vmatmul.bf16.gmra.mxu0 %v390
        %v1107 = vpop.f32.mrf.mxu0
        %v1108 = vadd.f32 %v1095, %v1107
        %v1109 = vpop.f32.mrf.mxu0
        %1110 = vdwg.mxu0
        %1111 = vmatpush.bf16.msra.mxu0 %v836
        %1112 = vmatpush.bf16.msra.mxu0 %v830
        %1113 = vmatpush.bf16.msra.mxu0 %v824
        %1114 = vmatpush.bf16.msra.mxu0 %v818
        %1115 = vmatpush.bf16.msra.mxu0 %v812
        %1116 = vmatpush.bf16.msra.mxu0 %v806
        %1117 = vmatpush.bf16.msra.mxu0 %v800
        %1118 = vmatpush.bf16.msra.mxu0 %v794
        %1119 = vmatmul.bf16.gmra.mxu0 %v389
        %v1120 = vpop.f32.mrf.mxu0
        %v1121 = vadd.f32 %v494, %v1120
        %v1122 = vpop.f32.mrf.mxu0
        %1123 = vdwg.mxu0
        %1124 = vmatpush.bf16.msra.mxu0 %v884
        %1125 = vmatpush.bf16.msra.mxu0 %v878
        %1126 = vmatpush.bf16.msra.mxu0 %v872
        %1127 = vmatpush.bf16.msra.mxu0 %v866
        %1128 = vmatpush.bf16.msra.mxu0 %v860
        %1129 = vmatpush.bf16.msra.mxu0 %v854
        %1130 = vmatpush.bf16.msra.mxu0 %v848
        %1131 = vmatpush.bf16.msra.mxu0 %v842
        %1132 = vmatmul.bf16.gmra.mxu0 %v390
        %v1133 = vpop.f32.mrf.mxu0
        %v1134 = vadd.f32 %v1121, %v1133
        %v1135 = vpop.f32.mrf.mxu0
        %1136 = vdwg.mxu0
        %v1137 = vld [vmem:[%s331] sm:$0x1]
        %v1138 = vsub.f32 %v1137, 1.0
        %v1139 = vmul.f32 %v1138, 1e+09
        %v1140 = vmul.f32 %v1139, -1.0
        %v1141 = vlaneseq
        %v1142 = vshrl.u32 %v1141, 7
        %v1143 = vlaneseq
        %v1144 = vand.u32 %v1143, 127
        %vm1145 = vcmp.gt.s32.totalorder %v1144, %v1142
        %v1146 = vsel %vm1145, 1, 0
        %v1147 = vcvt.s32.f32 %v1146
        %v1148 = vmul.f32 %v1147, -1e+09
        %v1150 = vperm.slane %v1140, 0
        %v1152 = vadd.f32 %v1150, %v1148
        %v1153 = vpack.c.bf16 %v1004, %v1004
        %v1154 = vpack.c.bf16 %v1056, %v1056
        %v1155 = vpack.c.bf16 %v1108, %v1108
        %1156 = vmatpush.bf16.xpose.msra.mxu0 0
        %1157 = vmatpush.bf16.xpose.msra.mxu0 0
        %1158 = vmatpush.bf16.xpose.msra.mxu0 0
        %1159 = vmatpush.bf16.xpose.msra.mxu0 0
        %1160 = vmatpush.bf16.xpose.msra.mxu0 0
        %1161 = vmatpush.bf16.xpose.msra.mxu0 0
        %1162 = vmatpush.bf16.xpose.msra.mxu0 0
        %1163 = vmatpush.bf16.xpose.msra.mxu0 %v1154
        %1164 = vmatmul.bf16.gmra.mxu0 %v1153
        %v1165 = vpop.f32.mrf.mxu0
        %v1166 = vadd.f32 %v1152, %v1165
        %v1167 = vpop.f32.mrf.mxu0
        %1168 = vdwg.mxu0
        %vm1169 = vcmask 64512
        %v1170 = vsel %vm1169, %v1166, -inf
        %1171 = vmax.xlane.f32.xlu0 %v1170
        %v1172 = vpop.xlane.xlu0 %1171
        %v1173 = vsub.f32 %v1166, %v1172
        %v1174 = vmul.f32 %v1173, 1.442695
        %v1175 = vpow.pop %v1174
        %v1176 = vsel %vm1169, %v1175, 0.0
        %1177 = vadd.xlane.f32.xlu0 %v1176
        %v1178 = vpop.xlane.xlu0 %1177
        %v1179 = vrcp.pop %v1178
        %v1180 = vmul.f32 %v1175, %v1179
        %v1181 = vpack.c.bf16 %v1180, %v1180
        %v1183 = vsel %vm1169, %v1181, 0
        %vm1185 = vcmask 1043456
        %v1187 = vsel %vm1185, %v1155, 0
        %1189 = vmatpush.bf16.msra.mxu0 0
        %1190 = vmatpush.bf16.msra.mxu0 0
        %1191 = vmatpush.bf16.msra.mxu0 0
        %1192 = vmatpush.bf16.msra.mxu0 0
        %1193 = vmatpush.bf16.msra.mxu0 0
        %1194 = vmatpush.bf16.msra.mxu0 0
        %1195 = vmatpush.bf16.msra.mxu0 0
        %1196 = vmatpush.bf16.msra.mxu0 %v1187
        %1197 = vmatmul.bf16.gmra.mxu0 %v1183
        %v1198 = vpop.f32.mrf.mxu0
        %v1199 = vadd.f32 0.0, %v1198
        %v1200 = vpop.f32.mrf.mxu0
        %1201 = vdwg.mxu0
        %v1202 = vpack.c.bf16 %v1199, %v1199
        %v1203 = vld [vmem:[%s6] sm:$0xff]
        %v1204 = vld [vmem:[%s6 + $0x8] sm:$0xff]
        %v1205 = vld [vmem:[%s6 + $0x10] sm:$0xff]
        %v1206 = vld [vmem:[%s6 + $0x18] sm:$0xff]
        %v1207 = vld [vmem:[%s6 + $0x20] sm:$0xff]
        %v1208 = vld [vmem:[%s6 + $0x28] sm:$0xff]
        %v1209 = vld [vmem:[%s6 + $0x30] sm:$0xff]
        %v1210 = vld [vmem:[%s6 + $0x38] sm:$0xff]
        %v1211 = vld [vmem:[%s6 + $0x40] sm:$0xff]
        %v1212 = vld [vmem:[%s6 + $0x48] sm:$0xff]
        %v1213 = vld [vmem:[%s6 + $0x50] sm:$0xff]
        %v1214 = vld [vmem:[%s6 + $0x58] sm:$0xff]
        %v1215 = vld [vmem:[%s6 + $0x60] sm:$0xff]
        %v1216 = vld [vmem:[%s6 + $0x68] sm:$0xff]
        %v1217 = vld [vmem:[%s6 + $0x70] sm:$0xff]
        %v1218 = vld [vmem:[%s6 + $0x78] sm:$0xff]
        %v1219 = vpack.c.bf16 %v1030, %v1030
        %v1220 = vpack.c.bf16 %v1082, %v1082
        %v1221 = vpack.c.bf16 %v1134, %v1134
        %1222 = vmatpush.bf16.xpose.msra.mxu0 0
        %1223 = vmatpush.bf16.xpose.msra.mxu0 0
        %1224 = vmatpush.bf16.xpose.msra.mxu0 0
        %1225 = vmatpush.bf16.xpose.msra.mxu0 0
        %1226 = vmatpush.bf16.xpose.msra.mxu0 0
        %1227 = vmatpush.bf16.xpose.msra.mxu0 0
        %1228 = vmatpush.bf16.xpose.msra.mxu0 0
        %1229 = vmatpush.bf16.xpose.msra.mxu0 %v1220
        %1230 = vmatmul.bf16.gmra.mxu0 %v1219
        %v1231 = vpop.f32.mrf.mxu0
        %v1232 = vadd.f32 %v1152, %v1231
        %v1233 = vpop.f32.mrf.mxu0
        %1234 = vdwg.mxu0
        %v1235 = vsel %vm1169, %v1232, -inf
        %1236 = vmax.xlane.f32.xlu0 %v1235
        %v1237 = vpop.xlane.xlu0 %1236
        %v1238 = vsub.f32 %v1232, %v1237
        %v1239 = vmul.f32 %v1238, 1.442695
        %v1240 = vpow.pop %v1239
        %v1241 = vsel %vm1169, %v1240, 0.0
        %1242 = vadd.xlane.f32.xlu0 %v1241
        %v1243 = vpop.xlane.xlu0 %1242
        %v1244 = vrcp.pop %v1243
        %v1245 = vmul.f32 %v1240, %v1244
        %v1246 = vpack.c.bf16 %v1245, %v1245
        %v1248 = vsel %vm1169, %v1246, 0
        %v1251 = vsel %vm1185, %v1221, 0
        %1253 = vmatpush.bf16.msra.mxu0 0
        %1254 = vmatpush.bf16.msra.mxu0 0
        %1255 = vmatpush.bf16.msra.mxu0 0
        %1256 = vmatpush.bf16.msra.mxu0 0
        %1257 = vmatpush.bf16.msra.mxu0 0
        %1258 = vmatpush.bf16.msra.mxu0 0
        %1259 = vmatpush.bf16.msra.mxu0 0
        %1260 = vmatpush.bf16.msra.mxu0 %v1251
        %1261 = vmatmul.bf16.gmra.mxu0 %v1248
        %v1262 = vpop.f32.mrf.mxu0
        %v1263 = vadd.f32 0.0, %v1262
        %v1264 = vpop.f32.mrf.mxu0
        %1265 = vdwg.mxu0
        %v1266 = vpack.c.bf16 %v1263, %v1263
        %v1267 = vld [vmem:[%s6 + $0x80] sm:$0xff]
        %v1268 = vld [vmem:[%s6 + $0x88] sm:$0xff]
        %v1269 = vld [vmem:[%s6 + $0x90] sm:$0xff]
        %v1270 = vld [vmem:[%s6 + $0x98] sm:$0xff]
        %v1271 = vld [vmem:[%s6 + $0xa0] sm:$0xff]
        %v1272 = vld [vmem:[%s6 + $0xa8] sm:$0xff]
        %v1273 = vld [vmem:[%s6 + $0xb0] sm:$0xff]
        %v1274 = vld [vmem:[%s6 + $0xb8] sm:$0xff]
        %v1275 = vld [vmem:[%s6 + $0xc0] sm:$0xff]
        %v1276 = vld [vmem:[%s6 + $0xc8] sm:$0xff]
        %v1277 = vld [vmem:[%s6 + $0xd0] sm:$0xff]
        %v1278 = vld [vmem:[%s6 + $0xd8] sm:$0xff]
        %v1279 = vld [vmem:[%s6 + $0xe0] sm:$0xff]
        %v1280 = vld [vmem:[%s6 + $0xe8] sm:$0xff]
        %v1281 = vld [vmem:[%s6 + $0xf0] sm:$0xff]
        %v1282 = vld [vmem:[%s6 + $0xf8] sm:$0xff]
        %v1299 = vunpack.c.l.b16 %v1267
        %v1300 = vunpack.c.h.b16 %v1267
        %v1301 = vunpack.c.l.b16 %v1268
        %v1302 = vunpack.c.h.b16 %v1268
        %v1303 = vunpack.c.l.b16 %v1269
        %v1304 = vunpack.c.h.b16 %v1269
        %v1305 = vunpack.c.l.b16 %v1270
        %v1306 = vunpack.c.h.b16 %v1270
        %v1307 = vunpack.c.l.b16 %v1271
        %v1308 = vunpack.c.h.b16 %v1271
        %v1309 = vunpack.c.l.b16 %v1272
        %v1310 = vunpack.c.h.b16 %v1272
        %v1311 = vunpack.c.l.b16 %v1273
        %v1312 = vunpack.c.h.b16 %v1273
        %v1313 = vunpack.c.l.b16 %v1274
        %v1314 = vunpack.c.h.b16 %v1274
        %v1315 = vunpack.c.l.b16 %v1275
        %v1316 = vunpack.c.h.b16 %v1275
        %v1317 = vunpack.c.l.b16 %v1276
        %v1318 = vunpack.c.h.b16 %v1276
        %v1319 = vunpack.c.l.b16 %v1277
        %v1320 = vunpack.c.h.b16 %v1277
        %v1321 = vunpack.c.l.b16 %v1278
        %v1322 = vunpack.c.h.b16 %v1278
        %v1323 = vunpack.c.l.b16 %v1279
        %v1324 = vunpack.c.h.b16 %v1279
        %v1325 = vunpack.c.l.b16 %v1280
        %v1326 = vunpack.c.h.b16 %v1280
        %v1327 = vunpack.c.l.b16 %v1281
        %v1328 = vunpack.c.h.b16 %v1281
        %v1329 = vunpack.c.l.b16 %v1282
        %v1330 = vunpack.c.h.b16 %v1282
        %v1331 = vpack.c.b16 %v1301, %v1299
        %v1332 = vpack.c.b16 %v1302, %v1300
        %v1333 = vpack.c.b16 %v1305, %v1303
        %v1334 = vpack.c.b16 %v1306, %v1304
        %v1335 = vpack.c.b16 %v1309, %v1307
        %v1336 = vpack.c.b16 %v1310, %v1308
        %v1337 = vpack.c.b16 %v1313, %v1311
        %v1338 = vpack.c.b16 %v1314, %v1312
        %v1339 = vpack.c.b16 %v1317, %v1315
        %v1340 = vpack.c.b16 %v1318, %v1316
        %v1341 = vpack.c.b16 %v1321, %v1319
        %v1342 = vpack.c.b16 %v1322, %v1320
        %v1343 = vpack.c.b16 %v1325, %v1323
        %v1344 = vpack.c.b16 %v1326, %v1324
        %v1345 = vpack.c.b16 %v1329, %v1327
        %v1346 = vpack.c.b16 %v1330, %v1328
        %1363 = vmatpush.bf16.msra.mxu0 %v1345
        %1364 = vmatpush.bf16.msra.mxu0 %v1343
        %1365 = vmatpush.bf16.msra.mxu0 %v1341
        %1366 = vmatpush.bf16.msra.mxu0 %v1339
        %1367 = vmatpush.bf16.msra.mxu0 %v1337
        %1368 = vmatpush.bf16.msra.mxu0 %v1335
        %1369 = vmatpush.bf16.msra.mxu0 %v1333
        %1370 = vmatpush.bf16.msra.mxu0 %v1331
        %1371 = vmatmul.bf16.gmra.mxu0 %v1266
        %v1372 = vpop.f32.mrf.mxu0
        %v1373 = vadd.f32 0.0, %v1372
        %v1374 = vpop.f32.mrf.mxu0
        %1375 = vdwg.mxu0
        %1376 = vmatpush.bf16.msra.mxu0 %v1346
        %1377 = vmatpush.bf16.msra.mxu0 %v1344
        %1378 = vmatpush.bf16.msra.mxu0 %v1342
        %1379 = vmatpush.bf16.msra.mxu0 %v1340
        %1380 = vmatpush.bf16.msra.mxu0 %v1338
        %1381 = vmatpush.bf16.msra.mxu0 %v1336
        %1382 = vmatpush.bf16.msra.mxu0 %v1334
        %1383 = vmatpush.bf16.msra.mxu0 %v1332
        %1384 = vmatmul.bf16.gmra.mxu0 %v1266
        %v1385 = vpop.f32.mrf.mxu0
        %v1386 = vadd.f32 0.0, %v1385
        %v1387 = vpop.f32.mrf.mxu0
        %1388 = vdwg.mxu0
        %v1405 = vunpack.c.l.b16 %v1203
        %v1406 = vunpack.c.h.b16 %v1203
        %v1407 = vunpack.c.l.b16 %v1204
        %v1408 = vunpack.c.h.b16 %v1204
        %v1409 = vunpack.c.l.b16 %v1205
        %v1410 = vunpack.c.h.b16 %v1205
        %v1411 = vunpack.c.l.b16 %v1206
        %v1412 = vunpack.c.h.b16 %v1206
        %v1413 = vunpack.c.l.b16 %v1207
        %v1414 = vunpack.c.h.b16 %v1207
        %v1415 = vunpack.c.l.b16 %v1208
        %v1416 = vunpack.c.h.b16 %v1208
        %v1417 = vunpack.c.l.b16 %v1209
        %v1418 = vunpack.c.h.b16 %v1209
        %v1419 = vunpack.c.l.b16 %v1210
        %v1420 = vunpack.c.h.b16 %v1210
        %v1421 = vunpack.c.l.b16 %v1211
        %v1422 = vunpack.c.h.b16 %v1211
        %v1423 = vunpack.c.l.b16 %v1212
        %v1424 = vunpack.c.h.b16 %v1212
        %v1425 = vunpack.c.l.b16 %v1213
        %v1426 = vunpack.c.h.b16 %v1213
        %v1427 = vunpack.c.l.b16 %v1214
        %v1428 = vunpack.c.h.b16 %v1214
        %v1429 = vunpack.c.l.b16 %v1215
        %v1430 = vunpack.c.h.b16 %v1215
        %v1431 = vunpack.c.l.b16 %v1216
        %v1432 = vunpack.c.h.b16 %v1216
        %v1433 = vunpack.c.l.b16 %v1217
        %v1434 = vunpack.c.h.b16 %v1217
        %v1435 = vunpack.c.l.b16 %v1218
        %v1436 = vunpack.c.h.b16 %v1218
        %v1437 = vpack.c.b16 %v1407, %v1405
        %v1438 = vpack.c.b16 %v1408, %v1406
        %v1439 = vpack.c.b16 %v1411, %v1409
        %v1440 = vpack.c.b16 %v1412, %v1410
        %v1441 = vpack.c.b16 %v1415, %v1413
        %v1442 = vpack.c.b16 %v1416, %v1414
        %v1443 = vpack.c.b16 %v1419, %v1417
        %v1444 = vpack.c.b16 %v1420, %v1418
        %v1445 = vpack.c.b16 %v1423, %v1421
        %v1446 = vpack.c.b16 %v1424, %v1422
        %v1447 = vpack.c.b16 %v1427, %v1425
        %v1448 = vpack.c.b16 %v1428, %v1426
        %v1449 = vpack.c.b16 %v1431, %v1429
        %v1450 = vpack.c.b16 %v1432, %v1430
        %v1451 = vpack.c.b16 %v1435, %v1433
        %v1452 = vpack.c.b16 %v1436, %v1434
        %1469 = vmatpush.bf16.msra.mxu0 %v1451
        %1470 = vmatpush.bf16.msra.mxu0 %v1449
        %1471 = vmatpush.bf16.msra.mxu0 %v1447
        %1472 = vmatpush.bf16.msra.mxu0 %v1445
        %1473 = vmatpush.bf16.msra.mxu0 %v1443
        %1474 = vmatpush.bf16.msra.mxu0 %v1441
        %1475 = vmatpush.bf16.msra.mxu0 %v1439
        %1476 = vmatpush.bf16.msra.mxu0 %v1437
        %1477 = vmatmul.bf16.gmra.mxu0 %v1202
        %v1478 = vpop.f32.mrf.mxu0
        %v1479 = vadd.f32 %v1373, %v1478
        %v1480 = vpop.f32.mrf.mxu0
        %1481 = vdwg.mxu0
        %1482 = vmatpush.bf16.msra.mxu0 %v1452
        %1483 = vmatpush.bf16.msra.mxu0 %v1450
        %1484 = vmatpush.bf16.msra.mxu0 %v1448
        %1485 = vmatpush.bf16.msra.mxu0 %v1446
        %1486 = vmatpush.bf16.msra.mxu0 %v1444
        %1487 = vmatpush.bf16.msra.mxu0 %v1442
        %1488 = vmatpush.bf16.msra.mxu0 %v1440
        %1489 = vmatpush.bf16.msra.mxu0 %v1438
        %1490 = vmatmul.bf16.gmra.mxu0 %v1202
        %v1491 = vpop.f32.mrf.mxu0
        %v1492 = vadd.f32 %v1386, %v1491
        %v1493 = vpop.f32.mrf.mxu0
        %1494 = vdwg.mxu0
        %v1495 = vld [vmem:[%s7] sm:$0x3]
        %v1497 = vperm.slane %v1495, 0
        %v1498 = vperm.slane %v1495, 1
        %v1501 = vadd.f32 %v1479, %v1497
        %v1502 = vadd.f32 %v1492, %v1498
        %v1503 = vadd.f32 %v339, %v1501
        %v1504 = vadd.f32 %v340, %v1502
        %v1505 = vpack.c.bf16 %v1504, %v1503
        %1506 = vst [vmem:[%s336] sm:$0xff] %v1505
        %p1507 = scmp.lt.s32.totalorder %s20, 1
        %s1508 = scalar_select %p1507, %s20, 1
        %s1509 = smul.addr %s1508, 2
        %s1510 = smul.addr %s1509, 4
        %s1511 = scalar_lea.vmem %s8, %s1510
        // Predicated region
        $region57: #{_lambda_.15} parent=51 // pred_check
          %p1512 = pneg %p216
        $region58: #{_lambda_.15} parent=51 // pred_check_branch
          %1514 = sbr.rel (%p1512) target = $region60
        $region59: #{_lambda_.15} parent=51 // pred_region
          _
        $region60: #{_lambda_.15} parent=51 // pred_fallthru
          _
      $region52: #{_lambda_.15} parent=5 // pred_fallthru
        _
      %p1515 = scmp.le.s32.totalorder 2, %s15
      // Predicated region
      $region61: #{_lambda_.15} parent=5 // pred_check
        %p1516 = pneg %p1515
      $region62: #{_lambda_.15} parent=5 // pred_check_branch
        %1518 = sbr.rel (%p1516) target = $region64
      $region63: #{_lambda_.15} parent=5 // pred_region
        %s1519 = ssub.s32 %s15, 2
        // Predicated region
        $region65: #{_lambda_.15} parent=63 // pred_check
          %p1520 = pneg %p222
        $region66: #{_lambda_.15} parent=63 // pred_check_branch
          %1522 = sbr.rel (%p1520) target = $region68
        $region67: #{_lambda_.15} parent=63 // pred_region
          %p1523 = scmp.lt.s32.totalorder %s21, 1
          %s1524 = scalar_select %p1523, %s21, 1
          %s1525 = smul.addr %s1524, 2
          %s1526 = smul.addr %s1525, 4
          %s1527 = scalar_lea.vmem %s8, %s1526
        $region68: #{_lambda_.15} parent=63 // pred_fallthru
          _
      $region64: #{_lambda_.15} parent=5 // pred_fallthru
        _
    $region6: #{_lambda_.15} parent=1 // loop_footer
      %s19 = sadd.s32 1, %s15
    $region7: #{_lambda_.15} parent=1 // loop_footer_branch
      %14 = sbr.rel target = $region3
    $region8: #{_lambda_.15} parent=1 // loop_exit
      _
    %1528 = vsyncpa [#allocation3], 1
    %s1529 = scalar_lea.sflag [#allocation3], 1
    %1530 = vsyncpa %s1529, 1

// kernel: _lambda_.13
$region0: #{_lambda_.13}
  #allocation0 [shape = 'u32[]', space=smem, size = 0x4, offset = 0x4, fixed_abs, tag = 'smem constant byte address 0x4 - core index']
  #allocation1 [shape = 'u32[72,128]{1,0:T(1,128)}', space=vmem, size = 0x9000, scoped, tag = 'internal scratch']
  %s0 = inlined_call_operand.vmem [shape: bf16[2,8,256], index: 0, kind: input, shape index: {}]
  %s1 = inlined_call_operand.vmem [shape: f32[2,1,8], index: 1, kind: input, shape index: {}]
  %s2 = inlined_call_operand.vmem [shape: f32[1,256], index: 2, kind: input, shape index: {}]
  %s3 = inlined_call_operand.vmem [shape: f32[1,256], index: 3, kind: input, shape index: {}]
  %s4 = inlined_call_operand.hbm [shape: bf16[256,768], index: 4, kind: input, shape index: {}]
  %s5 = inlined_call_operand.vmem [shape: f32[1,768], index: 5, kind: input, shape index: {}]
  %s6 = inlined_call_operand.hbm [shape: bf16[256,256], index: 6, kind: input, shape index: {}]
  %s7 = inlined_call_operand.vmem [shape: f32[1,256], index: 7, kind: input, shape index: {}]
  %s8 = inlined_call_operand.vmem [shape: bf16[2,8,256], index: 8, kind: output, shape index: {}]
  %s9 = sld [smem:[#allocation0]]
  $region73: #{_lambda_.13} parent=0
    _
  %s11 = ssub.s32 1, %s9
  %s12 = scalar_select 0, %s11, %s9
  $region1: #{_lambda_.13} parent=0
    #allocation2 [shape = 'u8[393216]{0}', space=vmem, size = 0x60000, scoped, tag = 'input window, operand 4, single buffered']
    #allocation3 [shape = 's32[2]{0}', space=sflag, size = 0x8, scoped, tag = 'scoped memory for _lambda_.13']
    #allocation4 [shape = 'u8[131072]{0}', space=vmem, size = 0x20000, scoped, tag = 'input window, operand 6, single buffered']
    #allocation5 [shape = 's32[1]{0}', space=sflag, size = 0x4, scoped, tag = 'scoped memory for _lambda_.13']
    %13 = vsyncpa [#allocation3], 0
    %14 = vsyncpa [#allocation5], 0
    loop: start=0, step=1, limit=4
    $region2: #{_lambda_.13} parent=1 // loop_pre_header
      _
    $region3: #{_lambda_.13} parent=1 // loop_header
      %s16 = sphi 0, %s20
      %p17 = scmp.ge.s32.totalorder %s16, 4
      %s26 = sphi 0, %s28
      %s29 = sphi 0, %s26
      %s30 = sphi 0, %s29
      %s46 = sphi 0, %s30
      %s52 = sphi 0, %s54
      %s55 = sphi 0, %s52
      %s56 = sphi 0, %s55
      %s72 = sphi 0, %s56
      %s76 = sphi 0, %s76
      %s78 = sphi 0, %s76
      %s79 = sphi 0, %s78
      %s93 = sphi 0, %s79
      %s97 = sphi 0, %s97
      %s99 = sphi 0, %s97
      %s100 = sphi 0, %s99
      %s114 = sphi 0, %s100
      %s118 = sphi 0, %s118
      %s120 = sphi 0, %s118
      %s121 = sphi 0, %s120
      %s135 = sphi 0, %s121
      %s139 = sphi 0, %s139
      %s141 = sphi 0, %s139
      %s142 = sphi 0, %s141
      %s156 = sphi 0, %s142
      %s160 = sphi 0, %s160
      %s162 = sphi 0, %s160
      %s163 = sphi 0, %s162
      %s177 = sphi 0, %s163
      %s181 = sphi 0, %s181
      %s183 = sphi 0, %s181
      %s184 = sphi 0, %s183
      %s198 = sphi 0, %s184
      %s204 = sphi 0, %s206
      %s207 = sphi 0, %s204
      %s208 = sphi 0, %s207
      %s224 = sphi 0, %s208
    $region4: #{_lambda_.13} parent=1 // loop_header_branch
      %19 = sbr.rel (%p17) target = $region8
    $region5: #{_lambda_.13} parent=1 // loop_body
      %s21 = ssub.s32 %s16, 1
      %s22 = ssub.s32 %s16, 2
      %s23 = sadd.s32 %s16, 1
      %s24 = ssub.s32 %s16, %s23
      %p25 = scmp.eq.s32.totalorder %s24, 0
      %s27 = sadd.s32 %s26, 1
      %s28 = scalar_select %p25, %s26, %s27
      %p31 = pneg %p25
      %p32 = scmp.eq.s32.totalorder %s16, 1
      %p33 = por %p31, %p32
      %p34 = scmp.ne.s32.totalorder %s26, %s29
      %p35 = scmp.eq.s32.totalorder %s16, 0
      %p36 = por %p34, %p35
      %p37 = scmp.ne.s32.totalorder %s26, %s29
      %p38 = scmp.eq.s32.totalorder %s21, 1
      %p39 = por %p37, %p38
      %p40 = scmp.ne.s32.totalorder %s29, %s30
      %p41 = scmp.eq.s32.totalorder %s21, 0
      %p42 = por %p40, %p41
      %p43 = scmp.ne.s32.totalorder %s29, %s30
      %p44 = scmp.eq.s32.totalorder %s22, 1
      %p45 = por %p43, %p44
      %p47 = scmp.ne.s32.totalorder %s30, %s46
      %p48 = scmp.eq.s32.totalorder %s22, 0
      %p49 = por %p47, %p48
      %s50 = ssub.s32 %s16, %s23
      %p51 = scmp.eq.s32.totalorder %s50, 0
      %s53 = sadd.s32 %s52, 1
      %s54 = scalar_select %p51, %s52, %s53
      %p57 = pneg %p51
      %p58 = scmp.eq.s32.totalorder %s16, 1
      %p59 = por %p57, %p58
      %p60 = scmp.ne.s32.totalorder %s52, %s55
      %p61 = scmp.eq.s32.totalorder %s16, 0
      %p62 = por %p60, %p61
      %p63 = scmp.ne.s32.totalorder %s52, %s55
      %p64 = scmp.eq.s32.totalorder %s21, 1
      %p65 = por %p63, %p64
      %p66 = scmp.ne.s32.totalorder %s55, %s56
      %p67 = scmp.eq.s32.totalorder %s21, 0
      %p68 = por %p66, %p67
      %p69 = scmp.ne.s32.totalorder %s55, %s56
      %p70 = scmp.eq.s32.totalorder %s22, 1
      %p71 = por %p69, %p70
      %p73 = scmp.ne.s32.totalorder %s56, %s72
      %p74 = scmp.eq.s32.totalorder %s22, 0
      %p75 = por %p73, %p74
      %s77 = sadd.s32 %s76, 1
      %p80 = scmp.eq.s32.totalorder %s16, 1
      %p81 = scmp.ne.s32.totalorder %s76, %s78
      %p82 = scmp.eq.s32.totalorder %s16, 0
      %p83 = por %p81, %p82
      %p84 = scmp.ne.s32.totalorder %s76, %s78
      %p85 = scmp.eq.s32.totalorder %s21, 1
      %p86 = por %p84, %p85
      %p87 = scmp.ne.s32.totalorder %s78, %s79
      %p88 = scmp.eq.s32.totalorder %s21, 0
      %p89 = por %p87, %p88
      %p90 = scmp.ne.s32.totalorder %s78, %s79
      %p91 = scmp.eq.s32.totalorder %s22, 1
      %p92 = por %p90, %p91
      %p94 = scmp.ne.s32.totalorder %s79, %s93
      %p95 = scmp.eq.s32.totalorder %s22, 0
      %p96 = por %p94, %p95
      %s98 = sadd.s32 %s97, 1
      %p101 = scmp.eq.s32.totalorder %s16, 1
      %p102 = scmp.ne.s32.totalorder %s97, %s99
      %p103 = scmp.eq.s32.totalorder %s16, 0
      %p104 = por %p102, %p103
      %p105 = scmp.ne.s32.totalorder %s97, %s99
      %p106 = scmp.eq.s32.totalorder %s21, 1
      %p107 = por %p105, %p106
      %p108 = scmp.ne.s32.totalorder %s99, %s100
      %p109 = scmp.eq.s32.totalorder %s21, 0
      %p110 = por %p108, %p109
      %p111 = scmp.ne.s32.totalorder %s99, %s100
      %p112 = scmp.eq.s32.totalorder %s22, 1
      %p113 = por %p111, %p112
      %p115 = scmp.ne.s32.totalorder %s100, %s114
      %p116 = scmp.eq.s32.totalorder %s22, 0
      %p117 = por %p115, %p116
      %s119 = sadd.s32 %s118, 1
      %p122 = scmp.eq.s32.totalorder %s16, 1
      %p123 = scmp.ne.s32.totalorder %s118, %s120
      %p124 = scmp.eq.s32.totalorder %s16, 0
      %p125 = por %p123, %p124
      %p126 = scmp.ne.s32.totalorder %s118, %s120
      %p127 = scmp.eq.s32.totalorder %s21, 1
      %p128 = por %p126, %p127
      %p129 = scmp.ne.s32.totalorder %s120, %s121
      %p130 = scmp.eq.s32.totalorder %s21, 0
      %p131 = por %p129, %p130
      %p132 = scmp.ne.s32.totalorder %s120, %s121
      %p133 = scmp.eq.s32.totalorder %s22, 1
      %p134 = por %p132, %p133
      %p136 = scmp.ne.s32.totalorder %s121, %s135
      %p137 = scmp.eq.s32.totalorder %s22, 0
      %p138 = por %p136, %p137
      %s140 = sadd.s32 %s139, 1
      %p143 = scmp.eq.s32.totalorder %s16, 1
      %p144 = scmp.ne.s32.totalorder %s139, %s141
      %p145 = scmp.eq.s32.totalorder %s16, 0
      %p146 = por %p144, %p145
      %p147 = scmp.ne.s32.totalorder %s139, %s141
      %p148 = scmp.eq.s32.totalorder %s21, 1
      %p149 = por %p147, %p148
      %p150 = scmp.ne.s32.totalorder %s141, %s142
      %p151 = scmp.eq.s32.totalorder %s21, 0
      %p152 = por %p150, %p151
      %p153 = scmp.ne.s32.totalorder %s141, %s142
      %p154 = scmp.eq.s32.totalorder %s22, 1
      %p155 = por %p153, %p154
      %p157 = scmp.ne.s32.totalorder %s142, %s156
      %p158 = scmp.eq.s32.totalorder %s22, 0
      %p159 = por %p157, %p158
      %s161 = sadd.s32 %s160, 1
      %p164 = scmp.eq.s32.totalorder %s16, 1
      %p165 = scmp.ne.s32.totalorder %s160, %s162
      %p166 = scmp.eq.s32.totalorder %s16, 0
      %p167 = por %p165, %p166
      %p168 = scmp.ne.s32.totalorder %s160, %s162
      %p169 = scmp.eq.s32.totalorder %s21, 1
      %p170 = por %p168, %p169
      %p171 = scmp.ne.s32.totalorder %s162, %s163
      %p172 = scmp.eq.s32.totalorder %s21, 0
      %p173 = por %p171, %p172
      %p174 = scmp.ne.s32.totalorder %s162, %s163
      %p175 = scmp.eq.s32.totalorder %s22, 1
      %p176 = por %p174, %p175
      %p178 = scmp.ne.s32.totalorder %s163, %s177
      %p179 = scmp.eq.s32.totalorder %s22, 0
      %p180 = por %p178, %p179
      %s182 = sadd.s32 %s181, 1
      %p185 = scmp.eq.s32.totalorder %s16, 1
      %p186 = scmp.ne.s32.totalorder %s181, %s183
      %p187 = scmp.eq.s32.totalorder %s16, 0
      %p188 = por %p186, %p187
      %p189 = scmp.ne.s32.totalorder %s181, %s183
      %p190 = scmp.eq.s32.totalorder %s21, 1
      %p191 = por %p189, %p190
      %p192 = scmp.ne.s32.totalorder %s183, %s184
      %p193 = scmp.eq.s32.totalorder %s21, 0
      %p194 = por %p192, %p193
      %p195 = scmp.ne.s32.totalorder %s183, %s184
      %p196 = scmp.eq.s32.totalorder %s22, 1
      %p197 = por %p195, %p196
      %p199 = scmp.ne.s32.totalorder %s184, %s198
      %p200 = scmp.eq.s32.totalorder %s22, 0
      %p201 = por %p199, %p200
      %s202 = ssub.s32 %s16, %s23
      %p203 = scmp.eq.s32.totalorder %s202, 0
      %s205 = sadd.s32 %s204, 1
      %s206 = scalar_select %p203, %s204, %s205
      %p209 = pneg %p203
      %p210 = scmp.eq.s32.totalorder %s16, 1
      %p211 = por %p209, %p210
      %p212 = scmp.ne.s32.totalorder %s204, %s207
      %p213 = scmp.eq.s32.totalorder %s16, 0
      %p214 = por %p212, %p213
      %p215 = scmp.ne.s32.totalorder %s204, %s207
      %p216 = scmp.eq.s32.totalorder %s21, 1
      %p217 = por %p215, %p216
      %p218 = scmp.ne.s32.totalorder %s207, %s208
      %p219 = scmp.eq.s32.totalorder %s21, 0
      %p220 = por %p218, %p219
      %p221 = scmp.ne.s32.totalorder %s207, %s208
      %p222 = scmp.eq.s32.totalorder %s22, 1
      %p223 = por %p221, %p222
      %p225 = scmp.ne.s32.totalorder %s208, %s224
      %p226 = scmp.eq.s32.totalorder %s22, 0
      %p227 = por %p225, %p226
      %p228 = scmp.le.s32.totalorder 1, %s16
      %p229 = scmp.lt.s32.totalorder %s16, 3
      %p230 = pnand %p228, %p229
      %p231 = pneg %p230
      // Predicated region
      $region9: #{_lambda_.13} parent=5 // pred_check
        _
      $region10: #{_lambda_.13} parent=5 // pred_check_branch
        %233 = sbr.rel (%p230) target = $region12
      $region11: #{_lambda_.13} parent=5 // pred_region
        %s234 = ssub.s32 %s16, 1
        // Predicated region
        $region13: #{_lambda_.13} parent=11 // pred_check
          %p235 = pneg %p89
        $region14: #{_lambda_.13} parent=11 // pred_check_branch
          %237 = sbr.rel (%p235) target = $region16
        $region15: #{_lambda_.13} parent=11 // pred_region
          _
        $region16: #{_lambda_.13} parent=11 // pred_fallthru
          _
        // Predicated region
        $region17: #{_lambda_.13} parent=11 // pred_check
          %p238 = pneg %p110
        $region18: #{_lambda_.13} parent=11 // pred_check_branch
          %240 = sbr.rel (%p238) target = $region20
        $region19: #{_lambda_.13} parent=11 // pred_region
          _
        $region20: #{_lambda_.13} parent=11 // pred_fallthru
          _
        // Predicated region
        $region21: #{_lambda_.13} parent=11 // pred_check
          %p241 = pneg %p131
        $region22: #{_lambda_.13} parent=11 // pred_check_branch
          %243 = sbr.rel (%p241) target = $region24
        $region23: #{_lambda_.13} parent=11 // pred_region
          %245 = vsyncadd [#allocation3], 0
          %s246 = sshll.u32 %s4, 4
          %s247 = int_to_ptr.hbm [resolvable:$true] %s246
          %s248 = sshll.u32 [#allocation2], 4
          %s249 = int_to_ptr.vmem [resolvable:$true] %s248
          %254 = dma.hbm_to_vmem [thread:$0]  %s247, 12288, %s249, [#allocation3], 384, 384, 24
        $region24: #{_lambda_.13} parent=11 // pred_fallthru
          _
        // Predicated region
        $region25: #{_lambda_.13} parent=11 // pred_check
          %p255 = pneg %p152
        $region26: #{_lambda_.13} parent=11 // pred_check_branch
          %257 = sbr.rel (%p255) target = $region28
        $region27: #{_lambda_.13} parent=11 // pred_region
          _
        $region28: #{_lambda_.13} parent=11 // pred_fallthru
          _
        // Predicated region
        $region29: #{_lambda_.13} parent=11 // pred_check
          %p258 = pneg %p173
        $region30: #{_lambda_.13} parent=11 // pred_check_branch
          %260 = sbr.rel (%p258) target = $region32
        $region31: #{_lambda_.13} parent=11 // pred_region
          %262 = vsyncadd [#allocation5], 0
          %s263 = sshll.u32 %s6, 4
          %s264 = int_to_ptr.hbm [resolvable:$true] %s263
          %s265 = sshll.u32 [#allocation4], 4
          %s266 = int_to_ptr.vmem [resolvable:$true] %s265
          %271 = dma.hbm_to_vmem [thread:$0]  %s264, 4096, %s266, [#allocation5], 128, 128, 8
        $region32: #{_lambda_.13} parent=11 // pred_fallthru
          _
        // Predicated region
        $region33: #{_lambda_.13} parent=11 // pred_check
          %p272 = pneg %p194
        $region34: #{_lambda_.13} parent=11 // pred_check_branch
          %274 = sbr.rel (%p272) target = $region36
        $region35: #{_lambda_.13} parent=11 // pred_region
          _
        $region36: #{_lambda_.13} parent=11 // pred_fallthru
          _
      $region12: #{_lambda_.13} parent=5 // pred_fallthru
        _
      %p275 = scmp.lt.s32.totalorder %s16, 2
      // Predicated region
      $region37: #{_lambda_.13} parent=5 // pred_check
        %p276 = pneg %p275
      $region38: #{_lambda_.13} parent=5 // pred_check_branch
        %278 = sbr.rel (%p276) target = $region40
      $region39: #{_lambda_.13} parent=5 // pred_region
        // Predicated region
        $region41: #{_lambda_.13} parent=39 // pred_check
          %p279 = pneg %p36
        $region42: #{_lambda_.13} parent=39 // pred_check_branch
          %281 = sbr.rel (%p279) target = $region44
        $region43: #{_lambda_.13} parent=39 // pred_region
          %p282 = scmp.lt.s32.totalorder %s16, 1
          %s283 = scalar_select %p282, %s16, 1
          %s284 = smul.addr %s283, 2
          %s285 = smul.addr %s284, 4
          %s286 = scalar_lea.vmem %s0, %s285
        $region44: #{_lambda_.13} parent=39 // pred_fallthru
          _
        // Predicated region
        $region45: #{_lambda_.13} parent=39 // pred_check
          %p287 = pneg %p62
        $region46: #{_lambda_.13} parent=39 // pred_check_branch
          %289 = sbr.rel (%p287) target = $region48
        $region47: #{_lambda_.13} parent=39 // pred_region
          %p290 = scmp.lt.s32.totalorder %s16, 1
          %s291 = scalar_select %p290, %s16, 1
          %s292 = scalar_lea.vmem %s1, %s291
        $region48: #{_lambda_.13} parent=39 // pred_fallthru
          _
      $region40: #{_lambda_.13} parent=5 // pred_fallthru
        _
      %p293 = scmp.le.s32.totalorder 1, %s16
      %p294 = scmp.lt.s32.totalorder %s16, 3
      %p295 = pnand %p293, %p294
      %p296 = pneg %p295
      // Predicated region
      $region49: #{_lambda_.13} parent=5 // pred_check
        _
      $region50: #{_lambda_.13} parent=5 // pred_check_branch
        %298 = sbr.rel (%p295) target = $region52
      $region51: #{_lambda_.13} parent=5 // pred_region
        %s299 = ssub.s32 %s16, 1
        // Predicated region
        $region53: #{_lambda_.13} parent=51 // pred_check
          %p300 = pneg %p131
        $region54: #{_lambda_.13} parent=51 // pred_check_branch
          %302 = sbr.rel (%p300) target = $region56
        $region55: #{_lambda_.13} parent=51 // pred_region
          %304 = dma.done [#allocation3], 12288
        $region56: #{_lambda_.13} parent=51 // pred_fallthru
          _
        // Predicated region
        $region57: #{_lambda_.13} parent=51 // pred_check
          %p305 = pneg %p173
        $region58: #{_lambda_.13} parent=51 // pred_check_branch
          %307 = sbr.rel (%p305) target = $region60
        $region59: #{_lambda_.13} parent=51 // pred_region
          %309 = dma.done [#allocation5], 4096
        $region60: #{_lambda_.13} parent=51 // pred_fallthru
          _
        %p310 = scmp.lt.s32.totalorder %s21, 1
        %s311 = scalar_select %p310, %s21, 1
        %s312 = smul.addr %s311, 2
        %s313 = smul.addr %s312, 4
        %s314 = scalar_lea.vmem %s0, %s313
        %p315 = pneg %p42
        %p316 = pneg %p39
        %p317 = scmp.lt.s32.totalorder %s21, 1
        %s318 = scalar_select %p317, %s21, 1
        %s319 = scalar_lea.vmem %s1, %s318
        %p320 = pneg %p68
        %p321 = pneg %p65
        %p322 = pneg %p89
        %p323 = pneg %p86
        %p324 = pneg %p110
        %p325 = pneg %p107
        %p326 = pneg %p131
        %p327 = pneg %p128
        %p328 = pneg %p152
        %p329 = pneg %p149
        %p330 = pneg %p173
        %p331 = pneg %p170
        %p332 = pneg %p194
        %p333 = pneg %p191
        %p334 = pneg %p220
        %p335 = pneg %p217
        %p336 = scmp.lt.s32.totalorder %s21, 1
        %s337 = scalar_select %p336, %s21, 1
        %s338 = smul.addr %s337, 2
        %s339 = smul.addr %s338, 4
        %s340 = scalar_lea.vmem %s8, %s339
        %p341 = scmp.lt.s32.totalorder %s21, 1
        %s342 = scalar_select %p341, %s21, 1
        %s343 = smul.addr %s342, 2
        %s344 = smul.addr %s343, 4
        %s345 = scalar_lea.vmem %s0, %s344
        %p346 = scmp.lt.s32.totalorder %s21, 1
        %s347 = scalar_select %p346, %s21, 1
        %s348 = scalar_lea.vmem %s1, %s347
        %p349 = scmp.lt.s32.totalorder %s21, 1
        %s350 = scalar_select %p349, %s21, 1
        %s351 = smul.addr %s350, 2
        %s352 = smul.addr %s351, 4
        %s353 = scalar_lea.vmem %s8, %s352
        %v355 = vld [vmem:[%s345] sm:$0xff]
        %v356 = vunpack.c.l.bf16 %v355
        %v357 = vunpack.c.h.bf16 %v355
        %v358 = vld [vmem:[%s2] sm:$0x3]
        %v359 = vld [vmem:[%s3] sm:$0x3]
        %v360 = vadd.f32 %v356, %v357
        %361 = vadd.xlane.f32.xlu0 %v360
        %v362 = vpop.xlane.xlu0 %361
        %v363 = vrcp.pop 256.0
        %v364 = vmul.f32 256.0, %v363
        %v365 = vsub.f32 1.0, %v364
        %v366 = vmul.f32 %v363, %v365
        %v367 = vadd.f32 %v363, %v366
        %vm368 = vweird.f32 %v363
        %v369 = vsel %vm368, %v363, %v367
        %v370 = vmul.f32 %v362, %v369
        %v371 = vsub.f32 %v356, %v370
        %v372 = vsub.f32 %v357, %v370
        %v373 = vmul.f32 %v371, %v371
        %v374 = vmul.f32 %v372, %v372
        %v375 = vadd.f32 %v373, %v374
        %376 = vadd.xlane.f32.xlu0 %v375
        %v377 = vpop.xlane.xlu0 %376
        %v378 = vmul.f32 %v377, %v369
        %v379 = vadd.f32 %v378, 1e-05
        %v380 = vrsqrt.pop %v379
        %v381 = vmul.f32 %v380, %v379
        %v382 = vmul.f32 %v381, %v380
        %v383 = vmul.f32 0.5, %v382
        %v384 = vsub.f32 1.5, %v383
        %v385 = vmul.f32 %v380, %v384
        %vm386 = vweird.f32 %v379
        %vm387 = vweird.f32 %v380
        %vm388 = vmor %vm386, %vm387
        %v389 = vsel %vm388, %v380, %v385
        %v390 = vmul.f32 %v371, %v389
        %v391 = vmul.f32 %v372, %v389
        %v393 = vperm.slane %v358, 0
        %v394 = vperm.slane %v358, 1
        %v397 = vmul.f32 %v390, %v393
        %v398 = vmul.f32 %v391, %v394
        %v400 = vperm.slane %v359, 0
        %v401 = vperm.slane %v359, 1
        %v404 = vadd.f32 %v397, %v400
        %v405 = vadd.f32 %v398, %v401
        %v406 = vpack.c.bf16 %v404, %v404
        %v407 = vpack.c.bf16 %v405, %v405
        %v408 = vld [vmem:[#allocation2] sm:$0xff]
        %v409 = vld [vmem:[#allocation2 + $0x8] sm:$0xff]
        %v410 = vld [vmem:[#allocation2 + $0x10] sm:$0xff]
        %v411 = vld [vmem:[#allocation2 + $0x18] sm:$0xff]
        %v412 = vld [vmem:[#allocation2 + $0x20] sm:$0xff]
        %v413 = vld [vmem:[#allocation2 + $0x28] sm:$0xff]
        %v414 = vld [vmem:[#allocation2 + $0x30] sm:$0xff]
        %v415 = vld [vmem:[#allocation2 + $0x38] sm:$0xff]
        %v416 = vld [vmem:[#allocation2 + $0x40] sm:$0xff]
        %v417 = vld [vmem:[#allocation2 + $0x48] sm:$0xff]
        %v418 = vld [vmem:[#allocation2 + $0x50] sm:$0xff]
        %v419 = vld [vmem:[#allocation2 + $0x58] sm:$0xff]
        %v420 = vld [vmem:[#allocation2 + $0x60] sm:$0xff]
        %v421 = vld [vmem:[#allocation2 + $0x68] sm:$0xff]
        %v422 = vld [vmem:[#allocation2 + $0x70] sm:$0xff]
        %v423 = vld [vmem:[#allocation2 + $0x78] sm:$0xff]
        %v424 = vld [vmem:[#allocation2 + $0x80] sm:$0xff]
        %v425 = vld [vmem:[#allocation2 + $0x88] sm:$0xff]
        %v426 = vld [vmem:[#allocation2 + $0x90] sm:$0xff]
        %v427 = vld [vmem:[#allocation2 + $0x98] sm:$0xff]
        %v428 = vld [vmem:[#allocation2 + $0xa0] sm:$0xff]
        %v429 = vld [vmem:[#allocation2 + $0xa8] sm:$0xff]
        %v430 = vld [vmem:[#allocation2 + $0xb0] sm:$0xff]
        %v431 = vld [vmem:[#allocation2 + $0xb8] sm:$0xff]
        %v432 = vld [vmem:[#allocation2 + $0xc0] sm:$0xff]
        %v433 = vld [vmem:[#allocation2 + $0xc8] sm:$0xff]
        %v434 = vld [vmem:[#allocation2 + $0xd0] sm:$0xff]
        %v435 = vld [vmem:[#allocation2 + $0xd8] sm:$0xff]
        %v436 = vld [vmem:[#allocation2 + $0xe0] sm:$0xff]
        %v437 = vld [vmem:[#allocation2 + $0xe8] sm:$0xff]
        %v438 = vld [vmem:[#allocation2 + $0xf0] sm:$0xff]
        %v439 = vld [vmem:[#allocation2 + $0xf8] sm:$0xff]
        %v440 = vld [vmem:[#allocation2 + $0x100] sm:$0xff]
        %v441 = vld [vmem:[#allocation2 + $0x108] sm:$0xff]
        %v442 = vld [vmem:[#allocation2 + $0x110] sm:$0xff]
        %v443 = vld [vmem:[#allocation2 + $0x118] sm:$0xff]
        %v444 = vld [vmem:[#allocation2 + $0x120] sm:$0xff]
        %v445 = vld [vmem:[#allocation2 + $0x128] sm:$0xff]
        %v446 = vld [vmem:[#allocation2 + $0x130] sm:$0xff]
        %v447 = vld [vmem:[#allocation2 + $0x138] sm:$0xff]
        %v448 = vld [vmem:[#allocation2 + $0x140] sm:$0xff]
        %v449 = vld [vmem:[#allocation2 + $0x148] sm:$0xff]
        %v450 = vld [vmem:[#allocation2 + $0x150] sm:$0xff]
        %v451 = vld [vmem:[#allocation2 + $0x158] sm:$0xff]
        %v452 = vld [vmem:[#allocation2 + $0x160] sm:$0xff]
        %v453 = vld [vmem:[#allocation2 + $0x168] sm:$0xff]
        %v454 = vld [vmem:[#allocation2 + $0x170] sm:$0xff]
        %v455 = vld [vmem:[#allocation2 + $0x178] sm:$0xff]
        %v456 = vld [vmem:[#allocation2 + $0x180] sm:$0xff]
        %v457 = vld [vmem:[#allocation2 + $0x188] sm:$0xff]
        %v458 = vld [vmem:[#allocation2 + $0x190] sm:$0xff]
        %v459 = vld [vmem:[#allocation2 + $0x198] sm:$0xff]
        %v460 = vld [vmem:[#allocation2 + $0x1a0] sm:$0xff]
        %v461 = vld [vmem:[#allocation2 + $0x1a8] sm:$0xff]
        %v462 = vld [vmem:[#allocation2 + $0x1b0] sm:$0xff]
        %v463 = vld [vmem:[#allocation2 + $0x1b8] sm:$0xff]
        %v464 = vld [vmem:[#allocation2 + $0x1c0] sm:$0xff]
        %v465 = vld [vmem:[#allocation2 + $0x1c8] sm:$0xff]
        %v466 = vld [vmem:[#allocation2 + $0x1d0] sm:$0xff]
        %v467 = vld [vmem:[#allocation2 + $0x1d8] sm:$0xff]
        %v468 = vld [vmem:[#allocation2 + $0x1e0] sm:$0xff]
        %v469 = vld [vmem:[#allocation2 + $0x1e8] sm:$0xff]
        %v470 = vld [vmem:[#allocation2 + $0x1f0] sm:$0xff]
        %v471 = vld [vmem:[#allocation2 + $0x1f8] sm:$0xff]
        %v472 = vld [vmem:[#allocation2 + $0x200] sm:$0xff]
        %v473 = vld [vmem:[#allocation2 + $0x208] sm:$0xff]
        %v474 = vld [vmem:[#allocation2 + $0x210] sm:$0xff]
        %v475 = vld [vmem:[#allocation2 + $0x218] sm:$0xff]
        %v476 = vld [vmem:[#allocation2 + $0x220] sm:$0xff]
        %v477 = vld [vmem:[#allocation2 + $0x228] sm:$0xff]
        %v478 = vld [vmem:[#allocation2 + $0x230] sm:$0xff]
        %v479 = vld [vmem:[#allocation2 + $0x238] sm:$0xff]
        %v480 = vld [vmem:[#allocation2 + $0x240] sm:$0xff]
        %v481 = vld [vmem:[#allocation2 + $0x248] sm:$0xff]
        %v482 = vld [vmem:[#allocation2 + $0x250] sm:$0xff]
        %v483 = vld [vmem:[#allocation2 + $0x258] sm:$0xff]
        %v484 = vld [vmem:[#allocation2 + $0x260] sm:$0xff]
        %v485 = vld [vmem:[#allocation2 + $0x268] sm:$0xff]
        %v486 = vld [vmem:[#allocation2 + $0x270] sm:$0xff]
        %v487 = vld [vmem:[#allocation2 + $0x278] sm:$0xff]
        %v488 = vld [vmem:[#allocation2 + $0x280] sm:$0xff]
        %v489 = vld [vmem:[#allocation2 + $0x288] sm:$0xff]
        %v490 = vld [vmem:[#allocation2 + $0x290] sm:$0xff]
        %v491 = vld [vmem:[#allocation2 + $0x298] sm:$0xff]
        %v492 = vld [vmem:[#allocation2 + $0x2a0] sm:$0xff]
        %v493 = vld [vmem:[#allocation2 + $0x2a8] sm:$0xff]
        %v494 = vld [vmem:[#allocation2 + $0x2b0] sm:$0xff]
        %v495 = vld [vmem:[#allocation2 + $0x2b8] sm:$0xff]
        %v496 = vld [vmem:[#allocation2 + $0x2c0] sm:$0xff]
        %v497 = vld [vmem:[#allocation2 + $0x2c8] sm:$0xff]
        %v498 = vld [vmem:[#allocation2 + $0x2d0] sm:$0xff]
        %v499 = vld [vmem:[#allocation2 + $0x2d8] sm:$0xff]
        %v500 = vld [vmem:[#allocation2 + $0x2e0] sm:$0xff]
        %v501 = vld [vmem:[#allocation2 + $0x2e8] sm:$0xff]
        %v502 = vld [vmem:[#allocation2 + $0x2f0] sm:$0xff]
        %v503 = vld [vmem:[#allocation2 + $0x2f8] sm:$0xff]
        %v504 = vld [vmem:[%s5] sm:$0x3f]
        %v506 = vperm.slane %v504, 0
        %v507 = vperm.slane %v504, 1
        %v508 = vperm.slane %v504, 2
        %v509 = vperm.slane %v504, 3
        %v510 = vperm.slane %v504, 4
        %v511 = vperm.slane %v504, 5
        %v614 = vunpack.c.l.b16 %v408
        %v615 = vunpack.c.h.b16 %v408
        %v616 = vunpack.c.l.b16 %v409
        %v617 = vunpack.c.h.b16 %v409
        %v618 = vunpack.c.l.b16 %v410
        %v619 = vunpack.c.h.b16 %v410
        %v620 = vunpack.c.l.b16 %v411
        %v621 = vunpack.c.h.b16 %v411
        %v622 = vunpack.c.l.b16 %v412
        %v623 = vunpack.c.h.b16 %v412
        %v624 = vunpack.c.l.b16 %v413
        %v625 = vunpack.c.h.b16 %v413
        %v626 = vunpack.c.l.b16 %v414
        %v627 = vunpack.c.h.b16 %v414
        %v628 = vunpack.c.l.b16 %v415
        %v629 = vunpack.c.h.b16 %v415
        %v630 = vunpack.c.l.b16 %v416
        %v631 = vunpack.c.h.b16 %v416
        %v632 = vunpack.c.l.b16 %v417
        %v633 = vunpack.c.h.b16 %v417
        %v634 = vunpack.c.l.b16 %v418
        %v635 = vunpack.c.h.b16 %v418
        %v636 = vunpack.c.l.b16 %v419
        %v637 = vunpack.c.h.b16 %v419
        %v638 = vunpack.c.l.b16 %v420
        %v639 = vunpack.c.h.b16 %v420
        %v640 = vunpack.c.l.b16 %v421
        %v641 = vunpack.c.h.b16 %v421
        %v642 = vunpack.c.l.b16 %v422
        %v643 = vunpack.c.h.b16 %v422
        %v644 = vunpack.c.l.b16 %v423
        %v645 = vunpack.c.h.b16 %v423
        %v646 = vunpack.c.l.b16 %v424
        %v647 = vunpack.c.h.b16 %v424
        %v648 = vunpack.c.l.b16 %v425
        %v649 = vunpack.c.h.b16 %v425
        %v650 = vunpack.c.l.b16 %v426
        %v651 = vunpack.c.h.b16 %v426
        %v652 = vunpack.c.l.b16 %v427
        %v653 = vunpack.c.h.b16 %v427
        %v654 = vunpack.c.l.b16 %v428
        %v655 = vunpack.c.h.b16 %v428
        %v656 = vunpack.c.l.b16 %v429
        %v657 = vunpack.c.h.b16 %v429
        %v658 = vunpack.c.l.b16 %v430
        %v659 = vunpack.c.h.b16 %v430
        %v660 = vunpack.c.l.b16 %v431
        %v661 = vunpack.c.h.b16 %v431
        %v662 = vunpack.c.l.b16 %v432
        %v663 = vunpack.c.h.b16 %v432
        %v664 = vunpack.c.l.b16 %v433
        %v665 = vunpack.c.h.b16 %v433
        %v666 = vunpack.c.l.b16 %v434
        %v667 = vunpack.c.h.b16 %v434
        %v668 = vunpack.c.l.b16 %v435
        %v669 = vunpack.c.h.b16 %v435
        %v670 = vunpack.c.l.b16 %v436
        %v671 = vunpack.c.h.b16 %v436
        %v672 = vunpack.c.l.b16 %v437
        %v673 = vunpack.c.h.b16 %v437
        %v674 = vunpack.c.l.b16 %v438
        %v675 = vunpack.c.h.b16 %v438
        %v676 = vunpack.c.l.b16 %v439
        %v677 = vunpack.c.h.b16 %v439
        %v678 = vunpack.c.l.b16 %v440
        %v679 = vunpack.c.h.b16 %v440
        %v680 = vunpack.c.l.b16 %v441
        %v681 = vunpack.c.h.b16 %v441
        %v682 = vunpack.c.l.b16 %v442
        %v683 = vunpack.c.h.b16 %v442
        %v684 = vunpack.c.l.b16 %v443
        %v685 = vunpack.c.h.b16 %v443
        %v686 = vunpack.c.l.b16 %v444
        %v687 = vunpack.c.h.b16 %v444
        %v688 = vunpack.c.l.b16 %v445
        %v689 = vunpack.c.h.b16 %v445
        %v690 = vunpack.c.l.b16 %v446
        %v691 = vunpack.c.h.b16 %v446
        %v692 = vunpack.c.l.b16 %v447
        %v693 = vunpack.c.h.b16 %v447
        %v694 = vunpack.c.l.b16 %v448
        %v695 = vunpack.c.h.b16 %v448
        %v696 = vunpack.c.l.b16 %v449
        %v697 = vunpack.c.h.b16 %v449
        %v698 = vunpack.c.l.b16 %v450
        %v699 = vunpack.c.h.b16 %v450
        %v700 = vunpack.c.l.b16 %v451
        %v701 = vunpack.c.h.b16 %v451
        %v702 = vunpack.c.l.b16 %v452
        %v703 = vunpack.c.h.b16 %v452
        %v704 = vunpack.c.l.b16 %v453
        %v705 = vunpack.c.h.b16 %v453
        %v706 = vunpack.c.l.b16 %v454
        %v707 = vunpack.c.h.b16 %v454
        %v708 = vunpack.c.l.b16 %v455
        %v709 = vunpack.c.h.b16 %v455
        %v710 = vunpack.c.l.b16 %v456
        %v711 = vunpack.c.h.b16 %v456
        %v712 = vunpack.c.l.b16 %v457
        %v713 = vunpack.c.h.b16 %v457
        %v714 = vunpack.c.l.b16 %v458
        %v715 = vunpack.c.h.b16 %v458
        %v716 = vunpack.c.l.b16 %v459
        %v717 = vunpack.c.h.b16 %v459
        %v718 = vunpack.c.l.b16 %v460
        %v719 = vunpack.c.h.b16 %v460
        %v720 = vunpack.c.l.b16 %v461
        %v721 = vunpack.c.h.b16 %v461
        %v722 = vunpack.c.l.b16 %v462
        %v723 = vunpack.c.h.b16 %v462
        %v724 = vunpack.c.l.b16 %v463
        %v725 = vunpack.c.h.b16 %v463
        %v726 = vunpack.c.l.b16 %v464
        %v727 = vunpack.c.h.b16 %v464
        %v728 = vunpack.c.l.b16 %v465
        %v729 = vunpack.c.h.b16 %v465
        %v730 = vunpack.c.l.b16 %v466
        %v731 = vunpack.c.h.b16 %v466
        %v732 = vunpack.c.l.b16 %v467
        %v733 = vunpack.c.h.b16 %v467
        %v734 = vunpack.c.l.b16 %v468
        %v735 = vunpack.c.h.b16 %v468
        %v736 = vunpack.c.l.b16 %v469
        %v737 = vunpack.c.h.b16 %v469
        %v738 = vunpack.c.l.b16 %v470
        %v739 = vunpack.c.h.b16 %v470
        %v740 = vunpack.c.l.b16 %v471
        %v741 = vunpack.c.h.b16 %v471
        %v742 = vunpack.c.l.b16 %v472
        %v743 = vunpack.c.h.b16 %v472
        %v744 = vunpack.c.l.b16 %v473
        %v745 = vunpack.c.h.b16 %v473
        %v746 = vunpack.c.l.b16 %v474
        %v747 = vunpack.c.h.b16 %v474
        %v748 = vunpack.c.l.b16 %v475
        %v749 = vunpack.c.h.b16 %v475
        %v750 = vunpack.c.l.b16 %v476
        %v751 = vunpack.c.h.b16 %v476
        %v752 = vunpack.c.l.b16 %v477
        %v753 = vunpack.c.h.b16 %v477
        %v754 = vunpack.c.l.b16 %v478
        %v755 = vunpack.c.h.b16 %v478
        %v756 = vunpack.c.l.b16 %v479
        %v757 = vunpack.c.h.b16 %v479
        %v758 = vunpack.c.l.b16 %v480
        %v759 = vunpack.c.h.b16 %v480
        %v760 = vunpack.c.l.b16 %v481
        %v761 = vunpack.c.h.b16 %v481
        %v762 = vunpack.c.l.b16 %v482
        %v763 = vunpack.c.h.b16 %v482
        %v764 = vunpack.c.l.b16 %v483
        %v765 = vunpack.c.h.b16 %v483
        %v766 = vunpack.c.l.b16 %v484
        %v767 = vunpack.c.h.b16 %v484
        %v768 = vunpack.c.l.b16 %v485
        %v769 = vunpack.c.h.b16 %v485
        %v770 = vunpack.c.l.b16 %v486
        %v771 = vunpack.c.h.b16 %v486
        %v772 = vunpack.c.l.b16 %v487
        %v773 = vunpack.c.h.b16 %v487
        %v774 = vunpack.c.l.b16 %v488
        %v775 = vunpack.c.h.b16 %v488
        %v776 = vunpack.c.l.b16 %v489
        %v777 = vunpack.c.h.b16 %v489
        %v778 = vunpack.c.l.b16 %v490
        %v779 = vunpack.c.h.b16 %v490
        %v780 = vunpack.c.l.b16 %v491
        %v781 = vunpack.c.h.b16 %v491
        %v782 = vunpack.c.l.b16 %v492
        %v783 = vunpack.c.h.b16 %v492
        %v784 = vunpack.c.l.b16 %v493
        %v785 = vunpack.c.h.b16 %v493
        %v786 = vunpack.c.l.b16 %v494
        %v787 = vunpack.c.h.b16 %v494
        %v788 = vunpack.c.l.b16 %v495
        %v789 = vunpack.c.h.b16 %v495
        %v790 = vunpack.c.l.b16 %v496
        %v791 = vunpack.c.h.b16 %v496
        %v792 = vunpack.c.l.b16 %v497
        %v793 = vunpack.c.h.b16 %v497
        %v794 = vunpack.c.l.b16 %v498
        %v795 = vunpack.c.h.b16 %v498
        %v796 = vunpack.c.l.b16 %v499
        %v797 = vunpack.c.h.b16 %v499
        %v798 = vunpack.c.l.b16 %v500
        %v799 = vunpack.c.h.b16 %v500
        %v800 = vunpack.c.l.b16 %v501
        %v801 = vunpack.c.h.b16 %v501
        %v802 = vunpack.c.l.b16 %v502
        %v803 = vunpack.c.h.b16 %v502
        %v804 = vunpack.c.l.b16 %v503
        %v805 = vunpack.c.h.b16 %v503
        %v806 = vpack.c.b16 %v620, %v614
        %v807 = vpack.c.b16 %v621, %v615
        %v808 = vpack.c.b16 %v622, %v616
        %v809 = vpack.c.b16 %v623, %v617
        %v810 = vpack.c.b16 %v624, %v618
        %v811 = vpack.c.b16 %v625, %v619
        %v812 = vpack.c.b16 %v632, %v626
        %v813 = vpack.c.b16 %v633, %v627
        %v814 = vpack.c.b16 %v634, %v628
        %v815 = vpack.c.b16 %v635, %v629
        %v816 = vpack.c.b16 %v636, %v630
        %v817 = vpack.c.b16 %v637, %v631
        %v818 = vpack.c.b16 %v644, %v638
        %v819 = vpack.c.b16 %v645, %v639
        %v820 = vpack.c.b16 %v646, %v640
        %v821 = vpack.c.b16 %v647, %v641
        %v822 = vpack.c.b16 %v648, %v642
        %v823 = vpack.c.b16 %v649, %v643
        %v824 = vpack.c.b16 %v656, %v650
        %v825 = vpack.c.b16 %v657, %v651
        %v826 = vpack.c.b16 %v658, %v652
        %v827 = vpack.c.b16 %v659, %v653
        %v828 = vpack.c.b16 %v660, %v654
        %v829 = vpack.c.b16 %v661, %v655
        %v830 = vpack.c.b16 %v668, %v662
        %v831 = vpack.c.b16 %v669, %v663
        %v832 = vpack.c.b16 %v670, %v664
        %v833 = vpack.c.b16 %v671, %v665
        %v834 = vpack.c.b16 %v672, %v666
        %v835 = vpack.c.b16 %v673, %v667
        %v836 = vpack.c.b16 %v680, %v674
        %v837 = vpack.c.b16 %v681, %v675
        %v838 = vpack.c.b16 %v682, %v676
        %v839 = vpack.c.b16 %v683, %v677
        %v840 = vpack.c.b16 %v684, %v678
        %v841 = vpack.c.b16 %v685, %v679
        %v842 = vpack.c.b16 %v692, %v686
        %v843 = vpack.c.b16 %v693, %v687
        %v844 = vpack.c.b16 %v694, %v688
        %v845 = vpack.c.b16 %v695, %v689
        %v846 = vpack.c.b16 %v696, %v690
        %v847 = vpack.c.b16 %v697, %v691
        %v848 = vpack.c.b16 %v704, %v698
        %v849 = vpack.c.b16 %v705, %v699
        %v850 = vpack.c.b16 %v706, %v700
        %v851 = vpack.c.b16 %v707, %v701
        %v852 = vpack.c.b16 %v708, %v702
        %v853 = vpack.c.b16 %v709, %v703
        %v854 = vpack.c.b16 %v716, %v710
        %v855 = vpack.c.b16 %v717, %v711
        %v856 = vpack.c.b16 %v718, %v712
        %v857 = vpack.c.b16 %v719, %v713
        %v858 = vpack.c.b16 %v720, %v714
        %v859 = vpack.c.b16 %v721, %v715
        %v860 = vpack.c.b16 %v728, %v722
        %v861 = vpack.c.b16 %v729, %v723
        %v862 = vpack.c.b16 %v730, %v724
        %v863 = vpack.c.b16 %v731, %v725
        %v864 = vpack.c.b16 %v732, %v726
        %v865 = vpack.c.b16 %v733, %v727
        %v866 = vpack.c.b16 %v740, %v734
        %v867 = vpack.c.b16 %v741, %v735
        %v868 = vpack.c.b16 %v742, %v736
        %v869 = vpack.c.b16 %v743, %v737
        %v870 = vpack.c.b16 %v744, %v738
        %v871 = vpack.c.b16 %v745, %v739
        %v872 = vpack.c.b16 %v752, %v746
        %v873 = vpack.c.b16 %v753, %v747
        %v874 = vpack.c.b16 %v754, %v748
        %v875 = vpack.c.b16 %v755, %v749
        %v876 = vpack.c.b16 %v756, %v750
        %v877 = vpack.c.b16 %v757, %v751
        %v878 = vpack.c.b16 %v764, %v758
        %v879 = vpack.c.b16 %v765, %v759
        %v880 = vpack.c.b16 %v766, %v760
        %v881 = vpack.c.b16 %v767, %v761
        %v882 = vpack.c.b16 %v768, %v762
        %v883 = vpack.c.b16 %v769, %v763
        %v884 = vpack.c.b16 %v776, %v770
        %v885 = vpack.c.b16 %v777, %v771
        %v886 = vpack.c.b16 %v778, %v772
        %v887 = vpack.c.b16 %v779, %v773
        %v888 = vpack.c.b16 %v780, %v774
        %v889 = vpack.c.b16 %v781, %v775
        %v890 = vpack.c.b16 %v788, %v782
        %v891 = vpack.c.b16 %v789, %v783
        %v892 = vpack.c.b16 %v790, %v784
        %v893 = vpack.c.b16 %v791, %v785
        %v894 = vpack.c.b16 %v792, %v786
        %v895 = vpack.c.b16 %v793, %v787
        %v896 = vpack.c.b16 %v800, %v794
        %v897 = vpack.c.b16 %v801, %v795
        %v898 = vpack.c.b16 %v802, %v796
        %v899 = vpack.c.b16 %v803, %v797
        %v900 = vpack.c.b16 %v804, %v798
        %v901 = vpack.c.b16 %v805, %v799
        %998 = vmatpush.bf16.msra.mxu0 %v848
        %999 = vmatpush.bf16.msra.mxu0 %v842
        %1000 = vmatpush.bf16.msra.mxu0 %v836
        %1001 = vmatpush.bf16.msra.mxu0 %v830
        %1002 = vmatpush.bf16.msra.mxu0 %v824
        %1003 = vmatpush.bf16.msra.mxu0 %v818
        %1004 = vmatpush.bf16.msra.mxu0 %v812
        %1005 = vmatpush.bf16.msra.mxu0 %v806
        %1006 = vmatmul.bf16.gmra.mxu0 %v406
        %v1007 = vpop.f32.mrf.mxu0
        %v1008 = vadd.f32 %v506, %v1007
        %v1009 = vpop.f32.mrf.mxu0
        %1010 = vdwg.mxu0
        %1011 = vmatpush.bf16.msra.mxu0 %v896
        %1012 = vmatpush.bf16.msra.mxu0 %v890
        %1013 = vmatpush.bf16.msra.mxu0 %v884
        %1014 = vmatpush.bf16.msra.mxu0 %v878
        %1015 = vmatpush.bf16.msra.mxu0 %v872
        %1016 = vmatpush.bf16.msra.mxu0 %v866
        %1017 = vmatpush.bf16.msra.mxu0 %v860
        %1018 = vmatpush.bf16.msra.mxu0 %v854
        %1019 = vmatmul.bf16.gmra.mxu0 %v407
        %v1020 = vpop.f32.mrf.mxu0
        %v1021 = vadd.f32 %v1008, %v1020
        %v1022 = vpop.f32.mrf.mxu0
        %1023 = vdwg.mxu0
        %1024 = vmatpush.bf16.msra.mxu0 %v849
        %1025 = vmatpush.bf16.msra.mxu0 %v843
        %1026 = vmatpush.bf16.msra.mxu0 %v837
        %1027 = vmatpush.bf16.msra.mxu0 %v831
        %1028 = vmatpush.bf16.msra.mxu0 %v825
        %1029 = vmatpush.bf16.msra.mxu0 %v819
        %1030 = vmatpush.bf16.msra.mxu0 %v813
        %1031 = vmatpush.bf16.msra.mxu0 %v807
        %1032 = vmatmul.bf16.gmra.mxu0 %v406
        %v1033 = vpop.f32.mrf.mxu0
        %v1034 = vadd.f32 %v507, %v1033
        %v1035 = vpop.f32.mrf.mxu0
        %1036 = vdwg.mxu0
        %1037 = vmatpush.bf16.msra.mxu0 %v897
        %1038 = vmatpush.bf16.msra.mxu0 %v891
        %1039 = vmatpush.bf16.msra.mxu0 %v885
        %1040 = vmatpush.bf16.msra.mxu0 %v879
        %1041 = vmatpush.bf16.msra.mxu0 %v873
        %1042 = vmatpush.bf16.msra.mxu0 %v867
        %1043 = vmatpush.bf16.msra.mxu0 %v861
        %1044 = vmatpush.bf16.msra.mxu0 %v855
        %1045 = vmatmul.bf16.gmra.mxu0 %v407
        %v1046 = vpop.f32.mrf.mxu0
        %v1047 = vadd.f32 %v1034, %v1046
        %v1048 = vpop.f32.mrf.mxu0
        %1049 = vdwg.mxu0
        %1050 = vmatpush.bf16.msra.mxu0 %v850
        %1051 = vmatpush.bf16.msra.mxu0 %v844
        %1052 = vmatpush.bf16.msra.mxu0 %v838
        %1053 = vmatpush.bf16.msra.mxu0 %v832
        %1054 = vmatpush.bf16.msra.mxu0 %v826
        %1055 = vmatpush.bf16.msra.mxu0 %v820
        %1056 = vmatpush.bf16.msra.mxu0 %v814
        %1057 = vmatpush.bf16.msra.mxu0 %v808
        %1058 = vmatmul.bf16.gmra.mxu0 %v406
        %v1059 = vpop.f32.mrf.mxu0
        %v1060 = vadd.f32 %v508, %v1059
        %v1061 = vpop.f32.mrf.mxu0
        %1062 = vdwg.mxu0
        %1063 = vmatpush.bf16.msra.mxu0 %v898
        %1064 = vmatpush.bf16.msra.mxu0 %v892
        %1065 = vmatpush.bf16.msra.mxu0 %v886
        %1066 = vmatpush.bf16.msra.mxu0 %v880
        %1067 = vmatpush.bf16.msra.mxu0 %v874
        %1068 = vmatpush.bf16.msra.mxu0 %v868
        %1069 = vmatpush.bf16.msra.mxu0 %v862
        %1070 = vmatpush.bf16.msra.mxu0 %v856
        %1071 = vmatmul.bf16.gmra.mxu0 %v407
        %v1072 = vpop.f32.mrf.mxu0
        %v1073 = vadd.f32 %v1060, %v1072
        %v1074 = vpop.f32.mrf.mxu0
        %1075 = vdwg.mxu0
        %1076 = vmatpush.bf16.msra.mxu0 %v851
        %1077 = vmatpush.bf16.msra.mxu0 %v845
        %1078 = vmatpush.bf16.msra.mxu0 %v839
        %1079 = vmatpush.bf16.msra.mxu0 %v833
        %1080 = vmatpush.bf16.msra.mxu0 %v827
        %1081 = vmatpush.bf16.msra.mxu0 %v821
        %1082 = vmatpush.bf16.msra.mxu0 %v815
        %1083 = vmatpush.bf16.msra.mxu0 %v809
        %1084 = vmatmul.bf16.gmra.mxu0 %v406
        %v1085 = vpop.f32.mrf.mxu0
        %v1086 = vadd.f32 %v509, %v1085
        %v1087 = vpop.f32.mrf.mxu0
        %1088 = vdwg.mxu0
        %1089 = vmatpush.bf16.msra.mxu0 %v899
        %1090 = vmatpush.bf16.msra.mxu0 %v893
        %1091 = vmatpush.bf16.msra.mxu0 %v887
        %1092 = vmatpush.bf16.msra.mxu0 %v881
        %1093 = vmatpush.bf16.msra.mxu0 %v875
        %1094 = vmatpush.bf16.msra.mxu0 %v869
        %1095 = vmatpush.bf16.msra.mxu0 %v863
        %1096 = vmatpush.bf16.msra.mxu0 %v857
        %1097 = vmatmul.bf16.gmra.mxu0 %v407
        %v1098 = vpop.f32.mrf.mxu0
        %v1099 = vadd.f32 %v1086, %v1098
        %v1100 = vpop.f32.mrf.mxu0
        %1101 = vdwg.mxu0
        %1102 = vmatpush.bf16.msra.mxu0 %v852
        %1103 = vmatpush.bf16.msra.mxu0 %v846
        %1104 = vmatpush.bf16.msra.mxu0 %v840
        %1105 = vmatpush.bf16.msra.mxu0 %v834
        %1106 = vmatpush.bf16.msra.mxu0 %v828
        %1107 = vmatpush.bf16.msra.mxu0 %v822
        %1108 = vmatpush.bf16.msra.mxu0 %v816
        %1109 = vmatpush.bf16.msra.mxu0 %v810
        %1110 = vmatmul.bf16.gmra.mxu0 %v406
        %v1111 = vpop.f32.mrf.mxu0
        %v1112 = vadd.f32 %v510, %v1111
        %v1113 = vpop.f32.mrf.mxu0
        %1114 = vdwg.mxu0
        %1115 = vmatpush.bf16.msra.mxu0 %v900
        %1116 = vmatpush.bf16.msra.mxu0 %v894
        %1117 = vmatpush.bf16.msra.mxu0 %v888
        %1118 = vmatpush.bf16.msra.mxu0 %v882
        %1119 = vmatpush.bf16.msra.mxu0 %v876
        %1120 = vmatpush.bf16.msra.mxu0 %v870
        %1121 = vmatpush.bf16.msra.mxu0 %v864
        %1122 = vmatpush.bf16.msra.mxu0 %v858
        %1123 = vmatmul.bf16.gmra.mxu0 %v407
        %v1124 = vpop.f32.mrf.mxu0
        %v1125 = vadd.f32 %v1112, %v1124
        %v1126 = vpop.f32.mrf.mxu0
        %1127 = vdwg.mxu0
        %1128 = vmatpush.bf16.msra.mxu0 %v853
        %1129 = vmatpush.bf16.msra.mxu0 %v847
        %1130 = vmatpush.bf16.msra.mxu0 %v841
        %1131 = vmatpush.bf16.msra.mxu0 %v835
        %1132 = vmatpush.bf16.msra.mxu0 %v829
        %1133 = vmatpush.bf16.msra.mxu0 %v823
        %1134 = vmatpush.bf16.msra.mxu0 %v817
        %1135 = vmatpush.bf16.msra.mxu0 %v811
        %1136 = vmatmul.bf16.gmra.mxu0 %v406
        %v1137 = vpop.f32.mrf.mxu0
        %v1138 = vadd.f32 %v511, %v1137
        %v1139 = vpop.f32.mrf.mxu0
        %1140 = vdwg.mxu0
        %1141 = vmatpush.bf16.msra.mxu0 %v901
        %1142 = vmatpush.bf16.msra.mxu0 %v895
        %1143 = vmatpush.bf16.msra.mxu0 %v889
        %1144 = vmatpush.bf16.msra.mxu0 %v883
        %1145 = vmatpush.bf16.msra.mxu0 %v877
        %1146 = vmatpush.bf16.msra.mxu0 %v871
        %1147 = vmatpush.bf16.msra.mxu0 %v865
        %1148 = vmatpush.bf16.msra.mxu0 %v859
        %1149 = vmatmul.bf16.gmra.mxu0 %v407
        %v1150 = vpop.f32.mrf.mxu0
        %v1151 = vadd.f32 %v1138, %v1150
        %v1152 = vpop.f32.mrf.mxu0
        %1153 = vdwg.mxu0
        %v1154 = vld [vmem:[%s348] sm:$0x1]
        %v1155 = vsub.f32 %v1154, 1.0
        %v1156 = vmul.f32 %v1155, 1e+09
        %v1157 = vmul.f32 %v1156, -1.0
        %v1158 = vpack.c.bf16 %v1021, %v1021
        %v1159 = vpack.c.bf16 %v1073, %v1073
        %v1160 = vpack.c.bf16 %v1125, %v1125
        %v1162 = vperm.slane %v1157, 0
        %1164 = vmatpush.bf16.xpose.msra.mxu0 0
        %1165 = vmatpush.bf16.xpose.msra.mxu0 0
        %1166 = vmatpush.bf16.xpose.msra.mxu0 0
        %1167 = vmatpush.bf16.xpose.msra.mxu0 0
        %1168 = vmatpush.bf16.xpose.msra.mxu0 0
        %1169 = vmatpush.bf16.xpose.msra.mxu0 0
        %1170 = vmatpush.bf16.xpose.msra.mxu0 0
        %1171 = vmatpush.bf16.xpose.msra.mxu0 %v1159
        %1172 = vmatmul.bf16.gmra.mxu0 %v1158
        %v1173 = vpop.f32.mrf.mxu0
        %v1174 = vadd.f32 %v1162, %v1173
        %v1175 = vpop.f32.mrf.mxu0
        %1176 = vdwg.mxu0
        %vm1177 = vcmask 64512
        %v1178 = vsel %vm1177, %v1174, -inf
        %1179 = vmax.xlane.f32.xlu0 %v1178
        %v1180 = vpop.xlane.xlu0 %1179
        %v1181 = vsub.f32 %v1174, %v1180
        %v1182 = vmul.f32 %v1181, 1.442695
        %v1183 = vpow.pop %v1182
        %v1184 = vsel %vm1177, %v1183, 0.0
        %1185 = vadd.xlane.f32.xlu0 %v1184
        %v1186 = vpop.xlane.xlu0 %1185
        %v1187 = vrcp.pop %v1186
        %v1188 = vmul.f32 %v1183, %v1187
        %v1189 = vpack.c.bf16 %v1188, %v1188
        %v1191 = vsel %vm1177, %v1189, 0
        %vm1193 = vcmask 1043456
        %v1195 = vsel %vm1193, %v1160, 0
        %1197 = vmatpush.bf16.msra.mxu0 0
        %1198 = vmatpush.bf16.msra.mxu0 0
        %1199 = vmatpush.bf16.msra.mxu0 0
        %1200 = vmatpush.bf16.msra.mxu0 0
        %1201 = vmatpush.bf16.msra.mxu0 0
        %1202 = vmatpush.bf16.msra.mxu0 0
        %1203 = vmatpush.bf16.msra.mxu0 0
        %1204 = vmatpush.bf16.msra.mxu0 %v1195
        %1205 = vmatmul.bf16.gmra.mxu0 %v1191
        %v1206 = vpop.f32.mrf.mxu0
        %v1207 = vadd.f32 0.0, %v1206
        %v1208 = vpop.f32.mrf.mxu0
        %1209 = vdwg.mxu0
        %v1210 = vpack.c.bf16 %v1207, %v1207
        %v1211 = vld [vmem:[#allocation4] sm:$0xff]
        %v1212 = vld [vmem:[#allocation4 + $0x8] sm:$0xff]
        %v1213 = vld [vmem:[#allocation4 + $0x10] sm:$0xff]
        %v1214 = vld [vmem:[#allocation4 + $0x18] sm:$0xff]
        %v1215 = vld [vmem:[#allocation4 + $0x20] sm:$0xff]
        %v1216 = vld [vmem:[#allocation4 + $0x28] sm:$0xff]
        %v1217 = vld [vmem:[#allocation4 + $0x30] sm:$0xff]
        %v1218 = vld [vmem:[#allocation4 + $0x38] sm:$0xff]
        %v1219 = vld [vmem:[#allocation4 + $0x40] sm:$0xff]
        %v1220 = vld [vmem:[#allocation4 + $0x48] sm:$0xff]
        %v1221 = vld [vmem:[#allocation4 + $0x50] sm:$0xff]
        %v1222 = vld [vmem:[#allocation4 + $0x58] sm:$0xff]
        %v1223 = vld [vmem:[#allocation4 + $0x60] sm:$0xff]
        %v1224 = vld [vmem:[#allocation4 + $0x68] sm:$0xff]
        %v1225 = vld [vmem:[#allocation4 + $0x70] sm:$0xff]
        %v1226 = vld [vmem:[#allocation4 + $0x78] sm:$0xff]
        %v1227 = vpack.c.bf16 %v1047, %v1047
        %v1228 = vpack.c.bf16 %v1099, %v1099
        %v1229 = vpack.c.bf16 %v1151, %v1151
        %1230 = vmatpush.bf16.xpose.msra.mxu0 0
        %1231 = vmatpush.bf16.xpose.msra.mxu0 0
        %1232 = vmatpush.bf16.xpose.msra.mxu0 0
        %1233 = vmatpush.bf16.xpose.msra.mxu0 0
        %1234 = vmatpush.bf16.xpose.msra.mxu0 0
        %1235 = vmatpush.bf16.xpose.msra.mxu0 0
        %1236 = vmatpush.bf16.xpose.msra.mxu0 0
        %1237 = vmatpush.bf16.xpose.msra.mxu0 %v1228
        %1238 = vmatmul.bf16.gmra.mxu0 %v1227
        %v1239 = vpop.f32.mrf.mxu0
        %v1240 = vadd.f32 %v1162, %v1239
        %v1241 = vpop.f32.mrf.mxu0
        %1242 = vdwg.mxu0
        %v1243 = vsel %vm1177, %v1240, -inf
        %1244 = vmax.xlane.f32.xlu0 %v1243
        %v1245 = vpop.xlane.xlu0 %1244
        %v1246 = vsub.f32 %v1240, %v1245
        %v1247 = vmul.f32 %v1246, 1.442695
        %v1248 = vpow.pop %v1247
        %v1249 = vsel %vm1177, %v1248, 0.0
        %1250 = vadd.xlane.f32.xlu0 %v1249
        %v1251 = vpop.xlane.xlu0 %1250
        %v1252 = vrcp.pop %v1251
        %v1253 = vmul.f32 %v1248, %v1252
        %v1254 = vpack.c.bf16 %v1253, %v1253
        %v1256 = vsel %vm1177, %v1254, 0
        %v1259 = vsel %vm1193, %v1229, 0
        %1261 = vmatpush.bf16.msra.mxu0 0
        %1262 = vmatpush.bf16.msra.mxu0 0
        %1263 = vmatpush.bf16.msra.mxu0 0
        %1264 = vmatpush.bf16.msra.mxu0 0
        %1265 = vmatpush.bf16.msra.mxu0 0
        %1266 = vmatpush.bf16.msra.mxu0 0
        %1267 = vmatpush.bf16.msra.mxu0 0
        %1268 = vmatpush.bf16.msra.mxu0 %v1259
        %1269 = vmatmul.bf16.gmra.mxu0 %v1256
        %v1270 = vpop.f32.mrf.mxu0
        %v1271 = vadd.f32 0.0, %v1270
        %v1272 = vpop.f32.mrf.mxu0
        %1273 = vdwg.mxu0
        %v1274 = vpack.c.bf16 %v1271, %v1271
        %v1275 = vld [vmem:[#allocation4 + $0x80] sm:$0xff]
        %v1276 = vld [vmem:[#allocation4 + $0x88] sm:$0xff]
        %v1277 = vld [vmem:[#allocation4 + $0x90] sm:$0xff]
        %v1278 = vld [vmem:[#allocation4 + $0x98] sm:$0xff]
        %v1279 = vld [vmem:[#allocation4 + $0xa0] sm:$0xff]
        %v1280 = vld [vmem:[#allocation4 + $0xa8] sm:$0xff]
        %v1281 = vld [vmem:[#allocation4 + $0xb0] sm:$0xff]
        %v1282 = vld [vmem:[#allocation4 + $0xb8] sm:$0xff]
        %v1283 = vld [vmem:[#allocation4 + $0xc0] sm:$0xff]
        %v1284 = vld [vmem:[#allocation4 + $0xc8] sm:$0xff]
        %v1285 = vld [vmem:[#allocation4 + $0xd0] sm:$0xff]
        %v1286 = vld [vmem:[#allocation4 + $0xd8] sm:$0xff]
        %v1287 = vld [vmem:[#allocation4 + $0xe0] sm:$0xff]
        %v1288 = vld [vmem:[#allocation4 + $0xe8] sm:$0xff]
        %v1289 = vld [vmem:[#allocation4 + $0xf0] sm:$0xff]
        %v1290 = vld [vmem:[#allocation4 + $0xf8] sm:$0xff]
        %v1307 = vunpack.c.l.b16 %v1275
        %v1308 = vunpack.c.h.b16 %v1275
        %v1309 = vunpack.c.l.b16 %v1276
        %v1310 = vunpack.c.h.b16 %v1276
        %v1311 = vunpack.c.l.b16 %v1277
        %v1312 = vunpack.c.h.b16 %v1277
        %v1313 = vunpack.c.l.b16 %v1278
        %v1314 = vunpack.c.h.b16 %v1278
        %v1315 = vunpack.c.l.b16 %v1279
        %v1316 = vunpack.c.h.b16 %v1279
        %v1317 = vunpack.c.l.b16 %v1280
        %v1318 = vunpack.c.h.b16 %v1280
        %v1319 = vunpack.c.l.b16 %v1281
        %v1320 = vunpack.c.h.b16 %v1281
        %v1321 = vunpack.c.l.b16 %v1282
        %v1322 = vunpack.c.h.b16 %v1282
        %v1323 = vunpack.c.l.b16 %v1283
        %v1324 = vunpack.c.h.b16 %v1283
        %v1325 = vunpack.c.l.b16 %v1284
        %v1326 = vunpack.c.h.b16 %v1284
        %v1327 = vunpack.c.l.b16 %v1285
        %v1328 = vunpack.c.h.b16 %v1285
        %v1329 = vunpack.c.l.b16 %v1286
        %v1330 = vunpack.c.h.b16 %v1286
        %v1331 = vunpack.c.l.b16 %v1287
        %v1332 = vunpack.c.h.b16 %v1287
        %v1333 = vunpack.c.l.b16 %v1288
        %v1334 = vunpack.c.h.b16 %v1288
        %v1335 = vunpack.c.l.b16 %v1289
        %v1336 = vunpack.c.h.b16 %v1289
        %v1337 = vunpack.c.l.b16 %v1290
        %v1338 = vunpack.c.h.b16 %v1290
        %v1339 = vpack.c.b16 %v1309, %v1307
        %v1340 = vpack.c.b16 %v1310, %v1308
        %v1341 = vpack.c.b16 %v1313, %v1311
        %v1342 = vpack.c.b16 %v1314, %v1312
        %v1343 = vpack.c.b16 %v1317, %v1315
        %v1344 = vpack.c.b16 %v1318, %v1316
        %v1345 = vpack.c.b16 %v1321, %v1319
        %v1346 = vpack.c.b16 %v1322, %v1320
        %v1347 = vpack.c.b16 %v1325, %v1323
        %v1348 = vpack.c.b16 %v1326, %v1324
        %v1349 = vpack.c.b16 %v1329, %v1327
        %v1350 = vpack.c.b16 %v1330, %v1328
        %v1351 = vpack.c.b16 %v1333, %v1331
        %v1352 = vpack.c.b16 %v1334, %v1332
        %v1353 = vpack.c.b16 %v1337, %v1335
        %v1354 = vpack.c.b16 %v1338, %v1336
        %1371 = vmatpush.bf16.msra.mxu0 %v1353
        %1372 = vmatpush.bf16.msra.mxu0 %v1351
        %1373 = vmatpush.bf16.msra.mxu0 %v1349
        %1374 = vmatpush.bf16.msra.mxu0 %v1347
        %1375 = vmatpush.bf16.msra.mxu0 %v1345
        %1376 = vmatpush.bf16.msra.mxu0 %v1343
        %1377 = vmatpush.bf16.msra.mxu0 %v1341
        %1378 = vmatpush.bf16.msra.mxu0 %v1339
        %1379 = vmatmul.bf16.gmra.mxu0 %v1274
        %v1380 = vpop.f32.mrf.mxu0
        %v1381 = vadd.f32 0.0, %v1380
        %v1382 = vpop.f32.mrf.mxu0
        %1383 = vdwg.mxu0
        %1384 = vmatpush.bf16.msra.mxu0 %v1354
        %1385 = vmatpush.bf16.msra.mxu0 %v1352
        %1386 = vmatpush.bf16.msra.mxu0 %v1350
        %1387 = vmatpush.bf16.msra.mxu0 %v1348
        %1388 = vmatpush.bf16.msra.mxu0 %v1346
        %1389 = vmatpush.bf16.msra.mxu0 %v1344
        %1390 = vmatpush.bf16.msra.mxu0 %v1342
        %1391 = vmatpush.bf16.msra.mxu0 %v1340
        %1392 = vmatmul.bf16.gmra.mxu0 %v1274
        %v1393 = vpop.f32.mrf.mxu0
        %v1394 = vadd.f32 0.0, %v1393
        %v1395 = vpop.f32.mrf.mxu0
        %1396 = vdwg.mxu0
        %v1413 = vunpack.c.l.b16 %v1211
        %v1414 = vunpack.c.h.b16 %v1211
        %v1415 = vunpack.c.l.b16 %v1212
        %v1416 = vunpack.c.h.b16 %v1212
        %v1417 = vunpack.c.l.b16 %v1213
        %v1418 = vunpack.c.h.b16 %v1213
        %v1419 = vunpack.c.l.b16 %v1214
        %v1420 = vunpack.c.h.b16 %v1214
        %v1421 = vunpack.c.l.b16 %v1215
        %v1422 = vunpack.c.h.b16 %v1215
        %v1423 = vunpack.c.l.b16 %v1216
        %v1424 = vunpack.c.h.b16 %v1216
        %v1425 = vunpack.c.l.b16 %v1217
        %v1426 = vunpack.c.h.b16 %v1217
        %v1427 = vunpack.c.l.b16 %v1218
        %v1428 = vunpack.c.h.b16 %v1218
        %v1429 = vunpack.c.l.b16 %v1219
        %v1430 = vunpack.c.h.b16 %v1219
        %v1431 = vunpack.c.l.b16 %v1220
        %v1432 = vunpack.c.h.b16 %v1220
        %v1433 = vunpack.c.l.b16 %v1221
        %v1434 = vunpack.c.h.b16 %v1221
        %v1435 = vunpack.c.l.b16 %v1222
        %v1436 = vunpack.c.h.b16 %v1222
        %v1437 = vunpack.c.l.b16 %v1223
        %v1438 = vunpack.c.h.b16 %v1223
        %v1439 = vunpack.c.l.b16 %v1224
        %v1440 = vunpack.c.h.b16 %v1224
        %v1441 = vunpack.c.l.b16 %v1225
        %v1442 = vunpack.c.h.b16 %v1225
        %v1443 = vunpack.c.l.b16 %v1226
        %v1444 = vunpack.c.h.b16 %v1226
        %v1445 = vpack.c.b16 %v1415, %v1413
        %v1446 = vpack.c.b16 %v1416, %v1414
        %v1447 = vpack.c.b16 %v1419, %v1417
        %v1448 = vpack.c.b16 %v1420, %v1418
        %v1449 = vpack.c.b16 %v1423, %v1421
        %v1450 = vpack.c.b16 %v1424, %v1422
        %v1451 = vpack.c.b16 %v1427, %v1425
        %v1452 = vpack.c.b16 %v1428, %v1426
        %v1453 = vpack.c.b16 %v1431, %v1429
        %v1454 = vpack.c.b16 %v1432, %v1430
        %v1455 = vpack.c.b16 %v1435, %v1433
        %v1456 = vpack.c.b16 %v1436, %v1434
        %v1457 = vpack.c.b16 %v1439, %v1437
        %v1458 = vpack.c.b16 %v1440, %v1438
        %v1459 = vpack.c.b16 %v1443, %v1441
        %v1460 = vpack.c.b16 %v1444, %v1442
        %1477 = vmatpush.bf16.msra.mxu0 %v1459
        %1478 = vmatpush.bf16.msra.mxu0 %v1457
        %1479 = vmatpush.bf16.msra.mxu0 %v1455
        %1480 = vmatpush.bf16.msra.mxu0 %v1453
        %1481 = vmatpush.bf16.msra.mxu0 %v1451
        %1482 = vmatpush.bf16.msra.mxu0 %v1449
        %1483 = vmatpush.bf16.msra.mxu0 %v1447
        %1484 = vmatpush.bf16.msra.mxu0 %v1445
        %1485 = vmatmul.bf16.gmra.mxu0 %v1210
        %v1486 = vpop.f32.mrf.mxu0
        %v1487 = vadd.f32 %v1381, %v1486
        %v1488 = vpop.f32.mrf.mxu0
        %1489 = vdwg.mxu0
        %1490 = vmatpush.bf16.msra.mxu0 %v1460
        %1491 = vmatpush.bf16.msra.mxu0 %v1458
        %1492 = vmatpush.bf16.msra.mxu0 %v1456
        %1493 = vmatpush.bf16.msra.mxu0 %v1454
        %1494 = vmatpush.bf16.msra.mxu0 %v1452
        %1495 = vmatpush.bf16.msra.mxu0 %v1450
        %1496 = vmatpush.bf16.msra.mxu0 %v1448
        %1497 = vmatpush.bf16.msra.mxu0 %v1446
        %1498 = vmatmul.bf16.gmra.mxu0 %v1210
        %v1499 = vpop.f32.mrf.mxu0
        %v1500 = vadd.f32 %v1394, %v1499
        %v1501 = vpop.f32.mrf.mxu0
        %1502 = vdwg.mxu0
        %v1503 = vld [vmem:[%s7] sm:$0x3]
        %v1505 = vperm.slane %v1503, 0
        %v1506 = vperm.slane %v1503, 1
        %v1509 = vadd.f32 %v1487, %v1505
        %v1510 = vadd.f32 %v1500, %v1506
        %v1511 = vadd.f32 %v356, %v1509
        %v1512 = vadd.f32 %v357, %v1510
        %v1513 = vpack.c.bf16 %v1512, %v1511
        %1514 = vst [vmem:[%s353] sm:$0xff] %v1513
        %p1515 = scmp.lt.s32.totalorder %s21, 1
        %s1516 = scalar_select %p1515, %s21, 1
        %s1517 = smul.addr %s1516, 2
        %s1518 = smul.addr %s1517, 4
        %s1519 = scalar_lea.vmem %s8, %s1518
        // Predicated region
        $region61: #{_lambda_.13} parent=51 // pred_check
          %p1520 = pneg %p217
        $region62: #{_lambda_.13} parent=51 // pred_check_branch
          %1522 = sbr.rel (%p1520) target = $region64
        $region63: #{_lambda_.13} parent=51 // pred_region
          _
        $region64: #{_lambda_.13} parent=51 // pred_fallthru
          _
      $region52: #{_lambda_.13} parent=5 // pred_fallthru
        _
      %p1523 = scmp.le.s32.totalorder 2, %s16
      // Predicated region
      $region65: #{_lambda_.13} parent=5 // pred_check
        %p1524 = pneg %p1523
      $region66: #{_lambda_.13} parent=5 // pred_check_branch
        %1526 = sbr.rel (%p1524) target = $region68
      $region67: #{_lambda_.13} parent=5 // pred_region
        %s1527 = ssub.s32 %s16, 2
        // Predicated region
        $region69: #{_lambda_.13} parent=67 // pred_check
          %p1528 = pneg %p223
        $region70: #{_lambda_.13} parent=67 // pred_check_branch
          %1530 = sbr.rel (%p1528) target = $region72
        $region71: #{_lambda_.13} parent=67 // pred_region
          %p1531 = scmp.lt.s32.totalorder %s22, 1
          %s1532 = scalar_select %p1531, %s22, 1
          %s1533 = smul.addr %s1532, 2
          %s1534 = smul.addr %s1533, 4
          %s1535 = scalar_lea.vmem %s8, %s1534
        $region72: #{_lambda_.13} parent=67 // pred_fallthru
          _
      $region68: #{_lambda_.13} parent=5 // pred_fallthru
        _
    $region6: #{_lambda_.13} parent=1 // loop_footer
      %s20 = sadd.s32 1, %s16
    $region7: #{_lambda_.13} parent=1 // loop_footer_branch
      %15 = sbr.rel target = $region3
    $region8: #{_lambda_.13} parent=1 // loop_exit
      _
    %1536 = vsyncpa [#allocation3], 1
    %s1537 = scalar_lea.sflag [#allocation3], 1
    %1538 = vsyncpa %s1537, 1
    %1539 = vsyncpa [#allocation5], 1

// kernel: _lambda_.11
$region0: #{_lambda_.11}
  #allocation0 [shape = 'u32[]', space=smem, size = 0x4, offset = 0x4, fixed_abs, tag = 'smem constant byte address 0x4 - core index']
  #allocation1 [shape = 'u32[72,128]{1,0:T(1,128)}', space=vmem, size = 0x9000, scoped, tag = 'internal scratch']
  %s0 = inlined_call_operand.vmem [shape: bf16[2,8,256], index: 0, kind: input, shape index: {}]
  %s1 = inlined_call_operand.vmem [shape: f32[2,1,8], index: 1, kind: input, shape index: {}]
  %s2 = inlined_call_operand.vmem [shape: f32[1,256], index: 2, kind: input, shape index: {}]
  %s3 = inlined_call_operand.vmem [shape: f32[1,256], index: 3, kind: input, shape index: {}]
  %s4 = inlined_call_operand.hbm [shape: bf16[256,768], index: 4, kind: input, shape index: {}]
  %s5 = inlined_call_operand.vmem [shape: f32[1,768], index: 5, kind: input, shape index: {}]
  %s6 = inlined_call_operand.vmem [shape: bf16[256,256], index: 6, kind: input, shape index: {}]
  %s7 = inlined_call_operand.vmem [shape: f32[1,256], index: 7, kind: input, shape index: {}]
  %s8 = inlined_call_operand.vmem [shape: bf16[2,8,256], index: 8, kind: output, shape index: {}]
  %s9 = sld [smem:[#allocation0]]
  $region69: #{_lambda_.11} parent=0
    _
  %s11 = ssub.s32 1, %s9
  %s12 = scalar_select 0, %s11, %s9
  $region1: #{_lambda_.11} parent=0
    #allocation2 [shape = 'u8[393216]{0}', space=vmem, size = 0x60000, scoped, tag = 'input window, operand 4, single buffered']
    #allocation3 [shape = 's32[2]{0}', space=sflag, size = 0x8, scoped, tag = 'scoped memory for _lambda_.11']
    %13 = vsyncpa [#allocation3], 0
    loop: start=0, step=1, limit=4
    $region2: #{_lambda_.11} parent=1 // loop_pre_header
      _
    $region3: #{_lambda_.11} parent=1 // loop_header
      %s15 = sphi 0, %s19
      %p16 = scmp.ge.s32.totalorder %s15, 4
      %s25 = sphi 0, %s27
      %s28 = sphi 0, %s25
      %s29 = sphi 0, %s28
      %s45 = sphi 0, %s29
      %s51 = sphi 0, %s53
      %s54 = sphi 0, %s51
      %s55 = sphi 0, %s54
      %s71 = sphi 0, %s55
      %s75 = sphi 0, %s75
      %s77 = sphi 0, %s75
      %s78 = sphi 0, %s77
      %s92 = sphi 0, %s78
      %s96 = sphi 0, %s96
      %s98 = sphi 0, %s96
      %s99 = sphi 0, %s98
      %s113 = sphi 0, %s99
      %s117 = sphi 0, %s117
      %s119 = sphi 0, %s117
      %s120 = sphi 0, %s119
      %s134 = sphi 0, %s120
      %s138 = sphi 0, %s138
      %s140 = sphi 0, %s138
      %s141 = sphi 0, %s140
      %s155 = sphi 0, %s141
      %s159 = sphi 0, %s159
      %s161 = sphi 0, %s159
      %s162 = sphi 0, %s161
      %s176 = sphi 0, %s162
      %s180 = sphi 0, %s180
      %s182 = sphi 0, %s180
      %s183 = sphi 0, %s182
      %s197 = sphi 0, %s183
      %s203 = sphi 0, %s205
      %s206 = sphi 0, %s203
      %s207 = sphi 0, %s206
      %s223 = sphi 0, %s207
    $region4: #{_lambda_.11} parent=1 // loop_header_branch
      %18 = sbr.rel (%p16) target = $region8
    $region5: #{_lambda_.11} parent=1 // loop_body
      %s20 = ssub.s32 %s15, 1
      %s21 = ssub.s32 %s15, 2
      %s22 = sadd.s32 %s15, 1
      %s23 = ssub.s32 %s15, %s22
      %p24 = scmp.eq.s32.totalorder %s23, 0
      %s26 = sadd.s32 %s25, 1
      %s27 = scalar_select %p24, %s25, %s26
      %p30 = pneg %p24
      %p31 = scmp.eq.s32.totalorder %s15, 1
      %p32 = por %p30, %p31
      %p33 = scmp.ne.s32.totalorder %s25, %s28
      %p34 = scmp.eq.s32.totalorder %s15, 0
      %p35 = por %p33, %p34
      %p36 = scmp.ne.s32.totalorder %s25, %s28
      %p37 = scmp.eq.s32.totalorder %s20, 1
      %p38 = por %p36, %p37
      %p39 = scmp.ne.s32.totalorder %s28, %s29
      %p40 = scmp.eq.s32.totalorder %s20, 0
      %p41 = por %p39, %p40
      %p42 = scmp.ne.s32.totalorder %s28, %s29
      %p43 = scmp.eq.s32.totalorder %s21, 1
      %p44 = por %p42, %p43
      %p46 = scmp.ne.s32.totalorder %s29, %s45
      %p47 = scmp.eq.s32.totalorder %s21, 0
      %p48 = por %p46, %p47
      %s49 = ssub.s32 %s15, %s22
      %p50 = scmp.eq.s32.totalorder %s49, 0
      %s52 = sadd.s32 %s51, 1
      %s53 = scalar_select %p50, %s51, %s52
      %p56 = pneg %p50
      %p57 = scmp.eq.s32.totalorder %s15, 1
      %p58 = por %p56, %p57
      %p59 = scmp.ne.s32.totalorder %s51, %s54
      %p60 = scmp.eq.s32.totalorder %s15, 0
      %p61 = por %p59, %p60
      %p62 = scmp.ne.s32.totalorder %s51, %s54
      %p63 = scmp.eq.s32.totalorder %s20, 1
      %p64 = por %p62, %p63
      %p65 = scmp.ne.s32.totalorder %s54, %s55
      %p66 = scmp.eq.s32.totalorder %s20, 0
      %p67 = por %p65, %p66
      %p68 = scmp.ne.s32.totalorder %s54, %s55
      %p69 = scmp.eq.s32.totalorder %s21, 1
      %p70 = por %p68, %p69
      %p72 = scmp.ne.s32.totalorder %s55, %s71
      %p73 = scmp.eq.s32.totalorder %s21, 0
      %p74 = por %p72, %p73
      %s76 = sadd.s32 %s75, 1
      %p79 = scmp.eq.s32.totalorder %s15, 1
      %p80 = scmp.ne.s32.totalorder %s75, %s77
      %p81 = scmp.eq.s32.totalorder %s15, 0
      %p82 = por %p80, %p81
      %p83 = scmp.ne.s32.totalorder %s75, %s77
      %p84 = scmp.eq.s32.totalorder %s20, 1
      %p85 = por %p83, %p84
      %p86 = scmp.ne.s32.totalorder %s77, %s78
      %p87 = scmp.eq.s32.totalorder %s20, 0
      %p88 = por %p86, %p87
      %p89 = scmp.ne.s32.totalorder %s77, %s78
      %p90 = scmp.eq.s32.totalorder %s21, 1
      %p91 = por %p89, %p90
      %p93 = scmp.ne.s32.totalorder %s78, %s92
      %p94 = scmp.eq.s32.totalorder %s21, 0
      %p95 = por %p93, %p94
      %s97 = sadd.s32 %s96, 1
      %p100 = scmp.eq.s32.totalorder %s15, 1
      %p101 = scmp.ne.s32.totalorder %s96, %s98
      %p102 = scmp.eq.s32.totalorder %s15, 0
      %p103 = por %p101, %p102
      %p104 = scmp.ne.s32.totalorder %s96, %s98
      %p105 = scmp.eq.s32.totalorder %s20, 1
      %p106 = por %p104, %p105
      %p107 = scmp.ne.s32.totalorder %s98, %s99
      %p108 = scmp.eq.s32.totalorder %s20, 0
      %p109 = por %p107, %p108
      %p110 = scmp.ne.s32.totalorder %s98, %s99
      %p111 = scmp.eq.s32.totalorder %s21, 1
      %p112 = por %p110, %p111
      %p114 = scmp.ne.s32.totalorder %s99, %s113
      %p115 = scmp.eq.s32.totalorder %s21, 0
      %p116 = por %p114, %p115
      %s118 = sadd.s32 %s117, 1
      %p121 = scmp.eq.s32.totalorder %s15, 1
      %p122 = scmp.ne.s32.totalorder %s117, %s119
      %p123 = scmp.eq.s32.totalorder %s15, 0
      %p124 = por %p122, %p123
      %p125 = scmp.ne.s32.totalorder %s117, %s119
      %p126 = scmp.eq.s32.totalorder %s20, 1
      %p127 = por %p125, %p126
      %p128 = scmp.ne.s32.totalorder %s119, %s120
      %p129 = scmp.eq.s32.totalorder %s20, 0
      %p130 = por %p128, %p129
      %p131 = scmp.ne.s32.totalorder %s119, %s120
      %p132 = scmp.eq.s32.totalorder %s21, 1
      %p133 = por %p131, %p132
      %p135 = scmp.ne.s32.totalorder %s120, %s134
      %p136 = scmp.eq.s32.totalorder %s21, 0
      %p137 = por %p135, %p136
      %s139 = sadd.s32 %s138, 1
      %p142 = scmp.eq.s32.totalorder %s15, 1
      %p143 = scmp.ne.s32.totalorder %s138, %s140
      %p144 = scmp.eq.s32.totalorder %s15, 0
      %p145 = por %p143, %p144
      %p146 = scmp.ne.s32.totalorder %s138, %s140
      %p147 = scmp.eq.s32.totalorder %s20, 1
      %p148 = por %p146, %p147
      %p149 = scmp.ne.s32.totalorder %s140, %s141
      %p150 = scmp.eq.s32.totalorder %s20, 0
      %p151 = por %p149, %p150
      %p152 = scmp.ne.s32.totalorder %s140, %s141
      %p153 = scmp.eq.s32.totalorder %s21, 1
      %p154 = por %p152, %p153
      %p156 = scmp.ne.s32.totalorder %s141, %s155
      %p157 = scmp.eq.s32.totalorder %s21, 0
      %p158 = por %p156, %p157
      %s160 = sadd.s32 %s159, 1
      %p163 = scmp.eq.s32.totalorder %s15, 1
      %p164 = scmp.ne.s32.totalorder %s159, %s161
      %p165 = scmp.eq.s32.totalorder %s15, 0
      %p166 = por %p164, %p165
      %p167 = scmp.ne.s32.totalorder %s159, %s161
      %p168 = scmp.eq.s32.totalorder %s20, 1
      %p169 = por %p167, %p168
      %p170 = scmp.ne.s32.totalorder %s161, %s162
      %p171 = scmp.eq.s32.totalorder %s20, 0
      %p172 = por %p170, %p171
      %p173 = scmp.ne.s32.totalorder %s161, %s162
      %p174 = scmp.eq.s32.totalorder %s21, 1
      %p175 = por %p173, %p174
      %p177 = scmp.ne.s32.totalorder %s162, %s176
      %p178 = scmp.eq.s32.totalorder %s21, 0
      %p179 = por %p177, %p178
      %s181 = sadd.s32 %s180, 1
      %p184 = scmp.eq.s32.totalorder %s15, 1
      %p185 = scmp.ne.s32.totalorder %s180, %s182
      %p186 = scmp.eq.s32.totalorder %s15, 0
      %p187 = por %p185, %p186
      %p188 = scmp.ne.s32.totalorder %s180, %s182
      %p189 = scmp.eq.s32.totalorder %s20, 1
      %p190 = por %p188, %p189
      %p191 = scmp.ne.s32.totalorder %s182, %s183
      %p192 = scmp.eq.s32.totalorder %s20, 0
      %p193 = por %p191, %p192
      %p194 = scmp.ne.s32.totalorder %s182, %s183
      %p195 = scmp.eq.s32.totalorder %s21, 1
      %p196 = por %p194, %p195
      %p198 = scmp.ne.s32.totalorder %s183, %s197
      %p199 = scmp.eq.s32.totalorder %s21, 0
      %p200 = por %p198, %p199
      %s201 = ssub.s32 %s15, %s22
      %p202 = scmp.eq.s32.totalorder %s201, 0
      %s204 = sadd.s32 %s203, 1
      %s205 = scalar_select %p202, %s203, %s204
      %p208 = pneg %p202
      %p209 = scmp.eq.s32.totalorder %s15, 1
      %p210 = por %p208, %p209
      %p211 = scmp.ne.s32.totalorder %s203, %s206
      %p212 = scmp.eq.s32.totalorder %s15, 0
      %p213 = por %p211, %p212
      %p214 = scmp.ne.s32.totalorder %s203, %s206
      %p215 = scmp.eq.s32.totalorder %s20, 1
      %p216 = por %p214, %p215
      %p217 = scmp.ne.s32.totalorder %s206, %s207
      %p218 = scmp.eq.s32.totalorder %s20, 0
      %p219 = por %p217, %p218
      %p220 = scmp.ne.s32.totalorder %s206, %s207
      %p221 = scmp.eq.s32.totalorder %s21, 1
      %p222 = por %p220, %p221
      %p224 = scmp.ne.s32.totalorder %s207, %s223
      %p225 = scmp.eq.s32.totalorder %s21, 0
      %p226 = por %p224, %p225
      %p227 = scmp.le.s32.totalorder 1, %s15
      %p228 = scmp.lt.s32.totalorder %s15, 3
      %p229 = pnand %p227, %p228
      %p230 = pneg %p229
      // Predicated region
      $region9: #{_lambda_.11} parent=5 // pred_check
        _
      $region10: #{_lambda_.11} parent=5 // pred_check_branch
        %232 = sbr.rel (%p229) target = $region12
      $region11: #{_lambda_.11} parent=5 // pred_region
        %s233 = ssub.s32 %s15, 1
        // Predicated region
        $region13: #{_lambda_.11} parent=11 // pred_check
          %p234 = pneg %p88
        $region14: #{_lambda_.11} parent=11 // pred_check_branch
          %236 = sbr.rel (%p234) target = $region16
        $region15: #{_lambda_.11} parent=11 // pred_region
          _
        $region16: #{_lambda_.11} parent=11 // pred_fallthru
          _
        // Predicated region
        $region17: #{_lambda_.11} parent=11 // pred_check
          %p237 = pneg %p109
        $region18: #{_lambda_.11} parent=11 // pred_check_branch
          %239 = sbr.rel (%p237) target = $region20
        $region19: #{_lambda_.11} parent=11 // pred_region
          _
        $region20: #{_lambda_.11} parent=11 // pred_fallthru
          _
        // Predicated region
        $region21: #{_lambda_.11} parent=11 // pred_check
          %p240 = pneg %p130
        $region22: #{_lambda_.11} parent=11 // pred_check_branch
          %242 = sbr.rel (%p240) target = $region24
        $region23: #{_lambda_.11} parent=11 // pred_region
          %244 = vsyncadd [#allocation3], 0
          %s245 = sshll.u32 %s4, 4
          %s246 = int_to_ptr.hbm [resolvable:$true] %s245
          %s247 = sshll.u32 [#allocation2], 4
          %s248 = int_to_ptr.vmem [resolvable:$true] %s247
          %253 = dma.hbm_to_vmem [thread:$0]  %s246, 12288, %s248, [#allocation3], 384, 384, 24
        $region24: #{_lambda_.11} parent=11 // pred_fallthru
          _
        // Predicated region
        $region25: #{_lambda_.11} parent=11 // pred_check
          %p254 = pneg %p151
        $region26: #{_lambda_.11} parent=11 // pred_check_branch
          %256 = sbr.rel (%p254) target = $region28
        $region27: #{_lambda_.11} parent=11 // pred_region
          _
        $region28: #{_lambda_.11} parent=11 // pred_fallthru
          _
        // Predicated region
        $region29: #{_lambda_.11} parent=11 // pred_check
          %p257 = pneg %p172
        $region30: #{_lambda_.11} parent=11 // pred_check_branch
          %259 = sbr.rel (%p257) target = $region32
        $region31: #{_lambda_.11} parent=11 // pred_region
          _
        $region32: #{_lambda_.11} parent=11 // pred_fallthru
          _
        // Predicated region
        $region33: #{_lambda_.11} parent=11 // pred_check
          %p260 = pneg %p193
        $region34: #{_lambda_.11} parent=11 // pred_check_branch
          %262 = sbr.rel (%p260) target = $region36
        $region35: #{_lambda_.11} parent=11 // pred_region
          _
        $region36: #{_lambda_.11} parent=11 // pred_fallthru
          _
      $region12: #{_lambda_.11} parent=5 // pred_fallthru
        _
      %p263 = scmp.lt.s32.totalorder %s15, 2
      // Predicated region
      $region37: #{_lambda_.11} parent=5 // pred_check
        %p264 = pneg %p263
      $region38: #{_lambda_.11} parent=5 // pred_check_branch
        %266 = sbr.rel (%p264) target = $region40
      $region39: #{_lambda_.11} parent=5 // pred_region
        // Predicated region
        $region41: #{_lambda_.11} parent=39 // pred_check
          %p267 = pneg %p35
        $region42: #{_lambda_.11} parent=39 // pred_check_branch
          %269 = sbr.rel (%p267) target = $region44
        $region43: #{_lambda_.11} parent=39 // pred_region
          %p270 = scmp.lt.s32.totalorder %s15, 1
          %s271 = scalar_select %p270, %s15, 1
          %s272 = smul.addr %s271, 2
          %s273 = smul.addr %s272, 4
          %s274 = scalar_lea.vmem %s0, %s273
        $region44: #{_lambda_.11} parent=39 // pred_fallthru
          _
        // Predicated region
        $region45: #{_lambda_.11} parent=39 // pred_check
          %p275 = pneg %p61
        $region46: #{_lambda_.11} parent=39 // pred_check_branch
          %277 = sbr.rel (%p275) target = $region48
        $region47: #{_lambda_.11} parent=39 // pred_region
          %p278 = scmp.lt.s32.totalorder %s15, 1
          %s279 = scalar_select %p278, %s15, 1
          %s280 = scalar_lea.vmem %s1, %s279
        $region48: #{_lambda_.11} parent=39 // pred_fallthru
          _
      $region40: #{_lambda_.11} parent=5 // pred_fallthru
        _
      %p281 = scmp.le.s32.totalorder 1, %s15
      %p282 = scmp.lt.s32.totalorder %s15, 3
      %p283 = pnand %p281, %p282
      %p284 = pneg %p283
      // Predicated region
      $region49: #{_lambda_.11} parent=5 // pred_check
        _
      $region50: #{_lambda_.11} parent=5 // pred_check_branch
        %286 = sbr.rel (%p283) target = $region52
      $region51: #{_lambda_.11} parent=5 // pred_region
        %s287 = ssub.s32 %s15, 1
        // Predicated region
        $region53: #{_lambda_.11} parent=51 // pred_check
          %p288 = pneg %p130
        $region54: #{_lambda_.11} parent=51 // pred_check_branch
          %290 = sbr.rel (%p288) target = $region56
        $region55: #{_lambda_.11} parent=51 // pred_region
          %292 = dma.done [#allocation3], 12288
        $region56: #{_lambda_.11} parent=51 // pred_fallthru
          _
        %p293 = scmp.lt.s32.totalorder %s20, 1
        %s294 = scalar_select %p293, %s20, 1
        %s295 = smul.addr %s294, 2
        %s296 = smul.addr %s295, 4
        %s297 = scalar_lea.vmem %s0, %s296
        %p298 = pneg %p41
        %p299 = pneg %p38
        %p300 = scmp.lt.s32.totalorder %s20, 1
        %s301 = scalar_select %p300, %s20, 1
        %s302 = scalar_lea.vmem %s1, %s301
        %p303 = pneg %p67
        %p304 = pneg %p64
        %p305 = pneg %p88
        %p306 = pneg %p85
        %p307 = pneg %p109
        %p308 = pneg %p106
        %p309 = pneg %p130
        %p310 = pneg %p127
        %p311 = pneg %p151
        %p312 = pneg %p148
        %p313 = pneg %p172
        %p314 = pneg %p169
        %p315 = pneg %p193
        %p316 = pneg %p190
        %p317 = pneg %p219
        %p318 = pneg %p216
        %p319 = scmp.lt.s32.totalorder %s20, 1
        %s320 = scalar_select %p319, %s20, 1
        %s321 = smul.addr %s320, 2
        %s322 = smul.addr %s321, 4
        %s323 = scalar_lea.vmem %s8, %s322
        %p324 = scmp.lt.s32.totalorder %s20, 1
        %s325 = scalar_select %p324, %s20, 1
        %s326 = smul.addr %s325, 2
        %s327 = smul.addr %s326, 4
        %s328 = scalar_lea.vmem %s0, %s327
        %p329 = scmp.lt.s32.totalorder %s20, 1
        %s330 = scalar_select %p329, %s20, 1
        %s331 = scalar_lea.vmem %s1, %s330
        %p332 = scmp.lt.s32.totalorder %s20, 1
        %s333 = scalar_select %p332, %s20, 1
        %s334 = smul.addr %s333, 2
        %s335 = smul.addr %s334, 4
        %s336 = scalar_lea.vmem %s8, %s335
        %v338 = vld [vmem:[%s328] sm:$0xff]
        %v339 = vunpack.c.l.bf16 %v338
        %v340 = vunpack.c.h.bf16 %v338
        %v341 = vld [vmem:[%s2] sm:$0x3]
        %v342 = vld [vmem:[%s3] sm:$0x3]
        %v343 = vadd.f32 %v339, %v340
        %344 = vadd.xlane.f32.xlu0 %v343
        %v345 = vpop.xlane.xlu0 %344
        %v346 = vrcp.pop 256.0
        %v347 = vmul.f32 256.0, %v346
        %v348 = vsub.f32 1.0, %v347
        %v349 = vmul.f32 %v346, %v348
        %v350 = vadd.f32 %v346, %v349
        %vm351 = vweird.f32 %v346
        %v352 = vsel %vm351, %v346, %v350
        %v353 = vmul.f32 %v345, %v352
        %v354 = vsub.f32 %v339, %v353
        %v355 = vsub.f32 %v340, %v353
        %v356 = vmul.f32 %v354, %v354
        %v357 = vmul.f32 %v355, %v355
        %v358 = vadd.f32 %v356, %v357
        %359 = vadd.xlane.f32.xlu0 %v358
        %v360 = vpop.xlane.xlu0 %359
        %v361 = vmul.f32 %v360, %v352
        %v362 = vadd.f32 %v361, 1e-05
        %v363 = vrsqrt.pop %v362
        %v364 = vmul.f32 %v363, %v362
        %v365 = vmul.f32 %v364, %v363
        %v366 = vmul.f32 0.5, %v365
        %v367 = vsub.f32 1.5, %v366
        %v368 = vmul.f32 %v363, %v367
        %vm369 = vweird.f32 %v362
        %vm370 = vweird.f32 %v363
        %vm371 = vmor %vm369, %vm370
        %v372 = vsel %vm371, %v363, %v368
        %v373 = vmul.f32 %v354, %v372
        %v374 = vmul.f32 %v355, %v372
        %v376 = vperm.slane %v341, 0
        %v377 = vperm.slane %v341, 1
        %v380 = vmul.f32 %v373, %v376
        %v381 = vmul.f32 %v374, %v377
        %v383 = vperm.slane %v342, 0
        %v384 = vperm.slane %v342, 1
        %v387 = vadd.f32 %v380, %v383
        %v388 = vadd.f32 %v381, %v384
        %v389 = vpack.c.bf16 %v387, %v387
        %v390 = vpack.c.bf16 %v388, %v388
        %v391 = vld [vmem:[#allocation2] sm:$0xff]
        %v392 = vld [vmem:[#allocation2 + $0x8] sm:$0xff]
        %v393 = vld [vmem:[#allocation2 + $0x10] sm:$0xff]
        %v394 = vld [vmem:[#allocation2 + $0x18] sm:$0xff]
        %v395 = vld [vmem:[#allocation2 + $0x20] sm:$0xff]
        %v396 = vld [vmem:[#allocation2 + $0x28] sm:$0xff]
        %v397 = vld [vmem:[#allocation2 + $0x30] sm:$0xff]
        %v398 = vld [vmem:[#allocation2 + $0x38] sm:$0xff]
        %v399 = vld [vmem:[#allocation2 + $0x40] sm:$0xff]
        %v400 = vld [vmem:[#allocation2 + $0x48] sm:$0xff]
        %v401 = vld [vmem:[#allocation2 + $0x50] sm:$0xff]
        %v402 = vld [vmem:[#allocation2 + $0x58] sm:$0xff]
        %v403 = vld [vmem:[#allocation2 + $0x60] sm:$0xff]
        %v404 = vld [vmem:[#allocation2 + $0x68] sm:$0xff]
        %v405 = vld [vmem:[#allocation2 + $0x70] sm:$0xff]
        %v406 = vld [vmem:[#allocation2 + $0x78] sm:$0xff]
        %v407 = vld [vmem:[#allocation2 + $0x80] sm:$0xff]
        %v408 = vld [vmem:[#allocation2 + $0x88] sm:$0xff]
        %v409 = vld [vmem:[#allocation2 + $0x90] sm:$0xff]
        %v410 = vld [vmem:[#allocation2 + $0x98] sm:$0xff]
        %v411 = vld [vmem:[#allocation2 + $0xa0] sm:$0xff]
        %v412 = vld [vmem:[#allocation2 + $0xa8] sm:$0xff]
        %v413 = vld [vmem:[#allocation2 + $0xb0] sm:$0xff]
        %v414 = vld [vmem:[#allocation2 + $0xb8] sm:$0xff]
        %v415 = vld [vmem:[#allocation2 + $0xc0] sm:$0xff]
        %v416 = vld [vmem:[#allocation2 + $0xc8] sm:$0xff]
        %v417 = vld [vmem:[#allocation2 + $0xd0] sm:$0xff]
        %v418 = vld [vmem:[#allocation2 + $0xd8] sm:$0xff]
        %v419 = vld [vmem:[#allocation2 + $0xe0] sm:$0xff]
        %v420 = vld [vmem:[#allocation2 + $0xe8] sm:$0xff]
        %v421 = vld [vmem:[#allocation2 + $0xf0] sm:$0xff]
        %v422 = vld [vmem:[#allocation2 + $0xf8] sm:$0xff]
        %v423 = vld [vmem:[#allocation2 + $0x100] sm:$0xff]
        %v424 = vld [vmem:[#allocation2 + $0x108] sm:$0xff]
        %v425 = vld [vmem:[#allocation2 + $0x110] sm:$0xff]
        %v426 = vld [vmem:[#allocation2 + $0x118] sm:$0xff]
        %v427 = vld [vmem:[#allocation2 + $0x120] sm:$0xff]
        %v428 = vld [vmem:[#allocation2 + $0x128] sm:$0xff]
        %v429 = vld [vmem:[#allocation2 + $0x130] sm:$0xff]
        %v430 = vld [vmem:[#allocation2 + $0x138] sm:$0xff]
        %v431 = vld [vmem:[#allocation2 + $0x140] sm:$0xff]
        %v432 = vld [vmem:[#allocation2 + $0x148] sm:$0xff]
        %v433 = vld [vmem:[#allocation2 + $0x150] sm:$0xff]
        %v434 = vld [vmem:[#allocation2 + $0x158] sm:$0xff]
        %v435 = vld [vmem:[#allocation2 + $0x160] sm:$0xff]
        %v436 = vld [vmem:[#allocation2 + $0x168] sm:$0xff]
        %v437 = vld [vmem:[#allocation2 + $0x170] sm:$0xff]
        %v438 = vld [vmem:[#allocation2 + $0x178] sm:$0xff]
        %v439 = vld [vmem:[#allocation2 + $0x180] sm:$0xff]
        %v440 = vld [vmem:[#allocation2 + $0x188] sm:$0xff]
        %v441 = vld [vmem:[#allocation2 + $0x190] sm:$0xff]
        %v442 = vld [vmem:[#allocation2 + $0x198] sm:$0xff]
        %v443 = vld [vmem:[#allocation2 + $0x1a0] sm:$0xff]
        %v444 = vld [vmem:[#allocation2 + $0x1a8] sm:$0xff]
        %v445 = vld [vmem:[#allocation2 + $0x1b0] sm:$0xff]
        %v446 = vld [vmem:[#allocation2 + $0x1b8] sm:$0xff]
        %v447 = vld [vmem:[#allocation2 + $0x1c0] sm:$0xff]
        %v448 = vld [vmem:[#allocation2 + $0x1c8] sm:$0xff]
        %v449 = vld [vmem:[#allocation2 + $0x1d0] sm:$0xff]
        %v450 = vld [vmem:[#allocation2 + $0x1d8] sm:$0xff]
        %v451 = vld [vmem:[#allocation2 + $0x1e0] sm:$0xff]
        %v452 = vld [vmem:[#allocation2 + $0x1e8] sm:$0xff]
        %v453 = vld [vmem:[#allocation2 + $0x1f0] sm:$0xff]
        %v454 = vld [vmem:[#allocation2 + $0x1f8] sm:$0xff]
        %v455 = vld [vmem:[#allocation2 + $0x200] sm:$0xff]
        %v456 = vld [vmem:[#allocation2 + $0x208] sm:$0xff]
        %v457 = vld [vmem:[#allocation2 + $0x210] sm:$0xff]
        %v458 = vld [vmem:[#allocation2 + $0x218] sm:$0xff]
        %v459 = vld [vmem:[#allocation2 + $0x220] sm:$0xff]
        %v460 = vld [vmem:[#allocation2 + $0x228] sm:$0xff]
        %v461 = vld [vmem:[#allocation2 + $0x230] sm:$0xff]
        %v462 = vld [vmem:[#allocation2 + $0x238] sm:$0xff]
        %v463 = vld [vmem:[#allocation2 + $0x240] sm:$0xff]
        %v464 = vld [vmem:[#allocation2 + $0x248] sm:$0xff]
        %v465 = vld [vmem:[#allocation2 + $0x250] sm:$0xff]
        %v466 = vld [vmem:[#allocation2 + $0x258] sm:$0xff]
        %v467 = vld [vmem:[#allocation2 + $0x260] sm:$0xff]
        %v468 = vld [vmem:[#allocation2 + $0x268] sm:$0xff]
        %v469 = vld [vmem:[#allocation2 + $0x270] sm:$0xff]
        %v470 = vld [vmem:[#allocation2 + $0x278] sm:$0xff]
        %v471 = vld [vmem:[#allocation2 + $0x280] sm:$0xff]
        %v472 = vld [vmem:[#allocation2 + $0x288] sm:$0xff]
        %v473 = vld [vmem:[#allocation2 + $0x290] sm:$0xff]
        %v474 = vld [vmem:[#allocation2 + $0x298] sm:$0xff]
        %v475 = vld [vmem:[#allocation2 + $0x2a0] sm:$0xff]
        %v476 = vld [vmem:[#allocation2 + $0x2a8] sm:$0xff]
        %v477 = vld [vmem:[#allocation2 + $0x2b0] sm:$0xff]
        %v478 = vld [vmem:[#allocation2 + $0x2b8] sm:$0xff]
        %v479 = vld [vmem:[#allocation2 + $0x2c0] sm:$0xff]
        %v480 = vld [vmem:[#allocation2 + $0x2c8] sm:$0xff]
        %v481 = vld [vmem:[#allocation2 + $0x2d0] sm:$0xff]
        %v482 = vld [vmem:[#allocation2 + $0x2d8] sm:$0xff]
        %v483 = vld [vmem:[#allocation2 + $0x2e0] sm:$0xff]
        %v484 = vld [vmem:[#allocation2 + $0x2e8] sm:$0xff]
        %v485 = vld [vmem:[#allocation2 + $0x2f0] sm:$0xff]
        %v486 = vld [vmem:[#allocation2 + $0x2f8] sm:$0xff]
        %v487 = vld [vmem:[%s5] sm:$0x3f]
        %v489 = vperm.slane %v487, 0
        %v490 = vperm.slane %v487, 1
        %v491 = vperm.slane %v487, 2
        %v492 = vperm.slane %v487, 3
        %v493 = vperm.slane %v487, 4
        %v494 = vperm.slane %v487, 5
        %v597 = vunpack.c.l.b16 %v391
        %v598 = vunpack.c.h.b16 %v391
        %v599 = vunpack.c.l.b16 %v392
        %v600 = vunpack.c.h.b16 %v392
        %v601 = vunpack.c.l.b16 %v393
        %v602 = vunpack.c.h.b16 %v393
        %v603 = vunpack.c.l.b16 %v394
        %v604 = vunpack.c.h.b16 %v394
        %v605 = vunpack.c.l.b16 %v395
        %v606 = vunpack.c.h.b16 %v395
        %v607 = vunpack.c.l.b16 %v396
        %v608 = vunpack.c.h.b16 %v396
        %v609 = vunpack.c.l.b16 %v397
        %v610 = vunpack.c.h.b16 %v397
        %v611 = vunpack.c.l.b16 %v398
        %v612 = vunpack.c.h.b16 %v398
        %v613 = vunpack.c.l.b16 %v399
        %v614 = vunpack.c.h.b16 %v399
        %v615 = vunpack.c.l.b16 %v400
        %v616 = vunpack.c.h.b16 %v400
        %v617 = vunpack.c.l.b16 %v401
        %v618 = vunpack.c.h.b16 %v401
        %v619 = vunpack.c.l.b16 %v402
        %v620 = vunpack.c.h.b16 %v402
        %v621 = vunpack.c.l.b16 %v403
        %v622 = vunpack.c.h.b16 %v403
        %v623 = vunpack.c.l.b16 %v404
        %v624 = vunpack.c.h.b16 %v404
        %v625 = vunpack.c.l.b16 %v405
        %v626 = vunpack.c.h.b16 %v405
        %v627 = vunpack.c.l.b16 %v406
        %v628 = vunpack.c.h.b16 %v406
        %v629 = vunpack.c.l.b16 %v407
        %v630 = vunpack.c.h.b16 %v407
        %v631 = vunpack.c.l.b16 %v408
        %v632 = vunpack.c.h.b16 %v408
        %v633 = vunpack.c.l.b16 %v409
        %v634 = vunpack.c.h.b16 %v409
        %v635 = vunpack.c.l.b16 %v410
        %v636 = vunpack.c.h.b16 %v410
        %v637 = vunpack.c.l.b16 %v411
        %v638 = vunpack.c.h.b16 %v411
        %v639 = vunpack.c.l.b16 %v412
        %v640 = vunpack.c.h.b16 %v412
        %v641 = vunpack.c.l.b16 %v413
        %v642 = vunpack.c.h.b16 %v413
        %v643 = vunpack.c.l.b16 %v414
        %v644 = vunpack.c.h.b16 %v414
        %v645 = vunpack.c.l.b16 %v415
        %v646 = vunpack.c.h.b16 %v415
        %v647 = vunpack.c.l.b16 %v416
        %v648 = vunpack.c.h.b16 %v416
        %v649 = vunpack.c.l.b16 %v417
        %v650 = vunpack.c.h.b16 %v417
        %v651 = vunpack.c.l.b16 %v418
        %v652 = vunpack.c.h.b16 %v418
        %v653 = vunpack.c.l.b16 %v419
        %v654 = vunpack.c.h.b16 %v419
        %v655 = vunpack.c.l.b16 %v420
        %v656 = vunpack.c.h.b16 %v420
        %v657 = vunpack.c.l.b16 %v421
        %v658 = vunpack.c.h.b16 %v421
        %v659 = vunpack.c.l.b16 %v422
        %v660 = vunpack.c.h.b16 %v422
        %v661 = vunpack.c.l.b16 %v423
        %v662 = vunpack.c.h.b16 %v423
        %v663 = vunpack.c.l.b16 %v424
        %v664 = vunpack.c.h.b16 %v424
        %v665 = vunpack.c.l.b16 %v425
        %v666 = vunpack.c.h.b16 %v425
        %v667 = vunpack.c.l.b16 %v426
        %v668 = vunpack.c.h.b16 %v426
        %v669 = vunpack.c.l.b16 %v427
        %v670 = vunpack.c.h.b16 %v427
        %v671 = vunpack.c.l.b16 %v428
        %v672 = vunpack.c.h.b16 %v428
        %v673 = vunpack.c.l.b16 %v429
        %v674 = vunpack.c.h.b16 %v429
        %v675 = vunpack.c.l.b16 %v430
        %v676 = vunpack.c.h.b16 %v430
        %v677 = vunpack.c.l.b16 %v431
        %v678 = vunpack.c.h.b16 %v431
        %v679 = vunpack.c.l.b16 %v432
        %v680 = vunpack.c.h.b16 %v432
        %v681 = vunpack.c.l.b16 %v433
        %v682 = vunpack.c.h.b16 %v433
        %v683 = vunpack.c.l.b16 %v434
        %v684 = vunpack.c.h.b16 %v434
        %v685 = vunpack.c.l.b16 %v435
        %v686 = vunpack.c.h.b16 %v435
        %v687 = vunpack.c.l.b16 %v436
        %v688 = vunpack.c.h.b16 %v436
        %v689 = vunpack.c.l.b16 %v437
        %v690 = vunpack.c.h.b16 %v437
        %v691 = vunpack.c.l.b16 %v438
        %v692 = vunpack.c.h.b16 %v438
        %v693 = vunpack.c.l.b16 %v439
        %v694 = vunpack.c.h.b16 %v439
        %v695 = vunpack.c.l.b16 %v440
        %v696 = vunpack.c.h.b16 %v440
        %v697 = vunpack.c.l.b16 %v441
        %v698 = vunpack.c.h.b16 %v441
        %v699 = vunpack.c.l.b16 %v442
        %v700 = vunpack.c.h.b16 %v442
        %v701 = vunpack.c.l.b16 %v443
        %v702 = vunpack.c.h.b16 %v443
        %v703 = vunpack.c.l.b16 %v444
        %v704 = vunpack.c.h.b16 %v444
        %v705 = vunpack.c.l.b16 %v445
        %v706 = vunpack.c.h.b16 %v445
        %v707 = vunpack.c.l.b16 %v446
        %v708 = vunpack.c.h.b16 %v446
        %v709 = vunpack.c.l.b16 %v447
        %v710 = vunpack.c.h.b16 %v447
        %v711 = vunpack.c.l.b16 %v448
        %v712 = vunpack.c.h.b16 %v448
        %v713 = vunpack.c.l.b16 %v449
        %v714 = vunpack.c.h.b16 %v449
        %v715 = vunpack.c.l.b16 %v450
        %v716 = vunpack.c.h.b16 %v450
        %v717 = vunpack.c.l.b16 %v451
        %v718 = vunpack.c.h.b16 %v451
        %v719 = vunpack.c.l.b16 %v452
        %v720 = vunpack.c.h.b16 %v452
        %v721 = vunpack.c.l.b16 %v453
        %v722 = vunpack.c.h.b16 %v453
        %v723 = vunpack.c.l.b16 %v454
        %v724 = vunpack.c.h.b16 %v454
        %v725 = vunpack.c.l.b16 %v455
        %v726 = vunpack.c.h.b16 %v455
        %v727 = vunpack.c.l.b16 %v456
        %v728 = vunpack.c.h.b16 %v456
        %v729 = vunpack.c.l.b16 %v457
        %v730 = vunpack.c.h.b16 %v457
        %v731 = vunpack.c.l.b16 %v458
        %v732 = vunpack.c.h.b16 %v458
        %v733 = vunpack.c.l.b16 %v459
        %v734 = vunpack.c.h.b16 %v459
        %v735 = vunpack.c.l.b16 %v460
        %v736 = vunpack.c.h.b16 %v460
        %v737 = vunpack.c.l.b16 %v461
        %v738 = vunpack.c.h.b16 %v461
        %v739 = vunpack.c.l.b16 %v462
        %v740 = vunpack.c.h.b16 %v462
        %v741 = vunpack.c.l.b16 %v463
        %v742 = vunpack.c.h.b16 %v463
        %v743 = vunpack.c.l.b16 %v464
        %v744 = vunpack.c.h.b16 %v464
        %v745 = vunpack.c.l.b16 %v465
        %v746 = vunpack.c.h.b16 %v465
        %v747 = vunpack.c.l.b16 %v466
        %v748 = vunpack.c.h.b16 %v466
        %v749 = vunpack.c.l.b16 %v467
        %v750 = vunpack.c.h.b16 %v467
        %v751 = vunpack.c.l.b16 %v468
        %v752 = vunpack.c.h.b16 %v468
        %v753 = vunpack.c.l.b16 %v469
        %v754 = vunpack.c.h.b16 %v469
        %v755 = vunpack.c.l.b16 %v470
        %v756 = vunpack.c.h.b16 %v470
        %v757 = vunpack.c.l.b16 %v471
        %v758 = vunpack.c.h.b16 %v471
        %v759 = vunpack.c.l.b16 %v472
        %v760 = vunpack.c.h.b16 %v472
        %v761 = vunpack.c.l.b16 %v473
        %v762 = vunpack.c.h.b16 %v473
        %v763 = vunpack.c.l.b16 %v474
        %v764 = vunpack.c.h.b16 %v474
        %v765 = vunpack.c.l.b16 %v475
        %v766 = vunpack.c.h.b16 %v475
        %v767 = vunpack.c.l.b16 %v476
        %v768 = vunpack.c.h.b16 %v476
        %v769 = vunpack.c.l.b16 %v477
        %v770 = vunpack.c.h.b16 %v477
        %v771 = vunpack.c.l.b16 %v478
        %v772 = vunpack.c.h.b16 %v478
        %v773 = vunpack.c.l.b16 %v479
        %v774 = vunpack.c.h.b16 %v479
        %v775 = vunpack.c.l.b16 %v480
        %v776 = vunpack.c.h.b16 %v480
        %v777 = vunpack.c.l.b16 %v481
        %v778 = vunpack.c.h.b16 %v481
        %v779 = vunpack.c.l.b16 %v482
        %v780 = vunpack.c.h.b16 %v482
        %v781 = vunpack.c.l.b16 %v483
        %v782 = vunpack.c.h.b16 %v483
        %v783 = vunpack.c.l.b16 %v484
        %v784 = vunpack.c.h.b16 %v484
        %v785 = vunpack.c.l.b16 %v485
        %v786 = vunpack.c.h.b16 %v485
        %v787 = vunpack.c.l.b16 %v486
        %v788 = vunpack.c.h.b16 %v486
        %v789 = vpack.c.b16 %v603, %v597
        %v790 = vpack.c.b16 %v604, %v598
        %v791 = vpack.c.b16 %v605, %v599
        %v792 = vpack.c.b16 %v606, %v600
        %v793 = vpack.c.b16 %v607, %v601
        %v794 = vpack.c.b16 %v608, %v602
        %v795 = vpack.c.b16 %v615, %v609
        %v796 = vpack.c.b16 %v616, %v610
        %v797 = vpack.c.b16 %v617, %v611
        %v798 = vpack.c.b16 %v618, %v612
        %v799 = vpack.c.b16 %v619, %v613
        %v800 = vpack.c.b16 %v620, %v614
        %v801 = vpack.c.b16 %v627, %v621
        %v802 = vpack.c.b16 %v628, %v622
        %v803 = vpack.c.b16 %v629, %v623
        %v804 = vpack.c.b16 %v630, %v624
        %v805 = vpack.c.b16 %v631, %v625
        %v806 = vpack.c.b16 %v632, %v626
        %v807 = vpack.c.b16 %v639, %v633
        %v808 = vpack.c.b16 %v640, %v634
        %v809 = vpack.c.b16 %v641, %v635
        %v810 = vpack.c.b16 %v642, %v636
        %v811 = vpack.c.b16 %v643, %v637
        %v812 = vpack.c.b16 %v644, %v638
        %v813 = vpack.c.b16 %v651, %v645
        %v814 = vpack.c.b16 %v652, %v646
        %v815 = vpack.c.b16 %v653, %v647
        %v816 = vpack.c.b16 %v654, %v648
        %v817 = vpack.c.b16 %v655, %v649
        %v818 = vpack.c.b16 %v656, %v650
        %v819 = vpack.c.b16 %v663, %v657
        %v820 = vpack.c.b16 %v664, %v658
        %v821 = vpack.c.b16 %v665, %v659
        %v822 = vpack.c.b16 %v666, %v660
        %v823 = vpack.c.b16 %v667, %v661
        %v824 = vpack.c.b16 %v668, %v662
        %v825 = vpack.c.b16 %v675, %v669
        %v826 = vpack.c.b16 %v676, %v670
        %v827 = vpack.c.b16 %v677, %v671
        %v828 = vpack.c.b16 %v678, %v672
        %v829 = vpack.c.b16 %v679, %v673
        %v830 = vpack.c.b16 %v680, %v674
        %v831 = vpack.c.b16 %v687, %v681
        %v832 = vpack.c.b16 %v688, %v682
        %v833 = vpack.c.b16 %v689, %v683
        %v834 = vpack.c.b16 %v690, %v684
        %v835 = vpack.c.b16 %v691, %v685
        %v836 = vpack.c.b16 %v692, %v686
        %v837 = vpack.c.b16 %v699, %v693
        %v838 = vpack.c.b16 %v700, %v694
        %v839 = vpack.c.b16 %v701, %v695
        %v840 = vpack.c.b16 %v702, %v696
        %v841 = vpack.c.b16 %v703, %v697
        %v842 = vpack.c.b16 %v704, %v698
        %v843 = vpack.c.b16 %v711, %v705
        %v844 = vpack.c.b16 %v712, %v706
        %v845 = vpack.c.b16 %v713, %v707
        %v846 = vpack.c.b16 %v714, %v708
        %v847 = vpack.c.b16 %v715, %v709
        %v848 = vpack.c.b16 %v716, %v710
        %v849 = vpack.c.b16 %v723, %v717
        %v850 = vpack.c.b16 %v724, %v718
        %v851 = vpack.c.b16 %v725, %v719
        %v852 = vpack.c.b16 %v726, %v720
        %v853 = vpack.c.b16 %v727, %v721
        %v854 = vpack.c.b16 %v728, %v722
        %v855 = vpack.c.b16 %v735, %v729
        %v856 = vpack.c.b16 %v736, %v730
        %v857 = vpack.c.b16 %v737, %v731
        %v858 = vpack.c.b16 %v738, %v732
        %v859 = vpack.c.b16 %v739, %v733
        %v860 = vpack.c.b16 %v740, %v734
        %v861 = vpack.c.b16 %v747, %v741
        %v862 = vpack.c.b16 %v748, %v742
        %v863 = vpack.c.b16 %v749, %v743
        %v864 = vpack.c.b16 %v750, %v744
        %v865 = vpack.c.b16 %v751, %v745
        %v866 = vpack.c.b16 %v752, %v746
        %v867 = vpack.c.b16 %v759, %v753
        %v868 = vpack.c.b16 %v760, %v754
        %v869 = vpack.c.b16 %v761, %v755
        %v870 = vpack.c.b16 %v762, %v756
        %v871 = vpack.c.b16 %v763, %v757
        %v872 = vpack.c.b16 %v764, %v758
        %v873 = vpack.c.b16 %v771, %v765
        %v874 = vpack.c.b16 %v772, %v766
        %v875 = vpack.c.b16 %v773, %v767
        %v876 = vpack.c.b16 %v774, %v768
        %v877 = vpack.c.b16 %v775, %v769
        %v878 = vpack.c.b16 %v776, %v770
        %v879 = vpack.c.b16 %v783, %v777
        %v880 = vpack.c.b16 %v784, %v778
        %v881 = vpack.c.b16 %v785, %v779
        %v882 = vpack.c.b16 %v786, %v780
        %v883 = vpack.c.b16 %v787, %v781
        %v884 = vpack.c.b16 %v788, %v782
        %981 = vmatpush.bf16.msra.mxu0 %v831
        %982 = vmatpush.bf16.msra.mxu0 %v825
        %983 = vmatpush.bf16.msra.mxu0 %v819
        %984 = vmatpush.bf16.msra.mxu0 %v813
        %985 = vmatpush.bf16.msra.mxu0 %v807
        %986 = vmatpush.bf16.msra.mxu0 %v801
        %987 = vmatpush.bf16.msra.mxu0 %v795
        %988 = vmatpush.bf16.msra.mxu0 %v789
        %989 = vmatmul.bf16.gmra.mxu0 %v389
        %v990 = vpop.f32.mrf.mxu0
        %v991 = vadd.f32 %v489, %v990
        %v992 = vpop.f32.mrf.mxu0
        %993 = vdwg.mxu0
        %994 = vmatpush.bf16.msra.mxu0 %v879
        %995 = vmatpush.bf16.msra.mxu0 %v873
        %996 = vmatpush.bf16.msra.mxu0 %v867
        %997 = vmatpush.bf16.msra.mxu0 %v861
        %998 = vmatpush.bf16.msra.mxu0 %v855
        %999 = vmatpush.bf16.msra.mxu0 %v849
        %1000 = vmatpush.bf16.msra.mxu0 %v843
        %1001 = vmatpush.bf16.msra.mxu0 %v837
        %1002 = vmatmul.bf16.gmra.mxu0 %v390
        %v1003 = vpop.f32.mrf.mxu0
        %v1004 = vadd.f32 %v991, %v1003
        %v1005 = vpop.f32.mrf.mxu0
        %1006 = vdwg.mxu0
        %1007 = vmatpush.bf16.msra.mxu0 %v832
        %1008 = vmatpush.bf16.msra.mxu0 %v826
        %1009 = vmatpush.bf16.msra.mxu0 %v820
        %1010 = vmatpush.bf16.msra.mxu0 %v814
        %1011 = vmatpush.bf16.msra.mxu0 %v808
        %1012 = vmatpush.bf16.msra.mxu0 %v802
        %1013 = vmatpush.bf16.msra.mxu0 %v796
        %1014 = vmatpush.bf16.msra.mxu0 %v790
        %1015 = vmatmul.bf16.gmra.mxu0 %v389
        %v1016 = vpop.f32.mrf.mxu0
        %v1017 = vadd.f32 %v490, %v1016
        %v1018 = vpop.f32.mrf.mxu0
        %1019 = vdwg.mxu0
        %1020 = vmatpush.bf16.msra.mxu0 %v880
        %1021 = vmatpush.bf16.msra.mxu0 %v874
        %1022 = vmatpush.bf16.msra.mxu0 %v868
        %1023 = vmatpush.bf16.msra.mxu0 %v862
        %1024 = vmatpush.bf16.msra.mxu0 %v856
        %1025 = vmatpush.bf16.msra.mxu0 %v850
        %1026 = vmatpush.bf16.msra.mxu0 %v844
        %1027 = vmatpush.bf16.msra.mxu0 %v838
        %1028 = vmatmul.bf16.gmra.mxu0 %v390
        %v1029 = vpop.f32.mrf.mxu0
        %v1030 = vadd.f32 %v1017, %v1029
        %v1031 = vpop.f32.mrf.mxu0
        %1032 = vdwg.mxu0
        %1033 = vmatpush.bf16.msra.mxu0 %v833
        %1034 = vmatpush.bf16.msra.mxu0 %v827
        %1035 = vmatpush.bf16.msra.mxu0 %v821
        %1036 = vmatpush.bf16.msra.mxu0 %v815
        %1037 = vmatpush.bf16.msra.mxu0 %v809
        %1038 = vmatpush.bf16.msra.mxu0 %v803
        %1039 = vmatpush.bf16.msra.mxu0 %v797
        %1040 = vmatpush.bf16.msra.mxu0 %v791
        %1041 = vmatmul.bf16.gmra.mxu0 %v389
        %v1042 = vpop.f32.mrf.mxu0
        %v1043 = vadd.f32 %v491, %v1042
        %v1044 = vpop.f32.mrf.mxu0
        %1045 = vdwg.mxu0
        %1046 = vmatpush.bf16.msra.mxu0 %v881
        %1047 = vmatpush.bf16.msra.mxu0 %v875
        %1048 = vmatpush.bf16.msra.mxu0 %v869
        %1049 = vmatpush.bf16.msra.mxu0 %v863
        %1050 = vmatpush.bf16.msra.mxu0 %v857
        %1051 = vmatpush.bf16.msra.mxu0 %v851
        %1052 = vmatpush.bf16.msra.mxu0 %v845
        %1053 = vmatpush.bf16.msra.mxu0 %v839
        %1054 = vmatmul.bf16.gmra.mxu0 %v390
        %v1055 = vpop.f32.mrf.mxu0
        %v1056 = vadd.f32 %v1043, %v1055
        %v1057 = vpop.f32.mrf.mxu0
        %1058 = vdwg.mxu0
        %1059 = vmatpush.bf16.msra.mxu0 %v834
        %1060 = vmatpush.bf16.msra.mxu0 %v828
        %1061 = vmatpush.bf16.msra.mxu0 %v822
        %1062 = vmatpush.bf16.msra.mxu0 %v816
        %1063 = vmatpush.bf16.msra.mxu0 %v810
        %1064 = vmatpush.bf16.msra.mxu0 %v804
        %1065 = vmatpush.bf16.msra.mxu0 %v798
        %1066 = vmatpush.bf16.msra.mxu0 %v792
        %1067 = vmatmul.bf16.gmra.mxu0 %v389
        %v1068 = vpop.f32.mrf.mxu0
        %v1069 = vadd.f32 %v492, %v1068
        %v1070 = vpop.f32.mrf.mxu0
        %1071 = vdwg.mxu0
        %1072 = vmatpush.bf16.msra.mxu0 %v882
        %1073 = vmatpush.bf16.msra.mxu0 %v876
        %1074 = vmatpush.bf16.msra.mxu0 %v870
        %1075 = vmatpush.bf16.msra.mxu0 %v864
        %1076 = vmatpush.bf16.msra.mxu0 %v858
        %1077 = vmatpush.bf16.msra.mxu0 %v852
        %1078 = vmatpush.bf16.msra.mxu0 %v846
        %1079 = vmatpush.bf16.msra.mxu0 %v840
        %1080 = vmatmul.bf16.gmra.mxu0 %v390
        %v1081 = vpop.f32.mrf.mxu0
        %v1082 = vadd.f32 %v1069, %v1081
        %v1083 = vpop.f32.mrf.mxu0
        %1084 = vdwg.mxu0
        %1085 = vmatpush.bf16.msra.mxu0 %v835
        %1086 = vmatpush.bf16.msra.mxu0 %v829
        %1087 = vmatpush.bf16.msra.mxu0 %v823
        %1088 = vmatpush.bf16.msra.mxu0 %v817
        %1089 = vmatpush.bf16.msra.mxu0 %v811
        %1090 = vmatpush.bf16.msra.mxu0 %v805
        %1091 = vmatpush.bf16.msra.mxu0 %v799
        %1092 = vmatpush.bf16.msra.mxu0 %v793
        %1093 = vmatmul.bf16.gmra.mxu0 %v389
        %v1094 = vpop.f32.mrf.mxu0
        %v1095 = vadd.f32 %v493, %v1094
        %v1096 = vpop.f32.mrf.mxu0
        %1097 = vdwg.mxu0
        %1098 = vmatpush.bf16.msra.mxu0 %v883
        %1099 = vmatpush.bf16.msra.mxu0 %v877
        %1100 = vmatpush.bf16.msra.mxu0 %v871
        %1101 = vmatpush.bf16.msra.mxu0 %v865
        %1102 = vmatpush.bf16.msra.mxu0 %v859
        %1103 = vmatpush.bf16.msra.mxu0 %v853
        %1104 = vmatpush.bf16.msra.mxu0 %v847
        %1105 = vmatpush.bf16.msra.mxu0 %v841
        %1106 = vmatmul.bf16.gmra.mxu0 %v390
        %v1107 = vpop.f32.mrf.mxu0
        %v1108 = vadd.f32 %v1095, %v1107
        %v1109 = vpop.f32.mrf.mxu0
        %1110 = vdwg.mxu0
        %1111 = vmatpush.bf16.msra.mxu0 %v836
        %1112 = vmatpush.bf16.msra.mxu0 %v830
        %1113 = vmatpush.bf16.msra.mxu0 %v824
        %1114 = vmatpush.bf16.msra.mxu0 %v818
        %1115 = vmatpush.bf16.msra.mxu0 %v812
        %1116 = vmatpush.bf16.msra.mxu0 %v806
        %1117 = vmatpush.bf16.msra.mxu0 %v800
        %1118 = vmatpush.bf16.msra.mxu0 %v794
        %1119 = vmatmul.bf16.gmra.mxu0 %v389
        %v1120 = vpop.f32.mrf.mxu0
        %v1121 = vadd.f32 %v494, %v1120
        %v1122 = vpop.f32.mrf.mxu0
        %1123 = vdwg.mxu0
        %1124 = vmatpush.bf16.msra.mxu0 %v884
        %1125 = vmatpush.bf16.msra.mxu0 %v878
        %1126 = vmatpush.bf16.msra.mxu0 %v872
        %1127 = vmatpush.bf16.msra.mxu0 %v866
        %1128 = vmatpush.bf16.msra.mxu0 %v860
        %1129 = vmatpush.bf16.msra.mxu0 %v854
        %1130 = vmatpush.bf16.msra.mxu0 %v848
        %1131 = vmatpush.bf16.msra.mxu0 %v842
        %1132 = vmatmul.bf16.gmra.mxu0 %v390
        %v1133 = vpop.f32.mrf.mxu0
        %v1134 = vadd.f32 %v1121, %v1133
        %v1135 = vpop.f32.mrf.mxu0
        %1136 = vdwg.mxu0
        %v1137 = vld [vmem:[%s331] sm:$0x1]
        %v1138 = vsub.f32 %v1137, 1.0
        %v1139 = vmul.f32 %v1138, 1e+09
        %v1140 = vmul.f32 %v1139, -1.0
        %v1141 = vpack.c.bf16 %v1004, %v1004
        %v1142 = vpack.c.bf16 %v1056, %v1056
        %v1143 = vpack.c.bf16 %v1108, %v1108
        %v1145 = vperm.slane %v1140, 0
        %1147 = vmatpush.bf16.xpose.msra.mxu0 0
        %1148 = vmatpush.bf16.xpose.msra.mxu0 0
        %1149 = vmatpush.bf16.xpose.msra.mxu0 0
        %1150 = vmatpush.bf16.xpose.msra.mxu0 0
        %1151 = vmatpush.bf16.xpose.msra.mxu0 0
        %1152 = vmatpush.bf16.xpose.msra.mxu0 0
        %1153 = vmatpush.bf16.xpose.msra.mxu0 0
        %1154 = vmatpush.bf16.xpose.msra.mxu0 %v1142
        %1155 = vmatmul.bf16.gmra.mxu0 %v1141
        %v1156 = vpop.f32.mrf.mxu0
        %v1157 = vadd.f32 %v1145, %v1156
        %v1158 = vpop.f32.mrf.mxu0
        %1159 = vdwg.mxu0
        %vm1160 = vcmask 64512
        %v1161 = vsel %vm1160, %v1157, -inf
        %1162 = vmax.xlane.f32.xlu0 %v1161
        %v1163 = vpop.xlane.xlu0 %1162
        %v1164 = vsub.f32 %v1157, %v1163
        %v1165 = vmul.f32 %v1164, 1.442695
        %v1166 = vpow.pop %v1165
        %v1167 = vsel %vm1160, %v1166, 0.0
        %1168 = vadd.xlane.f32.xlu0 %v1167
        %v1169 = vpop.xlane.xlu0 %1168
        %v1170 = vrcp.pop %v1169
        %v1171 = vmul.f32 %v1166, %v1170
        %v1172 = vpack.c.bf16 %v1171, %v1171
        %v1174 = vsel %vm1160, %v1172, 0
        %vm1176 = vcmask 1043456
        %v1178 = vsel %vm1176, %v1143, 0
        %1180 = vmatpush.bf16.msra.mxu0 0
        %1181 = vmatpush.bf16.msra.mxu0 0
        %1182 = vmatpush.bf16.msra.mxu0 0
        %1183 = vmatpush.bf16.msra.mxu0 0
        %1184 = vmatpush.bf16.msra.mxu0 0
        %1185 = vmatpush.bf16.msra.mxu0 0
        %1186 = vmatpush.bf16.msra.mxu0 0
        %1187 = vmatpush.bf16.msra.mxu0 %v1178
        %1188 = vmatmul.bf16.gmra.mxu0 %v1174
        %v1189 = vpop.f32.mrf.mxu0
        %v1190 = vadd.f32 0.0, %v1189
        %v1191 = vpop.f32.mrf.mxu0
        %1192 = vdwg.mxu0
        %v1193 = vpack.c.bf16 %v1190, %v1190
        %v1194 = vld [vmem:[%s6] sm:$0xff]
        %v1195 = vld [vmem:[%s6 + $0x8] sm:$0xff]
        %v1196 = vld [vmem:[%s6 + $0x10] sm:$0xff]
        %v1197 = vld [vmem:[%s6 + $0x18] sm:$0xff]
        %v1198 = vld [vmem:[%s6 + $0x20] sm:$0xff]
        %v1199 = vld [vmem:[%s6 + $0x28] sm:$0xff]
        %v1200 = vld [vmem:[%s6 + $0x30] sm:$0xff]
        %v1201 = vld [vmem:[%s6 + $0x38] sm:$0xff]
        %v1202 = vld [vmem:[%s6 + $0x40] sm:$0xff]
        %v1203 = vld [vmem:[%s6 + $0x48] sm:$0xff]
        %v1204 = vld [vmem:[%s6 + $0x50] sm:$0xff]
        %v1205 = vld [vmem:[%s6 + $0x58] sm:$0xff]
        %v1206 = vld [vmem:[%s6 + $0x60] sm:$0xff]
        %v1207 = vld [vmem:[%s6 + $0x68] sm:$0xff]
        %v1208 = vld [vmem:[%s6 + $0x70] sm:$0xff]
        %v1209 = vld [vmem:[%s6 + $0x78] sm:$0xff]
        %v1210 = vpack.c.bf16 %v1030, %v1030
        %v1211 = vpack.c.bf16 %v1082, %v1082
        %v1212 = vpack.c.bf16 %v1134, %v1134
        %1213 = vmatpush.bf16.xpose.msra.mxu0 0
        %1214 = vmatpush.bf16.xpose.msra.mxu0 0
        %1215 = vmatpush.bf16.xpose.msra.mxu0 0
        %1216 = vmatpush.bf16.xpose.msra.mxu0 0
        %1217 = vmatpush.bf16.xpose.msra.mxu0 0
        %1218 = vmatpush.bf16.xpose.msra.mxu0 0
        %1219 = vmatpush.bf16.xpose.msra.mxu0 0
        %1220 = vmatpush.bf16.xpose.msra.mxu0 %v1211
        %1221 = vmatmul.bf16.gmra.mxu0 %v1210
        %v1222 = vpop.f32.mrf.mxu0
        %v1223 = vadd.f32 %v1145, %v1222
        %v1224 = vpop.f32.mrf.mxu0
        %1225 = vdwg.mxu0
        %v1226 = vsel %vm1160, %v1223, -inf
        %1227 = vmax.xlane.f32.xlu0 %v1226
        %v1228 = vpop.xlane.xlu0 %1227
        %v1229 = vsub.f32 %v1223, %v1228
        %v1230 = vmul.f32 %v1229, 1.442695
        %v1231 = vpow.pop %v1230
        %v1232 = vsel %vm1160, %v1231, 0.0
        %1233 = vadd.xlane.f32.xlu0 %v1232
        %v1234 = vpop.xlane.xlu0 %1233
        %v1235 = vrcp.pop %v1234
        %v1236 = vmul.f32 %v1231, %v1235
        %v1237 = vpack.c.bf16 %v1236, %v1236
        %v1239 = vsel %vm1160, %v1237, 0
        %v1242 = vsel %vm1176, %v1212, 0
        %1244 = vmatpush.bf16.msra.mxu0 0
        %1245 = vmatpush.bf16.msra.mxu0 0
        %1246 = vmatpush.bf16.msra.mxu0 0
        %1247 = vmatpush.bf16.msra.mxu0 0
        %1248 = vmatpush.bf16.msra.mxu0 0
        %1249 = vmatpush.bf16.msra.mxu0 0
        %1250 = vmatpush.bf16.msra.mxu0 0
        %1251 = vmatpush.bf16.msra.mxu0 %v1242
        %1252 = vmatmul.bf16.gmra.mxu0 %v1239
        %v1253 = vpop.f32.mrf.mxu0
        %v1254 = vadd.f32 0.0, %v1253
        %v1255 = vpop.f32.mrf.mxu0
        %1256 = vdwg.mxu0
        %v1257 = vpack.c.bf16 %v1254, %v1254
        %v1258 = vld [vmem:[%s6 + $0x80] sm:$0xff]
        %v1259 = vld [vmem:[%s6 + $0x88] sm:$0xff]
        %v1260 = vld [vmem:[%s6 + $0x90] sm:$0xff]
        %v1261 = vld [vmem:[%s6 + $0x98] sm:$0xff]
        %v1262 = vld [vmem:[%s6 + $0xa0] sm:$0xff]
        %v1263 = vld [vmem:[%s6 + $0xa8] sm:$0xff]
        %v1264 = vld [vmem:[%s6 + $0xb0] sm:$0xff]
        %v1265 = vld [vmem:[%s6 + $0xb8] sm:$0xff]
        %v1266 = vld [vmem:[%s6 + $0xc0] sm:$0xff]
        %v1267 = vld [vmem:[%s6 + $0xc8] sm:$0xff]
        %v1268 = vld [vmem:[%s6 + $0xd0] sm:$0xff]
        %v1269 = vld [vmem:[%s6 + $0xd8] sm:$0xff]
        %v1270 = vld [vmem:[%s6 + $0xe0] sm:$0xff]
        %v1271 = vld [vmem:[%s6 + $0xe8] sm:$0xff]
        %v1272 = vld [vmem:[%s6 + $0xf0] sm:$0xff]
        %v1273 = vld [vmem:[%s6 + $0xf8] sm:$0xff]
        %v1290 = vunpack.c.l.b16 %v1258
        %v1291 = vunpack.c.h.b16 %v1258
        %v1292 = vunpack.c.l.b16 %v1259
        %v1293 = vunpack.c.h.b16 %v1259
        %v1294 = vunpack.c.l.b16 %v1260
        %v1295 = vunpack.c.h.b16 %v1260
        %v1296 = vunpack.c.l.b16 %v1261
        %v1297 = vunpack.c.h.b16 %v1261
        %v1298 = vunpack.c.l.b16 %v1262
        %v1299 = vunpack.c.h.b16 %v1262
        %v1300 = vunpack.c.l.b16 %v1263
        %v1301 = vunpack.c.h.b16 %v1263
        %v1302 = vunpack.c.l.b16 %v1264
        %v1303 = vunpack.c.h.b16 %v1264
        %v1304 = vunpack.c.l.b16 %v1265
        %v1305 = vunpack.c.h.b16 %v1265
        %v1306 = vunpack.c.l.b16 %v1266
        %v1307 = vunpack.c.h.b16 %v1266
        %v1308 = vunpack.c.l.b16 %v1267
        %v1309 = vunpack.c.h.b16 %v1267
        %v1310 = vunpack.c.l.b16 %v1268
        %v1311 = vunpack.c.h.b16 %v1268
        %v1312 = vunpack.c.l.b16 %v1269
        %v1313 = vunpack.c.h.b16 %v1269
        %v1314 = vunpack.c.l.b16 %v1270
        %v1315 = vunpack.c.h.b16 %v1270
        %v1316 = vunpack.c.l.b16 %v1271
        %v1317 = vunpack.c.h.b16 %v1271
        %v1318 = vunpack.c.l.b16 %v1272
        %v1319 = vunpack.c.h.b16 %v1272
        %v1320 = vunpack.c.l.b16 %v1273
        %v1321 = vunpack.c.h.b16 %v1273
        %v1322 = vpack.c.b16 %v1292, %v1290
        %v1323 = vpack.c.b16 %v1293, %v1291
        %v1324 = vpack.c.b16 %v1296, %v1294
        %v1325 = vpack.c.b16 %v1297, %v1295
        %v1326 = vpack.c.b16 %v1300, %v1298
        %v1327 = vpack.c.b16 %v1301, %v1299
        %v1328 = vpack.c.b16 %v1304, %v1302
        %v1329 = vpack.c.b16 %v1305, %v1303
        %v1330 = vpack.c.b16 %v1308, %v1306
        %v1331 = vpack.c.b16 %v1309, %v1307
        %v1332 = vpack.c.b16 %v1312, %v1310
        %v1333 = vpack.c.b16 %v1313, %v1311
        %v1334 = vpack.c.b16 %v1316, %v1314
        %v1335 = vpack.c.b16 %v1317, %v1315
        %v1336 = vpack.c.b16 %v1320, %v1318
        %v1337 = vpack.c.b16 %v1321, %v1319
        %1354 = vmatpush.bf16.msra.mxu0 %v1336
        %1355 = vmatpush.bf16.msra.mxu0 %v1334
        %1356 = vmatpush.bf16.msra.mxu0 %v1332
        %1357 = vmatpush.bf16.msra.mxu0 %v1330
        %1358 = vmatpush.bf16.msra.mxu0 %v1328
        %1359 = vmatpush.bf16.msra.mxu0 %v1326
        %1360 = vmatpush.bf16.msra.mxu0 %v1324
        %1361 = vmatpush.bf16.msra.mxu0 %v1322
        %1362 = vmatmul.bf16.gmra.mxu0 %v1257
        %v1363 = vpop.f32.mrf.mxu0
        %v1364 = vadd.f32 0.0, %v1363
        %v1365 = vpop.f32.mrf.mxu0
        %1366 = vdwg.mxu0
        %1367 = vmatpush.bf16.msra.mxu0 %v1337
        %1368 = vmatpush.bf16.msra.mxu0 %v1335
        %1369 = vmatpush.bf16.msra.mxu0 %v1333
        %1370 = vmatpush.bf16.msra.mxu0 %v1331
        %1371 = vmatpush.bf16.msra.mxu0 %v1329
        %1372 = vmatpush.bf16.msra.mxu0 %v1327
        %1373 = vmatpush.bf16.msra.mxu0 %v1325
        %1374 = vmatpush.bf16.msra.mxu0 %v1323
        %1375 = vmatmul.bf16.gmra.mxu0 %v1257
        %v1376 = vpop.f32.mrf.mxu0
        %v1377 = vadd.f32 0.0, %v1376
        %v1378 = vpop.f32.mrf.mxu0
        %1379 = vdwg.mxu0
        %v1396 = vunpack.c.l.b16 %v1194
        %v1397 = vunpack.c.h.b16 %v1194
        %v1398 = vunpack.c.l.b16 %v1195
        %v1399 = vunpack.c.h.b16 %v1195
        %v1400 = vunpack.c.l.b16 %v1196
        %v1401 = vunpack.c.h.b16 %v1196
        %v1402 = vunpack.c.l.b16 %v1197
        %v1403 = vunpack.c.h.b16 %v1197
        %v1404 = vunpack.c.l.b16 %v1198
        %v1405 = vunpack.c.h.b16 %v1198
        %v1406 = vunpack.c.l.b16 %v1199
        %v1407 = vunpack.c.h.b16 %v1199
        %v1408 = vunpack.c.l.b16 %v1200
        %v1409 = vunpack.c.h.b16 %v1200
        %v1410 = vunpack.c.l.b16 %v1201
        %v1411 = vunpack.c.h.b16 %v1201
        %v1412 = vunpack.c.l.b16 %v1202
        %v1413 = vunpack.c.h.b16 %v1202
        %v1414 = vunpack.c.l.b16 %v1203
        %v1415 = vunpack.c.h.b16 %v1203
        %v1416 = vunpack.c.l.b16 %v1204
        %v1417 = vunpack.c.h.b16 %v1204
        %v1418 = vunpack.c.l.b16 %v1205
        %v1419 = vunpack.c.h.b16 %v1205
        %v1420 = vunpack.c.l.b16 %v1206
        %v1421 = vunpack.c.h.b16 %v1206
        %v1422 = vunpack.c.l.b16 %v1207
        %v1423 = vunpack.c.h.b16 %v1207
        %v1424 = vunpack.c.l.b16 %v1208
        %v1425 = vunpack.c.h.b16 %v1208
        %v1426 = vunpack.c.l.b16 %v1209
        %v1427 = vunpack.c.h.b16 %v1209
        %v1428 = vpack.c.b16 %v1398, %v1396
        %v1429 = vpack.c.b16 %v1399, %v1397
        %v1430 = vpack.c.b16 %v1402, %v1400
        %v1431 = vpack.c.b16 %v1403, %v1401
        %v1432 = vpack.c.b16 %v1406, %v1404
        %v1433 = vpack.c.b16 %v1407, %v1405
        %v1434 = vpack.c.b16 %v1410, %v1408
        %v1435 = vpack.c.b16 %v1411, %v1409
        %v1436 = vpack.c.b16 %v1414, %v1412
        %v1437 = vpack.c.b16 %v1415, %v1413
        %v1438 = vpack.c.b16 %v1418, %v1416
        %v1439 = vpack.c.b16 %v1419, %v1417
        %v1440 = vpack.c.b16 %v1422, %v1420
        %v1441 = vpack.c.b16 %v1423, %v1421
        %v1442 = vpack.c.b16 %v1426, %v1424
        %v1443 = vpack.c.b16 %v1427, %v1425
        %1460 = vmatpush.bf16.msra.mxu0 %v1442
        %1461 = vmatpush.bf16.msra.mxu0 %v1440
        %1462 = vmatpush.bf16.msra.mxu0 %v1438
        %1463 = vmatpush.bf16.msra.mxu0 %v1436
        %1464 = vmatpush.bf16.msra.mxu0 %v1434
        %1465 = vmatpush.bf16.msra.mxu0 %v1432
        %1466 = vmatpush.bf16.msra.mxu0 %v1430
        %1467 = vmatpush.bf16.msra.mxu0 %v1428
        %1468 = vmatmul.bf16.gmra.mxu0 %v1193
        %v1469 = vpop.f32.mrf.mxu0
        %v1470 = vadd.f32 %v1364, %v1469
        %v1471 = vpop.f32.mrf.mxu0
        %1472 = vdwg.mxu0
        %1473 = vmatpush.bf16.msra.mxu0 %v1443
        %1474 = vmatpush.bf16.msra.mxu0 %v1441
        %1475 = vmatpush.bf16.msra.mxu0 %v1439
        %1476 = vmatpush.bf16.msra.mxu0 %v1437
        %1477 = vmatpush.bf16.msra.mxu0 %v1435
        %1478 = vmatpush.bf16.msra.mxu0 %v1433
        %1479 = vmatpush.bf16.msra.mxu0 %v1431
        %1480 = vmatpush.bf16.msra.mxu0 %v1429
        %1481 = vmatmul.bf16.gmra.mxu0 %v1193
        %v1482 = vpop.f32.mrf.mxu0
        %v1483 = vadd.f32 %v1377, %v1482
        %v1484 = vpop.f32.mrf.mxu0
        %1485 = vdwg.mxu0
        %v1486 = vld [vmem:[%s7] sm:$0x3]
        %v1488 = vperm.slane %v1486, 0
        %v1489 = vperm.slane %v1486, 1
        %v1492 = vadd.f32 %v1470, %v1488
        %v1493 = vadd.f32 %v1483, %v1489
        %v1494 = vadd.f32 %v339, %v1492
        %v1495 = vadd.f32 %v340, %v1493
        %v1496 = vpack.c.bf16 %v1495, %v1494
        %1497 = vst [vmem:[%s336] sm:$0xff] %v1496
        %p1498 = scmp.lt.s32.totalorder %s20, 1
        %s1499 = scalar_select %p1498, %s20, 1
        %s1500 = smul.addr %s1499, 2
        %s1501 = smul.addr %s1500, 4
        %s1502 = scalar_lea.vmem %s8, %s1501
        // Predicated region
        $region57: #{_lambda_.11} parent=51 // pred_check
          %p1503 = pneg %p216
        $region58: #{_lambda_.11} parent=51 // pred_check_branch
          %1505 = sbr.rel (%p1503) target = $region60
        $region59: #{_lambda_.11} parent=51 // pred_region
          _
        $region60: #{_lambda_.11} parent=51 // pred_fallthru
          _
      $region52: #{_lambda_.11} parent=5 // pred_fallthru
        _
      %p1506 = scmp.le.s32.totalorder 2, %s15
      // Predicated region
      $region61: #{_lambda_.11} parent=5 // pred_check
        %p1507 = pneg %p1506
      $region62: #{_lambda_.11} parent=5 // pred_check_branch
        %1509 = sbr.rel (%p1507) target = $region64
      $region63: #{_lambda_.11} parent=5 // pred_region
        %s1510 = ssub.s32 %s15, 2
        // Predicated region
        $region65: #{_lambda_.11} parent=63 // pred_check
          %p1511 = pneg %p222
        $region66: #{_lambda_.11} parent=63 // pred_check_branch
          %1513 = sbr.rel (%p1511) target = $region68
        $region67: #{_lambda_.11} parent=63 // pred_region
          %p1514 = scmp.lt.s32.totalorder %s21, 1
          %s1515 = scalar_select %p1514, %s21, 1
          %s1516 = smul.addr %s1515, 2
          %s1517 = smul.addr %s1516, 4
          %s1518 = scalar_lea.vmem %s8, %s1517
        $region68: #{_lambda_.11} parent=63 // pred_fallthru
          _
      $region64: #{_lambda_.11} parent=5 // pred_fallthru
        _
    $region6: #{_lambda_.11} parent=1 // loop_footer
      %s19 = sadd.s32 1, %s15
    $region7: #{_lambda_.11} parent=1 // loop_footer_branch
      %14 = sbr.rel target = $region3
    $region8: #{_lambda_.11} parent=1 // loop_exit
      _
    %1519 = vsyncpa [#allocation3], 1
    %s1520 = scalar_lea.sflag [#allocation3], 1
    %1521 = vsyncpa %s1520, 1

// kernel: _lambda_.21
$region0: #{_lambda_.21}
  #allocation0 [shape = 'u32[]', space=smem, size = 0x4, offset = 0x4, fixed_abs, tag = 'smem constant byte address 0x4 - core index']
  #allocation1 [shape = 'u32[72,128]{1,0:T(1,128)}', space=vmem, size = 0x9000, scoped, tag = 'internal scratch']
  %s0 = inlined_call_operand.vmem [shape: bf16[16,256], index: 0, kind: input, shape index: {}]
  %s1 = inlined_call_operand.hbm [shape: bf16[256,256], index: 1, kind: input, shape index: {}]
  %s2 = inlined_call_operand.vmem [shape: f32[1,256], index: 2, kind: input, shape index: {}]
  %s3 = inlined_call_operand.hbm [shape: f32[16,256], index: 3, kind: output, shape index: {}]
  %s4 = sld [smem:[#allocation0]]
  $region49: #{_lambda_.21} parent=0
    _
  %s6 = ssub.s32 1, %s4
  %s7 = scalar_select 0, %s6, %s4
  $region1: #{_lambda_.21} parent=0
    #allocation2 [shape = 'u8[131072]{0}', space=vmem, size = 0x20000, scoped, tag = 'input window, operand 1, single buffered']
    #allocation3 [shape = 's32[2]{0}', space=sflag, size = 0x8, scoped, tag = 'scoped memory for _lambda_.21']
    #allocation4 [shape = 's32[2]{0}', space=sflag, size = 0x8, scoped, tag = 'scoped memory for _lambda_.21']
    #allocation5 [shape = 'u8[16384]{0}', space=vmem, size = 0x4000, scoped, tag = 'output window, operand 0']
    %8 = vsyncpa [#allocation3], 0
    %9 = vsyncpa [#allocation4], 0
    %s10 = scalar_lea.sflag [#allocation4], 1
    %11 = vsyncpa %s10, 0
    loop: start=0, step=1, limit=4
    $region2: #{_lambda_.21} parent=1 // loop_pre_header
      _
    $region3: #{_lambda_.21} parent=1 // loop_header
      %s13 = sphi 0, %s17
      %p14 = scmp.ge.s32.totalorder %s13, 4
      %s20 = sphi 0, %s32
      %s21 = sphi 0, %s28
      %s22 = sphi 0, %s20
      %s23 = sphi 0, %s21
      %s24 = sphi 0, %s22
      %s25 = sphi 0, %s23
      %s35 = sphi 0, %s37
      %s38 = sphi 0, %s35
      %s39 = sphi 0, %s38
      %s55 = sphi 0, %s39
      %s61 = sphi 0, %s63
      %s64 = sphi 0, %s61
      %s65 = sphi 0, %s64
      %s81 = sphi 0, %s65
      %s87 = sphi 0, %s89
      %s90 = sphi 0, %s87
      %s91 = sphi 0, %s90
      %s107 = sphi 0, %s91
      %s115 = sphi 0, %s117
      %s118 = sphi 0, %s115
      %s119 = sphi 0, %s118
      %s135 = sphi 0, %s119
    $region4: #{_lambda_.21} parent=1 // loop_header_branch
      %16 = sbr.rel (%p14) target = $region8
    $region5: #{_lambda_.21} parent=1 // loop_body
      %s18 = ssub.s32 %s13, 1
      %s19 = ssub.s32 %s13, 2
      %s26 = sadd.s32 1, %s21
      %p27 = scmp.ge.s32.totalorder %s26, 1
      %s28 = scalar_select %p27, 0, %s26
      %s29 = sadd.s32 1, %s20
      %s30 = scalar_select %p27, %s29, %s20
      %p31 = scmp.ge.s32.totalorder %s30, 2
      %s32 = scalar_select %p31, 0, %s30
      %s33 = ssub.s32 %s20, %s32
      %p34 = scmp.eq.s32.totalorder %s33, 0
      %s36 = sadd.s32 %s35, 1
      %s37 = scalar_select %p34, %s35, %s36
      %p40 = pneg %p34
      %p41 = scmp.eq.s32.totalorder %s13, 1
      %p42 = por %p40, %p41
      %p43 = scmp.ne.s32.totalorder %s35, %s38
      %p44 = scmp.eq.s32.totalorder %s13, 0
      %p45 = por %p43, %p44
      %p46 = scmp.ne.s32.totalorder %s35, %s38
      %p47 = scmp.eq.s32.totalorder %s18, 1
      %p48 = por %p46, %p47
      %p49 = scmp.ne.s32.totalorder %s38, %s39
      %p50 = scmp.eq.s32.totalorder %s18, 0
      %p51 = por %p49, %p50
      %p52 = scmp.ne.s32.totalorder %s38, %s39
      %p53 = scmp.eq.s32.totalorder %s19, 1
      %p54 = por %p52, %p53
      %p56 = scmp.ne.s32.totalorder %s39, %s55
      %p57 = scmp.eq.s32.totalorder %s19, 0
      %p58 = por %p56, %p57
      %s59 = ssub.s32 %s21, %s28
      %p60 = scmp.eq.s32.totalorder %s59, 0
      %s62 = sadd.s32 %s61, 1
      %s63 = scalar_select %p60, %s61, %s62
      %p66 = pneg %p60
      %p67 = scmp.eq.s32.totalorder %s13, 1
      %p68 = por %p66, %p67
      %p69 = scmp.ne.s32.totalorder %s61, %s64
      %p70 = scmp.eq.s32.totalorder %s13, 0
      %p71 = por %p69, %p70
      %p72 = scmp.ne.s32.totalorder %s61, %s64
      %p73 = scmp.eq.s32.totalorder %s18, 1
      %p74 = por %p72, %p73
      %p75 = scmp.ne.s32.totalorder %s64, %s65
      %p76 = scmp.eq.s32.totalorder %s18, 0
      %p77 = por %p75, %p76
      %p78 = scmp.ne.s32.totalorder %s64, %s65
      %p79 = scmp.eq.s32.totalorder %s19, 1
      %p80 = por %p78, %p79
      %p82 = scmp.ne.s32.totalorder %s65, %s81
      %p83 = scmp.eq.s32.totalorder %s19, 0
      %p84 = por %p82, %p83
      %s85 = ssub.s32 %s21, %s28
      %p86 = scmp.eq.s32.totalorder %s85, 0
      %s88 = sadd.s32 %s87, 1
      %s89 = scalar_select %p86, %s87, %s88
      %p92 = pneg %p86
      %p93 = scmp.eq.s32.totalorder %s13, 1
      %p94 = por %p92, %p93
      %p95 = scmp.ne.s32.totalorder %s87, %s90
      %p96 = scmp.eq.s32.totalorder %s13, 0
      %p97 = por %p95, %p96
      %p98 = scmp.ne.s32.totalorder %s87, %s90
      %p99 = scmp.eq.s32.totalorder %s18, 1
      %p100 = por %p98, %p99
      %p101 = scmp.ne.s32.totalorder %s90, %s91
      %p102 = scmp.eq.s32.totalorder %s18, 0
      %p103 = por %p101, %p102
      %p104 = scmp.ne.s32.totalorder %s90, %s91
      %p105 = scmp.eq.s32.totalorder %s19, 1
      %p106 = por %p104, %p105
      %p108 = scmp.ne.s32.totalorder %s91, %s107
      %p109 = scmp.eq.s32.totalorder %s19, 0
      %p110 = por %p108, %p109
      %s111 = ssub.s32 %s20, %s32
      %s112 = ssub.s32 %s21, %s28
      %s113 = sor.u32 %s111, %s112
      %p114 = scmp.eq.s32.totalorder %s113, 0
      %s116 = sadd.s32 %s115, 1
      %s117 = scalar_select %p114, %s115, %s116
      %p120 = pneg %p114
      %p121 = scmp.eq.s32.totalorder %s13, 1
      %p122 = por %p120, %p121
      %p123 = scmp.ne.s32.totalorder %s115, %s118
      %p124 = scmp.eq.s32.totalorder %s13, 0
      %p125 = por %p123, %p124
      %p126 = scmp.ne.s32.totalorder %s115, %s118
      %p127 = scmp.eq.s32.totalorder %s18, 1
      %p128 = por %p126, %p127
      %p129 = scmp.ne.s32.totalorder %s118, %s119
      %p130 = scmp.eq.s32.totalorder %s18, 0
      %p131 = por %p129, %p130
      %p132 = scmp.ne.s32.totalorder %s118, %s119
      %p133 = scmp.eq.s32.totalorder %s19, 1
      %p134 = por %p132, %p133
      %p136 = scmp.ne.s32.totalorder %s119, %s135
      %p137 = scmp.eq.s32.totalorder %s19, 0
      %p138 = por %p136, %p137
      %p139 = scmp.le.s32.totalorder 1, %s13
      %p140 = scmp.lt.s32.totalorder %s13, 3
      %p141 = pnand %p139, %p140
      %p142 = pneg %p141
      // Predicated region
      $region9: #{_lambda_.21} parent=5 // pred_check
        _
      $region10: #{_lambda_.21} parent=5 // pred_check_branch
        %144 = sbr.rel (%p141) target = $region12
      $region11: #{_lambda_.21} parent=5 // pred_region
        %s145 = ssub.s32 %s13, 1
        // Predicated region
        $region13: #{_lambda_.21} parent=11 // pred_check
          %p146 = pneg %p77
        $region14: #{_lambda_.21} parent=11 // pred_check_branch
          %148 = sbr.rel (%p146) target = $region16
        $region15: #{_lambda_.21} parent=11 // pred_region
          %s149 = smul.u32 2, %s23
          %151 = vsyncadd [#allocation3], 0
          %s152 = smul.addr %s149, 4
          %s153 = scalar_lea.hbm %s1, %s152
          %s154 = sshll.u32 %s153, 4
          %s155 = int_to_ptr.hbm [resolvable:$true] %s154
          %s156 = sshll.u32 [#allocation2], 4
          %s157 = int_to_ptr.vmem [resolvable:$true] %s156
          %162 = dma.hbm_to_vmem [thread:$0]  %s155, 4096, %s157, [#allocation3], 128, 128, 8
        $region16: #{_lambda_.21} parent=11 // pred_fallthru
          _
        // Predicated region
        $region17: #{_lambda_.21} parent=11 // pred_check
          %p163 = pneg %p103
        $region18: #{_lambda_.21} parent=11 // pred_check_branch
          %165 = sbr.rel (%p163) target = $region20
        $region19: #{_lambda_.21} parent=11 // pred_region
          %s166 = smul.u32 2, %s23
          %p167 = scmp.lt.s32.totalorder %s166, 1
          %s168 = scalar_select %p167, %s166, 1
          %s169 = scalar_lea.vmem %s2, %s168
          %s170 = smul.u32 2, %s23
        $region20: #{_lambda_.21} parent=11 // pred_fallthru
          _
      $region12: #{_lambda_.21} parent=5 // pred_fallthru
        _
      %p171 = scmp.lt.s32.totalorder %s13, 2
      // Predicated region
      $region21: #{_lambda_.21} parent=5 // pred_check
        %p172 = pneg %p171
      $region22: #{_lambda_.21} parent=5 // pred_check_branch
        %174 = sbr.rel (%p172) target = $region24
      $region23: #{_lambda_.21} parent=5 // pred_region
        // Predicated region
        $region25: #{_lambda_.21} parent=23 // pred_check
          %p175 = pneg %p45
        $region26: #{_lambda_.21} parent=23 // pred_check_branch
          %177 = sbr.rel (%p175) target = $region28
        $region27: #{_lambda_.21} parent=23 // pred_region
          %p178 = scmp.lt.s32.totalorder %s20, 1
          %s179 = scalar_select %p178, %s20, 1
          %s180 = smul.addr %s179, 2
          %s181 = smul.addr %s180, 4
          %s182 = scalar_lea.vmem %s0, %s181
        $region28: #{_lambda_.21} parent=23 // pred_fallthru
          _
      $region24: #{_lambda_.21} parent=5 // pred_fallthru
        _
      %p183 = scmp.le.s32.totalorder 1, %s13
      %p184 = scmp.lt.s32.totalorder %s13, 3
      %p185 = pnand %p183, %p184
      %p186 = pneg %p185
      // Predicated region
      $region29: #{_lambda_.21} parent=5 // pred_check
        _
      $region30: #{_lambda_.21} parent=5 // pred_check_branch
        %188 = sbr.rel (%p185) target = $region32
      $region31: #{_lambda_.21} parent=5 // pred_region
        %s189 = ssub.s32 %s13, 1
        // Predicated region
        $region33: #{_lambda_.21} parent=31 // pred_check
          %p190 = pneg %p77
        $region34: #{_lambda_.21} parent=31 // pred_check_branch
          %192 = sbr.rel (%p190) target = $region36
        $region35: #{_lambda_.21} parent=31 // pred_region
          %194 = dma.done [#allocation3], 4096
        $region36: #{_lambda_.21} parent=31 // pred_fallthru
          _
        %p195 = scmp.lt.s32.totalorder %s22, 1
        %s196 = scalar_select %p195, %s22, 1
        %s197 = smul.addr %s196, 2
        %s198 = smul.addr %s197, 4
        %s199 = scalar_lea.vmem %s0, %s198
        %p200 = pneg %p51
        %p201 = pneg %p48
        %p202 = pneg %p77
        %p203 = pneg %p74
        %s204 = smul.u32 2, %s23
        %p205 = scmp.lt.s32.totalorder %s204, 1
        %s206 = scalar_select %p205, %s204, 1
        %s207 = scalar_lea.vmem %s2, %s206
        %p208 = pneg %p103
        %p209 = pneg %p100
        %p210 = pneg %p131
        %p211 = pneg %p128
        %s212 = sand.u32 %s118, 1
        %s213 = scalar_lea.sflag [#allocation4], %s212
        %s214 = sand.u32 %s118, 1
        %s215 = smul.addr %s214, 16
        %s216 = scalar_lea.vmem [#allocation5], %s215
        %p217 = scmp.lt.s32.totalorder %s22, 1
        %s218 = scalar_select %p217, %s22, 1
        %s219 = smul.addr %s218, 2
        %s220 = smul.addr %s219, 4
        %s221 = scalar_lea.vmem %s0, %s220
        %s222 = smul.u32 2, %s23
        %s223 = smul.u32 2, %s23
        %p224 = scmp.lt.s32.totalorder %s223, 1
        %s225 = scalar_select %p224, %s223, 1
        %s226 = scalar_lea.vmem %s2, %s225
        %s227 = smul.u32 2, %s23
        %s228 = smul.u32 2, %s23
        %v229 = vld [vmem:[%s221] sm:$0xff]
        %v230 = vld [vmem:[#allocation2] sm:$0xff]
        %v231 = vld [vmem:[#allocation2 + $0x8] sm:$0xff]
        %v232 = vld [vmem:[#allocation2 + $0x10] sm:$0xff]
        %v233 = vld [vmem:[#allocation2 + $0x18] sm:$0xff]
        %v234 = vld [vmem:[#allocation2 + $0x20] sm:$0xff]
        %v235 = vld [vmem:[#allocation2 + $0x28] sm:$0xff]
        %v236 = vld [vmem:[#allocation2 + $0x30] sm:$0xff]
        %v237 = vld [vmem:[#allocation2 + $0x38] sm:$0xff]
        %v238 = vld [vmem:[#allocation2 + $0x40] sm:$0xff]
        %v239 = vld [vmem:[#allocation2 + $0x48] sm:$0xff]
        %v240 = vld [vmem:[#allocation2 + $0x50] sm:$0xff]
        %v241 = vld [vmem:[#allocation2 + $0x58] sm:$0xff]
        %v242 = vld [vmem:[#allocation2 + $0x60] sm:$0xff]
        %v243 = vld [vmem:[#allocation2 + $0x68] sm:$0xff]
        %v244 = vld [vmem:[#allocation2 + $0x70] sm:$0xff]
        %v245 = vld [vmem:[#allocation2 + $0x78] sm:$0xff]
        %v246 = vld [vmem:[#allocation2 + $0x80] sm:$0xff]
        %v247 = vld [vmem:[#allocation2 + $0x88] sm:$0xff]
        %v248 = vld [vmem:[#allocation2 + $0x90] sm:$0xff]
        %v249 = vld [vmem:[#allocation2 + $0x98] sm:$0xff]
        %v250 = vld [vmem:[#allocation2 + $0xa0] sm:$0xff]
        %v251 = vld [vmem:[#allocation2 + $0xa8] sm:$0xff]
        %v252 = vld [vmem:[#allocation2 + $0xb0] sm:$0xff]
        %v253 = vld [vmem:[#allocation2 + $0xb8] sm:$0xff]
        %v254 = vld [vmem:[#allocation2 + $0xc0] sm:$0xff]
        %v255 = vld [vmem:[#allocation2 + $0xc8] sm:$0xff]
        %v256 = vld [vmem:[#allocation2 + $0xd0] sm:$0xff]
        %v257 = vld [vmem:[#allocation2 + $0xd8] sm:$0xff]
        %v258 = vld [vmem:[#allocation2 + $0xe0] sm:$0xff]
        %v259 = vld [vmem:[#allocation2 + $0xe8] sm:$0xff]
        %v260 = vld [vmem:[#allocation2 + $0xf0] sm:$0xff]
        %v261 = vld [vmem:[#allocation2 + $0xf8] sm:$0xff]
        %v262 = vld [vmem:[%s226] sm:$0x3]
        %v264 = vperm.slane %v262, 0
        %v265 = vperm.slane %v262, 1
        %v269 = vunpack.c.l.b16 %v229
        %v270 = vunpack.c.h.b16 %v229
        %v271 = vpack.c.b16 %v269, %v269
        %v272 = vpack.c.b16 %v270, %v270
        %v307 = vunpack.c.l.b16 %v230
        %v308 = vunpack.c.h.b16 %v230
        %v309 = vunpack.c.l.b16 %v231
        %v310 = vunpack.c.h.b16 %v231
        %v311 = vunpack.c.l.b16 %v232
        %v312 = vunpack.c.h.b16 %v232
        %v313 = vunpack.c.l.b16 %v233
        %v314 = vunpack.c.h.b16 %v233
        %v315 = vunpack.c.l.b16 %v234
        %v316 = vunpack.c.h.b16 %v234
        %v317 = vunpack.c.l.b16 %v235
        %v318 = vunpack.c.h.b16 %v235
        %v319 = vunpack.c.l.b16 %v236
        %v320 = vunpack.c.h.b16 %v236
        %v321 = vunpack.c.l.b16 %v237
        %v322 = vunpack.c.h.b16 %v237
        %v323 = vunpack.c.l.b16 %v238
        %v324 = vunpack.c.h.b16 %v238
        %v325 = vunpack.c.l.b16 %v239
        %v326 = vunpack.c.h.b16 %v239
        %v327 = vunpack.c.l.b16 %v240
        %v328 = vunpack.c.h.b16 %v240
        %v329 = vunpack.c.l.b16 %v241
        %v330 = vunpack.c.h.b16 %v241
        %v331 = vunpack.c.l.b16 %v242
        %v332 = vunpack.c.h.b16 %v242
        %v333 = vunpack.c.l.b16 %v243
        %v334 = vunpack.c.h.b16 %v243
        %v335 = vunpack.c.l.b16 %v244
        %v336 = vunpack.c.h.b16 %v244
        %v337 = vunpack.c.l.b16 %v245
        %v338 = vunpack.c.h.b16 %v245
        %v339 = vunpack.c.l.b16 %v246
        %v340 = vunpack.c.h.b16 %v246
        %v341 = vunpack.c.l.b16 %v247
        %v342 = vunpack.c.h.b16 %v247
        %v343 = vunpack.c.l.b16 %v248
        %v344 = vunpack.c.h.b16 %v248
        %v345 = vunpack.c.l.b16 %v249
        %v346 = vunpack.c.h.b16 %v249
        %v347 = vunpack.c.l.b16 %v250
        %v348 = vunpack.c.h.b16 %v250
        %v349 = vunpack.c.l.b16 %v251
        %v350 = vunpack.c.h.b16 %v251
        %v351 = vunpack.c.l.b16 %v252
        %v352 = vunpack.c.h.b16 %v252
        %v353 = vunpack.c.l.b16 %v253
        %v354 = vunpack.c.h.b16 %v253
        %v355 = vunpack.c.l.b16 %v254
        %v356 = vunpack.c.h.b16 %v254
        %v357 = vunpack.c.l.b16 %v255
        %v358 = vunpack.c.h.b16 %v255
        %v359 = vunpack.c.l.b16 %v256
        %v360 = vunpack.c.h.b16 %v256
        %v361 = vunpack.c.l.b16 %v257
        %v362 = vunpack.c.h.b16 %v257
        %v363 = vunpack.c.l.b16 %v258
        %v364 = vunpack.c.h.b16 %v258
        %v365 = vunpack.c.l.b16 %v259
        %v366 = vunpack.c.h.b16 %v259
        %v367 = vunpack.c.l.b16 %v260
        %v368 = vunpack.c.h.b16 %v260
        %v369 = vunpack.c.l.b16 %v261
        %v370 = vunpack.c.h.b16 %v261
        %v371 = vpack.c.b16 %v309, %v307
        %v372 = vpack.c.b16 %v310, %v308
        %v373 = vpack.c.b16 %v313, %v311
        %v374 = vpack.c.b16 %v314, %v312
        %v375 = vpack.c.b16 %v317, %v315
        %v376 = vpack.c.b16 %v318, %v316
        %v377 = vpack.c.b16 %v321, %v319
        %v378 = vpack.c.b16 %v322, %v320
        %v379 = vpack.c.b16 %v325, %v323
        %v380 = vpack.c.b16 %v326, %v324
        %v381 = vpack.c.b16 %v329, %v327
        %v382 = vpack.c.b16 %v330, %v328
        %v383 = vpack.c.b16 %v333, %v331
        %v384 = vpack.c.b16 %v334, %v332
        %v385 = vpack.c.b16 %v337, %v335
        %v386 = vpack.c.b16 %v338, %v336
        %v387 = vpack.c.b16 %v341, %v339
        %v388 = vpack.c.b16 %v342, %v340
        %v389 = vpack.c.b16 %v345, %v343
        %v390 = vpack.c.b16 %v346, %v344
        %v391 = vpack.c.b16 %v349, %v347
        %v392 = vpack.c.b16 %v350, %v348
        %v393 = vpack.c.b16 %v353, %v351
        %v394 = vpack.c.b16 %v354, %v352
        %v395 = vpack.c.b16 %v357, %v355
        %v396 = vpack.c.b16 %v358, %v356
        %v397 = vpack.c.b16 %v361, %v359
        %v398 = vpack.c.b16 %v362, %v360
        %v399 = vpack.c.b16 %v365, %v363
        %v400 = vpack.c.b16 %v366, %v364
        %v401 = vpack.c.b16 %v369, %v367
        %v402 = vpack.c.b16 %v370, %v368
        %435 = vmatpush.bf16.msra.mxu0 %v385
        %436 = vmatpush.bf16.msra.mxu0 %v383
        %437 = vmatpush.bf16.msra.mxu0 %v381
        %438 = vmatpush.bf16.msra.mxu0 %v379
        %439 = vmatpush.bf16.msra.mxu0 %v377
        %440 = vmatpush.bf16.msra.mxu0 %v375
        %441 = vmatpush.bf16.msra.mxu0 %v373
        %442 = vmatpush.bf16.msra.mxu0 %v371
        %443 = vmatmul.bf16.gmra.mxu0 %v271
        %v444 = vpop.f32.mrf.mxu0
        %v445 = vadd.f32 %v264, %v444
        %v446 = vpop.f32.mrf.mxu0
        %447 = vdwg.mxu0
        %448 = vmatpush.bf16.msra.mxu0 %v401
        %449 = vmatpush.bf16.msra.mxu0 %v399
        %450 = vmatpush.bf16.msra.mxu0 %v397
        %451 = vmatpush.bf16.msra.mxu0 %v395
        %452 = vmatpush.bf16.msra.mxu0 %v393
        %453 = vmatpush.bf16.msra.mxu0 %v391
        %454 = vmatpush.bf16.msra.mxu0 %v389
        %455 = vmatpush.bf16.msra.mxu0 %v387
        %456 = vmatmul.bf16.gmra.mxu0 %v272
        %v457 = vpop.f32.mrf.mxu0
        %v458 = vadd.f32 %v445, %v457
        %v459 = vpop.f32.mrf.mxu0
        %460 = vdwg.mxu0
        %461 = vmatpush.bf16.msra.mxu0 %v386
        %462 = vmatpush.bf16.msra.mxu0 %v384
        %463 = vmatpush.bf16.msra.mxu0 %v382
        %464 = vmatpush.bf16.msra.mxu0 %v380
        %465 = vmatpush.bf16.msra.mxu0 %v378
        %466 = vmatpush.bf16.msra.mxu0 %v376
        %467 = vmatpush.bf16.msra.mxu0 %v374
        %468 = vmatpush.bf16.msra.mxu0 %v372
        %469 = vmatmul.bf16.gmra.mxu0 %v271
        %v470 = vpop.f32.mrf.mxu0
        %v471 = vadd.f32 %v265, %v470
        %v472 = vpop.f32.mrf.mxu0
        %473 = vdwg.mxu0
        %474 = vmatpush.bf16.msra.mxu0 %v402
        %475 = vmatpush.bf16.msra.mxu0 %v400
        %476 = vmatpush.bf16.msra.mxu0 %v398
        %477 = vmatpush.bf16.msra.mxu0 %v396
        %478 = vmatpush.bf16.msra.mxu0 %v394
        %479 = vmatpush.bf16.msra.mxu0 %v392
        %480 = vmatpush.bf16.msra.mxu0 %v390
        %481 = vmatpush.bf16.msra.mxu0 %v388
        %482 = vmatmul.bf16.gmra.mxu0 %v272
        %v483 = vpop.f32.mrf.mxu0
        %v484 = vadd.f32 %v471, %v483
        %v485 = vpop.f32.mrf.mxu0
        %486 = vdwg.mxu0
        %487 = vst [vmem:[%s216] sm:$0xff] %v458
        %488 = vst [vmem:[%s216 + $0x8] sm:$0xff] %v484
        %s489 = sand.u32 %s118, 1
        %s490 = scalar_lea.sflag [#allocation4], %s489
        %s491 = sand.u32 %s118, 1
        %s492 = smul.addr %s491, 16
        %s493 = scalar_lea.vmem [#allocation5], %s492
        // Predicated region
        $region37: #{_lambda_.21} parent=31 // pred_check
          %p494 = pneg %p128
        $region38: #{_lambda_.21} parent=31 // pred_check_branch
          %496 = sbr.rel (%p494) target = $region40
        $region39: #{_lambda_.21} parent=31 // pred_region
          %s497 = smul.u32 2, %s23
          %499 = vsyncadd %s490, 0
          %s500 = smul.addr %s22, 2
          %s501 = sadd.s32 %s497, %s500
          %s502 = smul.addr %s501, 8
          %s503 = scalar_lea.hbm %s3, %s502
          %s505 = sshll.u32 %s493, 4
          %s506 = int_to_ptr.vmem [resolvable:$true] %s505
          %s507 = sshll.u32 %s503, 4
          %s508 = int_to_ptr.hbm [resolvable:$true] %s507
          %510 = dma.vmem_to_hbm [thread:$0]  %s506, 256, %s508, %s490
        $region40: #{_lambda_.21} parent=31 // pred_fallthru
          _
      $region32: #{_lambda_.21} parent=5 // pred_fallthru
        _
      %p511 = scmp.le.s32.totalorder 2, %s13
      // Predicated region
      $region41: #{_lambda_.21} parent=5 // pred_check
        %p512 = pneg %p511
      $region42: #{_lambda_.21} parent=5 // pred_check_branch
        %514 = sbr.rel (%p512) target = $region44
      $region43: #{_lambda_.21} parent=5 // pred_region
        %s515 = ssub.s32 %s13, 2
        // Predicated region
        $region45: #{_lambda_.21} parent=43 // pred_check
          %p516 = pneg %p134
        $region46: #{_lambda_.21} parent=43 // pred_check_branch
          %518 = sbr.rel (%p516) target = $region48
        $region47: #{_lambda_.21} parent=43 // pred_region
          %s519 = sand.u32 %s119, 1
          %s520 = scalar_lea.sflag [#allocation4], %s519
          %s521 = sand.u32 %s119, 1
          %s522 = smul.addr %s521, 16
          %s523 = scalar_lea.vmem [#allocation5], %s522
          %525 = dma.done %s520, 256
        $region48: #{_lambda_.21} parent=43 // pred_fallthru
          _
      $region44: #{_lambda_.21} parent=5 // pred_fallthru
        _
    $region6: #{_lambda_.21} parent=1 // loop_footer
      %s17 = sadd.s32 1, %s13
    $region7: #{_lambda_.21} parent=1 // loop_footer_branch
      %12 = sbr.rel target = $region3
    $region8: #{_lambda_.21} parent=1 // loop_exit
      _
    %526 = vsyncpa [#allocation3], 1
    %s527 = scalar_lea.sflag [#allocation3], 1
    %528 = vsyncpa %s527, 1
    %529 = vsyncpa [#allocation4], 1
    %s530 = scalar_lea.sflag [#allocation4], 1
    %531 = vsyncpa %s530, 1

// kernel: _lambda_.18
$region0: #{_lambda_.18}
  #allocation0 [shape = 'u32[]', space=smem, size = 0x4, offset = 0x4, fixed_abs, tag = 'smem constant byte address 0x4 - core index']
  #allocation1 [shape = 'u32[72,128]{1,0:T(1,128)}', space=vmem, size = 0x9000, scoped, tag = 'internal scratch']
  %s0 = inlined_call_operand.vmem [shape: bf16[2,8,256], index: 0, kind: input, shape index: {}]
  %s1 = inlined_call_operand.vmem [shape: f32[2,1,8], index: 1, kind: input, shape index: {}]
  %s2 = inlined_call_operand.vmem [shape: f32[1,256], index: 2, kind: input, shape index: {}]
  %s3 = inlined_call_operand.vmem [shape: f32[1,256], index: 3, kind: input, shape index: {}]
  %s4 = inlined_call_operand.hbm [shape: bf16[256,768], index: 4, kind: input, shape index: {}]
  %s5 = inlined_call_operand.vmem [shape: f32[1,768], index: 5, kind: input, shape index: {}]
  %s6 = inlined_call_operand.hbm [shape: bf16[256,256], index: 6, kind: input, shape index: {}]
  %s7 = inlined_call_operand.vmem [shape: f32[1,256], index: 7, kind: input, shape index: {}]
  %s8 = inlined_call_operand.vmem [shape: bf16[2,8,256], index: 8, kind: output, shape index: {}]
  %s9 = sld [smem:[#allocation0]]
  $region73: #{_lambda_.18} parent=0
    _
  %s11 = ssub.s32 1, %s9
  %s12 = scalar_select 0, %s11, %s9
  $region1: #{_lambda_.18} parent=0
    #allocation2 [shape = 'u8[393216]{0}', space=vmem, size = 0x60000, scoped, tag = 'input window, operand 4, single buffered']
    #allocation3 [shape = 's32[2]{0}', space=sflag, size = 0x8, scoped, tag = 'scoped memory for _lambda_.18']
    #allocation4 [shape = 'u8[131072]{0}', space=vmem, size = 0x20000, scoped, tag = 'input window, operand 6, single buffered']
    #allocation5 [shape = 's32[1]{0}', space=sflag, size = 0x4, scoped, tag = 'scoped memory for _lambda_.18']
    %13 = vsyncpa [#allocation3], 0
    %14 = vsyncpa [#allocation5], 0
    loop: start=0, step=1, limit=4
    $region2: #{_lambda_.18} parent=1 // loop_pre_header
      _
    $region3: #{_lambda_.18} parent=1 // loop_header
      %s16 = sphi 0, %s20
      %p17 = scmp.ge.s32.totalorder %s16, 4
      %s26 = sphi 0, %s28
      %s29 = sphi 0, %s26
      %s30 = sphi 0, %s29
      %s46 = sphi 0, %s30
      %s52 = sphi 0, %s54
      %s55 = sphi 0, %s52
      %s56 = sphi 0, %s55
      %s72 = sphi 0, %s56
      %s76 = sphi 0, %s76
      %s78 = sphi 0, %s76
      %s79 = sphi 0, %s78
      %s93 = sphi 0, %s79
      %s97 = sphi 0, %s97
      %s99 = sphi 0, %s97
      %s100 = sphi 0, %s99
      %s114 = sphi 0, %s100
      %s118 = sphi 0, %s118
      %s120 = sphi 0, %s118
      %s121 = sphi 0, %s120
      %s135 = sphi 0, %s121
      %s139 = sphi 0, %s139
      %s141 = sphi 0, %s139
      %s142 = sphi 0, %s141
      %s156 = sphi 0, %s142
      %s160 = sphi 0, %s160
      %s162 = sphi 0, %s160
      %s163 = sphi 0, %s162
      %s177 = sphi 0, %s163
      %s181 = sphi 0, %s181
      %s183 = sphi 0, %s181
      %s184 = sphi 0, %s183
      %s198 = sphi 0, %s184
      %s204 = sphi 0, %s206
      %s207 = sphi 0, %s204
      %s208 = sphi 0, %s207
      %s224 = sphi 0, %s208
    $region4: #{_lambda_.18} parent=1 // loop_header_branch
      %19 = sbr.rel (%p17) target = $region8
    $region5: #{_lambda_.18} parent=1 // loop_body
      %s21 = ssub.s32 %s16, 1
      %s22 = ssub.s32 %s16, 2
      %s23 = sadd.s32 %s16, 1
      %s24 = ssub.s32 %s16, %s23
      %p25 = scmp.eq.s32.totalorder %s24, 0
      %s27 = sadd.s32 %s26, 1
      %s28 = scalar_select %p25, %s26, %s27
      %p31 = pneg %p25
      %p32 = scmp.eq.s32.totalorder %s16, 1
      %p33 = por %p31, %p32
      %p34 = scmp.ne.s32.totalorder %s26, %s29
      %p35 = scmp.eq.s32.totalorder %s16, 0
      %p36 = por %p34, %p35
      %p37 = scmp.ne.s32.totalorder %s26, %s29
      %p38 = scmp.eq.s32.totalorder %s21, 1
      %p39 = por %p37, %p38
      %p40 = scmp.ne.s32.totalorder %s29, %s30
      %p41 = scmp.eq.s32.totalorder %s21, 0
      %p42 = por %p40, %p41
      %p43 = scmp.ne.s32.totalorder %s29, %s30
      %p44 = scmp.eq.s32.totalorder %s22, 1
      %p45 = por %p43, %p44
      %p47 = scmp.ne.s32.totalorder %s30, %s46
      %p48 = scmp.eq.s32.totalorder %s22, 0
      %p49 = por %p47, %p48
      %s50 = ssub.s32 %s16, %s23
      %p51 = scmp.eq.s32.totalorder %s50, 0
      %s53 = sadd.s32 %s52, 1
      %s54 = scalar_select %p51, %s52, %s53
      %p57 = pneg %p51
      %p58 = scmp.eq.s32.totalorder %s16, 1
      %p59 = por %p57, %p58
      %p60 = scmp.ne.s32.totalorder %s52, %s55
      %p61 = scmp.eq.s32.totalorder %s16, 0
      %p62 = por %p60, %p61
      %p63 = scmp.ne.s32.totalorder %s52, %s55
      %p64 = scmp.eq.s32.totalorder %s21, 1
      %p65 = por %p63, %p64
      %p66 = scmp.ne.s32.totalorder %s55, %s56
      %p67 = scmp.eq.s32.totalorder %s21, 0
      %p68 = por %p66, %p67
      %p69 = scmp.ne.s32.totalorder %s55, %s56
      %p70 = scmp.eq.s32.totalorder %s22, 1
      %p71 = por %p69, %p70
      %p73 = scmp.ne.s32.totalorder %s56, %s72
      %p74 = scmp.eq.s32.totalorder %s22, 0
      %p75 = por %p73, %p74
      %s77 = sadd.s32 %s76, 1
      %p80 = scmp.eq.s32.totalorder %s16, 1
      %p81 = scmp.ne.s32.totalorder %s76, %s78
      %p82 = scmp.eq.s32.totalorder %s16, 0
      %p83 = por %p81, %p82
      %p84 = scmp.ne.s32.totalorder %s76, %s78
      %p85 = scmp.eq.s32.totalorder %s21, 1
      %p86 = por %p84, %p85
      %p87 = scmp.ne.s32.totalorder %s78, %s79
      %p88 = scmp.eq.s32.totalorder %s21, 0
      %p89 = por %p87, %p88
      %p90 = scmp.ne.s32.totalorder %s78, %s79
      %p91 = scmp.eq.s32.totalorder %s22, 1
      %p92 = por %p90, %p91
      %p94 = scmp.ne.s32.totalorder %s79, %s93
      %p95 = scmp.eq.s32.totalorder %s22, 0
      %p96 = por %p94, %p95
      %s98 = sadd.s32 %s97, 1
      %p101 = scmp.eq.s32.totalorder %s16, 1
      %p102 = scmp.ne.s32.totalorder %s97, %s99
      %p103 = scmp.eq.s32.totalorder %s16, 0
      %p104 = por %p102, %p103
      %p105 = scmp.ne.s32.totalorder %s97, %s99
      %p106 = scmp.eq.s32.totalorder %s21, 1
      %p107 = por %p105, %p106
      %p108 = scmp.ne.s32.totalorder %s99, %s100
      %p109 = scmp.eq.s32.totalorder %s21, 0
      %p110 = por %p108, %p109
      %p111 = scmp.ne.s32.totalorder %s99, %s100
      %p112 = scmp.eq.s32.totalorder %s22, 1
      %p113 = por %p111, %p112
      %p115 = scmp.ne.s32.totalorder %s100, %s114
      %p116 = scmp.eq.s32.totalorder %s22, 0
      %p117 = por %p115, %p116
      %s119 = sadd.s32 %s118, 1
      %p122 = scmp.eq.s32.totalorder %s16, 1
      %p123 = scmp.ne.s32.totalorder %s118, %s120
      %p124 = scmp.eq.s32.totalorder %s16, 0
      %p125 = por %p123, %p124
      %p126 = scmp.ne.s32.totalorder %s118, %s120
      %p127 = scmp.eq.s32.totalorder %s21, 1
      %p128 = por %p126, %p127
      %p129 = scmp.ne.s32.totalorder %s120, %s121
      %p130 = scmp.eq.s32.totalorder %s21, 0
      %p131 = por %p129, %p130
      %p132 = scmp.ne.s32.totalorder %s120, %s121
      %p133 = scmp.eq.s32.totalorder %s22, 1
      %p134 = por %p132, %p133
      %p136 = scmp.ne.s32.totalorder %s121, %s135
      %p137 = scmp.eq.s32.totalorder %s22, 0
      %p138 = por %p136, %p137
      %s140 = sadd.s32 %s139, 1
      %p143 = scmp.eq.s32.totalorder %s16, 1
      %p144 = scmp.ne.s32.totalorder %s139, %s141
      %p145 = scmp.eq.s32.totalorder %s16, 0
      %p146 = por %p144, %p145
      %p147 = scmp.ne.s32.totalorder %s139, %s141
      %p148 = scmp.eq.s32.totalorder %s21, 1
      %p149 = por %p147, %p148
      %p150 = scmp.ne.s32.totalorder %s141, %s142
      %p151 = scmp.eq.s32.totalorder %s21, 0
      %p152 = por %p150, %p151
      %p153 = scmp.ne.s32.totalorder %s141, %s142
      %p154 = scmp.eq.s32.totalorder %s22, 1
      %p155 = por %p153, %p154
      %p157 = scmp.ne.s32.totalorder %s142, %s156
      %p158 = scmp.eq.s32.totalorder %s22, 0
      %p159 = por %p157, %p158
      %s161 = sadd.s32 %s160, 1
      %p164 = scmp.eq.s32.totalorder %s16, 1
      %p165 = scmp.ne.s32.totalorder %s160, %s162
      %p166 = scmp.eq.s32.totalorder %s16, 0
      %p167 = por %p165, %p166
      %p168 = scmp.ne.s32.totalorder %s160, %s162
      %p169 = scmp.eq.s32.totalorder %s21, 1
      %p170 = por %p168, %p169
      %p171 = scmp.ne.s32.totalorder %s162, %s163
      %p172 = scmp.eq.s32.totalorder %s21, 0
      %p173 = por %p171, %p172
      %p174 = scmp.ne.s32.totalorder %s162, %s163
      %p175 = scmp.eq.s32.totalorder %s22, 1
      %p176 = por %p174, %p175
      %p178 = scmp.ne.s32.totalorder %s163, %s177
      %p179 = scmp.eq.s32.totalorder %s22, 0
      %p180 = por %p178, %p179
      %s182 = sadd.s32 %s181, 1
      %p185 = scmp.eq.s32.totalorder %s16, 1
      %p186 = scmp.ne.s32.totalorder %s181, %s183
      %p187 = scmp.eq.s32.totalorder %s16, 0
      %p188 = por %p186, %p187
      %p189 = scmp.ne.s32.totalorder %s181, %s183
      %p190 = scmp.eq.s32.totalorder %s21, 1
      %p191 = por %p189, %p190
      %p192 = scmp.ne.s32.totalorder %s183, %s184
      %p193 = scmp.eq.s32.totalorder %s21, 0
      %p194 = por %p192, %p193
      %p195 = scmp.ne.s32.totalorder %s183, %s184
      %p196 = scmp.eq.s32.totalorder %s22, 1
      %p197 = por %p195, %p196
      %p199 = scmp.ne.s32.totalorder %s184, %s198
      %p200 = scmp.eq.s32.totalorder %s22, 0
      %p201 = por %p199, %p200
      %s202 = ssub.s32 %s16, %s23
      %p203 = scmp.eq.s32.totalorder %s202, 0
      %s205 = sadd.s32 %s204, 1
      %s206 = scalar_select %p203, %s204, %s205
      %p209 = pneg %p203
      %p210 = scmp.eq.s32.totalorder %s16, 1
      %p211 = por %p209, %p210
      %p212 = scmp.ne.s32.totalorder %s204, %s207
      %p213 = scmp.eq.s32.totalorder %s16, 0
      %p214 = por %p212, %p213
      %p215 = scmp.ne.s32.totalorder %s204, %s207
      %p216 = scmp.eq.s32.totalorder %s21, 1
      %p217 = por %p215, %p216
      %p218 = scmp.ne.s32.totalorder %s207, %s208
      %p219 = scmp.eq.s32.totalorder %s21, 0
      %p220 = por %p218, %p219
      %p221 = scmp.ne.s32.totalorder %s207, %s208
      %p222 = scmp.eq.s32.totalorder %s22, 1
      %p223 = por %p221, %p222
      %p225 = scmp.ne.s32.totalorder %s208, %s224
      %p226 = scmp.eq.s32.totalorder %s22, 0
      %p227 = por %p225, %p226
      %p228 = scmp.le.s32.totalorder 1, %s16
      %p229 = scmp.lt.s32.totalorder %s16, 3
      %p230 = pnand %p228, %p229
      %p231 = pneg %p230
      // Predicated region
      $region9: #{_lambda_.18} parent=5 // pred_check
        _
      $region10: #{_lambda_.18} parent=5 // pred_check_branch
        %233 = sbr.rel (%p230) target = $region12
      $region11: #{_lambda_.18} parent=5 // pred_region
        %s234 = ssub.s32 %s16, 1
        // Predicated region
        $region13: #{_lambda_.18} parent=11 // pred_check
          %p235 = pneg %p89
        $region14: #{_lambda_.18} parent=11 // pred_check_branch
          %237 = sbr.rel (%p235) target = $region16
        $region15: #{_lambda_.18} parent=11 // pred_region
          _
        $region16: #{_lambda_.18} parent=11 // pred_fallthru
          _
        // Predicated region
        $region17: #{_lambda_.18} parent=11 // pred_check
          %p238 = pneg %p110
        $region18: #{_lambda_.18} parent=11 // pred_check_branch
          %240 = sbr.rel (%p238) target = $region20
        $region19: #{_lambda_.18} parent=11 // pred_region
          _
        $region20: #{_lambda_.18} parent=11 // pred_fallthru
          _
        // Predicated region
        $region21: #{_lambda_.18} parent=11 // pred_check
          %p241 = pneg %p131
        $region22: #{_lambda_.18} parent=11 // pred_check_branch
          %243 = sbr.rel (%p241) target = $region24
        $region23: #{_lambda_.18} parent=11 // pred_region
          %245 = vsyncadd [#allocation3], 0
          %s246 = sshll.u32 %s4, 4
          %s247 = int_to_ptr.hbm [resolvable:$true] %s246
          %s248 = sshll.u32 [#allocation2], 4
          %s249 = int_to_ptr.vmem [resolvable:$true] %s248
          %254 = dma.hbm_to_vmem [thread:$0]  %s247, 12288, %s249, [#allocation3], 384, 384, 24
        $region24: #{_lambda_.18} parent=11 // pred_fallthru
          _
        // Predicated region
        $region25: #{_lambda_.18} parent=11 // pred_check
          %p255 = pneg %p152
        $region26: #{_lambda_.18} parent=11 // pred_check_branch
          %257 = sbr.rel (%p255) target = $region28
        $region27: #{_lambda_.18} parent=11 // pred_region
          _
        $region28: #{_lambda_.18} parent=11 // pred_fallthru
          _
        // Predicated region
        $region29: #{_lambda_.18} parent=11 // pred_check
          %p258 = pneg %p173
        $region30: #{_lambda_.18} parent=11 // pred_check_branch
          %260 = sbr.rel (%p258) target = $region32
        $region31: #{_lambda_.18} parent=11 // pred_region
          %262 = vsyncadd [#allocation5], 0
          %s263 = sshll.u32 %s6, 4
          %s264 = int_to_ptr.hbm [resolvable:$true] %s263
          %s265 = sshll.u32 [#allocation4], 4
          %s266 = int_to_ptr.vmem [resolvable:$true] %s265
          %271 = dma.hbm_to_vmem [thread:$0]  %s264, 4096, %s266, [#allocation5], 128, 128, 8
        $region32: #{_lambda_.18} parent=11 // pred_fallthru
          _
        // Predicated region
        $region33: #{_lambda_.18} parent=11 // pred_check
          %p272 = pneg %p194
        $region34: #{_lambda_.18} parent=11 // pred_check_branch
          %274 = sbr.rel (%p272) target = $region36
        $region35: #{_lambda_.18} parent=11 // pred_region
          _
        $region36: #{_lambda_.18} parent=11 // pred_fallthru
          _
      $region12: #{_lambda_.18} parent=5 // pred_fallthru
        _
      %p275 = scmp.lt.s32.totalorder %s16, 2
      // Predicated region
      $region37: #{_lambda_.18} parent=5 // pred_check
        %p276 = pneg %p275
      $region38: #{_lambda_.18} parent=5 // pred_check_branch
        %278 = sbr.rel (%p276) target = $region40
      $region39: #{_lambda_.18} parent=5 // pred_region
        // Predicated region
        $region41: #{_lambda_.18} parent=39 // pred_check
          %p279 = pneg %p36
        $region42: #{_lambda_.18} parent=39 // pred_check_branch
          %281 = sbr.rel (%p279) target = $region44
        $region43: #{_lambda_.18} parent=39 // pred_region
          %p282 = scmp.lt.s32.totalorder %s16, 1
          %s283 = scalar_select %p282, %s16, 1
          %s284 = smul.addr %s283, 2
          %s285 = smul.addr %s284, 4
          %s286 = scalar_lea.vmem %s0, %s285
        $region44: #{_lambda_.18} parent=39 // pred_fallthru
          _
        // Predicated region
        $region45: #{_lambda_.18} parent=39 // pred_check
          %p287 = pneg %p62
        $region46: #{_lambda_.18} parent=39 // pred_check_branch
          %289 = sbr.rel (%p287) target = $region48
        $region47: #{_lambda_.18} parent=39 // pred_region
          %p290 = scmp.lt.s32.totalorder %s16, 1
          %s291 = scalar_select %p290, %s16, 1
          %s292 = scalar_lea.vmem %s1, %s291
        $region48: #{_lambda_.18} parent=39 // pred_fallthru
          _
      $region40: #{_lambda_.18} parent=5 // pred_fallthru
        _
      %p293 = scmp.le.s32.totalorder 1, %s16
      %p294 = scmp.lt.s32.totalorder %s16, 3
      %p295 = pnand %p293, %p294
      %p296 = pneg %p295
      // Predicated region
      $region49: #{_lambda_.18} parent=5 // pred_check
        _
      $region50: #{_lambda_.18} parent=5 // pred_check_branch
        %298 = sbr.rel (%p295) target = $region52
      $region51: #{_lambda_.18} parent=5 // pred_region
        %s299 = ssub.s32 %s16, 1
        // Predicated region
        $region53: #{_lambda_.18} parent=51 // pred_check
          %p300 = pneg %p131
        $region54: #{_lambda_.18} parent=51 // pred_check_branch
          %302 = sbr.rel (%p300) target = $region56
        $region55: #{_lambda_.18} parent=51 // pred_region
          %304 = dma.done [#allocation3], 12288
        $region56: #{_lambda_.18} parent=51 // pred_fallthru
          _
        // Predicated region
        $region57: #{_lambda_.18} parent=51 // pred_check
          %p305 = pneg %p173
        $region58: #{_lambda_.18} parent=51 // pred_check_branch
          %307 = sbr.rel (%p305) target = $region60
        $region59: #{_lambda_.18} parent=51 // pred_region
          %309 = dma.done [#allocation5], 4096
        $region60: #{_lambda_.18} parent=51 // pred_fallthru
          _
        %p310 = scmp.lt.s32.totalorder %s21, 1
        %s311 = scalar_select %p310, %s21, 1
        %s312 = smul.addr %s311, 2
        %s313 = smul.addr %s312, 4
        %s314 = scalar_lea.vmem %s0, %s313
        %p315 = pneg %p42
        %p316 = pneg %p39
        %p317 = scmp.lt.s32.totalorder %s21, 1
        %s318 = scalar_select %p317, %s21, 1
        %s319 = scalar_lea.vmem %s1, %s318
        %p320 = pneg %p68
        %p321 = pneg %p65
        %p322 = pneg %p89
        %p323 = pneg %p86
        %p324 = pneg %p110
        %p325 = pneg %p107
        %p326 = pneg %p131
        %p327 = pneg %p128
        %p328 = pneg %p152
        %p329 = pneg %p149
        %p330 = pneg %p173
        %p331 = pneg %p170
        %p332 = pneg %p194
        %p333 = pneg %p191
        %p334 = pneg %p220
        %p335 = pneg %p217
        %p336 = scmp.lt.s32.totalorder %s21, 1
        %s337 = scalar_select %p336, %s21, 1
        %s338 = smul.addr %s337, 2
        %s339 = smul.addr %s338, 4
        %s340 = scalar_lea.vmem %s8, %s339
        %p341 = scmp.lt.s32.totalorder %s21, 1
        %s342 = scalar_select %p341, %s21, 1
        %s343 = smul.addr %s342, 2
        %s344 = smul.addr %s343, 4
        %s345 = scalar_lea.vmem %s0, %s344
        %p346 = scmp.lt.s32.totalorder %s21, 1
        %s347 = scalar_select %p346, %s21, 1
        %s348 = scalar_lea.vmem %s1, %s347
        %p349 = scmp.lt.s32.totalorder %s21, 1
        %s350 = scalar_select %p349, %s21, 1
        %s351 = smul.addr %s350, 2
        %s352 = smul.addr %s351, 4
        %s353 = scalar_lea.vmem %s8, %s352
        %v355 = vld [vmem:[%s345] sm:$0xff]
        %v356 = vunpack.c.l.bf16 %v355
        %v357 = vunpack.c.h.bf16 %v355
        %v358 = vld [vmem:[%s2] sm:$0x3]
        %v359 = vld [vmem:[%s3] sm:$0x3]
        %v360 = vadd.f32 %v356, %v357
        %361 = vadd.xlane.f32.xlu0 %v360
        %v362 = vpop.xlane.xlu0 %361
        %v363 = vrcp.pop 256.0
        %v364 = vmul.f32 256.0, %v363
        %v365 = vsub.f32 1.0, %v364
        %v366 = vmul.f32 %v363, %v365
        %v367 = vadd.f32 %v363, %v366
        %vm368 = vweird.f32 %v363
        %v369 = vsel %vm368, %v363, %v367
        %v370 = vmul.f32 %v362, %v369
        %v371 = vsub.f32 %v356, %v370
        %v372 = vsub.f32 %v357, %v370
        %v373 = vmul.f32 %v371, %v371
        %v374 = vmul.f32 %v372, %v372
        %v375 = vadd.f32 %v373, %v374
        %376 = vadd.xlane.f32.xlu0 %v375
        %v377 = vpop.xlane.xlu0 %376
        %v378 = vmul.f32 %v377, %v369
        %v379 = vadd.f32 %v378, 1e-05
        %v380 = vrsqrt.pop %v379
        %v381 = vmul.f32 %v380, %v379
        %v382 = vmul.f32 %v381, %v380
        %v383 = vmul.f32 0.5, %v382
        %v384 = vsub.f32 1.5, %v383
        %v385 = vmul.f32 %v380, %v384
        %vm386 = vweird.f32 %v379
        %vm387 = vweird.f32 %v380
        %vm388 = vmor %vm386, %vm387
        %v389 = vsel %vm388, %v380, %v385
        %v390 = vmul.f32 %v371, %v389
        %v391 = vmul.f32 %v372, %v389
        %v393 = vperm.slane %v358, 0
        %v394 = vperm.slane %v358, 1
        %v397 = vmul.f32 %v390, %v393
        %v398 = vmul.f32 %v391, %v394
        %v400 = vperm.slane %v359, 0
        %v401 = vperm.slane %v359, 1
        %v404 = vadd.f32 %v397, %v400
        %v405 = vadd.f32 %v398, %v401
        %v406 = vpack.c.bf16 %v404, %v404
        %v407 = vpack.c.bf16 %v405, %v405
        %v408 = vld [vmem:[#allocation2] sm:$0xff]
        %v409 = vld [vmem:[#allocation2 + $0x8] sm:$0xff]
        %v410 = vld [vmem:[#allocation2 + $0x10] sm:$0xff]
        %v411 = vld [vmem:[#allocation2 + $0x18] sm:$0xff]
        %v412 = vld [vmem:[#allocation2 + $0x20] sm:$0xff]
        %v413 = vld [vmem:[#allocation2 + $0x28] sm:$0xff]
        %v414 = vld [vmem:[#allocation2 + $0x30] sm:$0xff]
        %v415 = vld [vmem:[#allocation2 + $0x38] sm:$0xff]
        %v416 = vld [vmem:[#allocation2 + $0x40] sm:$0xff]
        %v417 = vld [vmem:[#allocation2 + $0x48] sm:$0xff]
        %v418 = vld [vmem:[#allocation2 + $0x50] sm:$0xff]
        %v419 = vld [vmem:[#allocation2 + $0x58] sm:$0xff]
        %v420 = vld [vmem:[#allocation2 + $0x60] sm:$0xff]
        %v421 = vld [vmem:[#allocation2 + $0x68] sm:$0xff]
        %v422 = vld [vmem:[#allocation2 + $0x70] sm:$0xff]
        %v423 = vld [vmem:[#allocation2 + $0x78] sm:$0xff]
        %v424 = vld [vmem:[#allocation2 + $0x80] sm:$0xff]
        %v425 = vld [vmem:[#allocation2 + $0x88] sm:$0xff]
        %v426 = vld [vmem:[#allocation2 + $0x90] sm:$0xff]
        %v427 = vld [vmem:[#allocation2 + $0x98] sm:$0xff]
        %v428 = vld [vmem:[#allocation2 + $0xa0] sm:$0xff]
        %v429 = vld [vmem:[#allocation2 + $0xa8] sm:$0xff]
        %v430 = vld [vmem:[#allocation2 + $0xb0] sm:$0xff]
        %v431 = vld [vmem:[#allocation2 + $0xb8] sm:$0xff]
        %v432 = vld [vmem:[#allocation2 + $0xc0] sm:$0xff]
        %v433 = vld [vmem:[#allocation2 + $0xc8] sm:$0xff]
        %v434 = vld [vmem:[#allocation2 + $0xd0] sm:$0xff]
        %v435 = vld [vmem:[#allocation2 + $0xd8] sm:$0xff]
        %v436 = vld [vmem:[#allocation2 + $0xe0] sm:$0xff]
        %v437 = vld [vmem:[#allocation2 + $0xe8] sm:$0xff]
        %v438 = vld [vmem:[#allocation2 + $0xf0] sm:$0xff]
        %v439 = vld [vmem:[#allocation2 + $0xf8] sm:$0xff]
        %v440 = vld [vmem:[#allocation2 + $0x100] sm:$0xff]
        %v441 = vld [vmem:[#allocation2 + $0x108] sm:$0xff]
        %v442 = vld [vmem:[#allocation2 + $0x110] sm:$0xff]
        %v443 = vld [vmem:[#allocation2 + $0x118] sm:$0xff]
        %v444 = vld [vmem:[#allocation2 + $0x120] sm:$0xff]
        %v445 = vld [vmem:[#allocation2 + $0x128] sm:$0xff]
        %v446 = vld [vmem:[#allocation2 + $0x130] sm:$0xff]
        %v447 = vld [vmem:[#allocation2 + $0x138] sm:$0xff]
        %v448 = vld [vmem:[#allocation2 + $0x140] sm:$0xff]
        %v449 = vld [vmem:[#allocation2 + $0x148] sm:$0xff]
        %v450 = vld [vmem:[#allocation2 + $0x150] sm:$0xff]
        %v451 = vld [vmem:[#allocation2 + $0x158] sm:$0xff]
        %v452 = vld [vmem:[#allocation2 + $0x160] sm:$0xff]
        %v453 = vld [vmem:[#allocation2 + $0x168] sm:$0xff]
        %v454 = vld [vmem:[#allocation2 + $0x170] sm:$0xff]
        %v455 = vld [vmem:[#allocation2 + $0x178] sm:$0xff]
        %v456 = vld [vmem:[#allocation2 + $0x180] sm:$0xff]
        %v457 = vld [vmem:[#allocation2 + $0x188] sm:$0xff]
        %v458 = vld [vmem:[#allocation2 + $0x190] sm:$0xff]
        %v459 = vld [vmem:[#allocation2 + $0x198] sm:$0xff]
        %v460 = vld [vmem:[#allocation2 + $0x1a0] sm:$0xff]
        %v461 = vld [vmem:[#allocation2 + $0x1a8] sm:$0xff]
        %v462 = vld [vmem:[#allocation2 + $0x1b0] sm:$0xff]
        %v463 = vld [vmem:[#allocation2 + $0x1b8] sm:$0xff]
        %v464 = vld [vmem:[#allocation2 + $0x1c0] sm:$0xff]
        %v465 = vld [vmem:[#allocation2 + $0x1c8] sm:$0xff]
        %v466 = vld [vmem:[#allocation2 + $0x1d0] sm:$0xff]
        %v467 = vld [vmem:[#allocation2 + $0x1d8] sm:$0xff]
        %v468 = vld [vmem:[#allocation2 + $0x1e0] sm:$0xff]
        %v469 = vld [vmem:[#allocation2 + $0x1e8] sm:$0xff]
        %v470 = vld [vmem:[#allocation2 + $0x1f0] sm:$0xff]
        %v471 = vld [vmem:[#allocation2 + $0x1f8] sm:$0xff]
        %v472 = vld [vmem:[#allocation2 + $0x200] sm:$0xff]
        %v473 = vld [vmem:[#allocation2 + $0x208] sm:$0xff]
        %v474 = vld [vmem:[#allocation2 + $0x210] sm:$0xff]
        %v475 = vld [vmem:[#allocation2 + $0x218] sm:$0xff]
        %v476 = vld [vmem:[#allocation2 + $0x220] sm:$0xff]
        %v477 = vld [vmem:[#allocation2 + $0x228] sm:$0xff]
        %v478 = vld [vmem:[#allocation2 + $0x230] sm:$0xff]
        %v479 = vld [vmem:[#allocation2 + $0x238] sm:$0xff]
        %v480 = vld [vmem:[#allocation2 + $0x240] sm:$0xff]
        %v481 = vld [vmem:[#allocation2 + $0x248] sm:$0xff]
        %v482 = vld [vmem:[#allocation2 + $0x250] sm:$0xff]
        %v483 = vld [vmem:[#allocation2 + $0x258] sm:$0xff]
        %v484 = vld [vmem:[#allocation2 + $0x260] sm:$0xff]
        %v485 = vld [vmem:[#allocation2 + $0x268] sm:$0xff]
        %v486 = vld [vmem:[#allocation2 + $0x270] sm:$0xff]
        %v487 = vld [vmem:[#allocation2 + $0x278] sm:$0xff]
        %v488 = vld [vmem:[#allocation2 + $0x280] sm:$0xff]
        %v489 = vld [vmem:[#allocation2 + $0x288] sm:$0xff]
        %v490 = vld [vmem:[#allocation2 + $0x290] sm:$0xff]
        %v491 = vld [vmem:[#allocation2 + $0x298] sm:$0xff]
        %v492 = vld [vmem:[#allocation2 + $0x2a0] sm:$0xff]
        %v493 = vld [vmem:[#allocation2 + $0x2a8] sm:$0xff]
        %v494 = vld [vmem:[#allocation2 + $0x2b0] sm:$0xff]
        %v495 = vld [vmem:[#allocation2 + $0x2b8] sm:$0xff]
        %v496 = vld [vmem:[#allocation2 + $0x2c0] sm:$0xff]
        %v497 = vld [vmem:[#allocation2 + $0x2c8] sm:$0xff]
        %v498 = vld [vmem:[#allocation2 + $0x2d0] sm:$0xff]
        %v499 = vld [vmem:[#allocation2 + $0x2d8] sm:$0xff]
        %v500 = vld [vmem:[#allocation2 + $0x2e0] sm:$0xff]
        %v501 = vld [vmem:[#allocation2 + $0x2e8] sm:$0xff]
        %v502 = vld [vmem:[#allocation2 + $0x2f0] sm:$0xff]
        %v503 = vld [vmem:[#allocation2 + $0x2f8] sm:$0xff]
        %v504 = vld [vmem:[%s5] sm:$0x3f]
        %v506 = vperm.slane %v504, 0
        %v507 = vperm.slane %v504, 1
        %v508 = vperm.slane %v504, 2
        %v509 = vperm.slane %v504, 3
        %v510 = vperm.slane %v504, 4
        %v511 = vperm.slane %v504, 5
        %v614 = vunpack.c.l.b16 %v408
        %v615 = vunpack.c.h.b16 %v408
        %v616 = vunpack.c.l.b16 %v409
        %v617 = vunpack.c.h.b16 %v409
        %v618 = vunpack.c.l.b16 %v410
        %v619 = vunpack.c.h.b16 %v410
        %v620 = vunpack.c.l.b16 %v411
        %v621 = vunpack.c.h.b16 %v411
        %v622 = vunpack.c.l.b16 %v412
        %v623 = vunpack.c.h.b16 %v412
        %v624 = vunpack.c.l.b16 %v413
        %v625 = vunpack.c.h.b16 %v413
        %v626 = vunpack.c.l.b16 %v414
        %v627 = vunpack.c.h.b16 %v414
        %v628 = vunpack.c.l.b16 %v415
        %v629 = vunpack.c.h.b16 %v415
        %v630 = vunpack.c.l.b16 %v416
        %v631 = vunpack.c.h.b16 %v416
        %v632 = vunpack.c.l.b16 %v417
        %v633 = vunpack.c.h.b16 %v417
        %v634 = vunpack.c.l.b16 %v418
        %v635 = vunpack.c.h.b16 %v418
        %v636 = vunpack.c.l.b16 %v419
        %v637 = vunpack.c.h.b16 %v419
        %v638 = vunpack.c.l.b16 %v420
        %v639 = vunpack.c.h.b16 %v420
        %v640 = vunpack.c.l.b16 %v421
        %v641 = vunpack.c.h.b16 %v421
        %v642 = vunpack.c.l.b16 %v422
        %v643 = vunpack.c.h.b16 %v422
        %v644 = vunpack.c.l.b16 %v423
        %v645 = vunpack.c.h.b16 %v423
        %v646 = vunpack.c.l.b16 %v424
        %v647 = vunpack.c.h.b16 %v424
        %v648 = vunpack.c.l.b16 %v425
        %v649 = vunpack.c.h.b16 %v425
        %v650 = vunpack.c.l.b16 %v426
        %v651 = vunpack.c.h.b16 %v426
        %v652 = vunpack.c.l.b16 %v427
        %v653 = vunpack.c.h.b16 %v427
        %v654 = vunpack.c.l.b16 %v428
        %v655 = vunpack.c.h.b16 %v428
        %v656 = vunpack.c.l.b16 %v429
        %v657 = vunpack.c.h.b16 %v429
        %v658 = vunpack.c.l.b16 %v430
        %v659 = vunpack.c.h.b16 %v430
        %v660 = vunpack.c.l.b16 %v431
        %v661 = vunpack.c.h.b16 %v431
        %v662 = vunpack.c.l.b16 %v432
        %v663 = vunpack.c.h.b16 %v432
        %v664 = vunpack.c.l.b16 %v433
        %v665 = vunpack.c.h.b16 %v433
        %v666 = vunpack.c.l.b16 %v434
        %v667 = vunpack.c.h.b16 %v434
        %v668 = vunpack.c.l.b16 %v435
        %v669 = vunpack.c.h.b16 %v435
        %v670 = vunpack.c.l.b16 %v436
        %v671 = vunpack.c.h.b16 %v436
        %v672 = vunpack.c.l.b16 %v437
        %v673 = vunpack.c.h.b16 %v437
        %v674 = vunpack.c.l.b16 %v438
        %v675 = vunpack.c.h.b16 %v438
        %v676 = vunpack.c.l.b16 %v439
        %v677 = vunpack.c.h.b16 %v439
        %v678 = vunpack.c.l.b16 %v440
        %v679 = vunpack.c.h.b16 %v440
        %v680 = vunpack.c.l.b16 %v441
        %v681 = vunpack.c.h.b16 %v441
        %v682 = vunpack.c.l.b16 %v442
        %v683 = vunpack.c.h.b16 %v442
        %v684 = vunpack.c.l.b16 %v443
        %v685 = vunpack.c.h.b16 %v443
        %v686 = vunpack.c.l.b16 %v444
        %v687 = vunpack.c.h.b16 %v444
        %v688 = vunpack.c.l.b16 %v445
        %v689 = vunpack.c.h.b16 %v445
        %v690 = vunpack.c.l.b16 %v446
        %v691 = vunpack.c.h.b16 %v446
        %v692 = vunpack.c.l.b16 %v447
        %v693 = vunpack.c.h.b16 %v447
        %v694 = vunpack.c.l.b16 %v448
        %v695 = vunpack.c.h.b16 %v448
        %v696 = vunpack.c.l.b16 %v449
        %v697 = vunpack.c.h.b16 %v449
        %v698 = vunpack.c.l.b16 %v450
        %v699 = vunpack.c.h.b16 %v450
        %v700 = vunpack.c.l.b16 %v451
        %v701 = vunpack.c.h.b16 %v451
        %v702 = vunpack.c.l.b16 %v452
        %v703 = vunpack.c.h.b16 %v452
        %v704 = vunpack.c.l.b16 %v453
        %v705 = vunpack.c.h.b16 %v453
        %v706 = vunpack.c.l.b16 %v454
        %v707 = vunpack.c.h.b16 %v454
        %v708 = vunpack.c.l.b16 %v455
        %v709 = vunpack.c.h.b16 %v455
        %v710 = vunpack.c.l.b16 %v456
        %v711 = vunpack.c.h.b16 %v456
        %v712 = vunpack.c.l.b16 %v457
        %v713 = vunpack.c.h.b16 %v457
        %v714 = vunpack.c.l.b16 %v458
        %v715 = vunpack.c.h.b16 %v458
        %v716 = vunpack.c.l.b16 %v459
        %v717 = vunpack.c.h.b16 %v459
        %v718 = vunpack.c.l.b16 %v460
        %v719 = vunpack.c.h.b16 %v460
        %v720 = vunpack.c.l.b16 %v461
        %v721 = vunpack.c.h.b16 %v461
        %v722 = vunpack.c.l.b16 %v462
        %v723 = vunpack.c.h.b16 %v462
        %v724 = vunpack.c.l.b16 %v463
        %v725 = vunpack.c.h.b16 %v463
        %v726 = vunpack.c.l.b16 %v464
        %v727 = vunpack.c.h.b16 %v464
        %v728 = vunpack.c.l.b16 %v465
        %v729 = vunpack.c.h.b16 %v465
        %v730 = vunpack.c.l.b16 %v466
        %v731 = vunpack.c.h.b16 %v466
        %v732 = vunpack.c.l.b16 %v467
        %v733 = vunpack.c.h.b16 %v467
        %v734 = vunpack.c.l.b16 %v468
        %v735 = vunpack.c.h.b16 %v468
        %v736 = vunpack.c.l.b16 %v469
        %v737 = vunpack.c.h.b16 %v469
        %v738 = vunpack.c.l.b16 %v470
        %v739 = vunpack.c.h.b16 %v470
        %v740 = vunpack.c.l.b16 %v471
        %v741 = vunpack.c.h.b16 %v471
        %v742 = vunpack.c.l.b16 %v472
        %v743 = vunpack.c.h.b16 %v472
        %v744 = vunpack.c.l.b16 %v473
        %v745 = vunpack.c.h.b16 %v473
        %v746 = vunpack.c.l.b16 %v474
        %v747 = vunpack.c.h.b16 %v474
        %v748 = vunpack.c.l.b16 %v475
        %v749 = vunpack.c.h.b16 %v475
        %v750 = vunpack.c.l.b16 %v476
        %v751 = vunpack.c.h.b16 %v476
        %v752 = vunpack.c.l.b16 %v477
        %v753 = vunpack.c.h.b16 %v477
        %v754 = vunpack.c.l.b16 %v478
        %v755 = vunpack.c.h.b16 %v478
        %v756 = vunpack.c.l.b16 %v479
        %v757 = vunpack.c.h.b16 %v479
        %v758 = vunpack.c.l.b16 %v480
        %v759 = vunpack.c.h.b16 %v480
        %v760 = vunpack.c.l.b16 %v481
        %v761 = vunpack.c.h.b16 %v481
        %v762 = vunpack.c.l.b16 %v482
        %v763 = vunpack.c.h.b16 %v482
        %v764 = vunpack.c.l.b16 %v483
        %v765 = vunpack.c.h.b16 %v483
        %v766 = vunpack.c.l.b16 %v484
        %v767 = vunpack.c.h.b16 %v484
        %v768 = vunpack.c.l.b16 %v485
        %v769 = vunpack.c.h.b16 %v485
        %v770 = vunpack.c.l.b16 %v486
        %v771 = vunpack.c.h.b16 %v486
        %v772 = vunpack.c.l.b16 %v487
        %v773 = vunpack.c.h.b16 %v487
        %v774 = vunpack.c.l.b16 %v488
        %v775 = vunpack.c.h.b16 %v488
        %v776 = vunpack.c.l.b16 %v489
        %v777 = vunpack.c.h.b16 %v489
        %v778 = vunpack.c.l.b16 %v490
        %v779 = vunpack.c.h.b16 %v490
        %v780 = vunpack.c.l.b16 %v491
        %v781 = vunpack.c.h.b16 %v491
        %v782 = vunpack.c.l.b16 %v492
        %v783 = vunpack.c.h.b16 %v492
        %v784 = vunpack.c.l.b16 %v493
        %v785 = vunpack.c.h.b16 %v493
        %v786 = vunpack.c.l.b16 %v494
        %v787 = vunpack.c.h.b16 %v494
        %v788 = vunpack.c.l.b16 %v495
        %v789 = vunpack.c.h.b16 %v495
        %v790 = vunpack.c.l.b16 %v496
        %v791 = vunpack.c.h.b16 %v496
        %v792 = vunpack.c.l.b16 %v497
        %v793 = vunpack.c.h.b16 %v497
        %v794 = vunpack.c.l.b16 %v498
        %v795 = vunpack.c.h.b16 %v498
        %v796 = vunpack.c.l.b16 %v499
        %v797 = vunpack.c.h.b16 %v499
        %v798 = vunpack.c.l.b16 %v500
        %v799 = vunpack.c.h.b16 %v500
        %v800 = vunpack.c.l.b16 %v501
        %v801 = vunpack.c.h.b16 %v501
        %v802 = vunpack.c.l.b16 %v502
        %v803 = vunpack.c.h.b16 %v502
        %v804 = vunpack.c.l.b16 %v503
        %v805 = vunpack.c.h.b16 %v503
        %v806 = vpack.c.b16 %v620, %v614
        %v807 = vpack.c.b16 %v621, %v615
        %v808 = vpack.c.b16 %v622, %v616
        %v809 = vpack.c.b16 %v623, %v617
        %v810 = vpack.c.b16 %v624, %v618
        %v811 = vpack.c.b16 %v625, %v619
        %v812 = vpack.c.b16 %v632, %v626
        %v813 = vpack.c.b16 %v633, %v627
        %v814 = vpack.c.b16 %v634, %v628
        %v815 = vpack.c.b16 %v635, %v629
        %v816 = vpack.c.b16 %v636, %v630
        %v817 = vpack.c.b16 %v637, %v631
        %v818 = vpack.c.b16 %v644, %v638
        %v819 = vpack.c.b16 %v645, %v639
        %v820 = vpack.c.b16 %v646, %v640
        %v821 = vpack.c.b16 %v647, %v641
        %v822 = vpack.c.b16 %v648, %v642
        %v823 = vpack.c.b16 %v649, %v643
        %v824 = vpack.c.b16 %v656, %v650
        %v825 = vpack.c.b16 %v657, %v651
        %v826 = vpack.c.b16 %v658, %v652
        %v827 = vpack.c.b16 %v659, %v653
        %v828 = vpack.c.b16 %v660, %v654
        %v829 = vpack.c.b16 %v661, %v655
        %v830 = vpack.c.b16 %v668, %v662
        %v831 = vpack.c.b16 %v669, %v663
        %v832 = vpack.c.b16 %v670, %v664
        %v833 = vpack.c.b16 %v671, %v665
        %v834 = vpack.c.b16 %v672, %v666
        %v835 = vpack.c.b16 %v673, %v667
        %v836 = vpack.c.b16 %v680, %v674
        %v837 = vpack.c.b16 %v681, %v675
        %v838 = vpack.c.b16 %v682, %v676
        %v839 = vpack.c.b16 %v683, %v677
        %v840 = vpack.c.b16 %v684, %v678
        %v841 = vpack.c.b16 %v685, %v679
        %v842 = vpack.c.b16 %v692, %v686
        %v843 = vpack.c.b16 %v693, %v687
        %v844 = vpack.c.b16 %v694, %v688
        %v845 = vpack.c.b16 %v695, %v689
        %v846 = vpack.c.b16 %v696, %v690
        %v847 = vpack.c.b16 %v697, %v691
        %v848 = vpack.c.b16 %v704, %v698
        %v849 = vpack.c.b16 %v705, %v699
        %v850 = vpack.c.b16 %v706, %v700
        %v851 = vpack.c.b16 %v707, %v701
        %v852 = vpack.c.b16 %v708, %v702
        %v853 = vpack.c.b16 %v709, %v703
        %v854 = vpack.c.b16 %v716, %v710
        %v855 = vpack.c.b16 %v717, %v711
        %v856 = vpack.c.b16 %v718, %v712
        %v857 = vpack.c.b16 %v719, %v713
        %v858 = vpack.c.b16 %v720, %v714
        %v859 = vpack.c.b16 %v721, %v715
        %v860 = vpack.c.b16 %v728, %v722
        %v861 = vpack.c.b16 %v729, %v723
        %v862 = vpack.c.b16 %v730, %v724
        %v863 = vpack.c.b16 %v731, %v725
        %v864 = vpack.c.b16 %v732, %v726
        %v865 = vpack.c.b16 %v733, %v727
        %v866 = vpack.c.b16 %v740, %v734
        %v867 = vpack.c.b16 %v741, %v735
        %v868 = vpack.c.b16 %v742, %v736
        %v869 = vpack.c.b16 %v743, %v737
        %v870 = vpack.c.b16 %v744, %v738
        %v871 = vpack.c.b16 %v745, %v739
        %v872 = vpack.c.b16 %v752, %v746
        %v873 = vpack.c.b16 %v753, %v747
        %v874 = vpack.c.b16 %v754, %v748
        %v875 = vpack.c.b16 %v755, %v749
        %v876 = vpack.c.b16 %v756, %v750
        %v877 = vpack.c.b16 %v757, %v751
        %v878 = vpack.c.b16 %v764, %v758
        %v879 = vpack.c.b16 %v765, %v759
        %v880 = vpack.c.b16 %v766, %v760
        %v881 = vpack.c.b16 %v767, %v761
        %v882 = vpack.c.b16 %v768, %v762
        %v883 = vpack.c.b16 %v769, %v763
        %v884 = vpack.c.b16 %v776, %v770
        %v885 = vpack.c.b16 %v777, %v771
        %v886 = vpack.c.b16 %v778, %v772
        %v887 = vpack.c.b16 %v779, %v773
        %v888 = vpack.c.b16 %v780, %v774
        %v889 = vpack.c.b16 %v781, %v775
        %v890 = vpack.c.b16 %v788, %v782
        %v891 = vpack.c.b16 %v789, %v783
        %v892 = vpack.c.b16 %v790, %v784
        %v893 = vpack.c.b16 %v791, %v785
        %v894 = vpack.c.b16 %v792, %v786
        %v895 = vpack.c.b16 %v793, %v787
        %v896 = vpack.c.b16 %v800, %v794
        %v897 = vpack.c.b16 %v801, %v795
        %v898 = vpack.c.b16 %v802, %v796
        %v899 = vpack.c.b16 %v803, %v797
        %v900 = vpack.c.b16 %v804, %v798
        %v901 = vpack.c.b16 %v805, %v799
        %998 = vmatpush.bf16.msra.mxu0 %v848
        %999 = vmatpush.bf16.msra.mxu0 %v842
        %1000 = vmatpush.bf16.msra.mxu0 %v836
        %1001 = vmatpush.bf16.msra.mxu0 %v830
        %1002 = vmatpush.bf16.msra.mxu0 %v824
        %1003 = vmatpush.bf16.msra.mxu0 %v818
        %1004 = vmatpush.bf16.msra.mxu0 %v812
        %1005 = vmatpush.bf16.msra.mxu0 %v806
        %1006 = vmatmul.bf16.gmra.mxu0 %v406
        %v1007 = vpop.f32.mrf.mxu0
        %v1008 = vadd.f32 %v506, %v1007
        %v1009 = vpop.f32.mrf.mxu0
        %1010 = vdwg.mxu0
        %1011 = vmatpush.bf16.msra.mxu0 %v896
        %1012 = vmatpush.bf16.msra.mxu0 %v890
        %1013 = vmatpush.bf16.msra.mxu0 %v884
        %1014 = vmatpush.bf16.msra.mxu0 %v878
        %1015 = vmatpush.bf16.msra.mxu0 %v872
        %1016 = vmatpush.bf16.msra.mxu0 %v866
        %1017 = vmatpush.bf16.msra.mxu0 %v860
        %1018 = vmatpush.bf16.msra.mxu0 %v854
        %1019 = vmatmul.bf16.gmra.mxu0 %v407
        %v1020 = vpop.f32.mrf.mxu0
        %v1021 = vadd.f32 %v1008, %v1020
        %v1022 = vpop.f32.mrf.mxu0
        %1023 = vdwg.mxu0
        %1024 = vmatpush.bf16.msra.mxu0 %v849
        %1025 = vmatpush.bf16.msra.mxu0 %v843
        %1026 = vmatpush.bf16.msra.mxu0 %v837
        %1027 = vmatpush.bf16.msra.mxu0 %v831
        %1028 = vmatpush.bf16.msra.mxu0 %v825
        %1029 = vmatpush.bf16.msra.mxu0 %v819
        %1030 = vmatpush.bf16.msra.mxu0 %v813
        %1031 = vmatpush.bf16.msra.mxu0 %v807
        %1032 = vmatmul.bf16.gmra.mxu0 %v406
        %v1033 = vpop.f32.mrf.mxu0
        %v1034 = vadd.f32 %v507, %v1033
        %v1035 = vpop.f32.mrf.mxu0
        %1036 = vdwg.mxu0
        %1037 = vmatpush.bf16.msra.mxu0 %v897
        %1038 = vmatpush.bf16.msra.mxu0 %v891
        %1039 = vmatpush.bf16.msra.mxu0 %v885
        %1040 = vmatpush.bf16.msra.mxu0 %v879
        %1041 = vmatpush.bf16.msra.mxu0 %v873
        %1042 = vmatpush.bf16.msra.mxu0 %v867
        %1043 = vmatpush.bf16.msra.mxu0 %v861
        %1044 = vmatpush.bf16.msra.mxu0 %v855
        %1045 = vmatmul.bf16.gmra.mxu0 %v407
        %v1046 = vpop.f32.mrf.mxu0
        %v1047 = vadd.f32 %v1034, %v1046
        %v1048 = vpop.f32.mrf.mxu0
        %1049 = vdwg.mxu0
        %1050 = vmatpush.bf16.msra.mxu0 %v850
        %1051 = vmatpush.bf16.msra.mxu0 %v844
        %1052 = vmatpush.bf16.msra.mxu0 %v838
        %1053 = vmatpush.bf16.msra.mxu0 %v832
        %1054 = vmatpush.bf16.msra.mxu0 %v826
        %1055 = vmatpush.bf16.msra.mxu0 %v820
        %1056 = vmatpush.bf16.msra.mxu0 %v814
        %1057 = vmatpush.bf16.msra.mxu0 %v808
        %1058 = vmatmul.bf16.gmra.mxu0 %v406
        %v1059 = vpop.f32.mrf.mxu0
        %v1060 = vadd.f32 %v508, %v1059
        %v1061 = vpop.f32.mrf.mxu0
        %1062 = vdwg.mxu0
        %1063 = vmatpush.bf16.msra.mxu0 %v898
        %1064 = vmatpush.bf16.msra.mxu0 %v892
        %1065 = vmatpush.bf16.msra.mxu0 %v886
        %1066 = vmatpush.bf16.msra.mxu0 %v880
        %1067 = vmatpush.bf16.msra.mxu0 %v874
        %1068 = vmatpush.bf16.msra.mxu0 %v868
        %1069 = vmatpush.bf16.msra.mxu0 %v862
        %1070 = vmatpush.bf16.msra.mxu0 %v856
        %1071 = vmatmul.bf16.gmra.mxu0 %v407
        %v1072 = vpop.f32.mrf.mxu0
        %v1073 = vadd.f32 %v1060, %v1072
        %v1074 = vpop.f32.mrf.mxu0
        %1075 = vdwg.mxu0
        %1076 = vmatpush.bf16.msra.mxu0 %v851
        %1077 = vmatpush.bf16.msra.mxu0 %v845
        %1078 = vmatpush.bf16.msra.mxu0 %v839
        %1079 = vmatpush.bf16.msra.mxu0 %v833
        %1080 = vmatpush.bf16.msra.mxu0 %v827
        %1081 = vmatpush.bf16.msra.mxu0 %v821
        %1082 = vmatpush.bf16.msra.mxu0 %v815
        %1083 = vmatpush.bf16.msra.mxu0 %v809
        %1084 = vmatmul.bf16.gmra.mxu0 %v406
        %v1085 = vpop.f32.mrf.mxu0
        %v1086 = vadd.f32 %v509, %v1085
        %v1087 = vpop.f32.mrf.mxu0
        %1088 = vdwg.mxu0
        %1089 = vmatpush.bf16.msra.mxu0 %v899
        %1090 = vmatpush.bf16.msra.mxu0 %v893
        %1091 = vmatpush.bf16.msra.mxu0 %v887
        %1092 = vmatpush.bf16.msra.mxu0 %v881
        %1093 = vmatpush.bf16.msra.mxu0 %v875
        %1094 = vmatpush.bf16.msra.mxu0 %v869
        %1095 = vmatpush.bf16.msra.mxu0 %v863
        %1096 = vmatpush.bf16.msra.mxu0 %v857
        %1097 = vmatmul.bf16.gmra.mxu0 %v407
        %v1098 = vpop.f32.mrf.mxu0
        %v1099 = vadd.f32 %v1086, %v1098
        %v1100 = vpop.f32.mrf.mxu0
        %1101 = vdwg.mxu0
        %1102 = vmatpush.bf16.msra.mxu0 %v852
        %1103 = vmatpush.bf16.msra.mxu0 %v846
        %1104 = vmatpush.bf16.msra.mxu0 %v840
        %1105 = vmatpush.bf16.msra.mxu0 %v834
        %1106 = vmatpush.bf16.msra.mxu0 %v828
        %1107 = vmatpush.bf16.msra.mxu0 %v822
        %1108 = vmatpush.bf16.msra.mxu0 %v816
        %1109 = vmatpush.bf16.msra.mxu0 %v810
        %1110 = vmatmul.bf16.gmra.mxu0 %v406
        %v1111 = vpop.f32.mrf.mxu0
        %v1112 = vadd.f32 %v510, %v1111
        %v1113 = vpop.f32.mrf.mxu0
        %1114 = vdwg.mxu0
        %1115 = vmatpush.bf16.msra.mxu0 %v900
        %1116 = vmatpush.bf16.msra.mxu0 %v894
        %1117 = vmatpush.bf16.msra.mxu0 %v888
        %1118 = vmatpush.bf16.msra.mxu0 %v882
        %1119 = vmatpush.bf16.msra.mxu0 %v876
        %1120 = vmatpush.bf16.msra.mxu0 %v870
        %1121 = vmatpush.bf16.msra.mxu0 %v864
        %1122 = vmatpush.bf16.msra.mxu0 %v858
        %1123 = vmatmul.bf16.gmra.mxu0 %v407
        %v1124 = vpop.f32.mrf.mxu0
        %v1125 = vadd.f32 %v1112, %v1124
        %v1126 = vpop.f32.mrf.mxu0
        %1127 = vdwg.mxu0
        %1128 = vmatpush.bf16.msra.mxu0 %v853
        %1129 = vmatpush.bf16.msra.mxu0 %v847
        %1130 = vmatpush.bf16.msra.mxu0 %v841
        %1131 = vmatpush.bf16.msra.mxu0 %v835
        %1132 = vmatpush.bf16.msra.mxu0 %v829
        %1133 = vmatpush.bf16.msra.mxu0 %v823
        %1134 = vmatpush.bf16.msra.mxu0 %v817
        %1135 = vmatpush.bf16.msra.mxu0 %v811
        %1136 = vmatmul.bf16.gmra.mxu0 %v406
        %v1137 = vpop.f32.mrf.mxu0
        %v1138 = vadd.f32 %v511, %v1137
        %v1139 = vpop.f32.mrf.mxu0
        %1140 = vdwg.mxu0
        %1141 = vmatpush.bf16.msra.mxu0 %v901
        %1142 = vmatpush.bf16.msra.mxu0 %v895
        %1143 = vmatpush.bf16.msra.mxu0 %v889
        %1144 = vmatpush.bf16.msra.mxu0 %v883
        %1145 = vmatpush.bf16.msra.mxu0 %v877
        %1146 = vmatpush.bf16.msra.mxu0 %v871
        %1147 = vmatpush.bf16.msra.mxu0 %v865
        %1148 = vmatpush.bf16.msra.mxu0 %v859
        %1149 = vmatmul.bf16.gmra.mxu0 %v407
        %v1150 = vpop.f32.mrf.mxu0
        %v1151 = vadd.f32 %v1138, %v1150
        %v1152 = vpop.f32.mrf.mxu0
        %1153 = vdwg.mxu0
        %v1154 = vld [vmem:[%s348] sm:$0x1]
        %v1155 = vsub.f32 %v1154, 1.0
        %v1156 = vmul.f32 %v1155, 1e+09
        %v1157 = vmul.f32 %v1156, -1.0
        %v1158 = vlaneseq
        %v1159 = vshrl.u32 %v1158, 7
        %v1160 = vlaneseq
        %v1161 = vand.u32 %v1160, 127
        %vm1162 = vcmp.gt.s32.totalorder %v1161, %v1159
        %v1163 = vsel %vm1162, 1, 0
        %v1164 = vcvt.s32.f32 %v1163
        %v1165 = vmul.f32 %v1164, -1e+09
        %v1167 = vperm.slane %v1157, 0
        %v1169 = vadd.f32 %v1167, %v1165
        %v1170 = vpack.c.bf16 %v1021, %v1021
        %v1171 = vpack.c.bf16 %v1073, %v1073
        %v1172 = vpack.c.bf16 %v1125, %v1125
        %1173 = vmatpush.bf16.xpose.msra.mxu0 0
        %1174 = vmatpush.bf16.xpose.msra.mxu0 0
        %1175 = vmatpush.bf16.xpose.msra.mxu0 0
        %1176 = vmatpush.bf16.xpose.msra.mxu0 0
        %1177 = vmatpush.bf16.xpose.msra.mxu0 0
        %1178 = vmatpush.bf16.xpose.msra.mxu0 0
        %1179 = vmatpush.bf16.xpose.msra.mxu0 0
        %1180 = vmatpush.bf16.xpose.msra.mxu0 %v1171
        %1181 = vmatmul.bf16.gmra.mxu0 %v1170
        %v1182 = vpop.f32.mrf.mxu0
        %v1183 = vadd.f32 %v1169, %v1182
        %v1184 = vpop.f32.mrf.mxu0
        %1185 = vdwg.mxu0
        %vm1186 = vcmask 64512
        %v1187 = vsel %vm1186, %v1183, -inf
        %1188 = vmax.xlane.f32.xlu0 %v1187
        %v1189 = vpop.xlane.xlu0 %1188
        %v1190 = vsub.f32 %v1183, %v1189
        %v1191 = vmul.f32 %v1190, 1.442695
        %v1192 = vpow.pop %v1191
        %v1193 = vsel %vm1186, %v1192, 0.0
        %1194 = vadd.xlane.f32.xlu0 %v1193
        %v1195 = vpop.xlane.xlu0 %1194
        %v1196 = vrcp.pop %v1195
        %v1197 = vmul.f32 %v1192, %v1196
        %v1198 = vpack.c.bf16 %v1197, %v1197
        %v1200 = vsel %vm1186, %v1198, 0
        %vm1202 = vcmask 1043456
        %v1204 = vsel %vm1202, %v1172, 0
        %1206 = vmatpush.bf16.msra.mxu0 0
        %1207 = vmatpush.bf16.msra.mxu0 0
        %1208 = vmatpush.bf16.msra.mxu0 0
        %1209 = vmatpush.bf16.msra.mxu0 0
        %1210 = vmatpush.bf16.msra.mxu0 0
        %1211 = vmatpush.bf16.msra.mxu0 0
        %1212 = vmatpush.bf16.msra.mxu0 0
        %1213 = vmatpush.bf16.msra.mxu0 %v1204
        %1214 = vmatmul.bf16.gmra.mxu0 %v1200
        %v1215 = vpop.f32.mrf.mxu0
        %v1216 = vadd.f32 0.0, %v1215
        %v1217 = vpop.f32.mrf.mxu0
        %1218 = vdwg.mxu0
        %v1219 = vpack.c.bf16 %v1216, %v1216
        %v1220 = vld [vmem:[#allocation4] sm:$0xff]
        %v1221 = vld [vmem:[#allocation4 + $0x8] sm:$0xff]
        %v1222 = vld [vmem:[#allocation4 + $0x10] sm:$0xff]
        %v1223 = vld [vmem:[#allocation4 + $0x18] sm:$0xff]
        %v1224 = vld [vmem:[#allocation4 + $0x20] sm:$0xff]
        %v1225 = vld [vmem:[#allocation4 + $0x28] sm:$0xff]
        %v1226 = vld [vmem:[#allocation4 + $0x30] sm:$0xff]
        %v1227 = vld [vmem:[#allocation4 + $0x38] sm:$0xff]
        %v1228 = vld [vmem:[#allocation4 + $0x40] sm:$0xff]
        %v1229 = vld [vmem:[#allocation4 + $0x48] sm:$0xff]
        %v1230 = vld [vmem:[#allocation4 + $0x50] sm:$0xff]
        %v1231 = vld [vmem:[#allocation4 + $0x58] sm:$0xff]
        %v1232 = vld [vmem:[#allocation4 + $0x60] sm:$0xff]
        %v1233 = vld [vmem:[#allocation4 + $0x68] sm:$0xff]
        %v1234 = vld [vmem:[#allocation4 + $0x70] sm:$0xff]
        %v1235 = vld [vmem:[#allocation4 + $0x78] sm:$0xff]
        %v1236 = vpack.c.bf16 %v1047, %v1047
        %v1237 = vpack.c.bf16 %v1099, %v1099
        %v1238 = vpack.c.bf16 %v1151, %v1151
        %1239 = vmatpush.bf16.xpose.msra.mxu0 0
        %1240 = vmatpush.bf16.xpose.msra.mxu0 0
        %1241 = vmatpush.bf16.xpose.msra.mxu0 0
        %1242 = vmatpush.bf16.xpose.msra.mxu0 0
        %1243 = vmatpush.bf16.xpose.msra.mxu0 0
        %1244 = vmatpush.bf16.xpose.msra.mxu0 0
        %1245 = vmatpush.bf16.xpose.msra.mxu0 0
        %1246 = vmatpush.bf16.xpose.msra.mxu0 %v1237
        %1247 = vmatmul.bf16.gmra.mxu0 %v1236
        %v1248 = vpop.f32.mrf.mxu0
        %v1249 = vadd.f32 %v1169, %v1248
        %v1250 = vpop.f32.mrf.mxu0
        %1251 = vdwg.mxu0
        %v1252 = vsel %vm1186, %v1249, -inf
        %1253 = vmax.xlane.f32.xlu0 %v1252
        %v1254 = vpop.xlane.xlu0 %1253
        %v1255 = vsub.f32 %v1249, %v1254
        %v1256 = vmul.f32 %v1255, 1.442695
        %v1257 = vpow.pop %v1256
        %v1258 = vsel %vm1186, %v1257, 0.0
        %1259 = vadd.xlane.f32.xlu0 %v1258
        %v1260 = vpop.xlane.xlu0 %1259
        %v1261 = vrcp.pop %v1260
        %v1262 = vmul.f32 %v1257, %v1261
        %v1263 = vpack.c.bf16 %v1262, %v1262
        %v1265 = vsel %vm1186, %v1263, 0
        %v1268 = vsel %vm1202, %v1238, 0
        %1270 = vmatpush.bf16.msra.mxu0 0
        %1271 = vmatpush.bf16.msra.mxu0 0
        %1272 = vmatpush.bf16.msra.mxu0 0
        %1273 = vmatpush.bf16.msra.mxu0 0
        %1274 = vmatpush.bf16.msra.mxu0 0
        %1275 = vmatpush.bf16.msra.mxu0 0
        %1276 = vmatpush.bf16.msra.mxu0 0
        %1277 = vmatpush.bf16.msra.mxu0 %v1268
        %1278 = vmatmul.bf16.gmra.mxu0 %v1265
        %v1279 = vpop.f32.mrf.mxu0
        %v1280 = vadd.f32 0.0, %v1279
        %v1281 = vpop.f32.mrf.mxu0
        %1282 = vdwg.mxu0
        %v1283 = vpack.c.bf16 %v1280, %v1280
        %v1284 = vld [vmem:[#allocation4 + $0x80] sm:$0xff]
        %v1285 = vld [vmem:[#allocation4 + $0x88] sm:$0xff]
        %v1286 = vld [vmem:[#allocation4 + $0x90] sm:$0xff]
        %v1287 = vld [vmem:[#allocation4 + $0x98] sm:$0xff]
        %v1288 = vld [vmem:[#allocation4 + $0xa0] sm:$0xff]
        %v1289 = vld [vmem:[#allocation4 + $0xa8] sm:$0xff]
        %v1290 = vld [vmem:[#allocation4 + $0xb0] sm:$0xff]
        %v1291 = vld [vmem:[#allocation4 + $0xb8] sm:$0xff]
        %v1292 = vld [vmem:[#allocation4 + $0xc0] sm:$0xff]
        %v1293 = vld [vmem:[#allocation4 + $0xc8] sm:$0xff]
        %v1294 = vld [vmem:[#allocation4 + $0xd0] sm:$0xff]
        %v1295 = vld [vmem:[#allocation4 + $0xd8] sm:$0xff]
        %v1296 = vld [vmem:[#allocation4 + $0xe0] sm:$0xff]
        %v1297 = vld [vmem:[#allocation4 + $0xe8] sm:$0xff]
        %v1298 = vld [vmem:[#allocation4 + $0xf0] sm:$0xff]
        %v1299 = vld [vmem:[#allocation4 + $0xf8] sm:$0xff]
        %v1316 = vunpack.c.l.b16 %v1284
        %v1317 = vunpack.c.h.b16 %v1284
        %v1318 = vunpack.c.l.b16 %v1285
        %v1319 = vunpack.c.h.b16 %v1285
        %v1320 = vunpack.c.l.b16 %v1286
        %v1321 = vunpack.c.h.b16 %v1286
        %v1322 = vunpack.c.l.b16 %v1287
        %v1323 = vunpack.c.h.b16 %v1287
        %v1324 = vunpack.c.l.b16 %v1288
        %v1325 = vunpack.c.h.b16 %v1288
        %v1326 = vunpack.c.l.b16 %v1289
        %v1327 = vunpack.c.h.b16 %v1289
        %v1328 = vunpack.c.l.b16 %v1290
        %v1329 = vunpack.c.h.b16 %v1290
        %v1330 = vunpack.c.l.b16 %v1291
        %v1331 = vunpack.c.h.b16 %v1291
        %v1332 = vunpack.c.l.b16 %v1292
        %v1333 = vunpack.c.h.b16 %v1292
        %v1334 = vunpack.c.l.b16 %v1293
        %v1335 = vunpack.c.h.b16 %v1293
        %v1336 = vunpack.c.l.b16 %v1294
        %v1337 = vunpack.c.h.b16 %v1294
        %v1338 = vunpack.c.l.b16 %v1295
        %v1339 = vunpack.c.h.b16 %v1295
        %v1340 = vunpack.c.l.b16 %v1296
        %v1341 = vunpack.c.h.b16 %v1296
        %v1342 = vunpack.c.l.b16 %v1297
        %v1343 = vunpack.c.h.b16 %v1297
        %v1344 = vunpack.c.l.b16 %v1298
        %v1345 = vunpack.c.h.b16 %v1298
        %v1346 = vunpack.c.l.b16 %v1299
        %v1347 = vunpack.c.h.b16 %v1299
        %v1348 = vpack.c.b16 %v1318, %v1316
        %v1349 = vpack.c.b16 %v1319, %v1317
        %v1350 = vpack.c.b16 %v1322, %v1320
        %v1351 = vpack.c.b16 %v1323, %v1321
        %v1352 = vpack.c.b16 %v1326, %v1324
        %v1353 = vpack.c.b16 %v1327, %v1325
        %v1354 = vpack.c.b16 %v1330, %v1328
        %v1355 = vpack.c.b16 %v1331, %v1329
        %v1356 = vpack.c.b16 %v1334, %v1332
        %v1357 = vpack.c.b16 %v1335, %v1333
        %v1358 = vpack.c.b16 %v1338, %v1336
        %v1359 = vpack.c.b16 %v1339, %v1337
        %v1360 = vpack.c.b16 %v1342, %v1340
        %v1361 = vpack.c.b16 %v1343, %v1341
        %v1362 = vpack.c.b16 %v1346, %v1344
        %v1363 = vpack.c.b16 %v1347, %v1345
        %1380 = vmatpush.bf16.msra.mxu0 %v1362
        %1381 = vmatpush.bf16.msra.mxu0 %v1360
        %1382 = vmatpush.bf16.msra.mxu0 %v1358
        %1383 = vmatpush.bf16.msra.mxu0 %v1356
        %1384 = vmatpush.bf16.msra.mxu0 %v1354
        %1385 = vmatpush.bf16.msra.mxu0 %v1352
        %1386 = vmatpush.bf16.msra.mxu0 %v1350
        %1387 = vmatpush.bf16.msra.mxu0 %v1348
        %1388 = vmatmul.bf16.gmra.mxu0 %v1283
        %v1389 = vpop.f32.mrf.mxu0
        %v1390 = vadd.f32 0.0, %v1389
        %v1391 = vpop.f32.mrf.mxu0
        %1392 = vdwg.mxu0
        %1393 = vmatpush.bf16.msra.mxu0 %v1363
        %1394 = vmatpush.bf16.msra.mxu0 %v1361
        %1395 = vmatpush.bf16.msra.mxu0 %v1359
        %1396 = vmatpush.bf16.msra.mxu0 %v1357
        %1397 = vmatpush.bf16.msra.mxu0 %v1355
        %1398 = vmatpush.bf16.msra.mxu0 %v1353
        %1399 = vmatpush.bf16.msra.mxu0 %v1351
        %1400 = vmatpush.bf16.msra.mxu0 %v1349
        %1401 = vmatmul.bf16.gmra.mxu0 %v1283
        %v1402 = vpop.f32.mrf.mxu0
        %v1403 = vadd.f32 0.0, %v1402
        %v1404 = vpop.f32.mrf.mxu0
        %1405 = vdwg.mxu0
        %v1422 = vunpack.c.l.b16 %v1220
        %v1423 = vunpack.c.h.b16 %v1220
        %v1424 = vunpack.c.l.b16 %v1221
        %v1425 = vunpack.c.h.b16 %v1221
        %v1426 = vunpack.c.l.b16 %v1222
        %v1427 = vunpack.c.h.b16 %v1222
        %v1428 = vunpack.c.l.b16 %v1223
        %v1429 = vunpack.c.h.b16 %v1223
        %v1430 = vunpack.c.l.b16 %v1224
        %v1431 = vunpack.c.h.b16 %v1224
        %v1432 = vunpack.c.l.b16 %v1225
        %v1433 = vunpack.c.h.b16 %v1225
        %v1434 = vunpack.c.l.b16 %v1226
        %v1435 = vunpack.c.h.b16 %v1226
        %v1436 = vunpack.c.l.b16 %v1227
        %v1437 = vunpack.c.h.b16 %v1227
        %v1438 = vunpack.c.l.b16 %v1228
        %v1439 = vunpack.c.h.b16 %v1228
        %v1440 = vunpack.c.l.b16 %v1229
        %v1441 = vunpack.c.h.b16 %v1229
        %v1442 = vunpack.c.l.b16 %v1230
        %v1443 = vunpack.c.h.b16 %v1230
        %v1444 = vunpack.c.l.b16 %v1231
        %v1445 = vunpack.c.h.b16 %v1231
        %v1446 = vunpack.c.l.b16 %v1232
        %v1447 = vunpack.c.h.b16 %v1232
        %v1448 = vunpack.c.l.b16 %v1233
        %v1449 = vunpack.c.h.b16 %v1233
        %v1450 = vunpack.c.l.b16 %v1234
        %v1451 = vunpack.c.h.b16 %v1234
        %v1452 = vunpack.c.l.b16 %v1235
        %v1453 = vunpack.c.h.b16 %v1235
        %v1454 = vpack.c.b16 %v1424, %v1422
        %v1455 = vpack.c.b16 %v1425, %v1423
        %v1456 = vpack.c.b16 %v1428, %v1426
        %v1457 = vpack.c.b16 %v1429, %v1427
        %v1458 = vpack.c.b16 %v1432, %v1430
        %v1459 = vpack.c.b16 %v1433, %v1431
        %v1460 = vpack.c.b16 %v1436, %v1434
        %v1461 = vpack.c.b16 %v1437, %v1435
        %v1462 = vpack.c.b16 %v1440, %v1438
        %v1463 = vpack.c.b16 %v1441, %v1439
        %v1464 = vpack.c.b16 %v1444, %v1442
        %v1465 = vpack.c.b16 %v1445, %v1443
        %v1466 = vpack.c.b16 %v1448, %v1446
        %v1467 = vpack.c.b16 %v1449, %v1447
        %v1468 = vpack.c.b16 %v1452, %v1450
        %v1469 = vpack.c.b16 %v1453, %v1451
        %1486 = vmatpush.bf16.msra.mxu0 %v1468
        %1487 = vmatpush.bf16.msra.mxu0 %v1466
        %1488 = vmatpush.bf16.msra.mxu0 %v1464
        %1489 = vmatpush.bf16.msra.mxu0 %v1462
        %1490 = vmatpush.bf16.msra.mxu0 %v1460
        %1491 = vmatpush.bf16.msra.mxu0 %v1458
        %1492 = vmatpush.bf16.msra.mxu0 %v1456
        %1493 = vmatpush.bf16.msra.mxu0 %v1454
        %1494 = vmatmul.bf16.gmra.mxu0 %v1219
        %v1495 = vpop.f32.mrf.mxu0
        %v1496 = vadd.f32 %v1390, %v1495
        %v1497 = vpop.f32.mrf.mxu0
        %1498 = vdwg.mxu0
        %1499 = vmatpush.bf16.msra.mxu0 %v1469
        %1500 = vmatpush.bf16.msra.mxu0 %v1467
        %1501 = vmatpush.bf16.msra.mxu0 %v1465
        %1502 = vmatpush.bf16.msra.mxu0 %v1463
        %1503 = vmatpush.bf16.msra.mxu0 %v1461
        %1504 = vmatpush.bf16.msra.mxu0 %v1459
        %1505 = vmatpush.bf16.msra.mxu0 %v1457
        %1506 = vmatpush.bf16.msra.mxu0 %v1455
        %1507 = vmatmul.bf16.gmra.mxu0 %v1219
        %v1508 = vpop.f32.mrf.mxu0
        %v1509 = vadd.f32 %v1403, %v1508
        %v1510 = vpop.f32.mrf.mxu0
        %1511 = vdwg.mxu0
        %v1512 = vld [vmem:[%s7] sm:$0x3]
        %v1514 = vperm.slane %v1512, 0
        %v1515 = vperm.slane %v1512, 1
        %v1518 = vadd.f32 %v1496, %v1514
        %v1519 = vadd.f32 %v1509, %v1515
        %v1520 = vadd.f32 %v356, %v1518
        %v1521 = vadd.f32 %v357, %v1519
        %v1522 = vpack.c.bf16 %v1521, %v1520
        %1523 = vst [vmem:[%s353] sm:$0xff] %v1522
        %p1524 = scmp.lt.s32.totalorder %s21, 1
        %s1525 = scalar_select %p1524, %s21, 1
        %s1526 = smul.addr %s1525, 2
        %s1527 = smul.addr %s1526, 4
        %s1528 = scalar_lea.vmem %s8, %s1527
        // Predicated region
        $region61: #{_lambda_.18} parent=51 // pred_check
          %p1529 = pneg %p217
        $region62: #{_lambda_.18} parent=51 // pred_check_branch
          %1531 = sbr.rel (%p1529) target = $region64
        $region63: #{_lambda_.18} parent=51 // pred_region
          _
        $region64: #{_lambda_.18} parent=51 // pred_fallthru
          _
      $region52: #{_lambda_.18} parent=5 // pred_fallthru
        _
      %p1532 = scmp.le.s32.totalorder 2, %s16
      // Predicated region
      $region65: #{_lambda_.18} parent=5 // pred_check
        %p1533 = pneg %p1532
      $region66: #{_lambda_.18} parent=5 // pred_check_branch
        %1535 = sbr.rel (%p1533) target = $region68
      $region67: #{_lambda_.18} parent=5 // pred_region
        %s1536 = ssub.s32 %s16, 2
        // Predicated region
        $region69: #{_lambda_.18} parent=67 // pred_check
          %p1537 = pneg %p223
        $region70: #{_lambda_.18} parent=67 // pred_check_branch
          %1539 = sbr.rel (%p1537) target = $region72
        $region71: #{_lambda_.18} parent=67 // pred_region
          %p1540 = scmp.lt.s32.totalorder %s22, 1
          %s1541 = scalar_select %p1540, %s22, 1
          %s1542 = smul.addr %s1541, 2
          %s1543 = smul.addr %s1542, 4
          %s1544 = scalar_lea.vmem %s8, %s1543
        $region72: #{_lambda_.18} parent=67 // pred_fallthru
          _
      $region68: #{_lambda_.18} parent=5 // pred_fallthru
        _
    $region6: #{_lambda_.18} parent=1 // loop_footer
      %s20 = sadd.s32 1, %s16
    $region7: #{_lambda_.18} parent=1 // loop_footer_branch
      %15 = sbr.rel target = $region3
    $region8: #{_lambda_.18} parent=1 // loop_exit
      _
    %1545 = vsyncpa [#allocation3], 1
    %s1546 = scalar_lea.sflag [#allocation3], 1
    %1547 = vsyncpa %s1546, 1
    %1548 = vsyncpa [#allocation5], 1

// kernel: _lambda_.16
$region0: #{_lambda_.16}
  #allocation0 [shape = 'u32[]', space=smem, size = 0x4, offset = 0x4, fixed_abs, tag = 'smem constant byte address 0x4 - core index']
  #allocation1 [shape = 'u32[72,128]{1,0:T(1,128)}', space=vmem, size = 0x9000, scoped, tag = 'internal scratch']
  %s0 = inlined_call_operand.vmem [shape: bf16[2,8,256], index: 0, kind: input, shape index: {}]
  %s1 = inlined_call_operand.vmem [shape: bf16[2,8,256], index: 1, kind: input, shape index: {}]
  %s2 = inlined_call_operand.vmem [shape: f32[2,8,1], index: 2, kind: input, shape index: {}]
  %s3 = inlined_call_operand.vmem [shape: f32[2,1,8], index: 3, kind: input, shape index: {}]
  %s4 = inlined_call_operand.vmem [shape: f32[1,256], index: 4, kind: input, shape index: {}]
  %s5 = inlined_call_operand.vmem [shape: f32[1,256], index: 5, kind: input, shape index: {}]
  %s6 = inlined_call_operand.hbm [shape: bf16[256,256], index: 6, kind: input, shape index: {}]
  %s7 = inlined_call_operand.vmem [shape: f32[1,256], index: 7, kind: input, shape index: {}]
  %s8 = inlined_call_operand.hbm [shape: bf16[256,512], index: 8, kind: input, shape index: {}]
  %s9 = inlined_call_operand.vmem [shape: f32[1,512], index: 9, kind: input, shape index: {}]
  %s10 = inlined_call_operand.hbm [shape: bf16[256,256], index: 10, kind: input, shape index: {}]
  %s11 = inlined_call_operand.vmem [shape: f32[1,256], index: 11, kind: input, shape index: {}]
  %s12 = inlined_call_operand.vmem [shape: bf16[2,8,256], index: 12, kind: output, shape index: {}]
  %s13 = sld [smem:[#allocation0]]
  $region93: #{_lambda_.16} parent=0
    _
  %s15 = ssub.s32 1, %s13
  %s16 = scalar_select 0, %s15, %s13
  $region1: #{_lambda_.16} parent=0
    #allocation2 [shape = 'u8[131072]{0}', space=vmem, size = 0x20000, scoped, tag = 'input window, operand 6, single buffered']
    #allocation3 [shape = 's32[2]{0}', space=sflag, size = 0x8, scoped, tag = 'scoped memory for _lambda_.16']
    #allocation4 [shape = 'u8[262144]{0}', space=vmem, size = 0x40000, scoped, tag = 'input window, operand 8, single buffered']
    #allocation5 [shape = 's32[1]{0}', space=sflag, size = 0x4, scoped, tag = 'scoped memory for _lambda_.16']
    #allocation6 [shape = 'u8[131072]{0}', space=vmem, size = 0x20000, scoped, tag = 'input window, operand 10, single buffered']
    %17 = vsyncpa [#allocation3], 0
    %18 = vsyncpa [#allocation5], 0
    loop: start=0, step=1, limit=4
    $region2: #{_lambda_.16} parent=1 // loop_pre_header
      _
    $region3: #{_lambda_.16} parent=1 // loop_header
      %s20 = sphi 0, %s24
      %p21 = scmp.ge.s32.totalorder %s20, 4
      %s30 = sphi 0, %s32
      %s33 = sphi 0, %s30
      %s34 = sphi 0, %s33
      %s50 = sphi 0, %s34
      %s56 = sphi 0, %s58
      %s59 = sphi 0, %s56
      %s60 = sphi 0, %s59
      %s76 = sphi 0, %s60
      %s82 = sphi 0, %s84
      %s85 = sphi 0, %s82
      %s86 = sphi 0, %s85
      %s102 = sphi 0, %s86
      %s108 = sphi 0, %s110
      %s111 = sphi 0, %s108
      %s112 = sphi 0, %s111
      %s128 = sphi 0, %s112
      %s132 = sphi 0, %s132
      %s134 = sphi 0, %s132
      %s135 = sphi 0, %s134
      %s149 = sphi 0, %s135
      %s153 = sphi 0, %s153
      %s155 = sphi 0, %s153
      %s156 = sphi 0, %s155
      %s170 = sphi 0, %s156
      %s174 = sphi 0, %s174
      %s176 = sphi 0, %s174
      %s177 = sphi 0, %s176
      %s191 = sphi 0, %s177
      %s195 = sphi 0, %s195
      %s197 = sphi 0, %s195
      %s198 = sphi 0, %s197
      %s212 = sphi 0, %s198
      %s216 = sphi 0, %s216
      %s218 = sphi 0, %s216
      %s219 = sphi 0, %s218
      %s233 = sphi 0, %s219
      %s237 = sphi 0, %s237
      %s239 = sphi 0, %s237
      %s240 = sphi 0, %s239
      %s254 = sphi 0, %s240
      %s258 = sphi 0, %s258
      %s260 = sphi 0, %s258
      %s261 = sphi 0, %s260
      %s275 = sphi 0, %s261
      %s279 = sphi 0, %s279
      %s281 = sphi 0, %s279
      %s282 = sphi 0, %s281
      %s296 = sphi 0, %s282
      %s302 = sphi 0, %s304
      %s305 = sphi 0, %s302
      %s306 = sphi 0, %s305
      %s322 = sphi 0, %s306
    $region4: #{_lambda_.16} parent=1 // loop_header_branch
      %23 = sbr.rel (%p21) target = $region8
    $region5: #{_lambda_.16} parent=1 // loop_body
      %s25 = ssub.s32 %s20, 1
      %s26 = ssub.s32 %s20, 2
      %s27 = sadd.s32 %s20, 1
      %s28 = ssub.s32 %s20, %s27
      %p29 = scmp.eq.s32.totalorder %s28, 0
      %s31 = sadd.s32 %s30, 1
      %s32 = scalar_select %p29, %s30, %s31
      %p35 = pneg %p29
      %p36 = scmp.eq.s32.totalorder %s20, 1
      %p37 = por %p35, %p36
      %p38 = scmp.ne.s32.totalorder %s30, %s33
      %p39 = scmp.eq.s32.totalorder %s20, 0
      %p40 = por %p38, %p39
      %p41 = scmp.ne.s32.totalorder %s30, %s33
      %p42 = scmp.eq.s32.totalorder %s25, 1
      %p43 = por %p41, %p42
      %p44 = scmp.ne.s32.totalorder %s33, %s34
      %p45 = scmp.eq.s32.totalorder %s25, 0
      %p46 = por %p44, %p45
      %p47 = scmp.ne.s32.totalorder %s33, %s34
      %p48 = scmp.eq.s32.totalorder %s26, 1
      %p49 = por %p47, %p48
      %p51 = scmp.ne.s32.totalorder %s34, %s50
      %p52 = scmp.eq.s32.totalorder %s26, 0
      %p53 = por %p51, %p52
      %s54 = ssub.s32 %s20, %s27
      %p55 = scmp.eq.s32.totalorder %s54, 0
      %s57 = sadd.s32 %s56, 1
      %s58 = scalar_select %p55, %s56, %s57
      %p61 = pneg %p55
      %p62 = scmp.eq.s32.totalorder %s20, 1
      %p63 = por %p61, %p62
      %p64 = scmp.ne.s32.totalorder %s56, %s59
      %p65 = scmp.eq.s32.totalorder %s20, 0
      %p66 = por %p64, %p65
      %p67 = scmp.ne.s32.totalorder %s56, %s59
      %p68 = scmp.eq.s32.totalorder %s25, 1
      %p69 = por %p67, %p68
      %p70 = scmp.ne.s32.totalorder %s59, %s60
      %p71 = scmp.eq.s32.totalorder %s25, 0
      %p72 = por %p70, %p71
      %p73 = scmp.ne.s32.totalorder %s59, %s60
      %p74 = scmp.eq.s32.totalorder %s26, 1
      %p75 = por %p73, %p74
      %p77 = scmp.ne.s32.totalorder %s60, %s76
      %p78 = scmp.eq.s32.totalorder %s26, 0
      %p79 = por %p77, %p78
      %s80 = ssub.s32 %s20, %s27
      %p81 = scmp.eq.s32.totalorder %s80, 0
      %s83 = sadd.s32 %s82, 1
      %s84 = scalar_select %p81, %s82, %s83
      %p87 = pneg %p81
      %p88 = scmp.eq.s32.totalorder %s20, 1
      %p89 = por %p87, %p88
      %p90 = scmp.ne.s32.totalorder %s82, %s85
      %p91 = scmp.eq.s32.totalorder %s20, 0
      %p92 = por %p90, %p91
      %p93 = scmp.ne.s32.totalorder %s82, %s85
      %p94 = scmp.eq.s32.totalorder %s25, 1
      %p95 = por %p93, %p94
      %p96 = scmp.ne.s32.totalorder %s85, %s86
      %p97 = scmp.eq.s32.totalorder %s25, 0
      %p98 = por %p96, %p97
      %p99 = scmp.ne.s32.totalorder %s85, %s86
      %p100 = scmp.eq.s32.totalorder %s26, 1
      %p101 = por %p99, %p100
      %p103 = scmp.ne.s32.totalorder %s86, %s102
      %p104 = scmp.eq.s32.totalorder %s26, 0
      %p105 = por %p103, %p104
      %s106 = ssub.s32 %s20, %s27
      %p107 = scmp.eq.s32.totalorder %s106, 0
      %s109 = sadd.s32 %s108, 1
      %s110 = scalar_select %p107, %s108, %s109
      %p113 = pneg %p107
      %p114 = scmp.eq.s32.totalorder %s20, 1
      %p115 = por %p113, %p114
      %p116 = scmp.ne.s32.totalorder %s108, %s111
      %p117 = scmp.eq.s32.totalorder %s20, 0
      %p118 = por %p116, %p117
      %p119 = scmp.ne.s32.totalorder %s108, %s111
      %p120 = scmp.eq.s32.totalorder %s25, 1
      %p121 = por %p119, %p120
      %p122 = scmp.ne.s32.totalorder %s111, %s112
      %p123 = scmp.eq.s32.totalorder %s25, 0
      %p124 = por %p122, %p123
      %p125 = scmp.ne.s32.totalorder %s111, %s112
      %p126 = scmp.eq.s32.totalorder %s26, 1
      %p127 = por %p125, %p126
      %p129 = scmp.ne.s32.totalorder %s112, %s128
      %p130 = scmp.eq.s32.totalorder %s26, 0
      %p131 = por %p129, %p130
      %s133 = sadd.s32 %s132, 1
      %p136 = scmp.eq.s32.totalorder %s20, 1
      %p137 = scmp.ne.s32.totalorder %s132, %s134
      %p138 = scmp.eq.s32.totalorder %s20, 0
      %p139 = por %p137, %p138
      %p140 = scmp.ne.s32.totalorder %s132, %s134
      %p141 = scmp.eq.s32.totalorder %s25, 1
      %p142 = por %p140, %p141
      %p143 = scmp.ne.s32.totalorder %s134, %s135
      %p144 = scmp.eq.s32.totalorder %s25, 0
      %p145 = por %p143, %p144
      %p146 = scmp.ne.s32.totalorder %s134, %s135
      %p147 = scmp.eq.s32.totalorder %s26, 1
      %p148 = por %p146, %p147
      %p150 = scmp.ne.s32.totalorder %s135, %s149
      %p151 = scmp.eq.s32.totalorder %s26, 0
      %p152 = por %p150, %p151
      %s154 = sadd.s32 %s153, 1
      %p157 = scmp.eq.s32.totalorder %s20, 1
      %p158 = scmp.ne.s32.totalorder %s153, %s155
      %p159 = scmp.eq.s32.totalorder %s20, 0
      %p160 = por %p158, %p159
      %p161 = scmp.ne.s32.totalorder %s153, %s155
      %p162 = scmp.eq.s32.totalorder %s25, 1
      %p163 = por %p161, %p162
      %p164 = scmp.ne.s32.totalorder %s155, %s156
      %p165 = scmp.eq.s32.totalorder %s25, 0
      %p166 = por %p164, %p165
      %p167 = scmp.ne.s32.totalorder %s155, %s156
      %p168 = scmp.eq.s32.totalorder %s26, 1
      %p169 = por %p167, %p168
      %p171 = scmp.ne.s32.totalorder %s156, %s170
      %p172 = scmp.eq.s32.totalorder %s26, 0
      %p173 = por %p171, %p172
      %s175 = sadd.s32 %s174, 1
      %p178 = scmp.eq.s32.totalorder %s20, 1
      %p179 = scmp.ne.s32.totalorder %s174, %s176
      %p180 = scmp.eq.s32.totalorder %s20, 0
      %p181 = por %p179, %p180
      %p182 = scmp.ne.s32.totalorder %s174, %s176
      %p183 = scmp.eq.s32.totalorder %s25, 1
      %p184 = por %p182, %p183
      %p185 = scmp.ne.s32.totalorder %s176, %s177
      %p186 = scmp.eq.s32.totalorder %s25, 0
      %p187 = por %p185, %p186
      %p188 = scmp.ne.s32.totalorder %s176, %s177
      %p189 = scmp.eq.s32.totalorder %s26, 1
      %p190 = por %p188, %p189
      %p192 = scmp.ne.s32.totalorder %s177, %s191
      %p193 = scmp.eq.s32.totalorder %s26, 0
      %p194 = por %p192, %p193
      %s196 = sadd.s32 %s195, 1
      %p199 = scmp.eq.s32.totalorder %s20, 1
      %p200 = scmp.ne.s32.totalorder %s195, %s197
      %p201 = scmp.eq.s32.totalorder %s20, 0
      %p202 = por %p200, %p201
      %p203 = scmp.ne.s32.totalorder %s195, %s197
      %p204 = scmp.eq.s32.totalorder %s25, 1
      %p205 = por %p203, %p204
      %p206 = scmp.ne.s32.totalorder %s197, %s198
      %p207 = scmp.eq.s32.totalorder %s25, 0
      %p208 = por %p206, %p207
      %p209 = scmp.ne.s32.totalorder %s197, %s198
      %p210 = scmp.eq.s32.totalorder %s26, 1
      %p211 = por %p209, %p210
      %p213 = scmp.ne.s32.totalorder %s198, %s212
      %p214 = scmp.eq.s32.totalorder %s26, 0
      %p215 = por %p213, %p214
      %s217 = sadd.s32 %s216, 1
      %p220 = scmp.eq.s32.totalorder %s20, 1
      %p221 = scmp.ne.s32.totalorder %s216, %s218
      %p222 = scmp.eq.s32.totalorder %s20, 0
      %p223 = por %p221, %p222
      %p224 = scmp.ne.s32.totalorder %s216, %s218
      %p225 = scmp.eq.s32.totalorder %s25, 1
      %p226 = por %p224, %p225
      %p227 = scmp.ne.s32.totalorder %s218, %s219
      %p228 = scmp.eq.s32.totalorder %s25, 0
      %p229 = por %p227, %p228
      %p230 = scmp.ne.s32.totalorder %s218, %s219
      %p231 = scmp.eq.s32.totalorder %s26, 1
      %p232 = por %p230, %p231
      %p234 = scmp.ne.s32.totalorder %s219, %s233
      %p235 = scmp.eq.s32.totalorder %s26, 0
      %p236 = por %p234, %p235
      %s238 = sadd.s32 %s237, 1
      %p241 = scmp.eq.s32.totalorder %s20, 1
      %p242 = scmp.ne.s32.totalorder %s237, %s239
      %p243 = scmp.eq.s32.totalorder %s20, 0
      %p244 = por %p242, %p243
      %p245 = scmp.ne.s32.totalorder %s237, %s239
      %p246 = scmp.eq.s32.totalorder %s25, 1
      %p247 = por %p245, %p246
      %p248 = scmp.ne.s32.totalorder %s239, %s240
      %p249 = scmp.eq.s32.totalorder %s25, 0
      %p250 = por %p248, %p249
      %p251 = scmp.ne.s32.totalorder %s239, %s240
      %p252 = scmp.eq.s32.totalorder %s26, 1
      %p253 = por %p251, %p252
      %p255 = scmp.ne.s32.totalorder %s240, %s254
      %p256 = scmp.eq.s32.totalorder %s26, 0
      %p257 = por %p255, %p256
      %s259 = sadd.s32 %s258, 1
      %p262 = scmp.eq.s32.totalorder %s20, 1
      %p263 = scmp.ne.s32.totalorder %s258, %s260
      %p264 = scmp.eq.s32.totalorder %s20, 0
      %p265 = por %p263, %p264
      %p266 = scmp.ne.s32.totalorder %s258, %s260
      %p267 = scmp.eq.s32.totalorder %s25, 1
      %p268 = por %p266, %p267
      %p269 = scmp.ne.s32.totalorder %s260, %s261
      %p270 = scmp.eq.s32.totalorder %s25, 0
      %p271 = por %p269, %p270
      %p272 = scmp.ne.s32.totalorder %s260, %s261
      %p273 = scmp.eq.s32.totalorder %s26, 1
      %p274 = por %p272, %p273
      %p276 = scmp.ne.s32.totalorder %s261, %s275
      %p277 = scmp.eq.s32.totalorder %s26, 0
      %p278 = por %p276, %p277
      %s280 = sadd.s32 %s279, 1
      %p283 = scmp.eq.s32.totalorder %s20, 1
      %p284 = scmp.ne.s32.totalorder %s279, %s281
      %p285 = scmp.eq.s32.totalorder %s20, 0
      %p286 = por %p284, %p285
      %p287 = scmp.ne.s32.totalorder %s279, %s281
      %p288 = scmp.eq.s32.totalorder %s25, 1
      %p289 = por %p287, %p288
      %p290 = scmp.ne.s32.totalorder %s281, %s282
      %p291 = scmp.eq.s32.totalorder %s25, 0
      %p292 = por %p290, %p291
      %p293 = scmp.ne.s32.totalorder %s281, %s282
      %p294 = scmp.eq.s32.totalorder %s26, 1
      %p295 = por %p293, %p294
      %p297 = scmp.ne.s32.totalorder %s282, %s296
      %p298 = scmp.eq.s32.totalorder %s26, 0
      %p299 = por %p297, %p298
      %s300 = ssub.s32 %s20, %s27
      %p301 = scmp.eq.s32.totalorder %s300, 0
      %s303 = sadd.s32 %s302, 1
      %s304 = scalar_select %p301, %s302, %s303
      %p307 = pneg %p301
      %p308 = scmp.eq.s32.totalorder %s20, 1
      %p309 = por %p307, %p308
      %p310 = scmp.ne.s32.totalorder %s302, %s305
      %p311 = scmp.eq.s32.totalorder %s20, 0
      %p312 = por %p310, %p311
      %p313 = scmp.ne.s32.totalorder %s302, %s305
      %p314 = scmp.eq.s32.totalorder %s25, 1
      %p315 = por %p313, %p314
      %p316 = scmp.ne.s32.totalorder %s305, %s306
      %p317 = scmp.eq.s32.totalorder %s25, 0
      %p318 = por %p316, %p317
      %p319 = scmp.ne.s32.totalorder %s305, %s306
      %p320 = scmp.eq.s32.totalorder %s26, 1
      %p321 = por %p319, %p320
      %p323 = scmp.ne.s32.totalorder %s306, %s322
      %p324 = scmp.eq.s32.totalorder %s26, 0
      %p325 = por %p323, %p324
      %p326 = scmp.le.s32.totalorder 1, %s20
      %p327 = scmp.lt.s32.totalorder %s20, 3
      %p328 = pnand %p326, %p327
      %p329 = pneg %p328
      // Predicated region
      $region9: #{_lambda_.16} parent=5 // pred_check
        _
      $region10: #{_lambda_.16} parent=5 // pred_check_branch
        %331 = sbr.rel (%p328) target = $region12
      $region11: #{_lambda_.16} parent=5 // pred_region
        %s332 = ssub.s32 %s20, 1
        // Predicated region
        $region13: #{_lambda_.16} parent=11 // pred_check
          %p333 = pneg %p145
        $region14: #{_lambda_.16} parent=11 // pred_check_branch
          %335 = sbr.rel (%p333) target = $region16
        $region15: #{_lambda_.16} parent=11 // pred_region
          _
        $region16: #{_lambda_.16} parent=11 // pred_fallthru
          _
        // Predicated region
        $region17: #{_lambda_.16} parent=11 // pred_check
          %p336 = pneg %p166
        $region18: #{_lambda_.16} parent=11 // pred_check_branch
          %338 = sbr.rel (%p336) target = $region20
        $region19: #{_lambda_.16} parent=11 // pred_region
          _
        $region20: #{_lambda_.16} parent=11 // pred_fallthru
          _
        // Predicated region
        $region21: #{_lambda_.16} parent=11 // pred_check
          %p339 = pneg %p187
        $region22: #{_lambda_.16} parent=11 // pred_check_branch
          %341 = sbr.rel (%p339) target = $region24
        $region23: #{_lambda_.16} parent=11 // pred_region
          %343 = vsyncadd [#allocation3], 0
          %s344 = sshll.u32 %s6, 4
          %s345 = int_to_ptr.hbm [resolvable:$true] %s344
          %s346 = sshll.u32 [#allocation2], 4
          %s347 = int_to_ptr.vmem [resolvable:$true] %s346
          %352 = dma.hbm_to_vmem [thread:$0]  %s345, 4096, %s347, [#allocation3], 128, 128, 8
        $region24: #{_lambda_.16} parent=11 // pred_fallthru
          _
        // Predicated region
        $region25: #{_lambda_.16} parent=11 // pred_check
          %p353 = pneg %p208
        $region26: #{_lambda_.16} parent=11 // pred_check_branch
          %355 = sbr.rel (%p353) target = $region28
        $region27: #{_lambda_.16} parent=11 // pred_region
          _
        $region28: #{_lambda_.16} parent=11 // pred_fallthru
          _
        // Predicated region
        $region29: #{_lambda_.16} parent=11 // pred_check
          %p356 = pneg %p229
        $region30: #{_lambda_.16} parent=11 // pred_check_branch
          %358 = sbr.rel (%p356) target = $region32
        $region31: #{_lambda_.16} parent=11 // pred_region
          %360 = vsyncadd [#allocation5], 0
          %s361 = sshll.u32 %s8, 4
          %s362 = int_to_ptr.hbm [resolvable:$true] %s361
          %s363 = sshll.u32 [#allocation4], 4
          %s364 = int_to_ptr.vmem [resolvable:$true] %s363
          %369 = dma.hbm_to_vmem [thread:$0]  %s362, 8192, %s364, [#allocation5], 256, 256, 16
        $region32: #{_lambda_.16} parent=11 // pred_fallthru
          _
        // Predicated region
        $region33: #{_lambda_.16} parent=11 // pred_check
          %p370 = pneg %p250
        $region34: #{_lambda_.16} parent=11 // pred_check_branch
          %372 = sbr.rel (%p370) target = $region36
        $region35: #{_lambda_.16} parent=11 // pred_region
          _
        $region36: #{_lambda_.16} parent=11 // pred_fallthru
          _
        // Predicated region
        $region37: #{_lambda_.16} parent=11 // pred_check
          %p373 = pneg %p271
        $region38: #{_lambda_.16} parent=11 // pred_check_branch
          %375 = sbr.rel (%p373) target = $region40
        $region39: #{_lambda_.16} parent=11 // pred_region
          %377 = vsyncadd [#allocation5], 0
          %s378 = sshll.u32 %s10, 4
          %s379 = int_to_ptr.hbm [resolvable:$true] %s378
          %s380 = sshll.u32 [#allocation6], 4
          %s381 = int_to_ptr.vmem [resolvable:$true] %s380
          %386 = dma.hbm_to_vmem [thread:$0]  %s379, 4096, %s381, [#allocation5], 128, 128, 8
        $region40: #{_lambda_.16} parent=11 // pred_fallthru
          _
        // Predicated region
        $region41: #{_lambda_.16} parent=11 // pred_check
          %p387 = pneg %p292
        $region42: #{_lambda_.16} parent=11 // pred_check_branch
          %389 = sbr.rel (%p387) target = $region44
        $region43: #{_lambda_.16} parent=11 // pred_region
          _
        $region44: #{_lambda_.16} parent=11 // pred_fallthru
          _
      $region12: #{_lambda_.16} parent=5 // pred_fallthru
        _
      %p390 = scmp.lt.s32.totalorder %s20, 2
      // Predicated region
      $region45: #{_lambda_.16} parent=5 // pred_check
        %p391 = pneg %p390
      $region46: #{_lambda_.16} parent=5 // pred_check_branch
        %393 = sbr.rel (%p391) target = $region48
      $region47: #{_lambda_.16} parent=5 // pred_region
        // Predicated region
        $region49: #{_lambda_.16} parent=47 // pred_check
          %p394 = pneg %p40
        $region50: #{_lambda_.16} parent=47 // pred_check_branch
          %396 = sbr.rel (%p394) target = $region52
        $region51: #{_lambda_.16} parent=47 // pred_region
          %p397 = scmp.lt.s32.totalorder %s20, 1
          %s398 = scalar_select %p397, %s20, 1
          %s399 = smul.addr %s398, 2
          %s400 = smul.addr %s399, 4
          %s401 = scalar_lea.vmem %s0, %s400
        $region52: #{_lambda_.16} parent=47 // pred_fallthru
          _
        // Predicated region
        $region53: #{_lambda_.16} parent=47 // pred_check
          %p402 = pneg %p66
        $region54: #{_lambda_.16} parent=47 // pred_check_branch
          %404 = sbr.rel (%p402) target = $region56
        $region55: #{_lambda_.16} parent=47 // pred_region
          %p405 = scmp.lt.s32.totalorder %s20, 1
          %s406 = scalar_select %p405, %s20, 1
          %s407 = smul.addr %s406, 2
          %s408 = smul.addr %s407, 4
          %s409 = scalar_lea.vmem %s1, %s408
        $region56: #{_lambda_.16} parent=47 // pred_fallthru
          _
        // Predicated region
        $region57: #{_lambda_.16} parent=47 // pred_check
          %p410 = pneg %p92
        $region58: #{_lambda_.16} parent=47 // pred_check_branch
          %412 = sbr.rel (%p410) target = $region60
        $region59: #{_lambda_.16} parent=47 // pred_region
          %p413 = scmp.lt.s32.totalorder %s20, 1
          %s414 = scalar_select %p413, %s20, 1
          %s415 = smul.addr %s414, 8
          %s416 = scalar_lea.vmem %s2, %s415
        $region60: #{_lambda_.16} parent=47 // pred_fallthru
          _
        // Predicated region
        $region61: #{_lambda_.16} parent=47 // pred_check
          %p417 = pneg %p118
        $region62: #{_lambda_.16} parent=47 // pred_check_branch
          %419 = sbr.rel (%p417) target = $region64
        $region63: #{_lambda_.16} parent=47 // pred_region
          %p420 = scmp.lt.s32.totalorder %s20, 1
          %s421 = scalar_select %p420, %s20, 1
          %s422 = scalar_lea.vmem %s3, %s421
        $region64: #{_lambda_.16} parent=47 // pred_fallthru
          _
      $region48: #{_lambda_.16} parent=5 // pred_fallthru
        _
      %p423 = scmp.le.s32.totalorder 1, %s20
      %p424 = scmp.lt.s32.totalorder %s20, 3
      %p425 = pnand %p423, %p424
      %p426 = pneg %p425
      // Predicated region
      $region65: #{_lambda_.16} parent=5 // pred_check
        _
      $region66: #{_lambda_.16} parent=5 // pred_check_branch
        %428 = sbr.rel (%p425) target = $region68
      $region67: #{_lambda_.16} parent=5 // pred_region
        %s429 = ssub.s32 %s20, 1
        // Predicated region
        $region69: #{_lambda_.16} parent=67 // pred_check
          %p430 = pneg %p187
        $region70: #{_lambda_.16} parent=67 // pred_check_branch
          %432 = sbr.rel (%p430) target = $region72
        $region71: #{_lambda_.16} parent=67 // pred_region
          %434 = dma.done [#allocation3], 4096
        $region72: #{_lambda_.16} parent=67 // pred_fallthru
          _
        // Predicated region
        $region73: #{_lambda_.16} parent=67 // pred_check
          %p435 = pneg %p229
        $region74: #{_lambda_.16} parent=67 // pred_check_branch
          %437 = sbr.rel (%p435) target = $region76
        $region75: #{_lambda_.16} parent=67 // pred_region
          %439 = dma.done [#allocation5], 8192
        $region76: #{_lambda_.16} parent=67 // pred_fallthru
          _
        // Predicated region
        $region77: #{_lambda_.16} parent=67 // pred_check
          %p440 = pneg %p271
        $region78: #{_lambda_.16} parent=67 // pred_check_branch
          %442 = sbr.rel (%p440) target = $region80
        $region79: #{_lambda_.16} parent=67 // pred_region
          %444 = dma.done [#allocation5], 4096
        $region80: #{_lambda_.16} parent=67 // pred_fallthru
          _
        %p445 = scmp.lt.s32.totalorder %s25, 1
        %s446 = scalar_select %p445, %s25, 1
        %s447 = smul.addr %s446, 2
        %s448 = smul.addr %s447, 4
        %s449 = scalar_lea.vmem %s0, %s448
        %p450 = pneg %p46
        %p451 = pneg %p43
        %p452 = scmp.lt.s32.totalorder %s25, 1
        %s453 = scalar_select %p452, %s25, 1
        %s454 = smul.addr %s453, 2
        %s455 = smul.addr %s454, 4
        %s456 = scalar_lea.vmem %s1, %s455
        %p457 = pneg %p72
        %p458 = pneg %p69
        %p459 = scmp.lt.s32.totalorder %s25, 1
        %s460 = scalar_select %p459, %s25, 1
        %s461 = smul.addr %s460, 8
        %s462 = scalar_lea.vmem %s2, %s461
        %p463 = pneg %p98
        %p464 = pneg %p95
        %p465 = scmp.lt.s32.totalorder %s25, 1
        %s466 = scalar_select %p465, %s25, 1
        %s467 = scalar_lea.vmem %s3, %s466
        %p468 = pneg %p124
        %p469 = pneg %p121
        %p470 = pneg %p145
        %p471 = pneg %p142
        %p472 = pneg %p166
        %p473 = pneg %p163
        %p474 = pneg %p187
        %p475 = pneg %p184
        %p476 = pneg %p208
        %p477 = pneg %p205
        %p478 = pneg %p229
        %p479 = pneg %p226
        %p480 = pneg %p250
        %p481 = pneg %p247
        %p482 = pneg %p271
        %p483 = pneg %p268
        %p484 = pneg %p292
        %p485 = pneg %p289
        %p486 = pneg %p318
        %p487 = pneg %p315
        %p488 = scmp.lt.s32.totalorder %s25, 1
        %s489 = scalar_select %p488, %s25, 1
        %s490 = smul.addr %s489, 2
        %s491 = smul.addr %s490, 4
        %s492 = scalar_lea.vmem %s12, %s491
        %p493 = scmp.lt.s32.totalorder %s25, 1
        %s494 = scalar_select %p493, %s25, 1
        %s495 = smul.addr %s494, 2
        %s496 = smul.addr %s495, 4
        %s497 = scalar_lea.vmem %s0, %s496
        %p498 = scmp.lt.s32.totalorder %s25, 1
        %s499 = scalar_select %p498, %s25, 1
        %s500 = smul.addr %s499, 2
        %s501 = smul.addr %s500, 4
        %s502 = scalar_lea.vmem %s1, %s501
        %p503 = scmp.lt.s32.totalorder %s25, 1
        %s504 = scalar_select %p503, %s25, 1
        %s505 = smul.addr %s504, 8
        %s506 = scalar_lea.vmem %s2, %s505
        %p507 = scmp.lt.s32.totalorder %s25, 1
        %s508 = scalar_select %p507, %s25, 1
        %s509 = scalar_lea.vmem %s3, %s508
        %p510 = scmp.lt.s32.totalorder %s25, 1
        %s511 = scalar_select %p510, %s25, 1
        %s512 = smul.addr %s511, 2
        %s513 = smul.addr %s512, 4
        %s514 = scalar_lea.vmem %s12, %s513
        %v516 = vld [vmem:[%s497] sm:$0xff]
        %v517 = vunpack.c.l.bf16 %v516
        %v518 = vunpack.c.h.bf16 %v516
        %v519 = vld [vmem:[%s4] sm:$0x3]
        %v520 = vld [vmem:[%s5] sm:$0x3]
        %v521 = vadd.f32 %v517, %v518
        %522 = vadd.xlane.f32.xlu0 %v521
        %v523 = vpop.xlane.xlu0 %522
        %v524 = vrcp.pop 256.0
        %v525 = vmul.f32 256.0, %v524
        %v526 = vsub.f32 1.0, %v525
        %v527 = vmul.f32 %v524, %v526
        %v528 = vadd.f32 %v524, %v527
        %vm529 = vweird.f32 %v524
        %v530 = vsel %vm529, %v524, %v528
        %v531 = vmul.f32 %v523, %v530
        %v532 = vsub.f32 %v517, %v531
        %v533 = vsub.f32 %v518, %v531
        %v534 = vmul.f32 %v532, %v532
        %v535 = vmul.f32 %v533, %v533
        %v536 = vadd.f32 %v534, %v535
        %537 = vadd.xlane.f32.xlu0 %v536
        %v538 = vpop.xlane.xlu0 %537
        %v539 = vmul.f32 %v538, %v530
        %v540 = vadd.f32 %v539, 1e-05
        %v541 = vrsqrt.pop %v540
        %v542 = vmul.f32 %v541, %v540
        %v543 = vmul.f32 %v542, %v541
        %v544 = vmul.f32 0.5, %v543
        %v545 = vsub.f32 1.5, %v544
        %v546 = vmul.f32 %v541, %v545
        %vm547 = vweird.f32 %v540
        %vm548 = vweird.f32 %v541
        %vm549 = vmor %vm547, %vm548
        %v550 = vsel %vm549, %v541, %v546
        %v551 = vmul.f32 %v532, %v550
        %v552 = vmul.f32 %v533, %v550
        %v554 = vperm.slane %v519, 0
        %v555 = vperm.slane %v519, 1
        %v558 = vmul.f32 %v551, %v554
        %v559 = vmul.f32 %v552, %v555
        %v561 = vperm.slane %v520, 0
        %v562 = vperm.slane %v520, 1
        %v565 = vadd.f32 %v558, %v561
        %v566 = vadd.f32 %v559, %v562
        %v567 = vpack.c.bf16 %v565, %v565
        %v568 = vpack.c.bf16 %v566, %v566
        %v569 = vld [vmem:[#allocation2] sm:$0xff]
        %v570 = vld [vmem:[#allocation2 + $0x8] sm:$0xff]
        %v571 = vld [vmem:[#allocation2 + $0x10] sm:$0xff]
        %v572 = vld [vmem:[#allocation2 + $0x18] sm:$0xff]
        %v573 = vld [vmem:[#allocation2 + $0x20] sm:$0xff]
        %v574 = vld [vmem:[#allocation2 + $0x28] sm:$0xff]
        %v575 = vld [vmem:[#allocation2 + $0x30] sm:$0xff]
        %v576 = vld [vmem:[#allocation2 + $0x38] sm:$0xff]
        %v577 = vld [vmem:[#allocation2 + $0x40] sm:$0xff]
        %v578 = vld [vmem:[#allocation2 + $0x48] sm:$0xff]
        %v579 = vld [vmem:[#allocation2 + $0x50] sm:$0xff]
        %v580 = vld [vmem:[#allocation2 + $0x58] sm:$0xff]
        %v581 = vld [vmem:[#allocation2 + $0x60] sm:$0xff]
        %v582 = vld [vmem:[#allocation2 + $0x68] sm:$0xff]
        %v583 = vld [vmem:[#allocation2 + $0x70] sm:$0xff]
        %v584 = vld [vmem:[#allocation2 + $0x78] sm:$0xff]
        %v585 = vld [vmem:[#allocation2 + $0x80] sm:$0xff]
        %v586 = vld [vmem:[#allocation2 + $0x88] sm:$0xff]
        %v587 = vld [vmem:[#allocation2 + $0x90] sm:$0xff]
        %v588 = vld [vmem:[#allocation2 + $0x98] sm:$0xff]
        %v589 = vld [vmem:[#allocation2 + $0xa0] sm:$0xff]
        %v590 = vld [vmem:[#allocation2 + $0xa8] sm:$0xff]
        %v591 = vld [vmem:[#allocation2 + $0xb0] sm:$0xff]
        %v592 = vld [vmem:[#allocation2 + $0xb8] sm:$0xff]
        %v593 = vld [vmem:[#allocation2 + $0xc0] sm:$0xff]
        %v594 = vld [vmem:[#allocation2 + $0xc8] sm:$0xff]
        %v595 = vld [vmem:[#allocation2 + $0xd0] sm:$0xff]
        %v596 = vld [vmem:[#allocation2 + $0xd8] sm:$0xff]
        %v597 = vld [vmem:[#allocation2 + $0xe0] sm:$0xff]
        %v598 = vld [vmem:[#allocation2 + $0xe8] sm:$0xff]
        %v599 = vld [vmem:[#allocation2 + $0xf0] sm:$0xff]
        %v600 = vld [vmem:[#allocation2 + $0xf8] sm:$0xff]
        %v601 = vld [vmem:[%s7] sm:$0x3]
        %v603 = vperm.slane %v601, 0
        %v604 = vperm.slane %v601, 1
        %v639 = vunpack.c.l.b16 %v569
        %v640 = vunpack.c.h.b16 %v569
        %v641 = vunpack.c.l.b16 %v570
        %v642 = vunpack.c.h.b16 %v570
        %v643 = vunpack.c.l.b16 %v571
        %v644 = vunpack.c.h.b16 %v571
        %v645 = vunpack.c.l.b16 %v572
        %v646 = vunpack.c.h.b16 %v572
        %v647 = vunpack.c.l.b16 %v573
        %v648 = vunpack.c.h.b16 %v573
        %v649 = vunpack.c.l.b16 %v574
        %v650 = vunpack.c.h.b16 %v574
        %v651 = vunpack.c.l.b16 %v575
        %v652 = vunpack.c.h.b16 %v575
        %v653 = vunpack.c.l.b16 %v576
        %v654 = vunpack.c.h.b16 %v576
        %v655 = vunpack.c.l.b16 %v577
        %v656 = vunpack.c.h.b16 %v577
        %v657 = vunpack.c.l.b16 %v578
        %v658 = vunpack.c.h.b16 %v578
        %v659 = vunpack.c.l.b16 %v579
        %v660 = vunpack.c.h.b16 %v579
        %v661 = vunpack.c.l.b16 %v580
        %v662 = vunpack.c.h.b16 %v580
        %v663 = vunpack.c.l.b16 %v581
        %v664 = vunpack.c.h.b16 %v581
        %v665 = vunpack.c.l.b16 %v582
        %v666 = vunpack.c.h.b16 %v582
        %v667 = vunpack.c.l.b16 %v583
        %v668 = vunpack.c.h.b16 %v583
        %v669 = vunpack.c.l.b16 %v584
        %v670 = vunpack.c.h.b16 %v584
        %v671 = vunpack.c.l.b16 %v585
        %v672 = vunpack.c.h.b16 %v585
        %v673 = vunpack.c.l.b16 %v586
        %v674 = vunpack.c.h.b16 %v586
        %v675 = vunpack.c.l.b16 %v587
        %v676 = vunpack.c.h.b16 %v587
        %v677 = vunpack.c.l.b16 %v588
        %v678 = vunpack.c.h.b16 %v588
        %v679 = vunpack.c.l.b16 %v589
        %v680 = vunpack.c.h.b16 %v589
        %v681 = vunpack.c.l.b16 %v590
        %v682 = vunpack.c.h.b16 %v590
        %v683 = vunpack.c.l.b16 %v591
        %v684 = vunpack.c.h.b16 %v591
        %v685 = vunpack.c.l.b16 %v592
        %v686 = vunpack.c.h.b16 %v592
        %v687 = vunpack.c.l.b16 %v593
        %v688 = vunpack.c.h.b16 %v593
        %v689 = vunpack.c.l.b16 %v594
        %v690 = vunpack.c.h.b16 %v594
        %v691 = vunpack.c.l.b16 %v595
        %v692 = vunpack.c.h.b16 %v595
        %v693 = vunpack.c.l.b16 %v596
        %v694 = vunpack.c.h.b16 %v596
        %v695 = vunpack.c.l.b16 %v597
        %v696 = vunpack.c.h.b16 %v597
        %v697 = vunpack.c.l.b16 %v598
        %v698 = vunpack.c.h.b16 %v598
        %v699 = vunpack.c.l.b16 %v599
        %v700 = vunpack.c.h.b16 %v599
        %v701 = vunpack.c.l.b16 %v600
        %v702 = vunpack.c.h.b16 %v600
        %v703 = vpack.c.b16 %v641, %v639
        %v704 = vpack.c.b16 %v642, %v640
        %v705 = vpack.c.b16 %v645, %v643
        %v706 = vpack.c.b16 %v646, %v644
        %v707 = vpack.c.b16 %v649, %v647
        %v708 = vpack.c.b16 %v650, %v648
        %v709 = vpack.c.b16 %v653, %v651
        %v710 = vpack.c.b16 %v654, %v652
        %v711 = vpack.c.b16 %v657, %v655
        %v712 = vpack.c.b16 %v658, %v656
        %v713 = vpack.c.b16 %v661, %v659
        %v714 = vpack.c.b16 %v662, %v660
        %v715 = vpack.c.b16 %v665, %v663
        %v716 = vpack.c.b16 %v666, %v664
        %v717 = vpack.c.b16 %v669, %v667
        %v718 = vpack.c.b16 %v670, %v668
        %v719 = vpack.c.b16 %v673, %v671
        %v720 = vpack.c.b16 %v674, %v672
        %v721 = vpack.c.b16 %v677, %v675
        %v722 = vpack.c.b16 %v678, %v676
        %v723 = vpack.c.b16 %v681, %v679
        %v724 = vpack.c.b16 %v682, %v680
        %v725 = vpack.c.b16 %v685, %v683
        %v726 = vpack.c.b16 %v686, %v684
        %v727 = vpack.c.b16 %v689, %v687
        %v728 = vpack.c.b16 %v690, %v688
        %v729 = vpack.c.b16 %v693, %v691
        %v730 = vpack.c.b16 %v694, %v692
        %v731 = vpack.c.b16 %v697, %v695
        %v732 = vpack.c.b16 %v698, %v696
        %v733 = vpack.c.b16 %v701, %v699
        %v734 = vpack.c.b16 %v702, %v700
        %767 = vmatpush.bf16.msra.mxu0 %v717
        %768 = vmatpush.bf16.msra.mxu0 %v715
        %769 = vmatpush.bf16.msra.mxu0 %v713
        %770 = vmatpush.bf16.msra.mxu0 %v711
        %771 = vmatpush.bf16.msra.mxu0 %v709
        %772 = vmatpush.bf16.msra.mxu0 %v707
        %773 = vmatpush.bf16.msra.mxu0 %v705
        %774 = vmatpush.bf16.msra.mxu0 %v703
        %775 = vmatmul.bf16.gmra.mxu0 %v567
        %v776 = vpop.f32.mrf.mxu0
        %v777 = vadd.f32 %v603, %v776
        %v778 = vpop.f32.mrf.mxu0
        %779 = vdwg.mxu0
        %780 = vmatpush.bf16.msra.mxu0 %v733
        %781 = vmatpush.bf16.msra.mxu0 %v731
        %782 = vmatpush.bf16.msra.mxu0 %v729
        %783 = vmatpush.bf16.msra.mxu0 %v727
        %784 = vmatpush.bf16.msra.mxu0 %v725
        %785 = vmatpush.bf16.msra.mxu0 %v723
        %786 = vmatpush.bf16.msra.mxu0 %v721
        %787 = vmatpush.bf16.msra.mxu0 %v719
        %788 = vmatmul.bf16.gmra.mxu0 %v568
        %v789 = vpop.f32.mrf.mxu0
        %v790 = vadd.f32 %v777, %v789
        %v791 = vpop.f32.mrf.mxu0
        %792 = vdwg.mxu0
        %793 = vmatpush.bf16.msra.mxu0 %v718
        %794 = vmatpush.bf16.msra.mxu0 %v716
        %795 = vmatpush.bf16.msra.mxu0 %v714
        %796 = vmatpush.bf16.msra.mxu0 %v712
        %797 = vmatpush.bf16.msra.mxu0 %v710
        %798 = vmatpush.bf16.msra.mxu0 %v708
        %799 = vmatpush.bf16.msra.mxu0 %v706
        %800 = vmatpush.bf16.msra.mxu0 %v704
        %801 = vmatmul.bf16.gmra.mxu0 %v567
        %v802 = vpop.f32.mrf.mxu0
        %v803 = vadd.f32 %v604, %v802
        %v804 = vpop.f32.mrf.mxu0
        %805 = vdwg.mxu0
        %806 = vmatpush.bf16.msra.mxu0 %v734
        %807 = vmatpush.bf16.msra.mxu0 %v732
        %808 = vmatpush.bf16.msra.mxu0 %v730
        %809 = vmatpush.bf16.msra.mxu0 %v728
        %810 = vmatpush.bf16.msra.mxu0 %v726
        %811 = vmatpush.bf16.msra.mxu0 %v724
        %812 = vmatpush.bf16.msra.mxu0 %v722
        %813 = vmatpush.bf16.msra.mxu0 %v720
        %814 = vmatmul.bf16.gmra.mxu0 %v568
        %v815 = vpop.f32.mrf.mxu0
        %v816 = vadd.f32 %v803, %v815
        %v817 = vpop.f32.mrf.mxu0
        %818 = vdwg.mxu0
        %v819 = vld [vmem:[%s502] sm:$0xff]
        %v820 = vld [vmem:[#allocation4] sm:$0xff]
        %v821 = vld [vmem:[#allocation4 + $0x8] sm:$0xff]
        %v822 = vld [vmem:[#allocation4 + $0x10] sm:$0xff]
        %v823 = vld [vmem:[#allocation4 + $0x18] sm:$0xff]
        %v824 = vld [vmem:[#allocation4 + $0x20] sm:$0xff]
        %v825 = vld [vmem:[#allocation4 + $0x28] sm:$0xff]
        %v826 = vld [vmem:[#allocation4 + $0x30] sm:$0xff]
        %v827 = vld [vmem:[#allocation4 + $0x38] sm:$0xff]
        %v828 = vld [vmem:[#allocation4 + $0x40] sm:$0xff]
        %v829 = vld [vmem:[#allocation4 + $0x48] sm:$0xff]
        %v830 = vld [vmem:[#allocation4 + $0x50] sm:$0xff]
        %v831 = vld [vmem:[#allocation4 + $0x58] sm:$0xff]
        %v832 = vld [vmem:[#allocation4 + $0x60] sm:$0xff]
        %v833 = vld [vmem:[#allocation4 + $0x68] sm:$0xff]
        %v834 = vld [vmem:[#allocation4 + $0x70] sm:$0xff]
        %v835 = vld [vmem:[#allocation4 + $0x78] sm:$0xff]
        %v836 = vld [vmem:[#allocation4 + $0x80] sm:$0xff]
        %v837 = vld [vmem:[#allocation4 + $0x88] sm:$0xff]
        %v838 = vld [vmem:[#allocation4 + $0x90] sm:$0xff]
        %v839 = vld [vmem:[#allocation4 + $0x98] sm:$0xff]
        %v840 = vld [vmem:[#allocation4 + $0xa0] sm:$0xff]
        %v841 = vld [vmem:[#allocation4 + $0xa8] sm:$0xff]
        %v842 = vld [vmem:[#allocation4 + $0xb0] sm:$0xff]
        %v843 = vld [vmem:[#allocation4 + $0xb8] sm:$0xff]
        %v844 = vld [vmem:[#allocation4 + $0xc0] sm:$0xff]
        %v845 = vld [vmem:[#allocation4 + $0xc8] sm:$0xff]
        %v846 = vld [vmem:[#allocation4 + $0xd0] sm:$0xff]
        %v847 = vld [vmem:[#allocation4 + $0xd8] sm:$0xff]
        %v848 = vld [vmem:[#allocation4 + $0xe0] sm:$0xff]
        %v849 = vld [vmem:[#allocation4 + $0xe8] sm:$0xff]
        %v850 = vld [vmem:[#allocation4 + $0xf0] sm:$0xff]
        %v851 = vld [vmem:[#allocation4 + $0xf8] sm:$0xff]
        %v852 = vld [vmem:[#allocation4 + $0x100] sm:$0xff]
        %v853 = vld [vmem:[#allocation4 + $0x108] sm:$0xff]
        %v854 = vld [vmem:[#allocation4 + $0x110] sm:$0xff]
        %v855 = vld [vmem:[#allocation4 + $0x118] sm:$0xff]
        %v856 = vld [vmem:[#allocation4 + $0x120] sm:$0xff]
        %v857 = vld [vmem:[#allocation4 + $0x128] sm:$0xff]
        %v858 = vld [vmem:[#allocation4 + $0x130] sm:$0xff]
        %v859 = vld [vmem:[#allocation4 + $0x138] sm:$0xff]
        %v860 = vld [vmem:[#allocation4 + $0x140] sm:$0xff]
        %v861 = vld [vmem:[#allocation4 + $0x148] sm:$0xff]
        %v862 = vld [vmem:[#allocation4 + $0x150] sm:$0xff]
        %v863 = vld [vmem:[#allocation4 + $0x158] sm:$0xff]
        %v864 = vld [vmem:[#allocation4 + $0x160] sm:$0xff]
        %v865 = vld [vmem:[#allocation4 + $0x168] sm:$0xff]
        %v866 = vld [vmem:[#allocation4 + $0x170] sm:$0xff]
        %v867 = vld [vmem:[#allocation4 + $0x178] sm:$0xff]
        %v868 = vld [vmem:[#allocation4 + $0x180] sm:$0xff]
        %v869 = vld [vmem:[#allocation4 + $0x188] sm:$0xff]
        %v870 = vld [vmem:[#allocation4 + $0x190] sm:$0xff]
        %v871 = vld [vmem:[#allocation4 + $0x198] sm:$0xff]
        %v872 = vld [vmem:[#allocation4 + $0x1a0] sm:$0xff]
        %v873 = vld [vmem:[#allocation4 + $0x1a8] sm:$0xff]
        %v874 = vld [vmem:[#allocation4 + $0x1b0] sm:$0xff]
        %v875 = vld [vmem:[#allocation4 + $0x1b8] sm:$0xff]
        %v876 = vld [vmem:[#allocation4 + $0x1c0] sm:$0xff]
        %v877 = vld [vmem:[#allocation4 + $0x1c8] sm:$0xff]
        %v878 = vld [vmem:[#allocation4 + $0x1d0] sm:$0xff]
        %v879 = vld [vmem:[#allocation4 + $0x1d8] sm:$0xff]
        %v880 = vld [vmem:[#allocation4 + $0x1e0] sm:$0xff]
        %v881 = vld [vmem:[#allocation4 + $0x1e8] sm:$0xff]
        %v882 = vld [vmem:[#allocation4 + $0x1f0] sm:$0xff]
        %v883 = vld [vmem:[#allocation4 + $0x1f8] sm:$0xff]
        %v884 = vld [vmem:[%s9] sm:$0xf]
        %v886 = vperm.slane %v884, 0
        %v887 = vperm.slane %v884, 1
        %v888 = vperm.slane %v884, 2
        %v889 = vperm.slane %v884, 3
        %v895 = vunpack.c.l.b16 %v819
        %v896 = vunpack.c.h.b16 %v819
        %v897 = vpack.c.b16 %v895, %v895
        %v898 = vpack.c.b16 %v896, %v896
        %v965 = vunpack.c.l.b16 %v820
        %v966 = vunpack.c.h.b16 %v820
        %v967 = vunpack.c.l.b16 %v821
        %v968 = vunpack.c.h.b16 %v821
        %v969 = vunpack.c.l.b16 %v822
        %v970 = vunpack.c.h.b16 %v822
        %v971 = vunpack.c.l.b16 %v823
        %v972 = vunpack.c.h.b16 %v823
        %v973 = vunpack.c.l.b16 %v824
        %v974 = vunpack.c.h.b16 %v824
        %v975 = vunpack.c.l.b16 %v825
        %v976 = vunpack.c.h.b16 %v825
        %v977 = vunpack.c.l.b16 %v826
        %v978 = vunpack.c.h.b16 %v826
        %v979 = vunpack.c.l.b16 %v827
        %v980 = vunpack.c.h.b16 %v827
        %v981 = vunpack.c.l.b16 %v828
        %v982 = vunpack.c.h.b16 %v828
        %v983 = vunpack.c.l.b16 %v829
        %v984 = vunpack.c.h.b16 %v829
        %v985 = vunpack.c.l.b16 %v830
        %v986 = vunpack.c.h.b16 %v830
        %v987 = vunpack.c.l.b16 %v831
        %v988 = vunpack.c.h.b16 %v831
        %v989 = vunpack.c.l.b16 %v832
        %v990 = vunpack.c.h.b16 %v832
        %v991 = vunpack.c.l.b16 %v833
        %v992 = vunpack.c.h.b16 %v833
        %v993 = vunpack.c.l.b16 %v834
        %v994 = vunpack.c.h.b16 %v834
        %v995 = vunpack.c.l.b16 %v835
        %v996 = vunpack.c.h.b16 %v835
        %v997 = vunpack.c.l.b16 %v836
        %v998 = vunpack.c.h.b16 %v836
        %v999 = vunpack.c.l.b16 %v837
        %v1000 = vunpack.c.h.b16 %v837
        %v1001 = vunpack.c.l.b16 %v838
        %v1002 = vunpack.c.h.b16 %v838
        %v1003 = vunpack.c.l.b16 %v839
        %v1004 = vunpack.c.h.b16 %v839
        %v1005 = vunpack.c.l.b16 %v840
        %v1006 = vunpack.c.h.b16 %v840
        %v1007 = vunpack.c.l.b16 %v841
        %v1008 = vunpack.c.h.b16 %v841
        %v1009 = vunpack.c.l.b16 %v842
        %v1010 = vunpack.c.h.b16 %v842
        %v1011 = vunpack.c.l.b16 %v843
        %v1012 = vunpack.c.h.b16 %v843
        %v1013 = vunpack.c.l.b16 %v844
        %v1014 = vunpack.c.h.b16 %v844
        %v1015 = vunpack.c.l.b16 %v845
        %v1016 = vunpack.c.h.b16 %v845
        %v1017 = vunpack.c.l.b16 %v846
        %v1018 = vunpack.c.h.b16 %v846
        %v1019 = vunpack.c.l.b16 %v847
        %v1020 = vunpack.c.h.b16 %v847
        %v1021 = vunpack.c.l.b16 %v848
        %v1022 = vunpack.c.h.b16 %v848
        %v1023 = vunpack.c.l.b16 %v849
        %v1024 = vunpack.c.h.b16 %v849
        %v1025 = vunpack.c.l.b16 %v850
        %v1026 = vunpack.c.h.b16 %v850
        %v1027 = vunpack.c.l.b16 %v851
        %v1028 = vunpack.c.h.b16 %v851
        %v1029 = vunpack.c.l.b16 %v852
        %v1030 = vunpack.c.h.b16 %v852
        %v1031 = vunpack.c.l.b16 %v853
        %v1032 = vunpack.c.h.b16 %v853
        %v1033 = vunpack.c.l.b16 %v854
        %v1034 = vunpack.c.h.b16 %v854
        %v1035 = vunpack.c.l.b16 %v855
        %v1036 = vunpack.c.h.b16 %v855
        %v1037 = vunpack.c.l.b16 %v856
        %v1038 = vunpack.c.h.b16 %v856
        %v1039 = vunpack.c.l.b16 %v857
        %v1040 = vunpack.c.h.b16 %v857
        %v1041 = vunpack.c.l.b16 %v858
        %v1042 = vunpack.c.h.b16 %v858
        %v1043 = vunpack.c.l.b16 %v859
        %v1044 = vunpack.c.h.b16 %v859
        %v1045 = vunpack.c.l.b16 %v860
        %v1046 = vunpack.c.h.b16 %v860
        %v1047 = vunpack.c.l.b16 %v861
        %v1048 = vunpack.c.h.b16 %v861
        %v1049 = vunpack.c.l.b16 %v862
        %v1050 = vunpack.c.h.b16 %v862
        %v1051 = vunpack.c.l.b16 %v863
        %v1052 = vunpack.c.h.b16 %v863
        %v1053 = vunpack.c.l.b16 %v864
        %v1054 = vunpack.c.h.b16 %v864
        %v1055 = vunpack.c.l.b16 %v865
        %v1056 = vunpack.c.h.b16 %v865
        %v1057 = vunpack.c.l.b16 %v866
        %v1058 = vunpack.c.h.b16 %v866
        %v1059 = vunpack.c.l.b16 %v867
        %v1060 = vunpack.c.h.b16 %v867
        %v1061 = vunpack.c.l.b16 %v868
        %v1062 = vunpack.c.h.b16 %v868
        %v1063 = vunpack.c.l.b16 %v869
        %v1064 = vunpack.c.h.b16 %v869
        %v1065 = vunpack.c.l.b16 %v870
        %v1066 = vunpack.c.h.b16 %v870
        %v1067 = vunpack.c.l.b16 %v871
        %v1068 = vunpack.c.h.b16 %v871
        %v1069 = vunpack.c.l.b16 %v872
        %v1070 = vunpack.c.h.b16 %v872
        %v1071 = vunpack.c.l.b16 %v873
        %v1072 = vunpack.c.h.b16 %v873
        %v1073 = vunpack.c.l.b16 %v874
        %v1074 = vunpack.c.h.b16 %v874
        %v1075 = vunpack.c.l.b16 %v875
        %v1076 = vunpack.c.h.b16 %v875
        %v1077 = vunpack.c.l.b16 %v876
        %v1078 = vunpack.c.h.b16 %v876
        %v1079 = vunpack.c.l.b16 %v877
        %v1080 = vunpack.c.h.b16 %v877
        %v1081 = vunpack.c.l.b16 %v878
        %v1082 = vunpack.c.h.b16 %v878
        %v1083 = vunpack.c.l.b16 %v879
        %v1084 = vunpack.c.h.b16 %v879
        %v1085 = vunpack.c.l.b16 %v880
        %v1086 = vunpack.c.h.b16 %v880
        %v1087 = vunpack.c.l.b16 %v881
        %v1088 = vunpack.c.h.b16 %v881
        %v1089 = vunpack.c.l.b16 %v882
        %v1090 = vunpack.c.h.b16 %v882
        %v1091 = vunpack.c.l.b16 %v883
        %v1092 = vunpack.c.h.b16 %v883
        %v1093 = vpack.c.b16 %v969, %v965
        %v1094 = vpack.c.b16 %v970, %v966
        %v1095 = vpack.c.b16 %v971, %v967
        %v1096 = vpack.c.b16 %v972, %v968
        %v1097 = vpack.c.b16 %v977, %v973
        %v1098 = vpack.c.b16 %v978, %v974
        %v1099 = vpack.c.b16 %v979, %v975
        %v1100 = vpack.c.b16 %v980, %v976
        %v1101 = vpack.c.b16 %v985, %v981
        %v1102 = vpack.c.b16 %v986, %v982
        %v1103 = vpack.c.b16 %v987, %v983
        %v1104 = vpack.c.b16 %v988, %v984
        %v1105 = vpack.c.b16 %v993, %v989
        %v1106 = vpack.c.b16 %v994, %v990
        %v1107 = vpack.c.b16 %v995, %v991
        %v1108 = vpack.c.b16 %v996, %v992
        %v1109 = vpack.c.b16 %v1001, %v997
        %v1110 = vpack.c.b16 %v1002, %v998
        %v1111 = vpack.c.b16 %v1003, %v999
        %v1112 = vpack.c.b16 %v1004, %v1000
        %v1113 = vpack.c.b16 %v1009, %v1005
        %v1114 = vpack.c.b16 %v1010, %v1006
        %v1115 = vpack.c.b16 %v1011, %v1007
        %v1116 = vpack.c.b16 %v1012, %v1008
        %v1117 = vpack.c.b16 %v1017, %v1013
        %v1118 = vpack.c.b16 %v1018, %v1014
        %v1119 = vpack.c.b16 %v1019, %v1015
        %v1120 = vpack.c.b16 %v1020, %v1016
        %v1121 = vpack.c.b16 %v1025, %v1021
        %v1122 = vpack.c.b16 %v1026, %v1022
        %v1123 = vpack.c.b16 %v1027, %v1023
        %v1124 = vpack.c.b16 %v1028, %v1024
        %v1125 = vpack.c.b16 %v1033, %v1029
        %v1126 = vpack.c.b16 %v1034, %v1030
        %v1127 = vpack.c.b16 %v1035, %v1031
        %v1128 = vpack.c.b16 %v1036, %v1032
        %v1129 = vpack.c.b16 %v1041, %v1037
        %v1130 = vpack.c.b16 %v1042, %v1038
        %v1131 = vpack.c.b16 %v1043, %v1039
        %v1132 = vpack.c.b16 %v1044, %v1040
        %v1133 = vpack.c.b16 %v1049, %v1045
        %v1134 = vpack.c.b16 %v1050, %v1046
        %v1135 = vpack.c.b16 %v1051, %v1047
        %v1136 = vpack.c.b16 %v1052, %v1048
        %v1137 = vpack.c.b16 %v1057, %v1053
        %v1138 = vpack.c.b16 %v1058, %v1054
        %v1139 = vpack.c.b16 %v1059, %v1055
        %v1140 = vpack.c.b16 %v1060, %v1056
        %v1141 = vpack.c.b16 %v1065, %v1061
        %v1142 = vpack.c.b16 %v1066, %v1062
        %v1143 = vpack.c.b16 %v1067, %v1063
        %v1144 = vpack.c.b16 %v1068, %v1064
        %v1145 = vpack.c.b16 %v1073, %v1069
        %v1146 = vpack.c.b16 %v1074, %v1070
        %v1147 = vpack.c.b16 %v1075, %v1071
        %v1148 = vpack.c.b16 %v1076, %v1072
        %v1149 = vpack.c.b16 %v1081, %v1077
        %v1150 = vpack.c.b16 %v1082, %v1078
        %v1151 = vpack.c.b16 %v1083, %v1079
        %v1152 = vpack.c.b16 %v1084, %v1080
        %v1153 = vpack.c.b16 %v1089, %v1085
        %v1154 = vpack.c.b16 %v1090, %v1086
        %v1155 = vpack.c.b16 %v1091, %v1087
        %v1156 = vpack.c.b16 %v1092, %v1088
        %1221 = vmatpush.bf16.msra.mxu0 %v1121
        %1222 = vmatpush.bf16.msra.mxu0 %v1117
        %1223 = vmatpush.bf16.msra.mxu0 %v1113
        %1224 = vmatpush.bf16.msra.mxu0 %v1109
        %1225 = vmatpush.bf16.msra.mxu0 %v1105
        %1226 = vmatpush.bf16.msra.mxu0 %v1101
        %1227 = vmatpush.bf16.msra.mxu0 %v1097
        %1228 = vmatpush.bf16.msra.mxu0 %v1093
        %1229 = vmatmul.bf16.gmra.mxu0 %v897
        %v1230 = vpop.f32.mrf.mxu0
        %v1231 = vadd.f32 %v886, %v1230
        %v1232 = vpop.f32.mrf.mxu0
        %1233 = vdwg.mxu0
        %1234 = vmatpush.bf16.msra.mxu0 %v1153
        %1235 = vmatpush.bf16.msra.mxu0 %v1149
        %1236 = vmatpush.bf16.msra.mxu0 %v1145
        %1237 = vmatpush.bf16.msra.mxu0 %v1141
        %1238 = vmatpush.bf16.msra.mxu0 %v1137
        %1239 = vmatpush.bf16.msra.mxu0 %v1133
        %1240 = vmatpush.bf16.msra.mxu0 %v1129
        %1241 = vmatpush.bf16.msra.mxu0 %v1125
        %1242 = vmatmul.bf16.gmra.mxu0 %v898
        %v1243 = vpop.f32.mrf.mxu0
        %v1244 = vadd.f32 %v1231, %v1243
        %v1245 = vpop.f32.mrf.mxu0
        %1246 = vdwg.mxu0
        %1247 = vmatpush.bf16.msra.mxu0 %v1122
        %1248 = vmatpush.bf16.msra.mxu0 %v1118
        %1249 = vmatpush.bf16.msra.mxu0 %v1114
        %1250 = vmatpush.bf16.msra.mxu0 %v1110
        %1251 = vmatpush.bf16.msra.mxu0 %v1106
        %1252 = vmatpush.bf16.msra.mxu0 %v1102
        %1253 = vmatpush.bf16.msra.mxu0 %v1098
        %1254 = vmatpush.bf16.msra.mxu0 %v1094
        %1255 = vmatmul.bf16.gmra.mxu0 %v897
        %v1256 = vpop.f32.mrf.mxu0
        %v1257 = vadd.f32 %v887, %v1256
        %v1258 = vpop.f32.mrf.mxu0
        %1259 = vdwg.mxu0
        %1260 = vmatpush.bf16.msra.mxu0 %v1154
        %1261 = vmatpush.bf16.msra.mxu0 %v1150
        %1262 = vmatpush.bf16.msra.mxu0 %v1146
        %1263 = vmatpush.bf16.msra.mxu0 %v1142
        %1264 = vmatpush.bf16.msra.mxu0 %v1138
        %1265 = vmatpush.bf16.msra.mxu0 %v1134
        %1266 = vmatpush.bf16.msra.mxu0 %v1130
        %1267 = vmatpush.bf16.msra.mxu0 %v1126
        %1268 = vmatmul.bf16.gmra.mxu0 %v898
        %v1269 = vpop.f32.mrf.mxu0
        %v1270 = vadd.f32 %v1257, %v1269
        %v1271 = vpop.f32.mrf.mxu0
        %1272 = vdwg.mxu0
        %1273 = vmatpush.bf16.msra.mxu0 %v1123
        %1274 = vmatpush.bf16.msra.mxu0 %v1119
        %1275 = vmatpush.bf16.msra.mxu0 %v1115
        %1276 = vmatpush.bf16.msra.mxu0 %v1111
        %1277 = vmatpush.bf16.msra.mxu0 %v1107
        %1278 = vmatpush.bf16.msra.mxu0 %v1103
        %1279 = vmatpush.bf16.msra.mxu0 %v1099
        %1280 = vmatpush.bf16.msra.mxu0 %v1095
        %1281 = vmatmul.bf16.gmra.mxu0 %v897
        %v1282 = vpop.f32.mrf.mxu0
        %v1283 = vadd.f32 %v888, %v1282
        %v1284 = vpop.f32.mrf.mxu0
        %1285 = vdwg.mxu0
        %1286 = vmatpush.bf16.msra.mxu0 %v1155
        %1287 = vmatpush.bf16.msra.mxu0 %v1151
        %1288 = vmatpush.bf16.msra.mxu0 %v1147
        %1289 = vmatpush.bf16.msra.mxu0 %v1143
        %1290 = vmatpush.bf16.msra.mxu0 %v1139
        %1291 = vmatpush.bf16.msra.mxu0 %v1135
        %1292 = vmatpush.bf16.msra.mxu0 %v1131
        %1293 = vmatpush.bf16.msra.mxu0 %v1127
        %1294 = vmatmul.bf16.gmra.mxu0 %v898
        %v1295 = vpop.f32.mrf.mxu0
        %v1296 = vadd.f32 %v1283, %v1295
        %v1297 = vpop.f32.mrf.mxu0
        %1298 = vdwg.mxu0
        %1299 = vmatpush.bf16.msra.mxu0 %v1124
        %1300 = vmatpush.bf16.msra.mxu0 %v1120
        %1301 = vmatpush.bf16.msra.mxu0 %v1116
        %1302 = vmatpush.bf16.msra.mxu0 %v1112
        %1303 = vmatpush.bf16.msra.mxu0 %v1108
        %1304 = vmatpush.bf16.msra.mxu0 %v1104
        %1305 = vmatpush.bf16.msra.mxu0 %v1100
        %1306 = vmatpush.bf16.msra.mxu0 %v1096
        %1307 = vmatmul.bf16.gmra.mxu0 %v897
        %v1308 = vpop.f32.mrf.mxu0
        %v1309 = vadd.f32 %v889, %v1308
        %v1310 = vpop.f32.mrf.mxu0
        %1311 = vdwg.mxu0
        %1312 = vmatpush.bf16.msra.mxu0 %v1156
        %1313 = vmatpush.bf16.msra.mxu0 %v1152
        %1314 = vmatpush.bf16.msra.mxu0 %v1148
        %1315 = vmatpush.bf16.msra.mxu0 %v1144
        %1316 = vmatpush.bf16.msra.mxu0 %v1140
        %1317 = vmatpush.bf16.msra.mxu0 %v1136
        %1318 = vmatpush.bf16.msra.mxu0 %v1132
        %1319 = vmatpush.bf16.msra.mxu0 %v1128
        %1320 = vmatmul.bf16.gmra.mxu0 %v898
        %v1321 = vpop.f32.mrf.mxu0
        %v1322 = vadd.f32 %v1309, %v1321
        %v1323 = vpop.f32.mrf.mxu0
        %1324 = vdwg.mxu0
        %v1325 = vld [vmem:[%s506] sm:$0xff]
        %v1326 = vld [vmem:[%s509] sm:$0x1]
        %1328 = vset.pattern.permute.xlu0 0
        %1329 = vperm.xlu0 %1328, %v1325
        %v1330 = vpop.permute.xlu0 %1329
        %v1333 = vperm.slane %v1326, 0
        %v1335 = vmul.f32 %v1330, %v1333
        %v1336 = vsub.f32 %v1335, 1.0
        %v1337 = vmul.f32 %v1336, 1e+09
        %v1338 = vmul.f32 %v1337, -1.0
        %v1339 = vpack.c.bf16 %v790, %v790
        %v1340 = vpack.c.bf16 %v1244, %v1244
        %v1341 = vpack.c.bf16 %v1296, %v1296
        %1342 = vmatpush.bf16.xpose.msra.mxu0 0
        %1343 = vmatpush.bf16.xpose.msra.mxu0 0
        %1344 = vmatpush.bf16.xpose.msra.mxu0 0
        %1345 = vmatpush.bf16.xpose.msra.mxu0 0
        %1346 = vmatpush.bf16.xpose.msra.mxu0 0
        %1347 = vmatpush.bf16.xpose.msra.mxu0 0
        %1348 = vmatpush.bf16.xpose.msra.mxu0 0
        %1349 = vmatpush.bf16.xpose.msra.mxu0 %v1340
        %1350 = vmatmul.bf16.gmra.mxu0 %v1339
        %v1351 = vpop.f32.mrf.mxu0
        %v1352 = vadd.f32 %v1338, %v1351
        %v1353 = vpop.f32.mrf.mxu0
        %1354 = vdwg.mxu0
        %vm1355 = vcmask 64512
        %v1356 = vsel %vm1355, %v1352, -inf
        %1357 = vmax.xlane.f32.xlu0 %v1356
        %v1358 = vpop.xlane.xlu0 %1357
        %v1359 = vsub.f32 %v1352, %v1358
        %v1360 = vmul.f32 %v1359, 1.442695
        %v1361 = vpow.pop %v1360
        %v1362 = vsel %vm1355, %v1361, 0.0
        %1363 = vadd.xlane.f32.xlu0 %v1362
        %v1364 = vpop.xlane.xlu0 %1363
        %v1365 = vrcp.pop %v1364
        %v1366 = vmul.f32 %v1361, %v1365
        %v1367 = vpack.c.bf16 %v1366, %v1366
        %v1369 = vsel %vm1355, %v1367, 0
        %vm1371 = vcmask 1043456
        %v1373 = vsel %vm1371, %v1341, 0
        %1375 = vmatpush.bf16.msra.mxu0 0
        %1376 = vmatpush.bf16.msra.mxu0 0
        %1377 = vmatpush.bf16.msra.mxu0 0
        %1378 = vmatpush.bf16.msra.mxu0 0
        %1379 = vmatpush.bf16.msra.mxu0 0
        %1380 = vmatpush.bf16.msra.mxu0 0
        %1381 = vmatpush.bf16.msra.mxu0 0
        %1382 = vmatpush.bf16.msra.mxu0 %v1373
        %1383 = vmatmul.bf16.gmra.mxu0 %v1369
        %v1384 = vpop.f32.mrf.mxu0
        %v1385 = vadd.f32 0.0, %v1384
        %v1386 = vpop.f32.mrf.mxu0
        %1387 = vdwg.mxu0
        %v1388 = vpack.c.bf16 %v1385, %v1385
        %v1389 = vld [vmem:[#allocation6] sm:$0xff]
        %v1390 = vld [vmem:[#allocation6 + $0x8] sm:$0xff]
        %v1391 = vld [vmem:[#allocation6 + $0x10] sm:$0xff]
        %v1392 = vld [vmem:[#allocation6 + $0x18] sm:$0xff]
        %v1393 = vld [vmem:[#allocation6 + $0x20] sm:$0xff]
        %v1394 = vld [vmem:[#allocation6 + $0x28] sm:$0xff]
        %v1395 = vld [vmem:[#allocation6 + $0x30] sm:$0xff]
        %v1396 = vld [vmem:[#allocation6 + $0x38] sm:$0xff]
        %v1397 = vld [vmem:[#allocation6 + $0x40] sm:$0xff]
        %v1398 = vld [vmem:[#allocation6 + $0x48] sm:$0xff]
        %v1399 = vld [vmem:[#allocation6 + $0x50] sm:$0xff]
        %v1400 = vld [vmem:[#allocation6 + $0x58] sm:$0xff]
        %v1401 = vld [vmem:[#allocation6 + $0x60] sm:$0xff]
        %v1402 = vld [vmem:[#allocation6 + $0x68] sm:$0xff]
        %v1403 = vld [vmem:[#allocation6 + $0x70] sm:$0xff]
        %v1404 = vld [vmem:[#allocation6 + $0x78] sm:$0xff]
        %v1405 = vpack.c.bf16 %v816, %v816
        %v1406 = vpack.c.bf16 %v1270, %v1270
        %v1407 = vpack.c.bf16 %v1322, %v1322
        %1408 = vmatpush.bf16.xpose.msra.mxu0 0
        %1409 = vmatpush.bf16.xpose.msra.mxu0 0
        %1410 = vmatpush.bf16.xpose.msra.mxu0 0
        %1411 = vmatpush.bf16.xpose.msra.mxu0 0
        %1412 = vmatpush.bf16.xpose.msra.mxu0 0
        %1413 = vmatpush.bf16.xpose.msra.mxu0 0
        %1414 = vmatpush.bf16.xpose.msra.mxu0 0
        %1415 = vmatpush.bf16.xpose.msra.mxu0 %v1406
        %1416 = vmatmul.bf16.gmra.mxu0 %v1405
        %v1417 = vpop.f32.mrf.mxu0
        %v1418 = vadd.f32 %v1338, %v1417
        %v1419 = vpop.f32.mrf.mxu0
        %1420 = vdwg.mxu0
        %v1421 = vsel %vm1355, %v1418, -inf
        %1422 = vmax.xlane.f32.xlu0 %v1421
        %v1423 = vpop.xlane.xlu0 %1422
        %v1424 = vsub.f32 %v1418, %v1423
        %v1425 = vmul.f32 %v1424, 1.442695
        %v1426 = vpow.pop %v1425
        %v1427 = vsel %vm1355, %v1426, 0.0
        %1428 = vadd.xlane.f32.xlu0 %v1427
        %v1429 = vpop.xlane.xlu0 %1428
        %v1430 = vrcp.pop %v1429
        %v1431 = vmul.f32 %v1426, %v1430
        %v1432 = vpack.c.bf16 %v1431, %v1431
        %v1434 = vsel %vm1355, %v1432, 0
        %v1437 = vsel %vm1371, %v1407, 0
        %1439 = vmatpush.bf16.msra.mxu0 0
        %1440 = vmatpush.bf16.msra.mxu0 0
        %1441 = vmatpush.bf16.msra.mxu0 0
        %1442 = vmatpush.bf16.msra.mxu0 0
        %1443 = vmatpush.bf16.msra.mxu0 0
        %1444 = vmatpush.bf16.msra.mxu0 0
        %1445 = vmatpush.bf16.msra.mxu0 0
        %1446 = vmatpush.bf16.msra.mxu0 %v1437
        %1447 = vmatmul.bf16.gmra.mxu0 %v1434
        %v1448 = vpop.f32.mrf.mxu0
        %v1449 = vadd.f32 0.0, %v1448
        %v1450 = vpop.f32.mrf.mxu0
        %1451 = vdwg.mxu0
        %v1452 = vpack.c.bf16 %v1449, %v1449
        %v1453 = vld [vmem:[#allocation6 + $0x80] sm:$0xff]
        %v1454 = vld [vmem:[#allocation6 + $0x88] sm:$0xff]
        %v1455 = vld [vmem:[#allocation6 + $0x90] sm:$0xff]
        %v1456 = vld [vmem:[#allocation6 + $0x98] sm:$0xff]
        %v1457 = vld [vmem:[#allocation6 + $0xa0] sm:$0xff]
        %v1458 = vld [vmem:[#allocation6 + $0xa8] sm:$0xff]
        %v1459 = vld [vmem:[#allocation6 + $0xb0] sm:$0xff]
        %v1460 = vld [vmem:[#allocation6 + $0xb8] sm:$0xff]
        %v1461 = vld [vmem:[#allocation6 + $0xc0] sm:$0xff]
        %v1462 = vld [vmem:[#allocation6 + $0xc8] sm:$0xff]
        %v1463 = vld [vmem:[#allocation6 + $0xd0] sm:$0xff]
        %v1464 = vld [vmem:[#allocation6 + $0xd8] sm:$0xff]
        %v1465 = vld [vmem:[#allocation6 + $0xe0] sm:$0xff]
        %v1466 = vld [vmem:[#allocation6 + $0xe8] sm:$0xff]
        %v1467 = vld [vmem:[#allocation6 + $0xf0] sm:$0xff]
        %v1468 = vld [vmem:[#allocation6 + $0xf8] sm:$0xff]
        %v1485 = vunpack.c.l.b16 %v1453
        %v1486 = vunpack.c.h.b16 %v1453
        %v1487 = vunpack.c.l.b16 %v1454
        %v1488 = vunpack.c.h.b16 %v1454
        %v1489 = vunpack.c.l.b16 %v1455
        %v1490 = vunpack.c.h.b16 %v1455
        %v1491 = vunpack.c.l.b16 %v1456
        %v1492 = vunpack.c.h.b16 %v1456
        %v1493 = vunpack.c.l.b16 %v1457
        %v1494 = vunpack.c.h.b16 %v1457
        %v1495 = vunpack.c.l.b16 %v1458
        %v1496 = vunpack.c.h.b16 %v1458
        %v1497 = vunpack.c.l.b16 %v1459
        %v1498 = vunpack.c.h.b16 %v1459
        %v1499 = vunpack.c.l.b16 %v1460
        %v1500 = vunpack.c.h.b16 %v1460
        %v1501 = vunpack.c.l.b16 %v1461
        %v1502 = vunpack.c.h.b16 %v1461
        %v1503 = vunpack.c.l.b16 %v1462
        %v1504 = vunpack.c.h.b16 %v1462
        %v1505 = vunpack.c.l.b16 %v1463
        %v1506 = vunpack.c.h.b16 %v1463
        %v1507 = vunpack.c.l.b16 %v1464
        %v1508 = vunpack.c.h.b16 %v1464
        %v1509 = vunpack.c.l.b16 %v1465
        %v1510 = vunpack.c.h.b16 %v1465
        %v1511 = vunpack.c.l.b16 %v1466
        %v1512 = vunpack.c.h.b16 %v1466
        %v1513 = vunpack.c.l.b16 %v1467
        %v1514 = vunpack.c.h.b16 %v1467
        %v1515 = vunpack.c.l.b16 %v1468
        %v1516 = vunpack.c.h.b16 %v1468
        %v1517 = vpack.c.b16 %v1487, %v1485
        %v1518 = vpack.c.b16 %v1488, %v1486
        %v1519 = vpack.c.b16 %v1491, %v1489
        %v1520 = vpack.c.b16 %v1492, %v1490
        %v1521 = vpack.c.b16 %v1495, %v1493
        %v1522 = vpack.c.b16 %v1496, %v1494
        %v1523 = vpack.c.b16 %v1499, %v1497
        %v1524 = vpack.c.b16 %v1500, %v1498
        %v1525 = vpack.c.b16 %v1503, %v1501
        %v1526 = vpack.c.b16 %v1504, %v1502
        %v1527 = vpack.c.b16 %v1507, %v1505
        %v1528 = vpack.c.b16 %v1508, %v1506
        %v1529 = vpack.c.b16 %v1511, %v1509
        %v1530 = vpack.c.b16 %v1512, %v1510
        %v1531 = vpack.c.b16 %v1515, %v1513
        %v1532 = vpack.c.b16 %v1516, %v1514
        %1549 = vmatpush.bf16.msra.mxu0 %v1531
        %1550 = vmatpush.bf16.msra.mxu0 %v1529
        %1551 = vmatpush.bf16.msra.mxu0 %v1527
        %1552 = vmatpush.bf16.msra.mxu0 %v1525
        %1553 = vmatpush.bf16.msra.mxu0 %v1523
        %1554 = vmatpush.bf16.msra.mxu0 %v1521
        %1555 = vmatpush.bf16.msra.mxu0 %v1519
        %1556 = vmatpush.bf16.msra.mxu0 %v1517
        %1557 = vmatmul.bf16.gmra.mxu0 %v1452
        %v1558 = vpop.f32.mrf.mxu0
        %v1559 = vadd.f32 0.0, %v1558
        %v1560 = vpop.f32.mrf.mxu0
        %1561 = vdwg.mxu0
        %1562 = vmatpush.bf16.msra.mxu0 %v1532
        %1563 = vmatpush.bf16.msra.mxu0 %v1530
        %1564 = vmatpush.bf16.msra.mxu0 %v1528
        %1565 = vmatpush.bf16.msra.mxu0 %v1526
        %1566 = vmatpush.bf16.msra.mxu0 %v1524
        %1567 = vmatpush.bf16.msra.mxu0 %v1522
        %1568 = vmatpush.bf16.msra.mxu0 %v1520
        %1569 = vmatpush.bf16.msra.mxu0 %v1518
        %1570 = vmatmul.bf16.gmra.mxu0 %v1452
        %v1571 = vpop.f32.mrf.mxu0
        %v1572 = vadd.f32 0.0, %v1571
        %v1573 = vpop.f32.mrf.mxu0
        %1574 = vdwg.mxu0
        %v1591 = vunpack.c.l.b16 %v1389
        %v1592 = vunpack.c.h.b16 %v1389
        %v1593 = vunpack.c.l.b16 %v1390
        %v1594 = vunpack.c.h.b16 %v1390
        %v1595 = vunpack.c.l.b16 %v1391
        %v1596 = vunpack.c.h.b16 %v1391
        %v1597 = vunpack.c.l.b16 %v1392
        %v1598 = vunpack.c.h.b16 %v1392
        %v1599 = vunpack.c.l.b16 %v1393
        %v1600 = vunpack.c.h.b16 %v1393
        %v1601 = vunpack.c.l.b16 %v1394
        %v1602 = vunpack.c.h.b16 %v1394
        %v1603 = vunpack.c.l.b16 %v1395
        %v1604 = vunpack.c.h.b16 %v1395
        %v1605 = vunpack.c.l.b16 %v1396
        %v1606 = vunpack.c.h.b16 %v1396
        %v1607 = vunpack.c.l.b16 %v1397
        %v1608 = vunpack.c.h.b16 %v1397
        %v1609 = vunpack.c.l.b16 %v1398
        %v1610 = vunpack.c.h.b16 %v1398
        %v1611 = vunpack.c.l.b16 %v1399
        %v1612 = vunpack.c.h.b16 %v1399
        %v1613 = vunpack.c.l.b16 %v1400
        %v1614 = vunpack.c.h.b16 %v1400
        %v1615 = vunpack.c.l.b16 %v1401
        %v1616 = vunpack.c.h.b16 %v1401
        %v1617 = vunpack.c.l.b16 %v1402
        %v1618 = vunpack.c.h.b16 %v1402
        %v1619 = vunpack.c.l.b16 %v1403
        %v1620 = vunpack.c.h.b16 %v1403
        %v1621 = vunpack.c.l.b16 %v1404
        %v1622 = vunpack.c.h.b16 %v1404
        %v1623 = vpack.c.b16 %v1593, %v1591
        %v1624 = vpack.c.b16 %v1594, %v1592
        %v1625 = vpack.c.b16 %v1597, %v1595
        %v1626 = vpack.c.b16 %v1598, %v1596
        %v1627 = vpack.c.b16 %v1601, %v1599
        %v1628 = vpack.c.b16 %v1602, %v1600
        %v1629 = vpack.c.b16 %v1605, %v1603
        %v1630 = vpack.c.b16 %v1606, %v1604
        %v1631 = vpack.c.b16 %v1609, %v1607
        %v1632 = vpack.c.b16 %v1610, %v1608
        %v1633 = vpack.c.b16 %v1613, %v1611
        %v1634 = vpack.c.b16 %v1614, %v1612
        %v1635 = vpack.c.b16 %v1617, %v1615
        %v1636 = vpack.c.b16 %v1618, %v1616
        %v1637 = vpack.c.b16 %v1621, %v1619
        %v1638 = vpack.c.b16 %v1622, %v1620
        %1655 = vmatpush.bf16.msra.mxu0 %v1637
        %1656 = vmatpush.bf16.msra.mxu0 %v1635
        %1657 = vmatpush.bf16.msra.mxu0 %v1633
        %1658 = vmatpush.bf16.msra.mxu0 %v1631
        %1659 = vmatpush.bf16.msra.mxu0 %v1629
        %1660 = vmatpush.bf16.msra.mxu0 %v1627
        %1661 = vmatpush.bf16.msra.mxu0 %v1625
        %1662 = vmatpush.bf16.msra.mxu0 %v1623
        %1663 = vmatmul.bf16.gmra.mxu0 %v1388
        %v1664 = vpop.f32.mrf.mxu0
        %v1665 = vadd.f32 %v1559, %v1664
        %v1666 = vpop.f32.mrf.mxu0
        %1667 = vdwg.mxu0
        %1668 = vmatpush.bf16.msra.mxu0 %v1638
        %1669 = vmatpush.bf16.msra.mxu0 %v1636
        %1670 = vmatpush.bf16.msra.mxu0 %v1634
        %1671 = vmatpush.bf16.msra.mxu0 %v1632
        %1672 = vmatpush.bf16.msra.mxu0 %v1630
        %1673 = vmatpush.bf16.msra.mxu0 %v1628
        %1674 = vmatpush.bf16.msra.mxu0 %v1626
        %1675 = vmatpush.bf16.msra.mxu0 %v1624
        %1676 = vmatmul.bf16.gmra.mxu0 %v1388
        %v1677 = vpop.f32.mrf.mxu0
        %v1678 = vadd.f32 %v1572, %v1677
        %v1679 = vpop.f32.mrf.mxu0
        %1680 = vdwg.mxu0
        %v1681 = vld [vmem:[%s11] sm:$0x3]
        %v1683 = vperm.slane %v1681, 0
        %v1684 = vperm.slane %v1681, 1
        %v1687 = vadd.f32 %v1665, %v1683
        %v1688 = vadd.f32 %v1678, %v1684
        %v1689 = vadd.f32 %v517, %v1687
        %v1690 = vadd.f32 %v518, %v1688
        %v1691 = vpack.c.bf16 %v1690, %v1689
        %1692 = vst [vmem:[%s514] sm:$0xff] %v1691
        %p1693 = scmp.lt.s32.totalorder %s25, 1
        %s1694 = scalar_select %p1693, %s25, 1
        %s1695 = smul.addr %s1694, 2
        %s1696 = smul.addr %s1695, 4
        %s1697 = scalar_lea.vmem %s12, %s1696
        // Predicated region
        $region81: #{_lambda_.16} parent=67 // pred_check
          %p1698 = pneg %p315
        $region82: #{_lambda_.16} parent=67 // pred_check_branch
          %1700 = sbr.rel (%p1698) target = $region84
        $region83: #{_lambda_.16} parent=67 // pred_region
          _
        $region84: #{_lambda_.16} parent=67 // pred_fallthru
          _
      $region68: #{_lambda_.16} parent=5 // pred_fallthru
        _
      %p1701 = scmp.le.s32.totalorder 2, %s20
      // Predicated region
      $region85: #{_lambda_.16} parent=5 // pred_check
        %p1702 = pneg %p1701
      $region86: #{_lambda_.16} parent=5 // pred_check_branch
        %1704 = sbr.rel (%p1702) target = $region88
      $region87: #{_lambda_.16} parent=5 // pred_region
        %s1705 = ssub.s32 %s20, 2
        // Predicated region
        $region89: #{_lambda_.16} parent=87 // pred_check
          %p1706 = pneg %p321
        $region90: #{_lambda_.16} parent=87 // pred_check_branch
          %1708 = sbr.rel (%p1706) target = $region92
        $region91: #{_lambda_.16} parent=87 // pred_region
          %p1709 = scmp.lt.s32.totalorder %s26, 1
          %s1710 = scalar_select %p1709, %s26, 1
          %s1711 = smul.addr %s1710, 2
          %s1712 = smul.addr %s1711, 4
          %s1713 = scalar_lea.vmem %s12, %s1712
        $region92: #{_lambda_.16} parent=87 // pred_fallthru
          _
      $region88: #{_lambda_.16} parent=5 // pred_fallthru
        _
    $region6: #{_lambda_.16} parent=1 // loop_footer
      %s24 = sadd.s32 1, %s20
    $region7: #{_lambda_.16} parent=1 // loop_footer_branch
      %19 = sbr.rel target = $region3
    $region8: #{_lambda_.16} parent=1 // loop_exit
      _
    %1714 = vsyncpa [#allocation3], 1
    %s1715 = scalar_lea.sflag [#allocation3], 1
    %1716 = vsyncpa %s1715, 1
    %1717 = vsyncpa [#allocation5], 1

</llo_original>
